<compile_context>
chip_gen: v7x
topology: tpu7x:2x2x1
jax: 0.10.0
libtpu: 0.0.40
codegen_flags: <defaults>
</compile_context>

<pallas_src>
import functools

import jax
import jax.numpy as jnp
from jax.experimental import pallas as pl
from jax.experimental.pallas import tpu as pltpu

EPS = 1e-5
_VMEM_LIMIT_BYTES = 32 * 1024 * 1024   # modest; fits all generations incl. v7x
_CIN_ALIGN = 8                          # min alignment of the contracted channel dim
_LANE = 128                             # lane-dense output channels


def _round_up(x, m):
    return (x + m - 1) // m * m


# ------------------------------ Pallas kernels ------------------------------

def _conv_stats_kernel(x_ref, w_ref, scale_ref, shift_ref, y_ref, stats_ref, *,
                       H, W, apply_input_act):
    """3x3 conv (pad=1) + BN batch statistics for one image.

    x_ref:       (1, L, Cin) bf16  zero-padded image, flat row-major over
                                   (H+4, W+2); the last 2 rows are phantom
                                   slack so every tap slice stays in bounds.
    w_ref:       (9, Cin, Cp) bf16 tap-major weights (kh*3+kw, cin, cout_pad)
    scale/shift: (1, Cin)  f32     folded BN affine of the *previous* layer
    y_ref:       (1, L, Cp) bf16   this layer's pre-BN output, same flat layout
    stats_ref:   (1, 2, Cp) f32    per-image [sum; sum_of_squares] over valid px
    """
    Wp2 = W + 2
    Mrows = H * Wp2                      # conv output rows incl. 2 junk cols/row
    L = x_ref.shape[1]

    x = x_ref[0]                         # (L, Cin) bf16

    if apply_input_act:
        # Fused BN+ReLU of the previous layer, applied in-register.  Border and
        # phantom rows are stored as pre-activation zeros, so re-mask them to
        # exact zero padding after the affine + ReLU.
        r = jax.lax.broadcasted_iota(jnp.int32, (L, 1), 0)
        col = r % Wp2
        interior = (r >= Wp2) & (r < (H + 1) * Wp2) & (col >= 1) & (col <= W)
        a = jnp.maximum(x.astype(jnp.float32) * scale_ref[...] + shift_ref[...], 0.0)
        x = jnp.where(interior, a, 0.0).astype(jnp.bfloat16)

    # 3x3 conv as 9 shifted (Mrows, Cin) @ (Cin, Cp) MXU dots with f32 accum.
    # In the flat layout, tap (kh, kw) of output row r reads input row
    # r + kh*(W+2) + kw -> a contiguous static slice (no strided gather).
    acc = jnp.zeros((Mrows, y_ref.shape[2]), jnp.float32)
    for kh in range(3):
        for kw in range(3):
            off = kh * Wp2 + kw
            acc = acc + jnp.dot(x[off:off + Mrows, :], w_ref[kh * 3 + kw],
                                preferred_element_type=jnp.float32)

    # Columns W and W+1 of each image row are wrap-around junk -> zero them.
    cols = jax.lax.broadcasted_iota(jnp.int32, (Mrows, 1), 0) % Wp2
    yv = jnp.where(cols < W, acc, 0.0)

    # Single-pass BN statistics over the H*W valid pixels (junk rows are 0).
    # Two separate row stores (no per-step concatenate).
    stats_ref[0, 0:1, :] = jnp.sum(yv, axis=0, keepdims=True)
    stats_ref[0, 1:2, :] = jnp.sum(yv * yv, axis=0, keepdims=True)

    # Store pre-BN y in the same flat padded layout (zero border ring) so the
    # next layer's conv pass can consume it directly.
    y_ref[...] = jnp.zeros(y_ref.shape, y_ref.dtype)
    y_ref[0, Wp2 + 1:Wp2 + 1 + Mrows, :] = yv.astype(y_ref.dtype)


def _bn_relu_kernel(y_ref, scale_ref, shift_ref, o_ref):
    # Final layer's BN+ReLU: out = max(scale*y + shift, 0).  Border / phantom
    # rows produce garbage that the wrapper slices away.
    y = y_ref[0].astype(jnp.float32)
    o_ref[0] = jnp.maximum(y * scale_ref[...] + shift_ref[...], 0.0).astype(o_ref.dtype)


# ------------------------------ layer wrappers --------------------------------

def _conv_pass(x_flat, w_oihw, cp_out, H, W, scale_in, shift_in, apply_input_act):
    """One conv + stats pallas_call (optionally with the previous BN+ReLU fused in)."""
    N, L, cin = x_flat.shape
    cin_w, cout = w_oihw.shape[1], w_oihw.shape[0]
    # PyTorch (Cout, Cin, 3, 3) -> (kh, kw, cin, cout) -> (9, cin, Cp), zero-padded.
    w = jnp.transpose(w_oihw, (2, 3, 1, 0)).reshape(9, cin_w, cout)
    w = jnp.pad(w, ((0, 0), (0, cin - cin_w), (0, cp_out - cout))).astype(jnp.bfloat16)

    kernel = functools.partial(_conv_stats_kernel, H=H, W=W,
                               apply_input_act=apply_input_act)
    flops = 2 * N * H * (W + 2) * 9 * cin * cp_out
    bytes_accessed = (N * L * cin * 2 + 9 * cin * cp_out * 2
                      + N * L * cp_out * 2 + N * 2 * cp_out * 4 + 2 * cin * 4)

    y, stats = pl.pallas_call(
        kernel,
        out_shape=(jax.ShapeDtypeStruct((N, L, cp_out), jnp.bfloat16),
                   jax.ShapeDtypeStruct((N, 2, cp_out), jnp.float32)),
        grid_spec=pltpu.PrefetchScalarGridSpec(
            num_scalar_prefetch=0,
            grid=(N,),
            in_specs=[pl.BlockSpec((1, L, cin), lambda n: (n, 0, 0)),
                      pl.BlockSpec((9, cin, cp_out), lambda n: (0, 0, 0)),  # weights resident
                      pl.BlockSpec((1, cin), lambda n: (0, 0)),
                      pl.BlockSpec((1, cin), lambda n: (0, 0))],
            out_specs=[pl.BlockSpec((1, L, cp_out), lambda n: (n, 0, 0)),
                       pl.BlockSpec((1, 2, cp_out), lambda n: (n, 0, 0))]),  # per-image partials
        compiler_params=pltpu.CompilerParams(
            dimension_semantics=("parallel",),       # no cross-step accumulator -> megacore OK
            vmem_limit_bytes=_VMEM_LIMIT_BYTES),
        cost_estimate=pl.CostEstimate(flops=flops, transcendentals=0,
                                      bytes_accessed=bytes_accessed),
    )(x_flat, w, scale_in, shift_in)
    return y, stats


def _fold_bn(stats, gamma, beta, count, cp):
    # Tiny per-channel glue: fold training-mode BatchNorm into one affine.
    # The conv bias cancels exactly under the batch-mean subtraction, so it
    # never enters the kernels.  Padded channels get scale=shift=0.
    s = jnp.sum(stats[:, 0, :], axis=0)
    s2 = jnp.sum(stats[:, 1, :], axis=0)
    mean = s / count
    var = jnp.maximum(s2 / count - mean * mean, 0.0)
    cout = gamma.shape[0]
    scale = jnp.pad(gamma, (0, cp - cout)) * jax.lax.rsqrt(var + EPS)
    shift = jnp.pad(beta, (0, cp - cout)) - mean * scale
    return (scale.reshape(1, cp).astype(jnp.float32),
            shift.reshape(1, cp).astype(jnp.float32))


def _bn_relu_pass(y_flat, scale, shift):
    N, L, cp = y_flat.shape
    return pl.pallas_call(
        _bn_relu_kernel,
        out_shape=jax.ShapeDtypeStruct((N, L, cp), jnp.bfloat16),
        grid_spec=pltpu.PrefetchScalarGridSpec(
            num_scalar_prefetch=0,
            grid=(N,),
            in_specs=[pl.BlockSpec((1, L, cp), lambda n: (n, 0, 0)),
                      pl.BlockSpec((1, cp), lambda n: (0, 0)),
                      pl.BlockSpec((1, cp), lambda n: (0, 0))],
            out_specs=pl.BlockSpec((1, L, cp), lambda n: (n, 0, 0))),
        compiler_params=pltpu.CompilerParams(
            dimension_semantics=("parallel",),
            vmem_limit_bytes=_VMEM_LIMIT_BYTES),
        input_output_aliases={0: 0},          # act reuses y's HBM buffer
    )(y_flat, scale, shift)


def _double_conv_impl(x_nchw, params):
    # Matches double_conv.forward(x) with x in NCHW (training-mode BatchNorm).
    N, cin_raw, H, W = x_nchw.shape
    cout1 = params["w1"].shape[0]
    cout2 = params["w2"].shape[0]
    cin1 = _round_up(max(cin_raw, _CIN_ALIGN), _CIN_ALIGN)
    cp1 = _round_up(cout1, _LANE)
    cp2 = _round_up(cout2, _LANE)
    Wp2 = W + 2
    L = (H + 4) * Wp2                      # flat padded length (+2 phantom tail rows)
    count = N * H * W

    # bf16 before the layout shuffle (halves transpose HBM traffic), NCHW->NHWC,
    # spatial zero-pad + channel align, then flatten to the padded-flat layout.
    x = jnp.transpose(x_nchw.astype(jnp.bfloat16), (0, 2, 3, 1))
    x = jnp.pad(x, ((0, 0), (1, 3), (1, 1), (0, cin1 - cin_raw)))
    x_flat = x.reshape(N, L, cin1)

    # Layer 1: conv + stats (no fused input activation on the raw input).
    one = jnp.ones((1, cin1), jnp.float32)
    zero = jnp.zeros((1, cin1), jnp.float32)
    y1, st1 = _conv_pass(x_flat, params["w1"], cp1, H, W, one, zero,
                         apply_input_act=False)
    scale1, shift1 = _fold_bn(st1, params["g1"], params["beta1"], count, cp1)

    # Layer 2: layer-1's BN+ReLU fused into this conv pass.
    y2, st2 = _conv_pass(y1, params["w2"], cp2, H, W, scale1, shift1,
                         apply_input_act=True)
    scale2, shift2 = _fold_bn(st2, params["g2"], params["beta2"], count, cp2)

    # Final standalone BN+ReLU (in place over y2's buffer).
    act = _bn_relu_pass(y2, scale2, shift2)

    act = act.reshape(N, H + 4, Wp2, cp2)[:, 1:H + 1, 1:W + 1, :cout2]
    return jnp.transpose(act, (0, 3, 1, 2)).astype(jnp.float32)


double_conv = jax.jit(_double_conv_impl)


# ------------------------------- references ----------------------------------

def _ref_layer_f32(x_nchw, w, b, g, beta):
    # Exact PyTorch forward semantics (f32, HIGHEST precision).
    y = jax.lax.conv_general_dilated(
        x_nchw, w, window_strides=(1, 1), padding=((1, 1), (1, 1)),
        dimension_numbers=("NCHW", "OIHW", "NCHW"),
        precision=jax.lax.Precision.HIGHEST)
    y = y + b[None, :, None, None]
    mean = jnp.mean(y, axis=(0, 2, 3), keepdims=True)
    var = jnp.mean(jnp.square(y - mean), axis=(0, 2, 3), keepdims=True)
    y = (y - mean) * jax.lax.rsqrt(var + EPS)
    y = y * g[None, :, None, None] + beta[None, :, None, None]
    return jnp.maximum(y, 0.0)


def _ref_double_conv_f32(x_nchw, params):
    x = _ref_layer_f32(x_nchw, params["w1"], params["b1"], params["g1"], params["beta1"])
    return _ref_layer_f32(x, params["w2"], params["b2"], params["g2"], params["beta2"])


def _ref_double_conv_bf16(x_nchw, params):
    # Pure-JAX mirror of the kernel numerics: bf16 conv operands / f32 accum,
    # f32 batch stats from the pre-rounding conv output, folded affine applied
    # to the bf16-rounded y, conv bias dropped (cancels under training-mode BN).
    def conv_bf16(a, w_oihw):
        w = jnp.transpose(w_oihw, (2, 3, 1, 0)).astype(jnp.bfloat16)   # HWIO
        return jax.lax.conv_general_dilated(
            a.astype(jnp.bfloat16), w, (1, 1), ((1, 1), (1, 1)),
            dimension_numbers=("NHWC", "HWIO", "NHWC"),
            preferred_element_type=jnp.float32)

    def layer(a_bf16, w, g, beta):
        y = conv_bf16(a_bf16, w)
        m = jnp.mean(y, axis=(0, 1, 2))
        v = jnp.maximum(jnp.mean(y * y, axis=(0, 1, 2)) - m * m, 0.0)
        sc = g * jax.lax.rsqrt(v + EPS)
        sh = beta - m * sc
        yb = y.astype(jnp.bfloat16).astype(jnp.float32)
        return jnp.maximum(yb * sc + sh, 0.0).astype(jnp.bfloat16)

    x = jnp.transpose(x_nchw.astype(jnp.bfloat16), (0, 2, 3, 1))
    a1 = layer(x, params["w1"], params["g1"], params["beta1"])
    a2 = layer(a1, params["w2"], params["g2"], params["beta2"])
    return jnp.transpose(a2, (0, 3, 1, 2)).astype(jnp.float32)


if __name__ == "__main__":
    N, inplanes, planes, H, W = 2, 4, 8, 16, 16
    key = jax.random.PRNGKey(0)
    ks = jax.random.split(key, 9)

    x = jax.random.normal(ks[0], (N, inplanes, H, W), jnp.float32)
    params = {
        "w1": 0.1 * jax.random.normal(ks[1], (planes, inplanes, 3, 3), jnp.float32),
        "b1": 0.1 * jax.random.normal(ks[2], (planes,), jnp.float32),
        "g1": 1.0 + 0.1 * jax.random.normal(ks[3], (planes,), jnp.float32),
        "beta1": 0.1 * jax.random.normal(ks[4], (planes,), jnp.float32),
        "w2": 0.1 * jax.random.normal(ks[5], (planes, planes, 3, 3), jnp.float32),
        "b2": 0.1 * jax.random.normal(ks[6], (planes,), jnp.float32),
        "g2": 1.0 + 0.1 * jax.random.normal(ks[7], (planes,), jnp.float32),
        "beta2": 0.1 * jax.random.normal(ks[8], (planes,), jnp.float32),
    }

    out = jax.block_until_ready(double_conv(x, params))
    assert out.shape == (N, planes, H, W), out.shape

    # 1) Tight check vs a pure-JAX mirror of the kernel numerics (validates the
    #    in-kernel patch building / fused BN+ReLU / padding / affine folding).
    ref_bf16 = _ref_double_conv_bf16(x, params)
    err_bf16 = float(jnp.max(jnp.abs(out - ref_bf16)))
    assert jnp.allclose(out, ref_bf16, atol=1e-2, rtol=1e-2), err_bf16

    # 2) Loose check vs exact f32 module semantics; slack = bf16 operand /
    #    bf16-intermediate error budget (outputs are O(1) after BatchNorm).
    ref_f32 = _ref_double_conv_f32(x, params)
    err_f32 = float(jnp.max(jnp.abs(out - ref_f32)))
    assert jnp.allclose(out, ref_f32, atol=8e-2, rtol=8e-2), err_f32

    print("KERNEL_OK")
</pallas_src>

<mosaic_0001>
module attributes {stable_mosaic.version = 11 : i64} {
  func.func @_bn_relu_kernel(%arg0: i32, %arg1: memref<1x360x128xbf16, #tpu.memory_space<vmem>>, %arg2: memref<1x128xf32, #tpu.memory_space<vmem>>, %arg3: memref<1x128xf32, #tpu.memory_space<vmem>>, %arg4: memref<1x360x128xbf16, #tpu.memory_space<vmem>>) attributes {dimension_semantics = [#tpu.dimension_semantics<parallel>], iteration_bounds = array<i64: 2>, scalar_prefetch = 0 : i64, scratch_operands = 0 : i64, tpu.core_type = #tpu.core_type<tc>, window_params = [{transform_indices = @transform_0, window_bounds = array<i64: 1, 360, 128>}, {pipeline_mode = #tpu.pipeline_mode<synchronous>, transform_indices = @transform_1, window_bounds = array<i64: 1, 128>}, {pipeline_mode = #tpu.pipeline_mode<synchronous>, transform_indices = @transform_2, window_bounds = array<i64: 1, 128>}, {transform_indices = @transform_3, window_bounds = array<i64: 1, 360, 128>}]} {
    %c0 = arith.constant 0 : index
    %c0_0 = arith.constant 0 : index
    %c0_1 = arith.constant 0 : index
    %0 = vector.load %arg1[%c0, %c0_0, %c0_1] : memref<1x360x128xbf16, #tpu.memory_space<vmem>>, vector<1x360x128xbf16>
    %1 = vector.shape_cast %0 : vector<1x360x128xbf16> to vector<360x128xbf16>
    %2 = arith.extf %1 : vector<360x128xbf16> to vector<360x128xf32>
    %c0_2 = arith.constant 0 : index
    %c0_3 = arith.constant 0 : index
    %3 = vector.load %arg2[%c0_2, %c0_3] : memref<1x128xf32, #tpu.memory_space<vmem>>, vector<1x128xf32>
    %4 = vector.broadcast %3 : vector<1x128xf32> to vector<360x128xf32>
    %5 = arith.mulf %2, %4 : vector<360x128xf32>
    %c0_4 = arith.constant 0 : index
    %c0_5 = arith.constant 0 : index
    %6 = vector.load %arg3[%c0_4, %c0_5] : memref<1x128xf32, #tpu.memory_space<vmem>>, vector<1x128xf32>
    %7 = vector.broadcast %6 : vector<1x128xf32> to vector<360x128xf32>
    %8 = arith.addf %5, %7 : vector<360x128xf32>
    %cst = arith.constant 0.000000e+00 : f32
    %9 = vector.broadcast %cst : f32 to vector<360x128xf32>
    %10 = arith.maximumf %8, %9 : vector<360x128xf32>
    %11 = arith.truncf %10 : vector<360x128xf32> to vector<360x128xbf16>
    %c0_6 = arith.constant 0 : index
    %c0_7 = arith.constant 0 : index
    %c0_8 = arith.constant 0 : index
    %12 = vector.load %arg4[%c0_6, %c0_7, %c0_8] : memref<1x360x128xbf16, #tpu.memory_space<vmem>>, vector<1x360x128xbf16>
    %13 = vector.shape_cast %12 : vector<1x360x128xbf16> to vector<360x128xbf16>
    %14 = vector.shape_cast %11 : vector<360x128xbf16> to vector<1x360x128xbf16>
    tpu.vector_store %arg4[%c0_6, %c0_7, %c0_8], %14 {strides = array<i32>} : memref<1x360x128xbf16, #tpu.memory_space<vmem>>, vector<1x360x128xbf16>,
    return
  }
  func.func @transform_0(%arg0: i32) -> (i32, i32, i32) {
    %c0_i32 = arith.constant 0 : i32
    %c0_i32_0 = arith.constant 0 : i32
    %c0_i32_1 = arith.constant 0 : i32
    return %arg0, %c0_i32, %c0_i32_0 : i32, i32, i32
  }
  func.func @transform_1(%arg0: i32) -> (i32, i32) {
    %c0_i32 = arith.constant 0 : i32
    %c0_i32_0 = arith.constant 0 : i32
    %c0_i32_1 = arith.constant 0 : i32
    return %c0_i32, %c0_i32_0 : i32, i32
  }
  func.func @transform_2(%arg0: i32) -> (i32, i32) {
    %c0_i32 = arith.constant 0 : i32
    %c0_i32_0 = arith.constant 0 : i32
    %c0_i32_1 = arith.constant 0 : i32
    return %c0_i32, %c0_i32_0 : i32, i32
  }
  func.func @transform_3(%arg0: i32) -> (i32, i32, i32) {
    %c0_i32 = arith.constant 0 : i32
    %c0_i32_0 = arith.constant 0 : i32
    %c0_i32_1 = arith.constant 0 : i32
    return %arg0, %c0_i32, %c0_i32_0 : i32, i32, i32
  }
}

module attributes {stable_mosaic.version = 11 : i64} {
  func.func @_conv_stats_kernel(%arg0: i32, %arg1: memref<1x360x128xbf16, #tpu.memory_space<vmem>>, %arg2: memref<9x128x128xbf16, #tpu.memory_space<vmem>>, %arg3: memref<1x128xf32, #tpu.memory_space<vmem>>, %arg4: memref<1x128xf32, #tpu.memory_space<vmem>>, %arg5: memref<1x360x128xbf16, #tpu.memory_space<vmem>>, %arg6: memref<1x2x128xf32, #tpu.memory_space<vmem>>) attributes {dimension_semantics = [#tpu.dimension_semantics<parallel>], iteration_bounds = array<i64: 2>, scalar_prefetch = 0 : i64, scratch_operands = 0 : i64, tpu.core_type = #tpu.core_type<tc>, window_params = [{transform_indices = @transform_0, window_bounds = array<i64: 1, 360, 128>}, {pipeline_mode = #tpu.pipeline_mode<synchronous>, transform_indices = @transform_1, window_bounds = array<i64: 9, 128, 128>}, {pipeline_mode = #tpu.pipeline_mode<synchronous>, transform_indices = @transform_2, window_bounds = array<i64: 1, 128>}, {pipeline_mode = #tpu.pipeline_mode<synchronous>, transform_indices = @transform_3, window_bounds = array<i64: 1, 128>}, {transform_indices = @transform_4, window_bounds = array<i64: 1, 360, 128>}, {transform_indices = @transform_5, window_bounds = array<i64: 1, 2, 128>}]} {
    %c0 = arith.constant 0 : index
    %c0_0 = arith.constant 0 : index
    %c0_1 = arith.constant 0 : index
    %0 = vector.load %arg1[%c0, %c0_0, %c0_1] : memref<1x360x128xbf16, #tpu.memory_space<vmem>>, vector<1x360x128xbf16>
    %1 = vector.shape_cast %0 : vector<1x360x128xbf16> to vector<360x128xbf16>
    %2 = tpu.iota {dimensions = array<i32: 0>} : vector<360x1xi32>
    %c18_i32 = arith.constant 18 : i32
    %c0_i32 = arith.constant 0 : i32
    %3 = arith.cmpi eq, %c18_i32, %c0_i32 : i32
    %c1_i32 = arith.constant 1 : i32
    %4 = arith.select %3, %c1_i32, %c18_i32 : i32
    %5 = vector.broadcast %4 : i32 to vector<360x1xi32>
    %6 = arith.remsi %2, %5 : vector<360x1xi32>
    %c0_i32_2 = arith.constant 0 : i32
    %7 = vector.broadcast %c0_i32_2 : i32 to vector<360x1xi32>
    %8 = arith.cmpi ne, %6, %7 : vector<360x1xi32>
    %c0_i32_3 = arith.constant 0 : i32
    %9 = vector.broadcast %c0_i32_3 : i32 to vector<360x1xi32>
    %10 = arith.cmpi slt, %6, %9 : vector<360x1xi32>
    %c0_i32_4 = arith.constant 0 : i32
    %11 = arith.cmpi slt, %4, %c0_i32_4 : i32
    %12 = vector.broadcast %11 : i1 to vector<360x1xi1>
    %13 = vector.broadcast %12 : vector<360x1xi1> to vector<360x1xi1>
    %14 = arith.xori %10, %13 : vector<360x1xi1>
    %15 = arith.andi %14, %8 : vector<360x1xi1>
    %16 = vector.broadcast %4 : i32 to vector<360x1xi32>
    %17 = arith.addi %6, %16 : vector<360x1xi32>
    %18 = arith.select %15, %17, %6 : vector<360x1xi1>, vector<360x1xi32>
    %c18_i32_5 = arith.constant 18 : i32
    %19 = vector.broadcast %c18_i32_5 : i32 to vector<360x1xi32>
    %20 = arith.cmpi sge, %2, %19 : vector<360x1xi32>
    %c306_i32 = arith.constant 306 : i32
    %21 = vector.broadcast %c306_i32 : i32 to vector<360x1xi32>
    %22 = arith.cmpi slt, %2, %21 : vector<360x1xi32>
    %23 = arith.andi %20, %22 : vector<360x1xi1>
    %c1_i32_6 = arith.constant 1 : i32
    %24 = vector.broadcast %c1_i32_6 : i32 to vector<360x1xi32>
    %25 = arith.cmpi sge, %18, %24 : vector<360x1xi32>
    %26 = arith.andi %23, %25 : vector<360x1xi1>
    %c16_i32 = arith.constant 16 : i32
    %27 = vector.broadcast %c16_i32 : i32 to vector<360x1xi32>
    %28 = arith.cmpi sle, %18, %27 : vector<360x1xi32>
    %29 = arith.andi %26, %28 : vector<360x1xi1>
    %30 = arith.extf %1 : vector<360x128xbf16> to vector<360x128xf32>
    %c0_7 = arith.constant 0 : index
    %c0_8 = arith.constant 0 : index
    %31 = vector.load %arg3[%c0_7, %c0_8] : memref<1x128xf32, #tpu.memory_space<vmem>>, vector<1x128xf32>
    %32 = vector.broadcast %31 : vector<1x128xf32> to vector<360x128xf32>
    %33 = arith.mulf %30, %32 : vector<360x128xf32>
    %c0_9 = arith.constant 0 : index
    %c0_10 = arith.constant 0 : index
    %34 = vector.load %arg4[%c0_9, %c0_10] : memref<1x128xf32, #tpu.memory_space<vmem>>, vector<1x128xf32>
    %35 = vector.broadcast %34 : vector<1x128xf32> to vector<360x128xf32>
    %36 = arith.addf %33, %35 : vector<360x128xf32>
    %cst = arith.constant 0.000000e+00 : f32
    %37 = vector.broadcast %cst : f32 to vector<360x128xf32>
    %38 = arith.maximumf %36, %37 : vector<360x128xf32>
    %cst_11 = arith.constant 0.000000e+00 : f32
    %39 = vector.shape_cast %29 : vector<360x1xi1> to vector<360x1xi1>
    %40 = vector.broadcast %39 : vector<360x1xi1> to vector<360x128xi1>
    %41 = vector.broadcast %cst_11 : f32 to vector<360x128xf32>
    %42 = arith.select %40, %38, %41 : vector<360x128xi1>, vector<360x128xf32>
    %43 = arith.truncf %42 : vector<360x128xf32> to vector<360x128xbf16>
    %cst_12 = arith.constant 0.000000e+00 : f32
    %44 = vector.broadcast %cst_12 : f32 to vector<288x128xf32>
    %45 = vector.extract_strided_slice %43 {offsets = [0, 0], sizes = [288, 128], strides = [1, 1]} : vector<360x128xbf16> to vector<288x128xbf16>
    %c0_13 = arith.constant 0 : index
    %c0_14 = arith.constant 0 : index
    %c0_15 = arith.constant 0 : index
    %46 = vector.load %arg2[%c0_13, %c0_14, %c0_15] : memref<9x128x128xbf16, #tpu.memory_space<vmem>>, vector<1x128x128xbf16>
    %47 = vector.shape_cast %46 : vector<1x128x128xbf16> to vector<128x128xbf16>
    %cst_16 = arith.constant dense<0.000000e+00> : vector<288x128xf32>
    %48 = tpu.matmul %45, %47, %cst_16 {dimension_numbers = #tpu.dot_dimension_numbers<[1], [0], [0], [1], [0, 0, 1, 1], [], []>} : vector<288x128xbf16>, vector<128x128xbf16>, vector<288x128xf32> -> vector<288x128xf32>
    %49 = arith.addf %44, %48 : vector<288x128xf32>
    %50 = vector.extract_strided_slice %43 {offsets = [1, 0], sizes = [288, 128], strides = [1, 1]} : vector<360x128xbf16> to vector<288x128xbf16>
    %c1 = arith.constant 1 : index
    %c0_17 = arith.constant 0 : index
    %c0_18 = arith.constant 0 : index
    %51 = vector.load %arg2[%c1, %c0_17, %c0_18] : memref<9x128x128xbf16, #tpu.memory_space<vmem>>, vector<1x128x128xbf16>
    %52 = vector.shape_cast %51 : vector<1x128x128xbf16> to vector<128x128xbf16>
    %cst_19 = arith.constant dense<0.000000e+00> : vector<288x128xf32>
    %53 = tpu.matmul %50, %52, %cst_19 {dimension_numbers = #tpu.dot_dimension_numbers<[1], [0], [0], [1], [0, 0, 1, 1], [], []>} : vector<288x128xbf16>, vector<128x128xbf16>, vector<288x128xf32> -> vector<288x128xf32>
    %54 = arith.addf %49, %53 : vector<288x128xf32>
    %55 = vector.extract_strided_slice %43 {offsets = [2, 0], sizes = [288, 128], strides = [1, 1]} : vector<360x128xbf16> to vector<288x128xbf16>
    %c2 = arith.constant 2 : index
    %c0_20 = arith.constant 0 : index
    %c0_21 = arith.constant 0 : index
    %56 = vector.load %arg2[%c2, %c0_20, %c0_21] : memref<9x128x128xbf16, #tpu.memory_space<vmem>>, vector<1x128x128xbf16>
    %57 = vector.shape_cast %56 : vector<1x128x128xbf16> to vector<128x128xbf16>
    %cst_22 = arith.constant dense<0.000000e+00> : vector<288x128xf32>
    %58 = tpu.matmul %55, %57, %cst_22 {dimension_numbers = #tpu.dot_dimension_numbers<[1], [0], [0], [1], [0, 0, 1, 1], [], []>} : vector<288x128xbf16>, vector<128x128xbf16>, vector<288x128xf32> -> vector<288x128xf32>
    %59 = arith.addf %54, %58 : vector<288x128xf32>
    %60 = vector.extract_strided_slice %43 {offsets = [18, 0], sizes = [288, 128], strides = [1, 1]} : vector<360x128xbf16> to vector<288x128xbf16>
    %c3 = arith.constant 3 : index
    %c0_23 = arith.constant 0 : index
    %c0_24 = arith.constant 0 : index
    %61 = vector.load %arg2[%c3, %c0_23, %c0_24] : memref<9x128x128xbf16, #tpu.memory_space<vmem>>, vector<1x128x128xbf16>
    %62 = vector.shape_cast %61 : vector<1x128x128xbf16> to vector<128x128xbf16>
    %cst_25 = arith.constant dense<0.000000e+00> : vector<288x128xf32>
    %63 = tpu.matmul %60, %62, %cst_25 {dimension_numbers = #tpu.dot_dimension_numbers<[1], [0], [0], [1], [0, 0, 1, 1], [], []>} : vector<288x128xbf16>, vector<128x128xbf16>, vector<288x128xf32> -> vector<288x128xf32>
    %64 = arith.addf %59, %63 : vector<288x128xf32>
    %65 = vector.extract_strided_slice %43 {offsets = [19, 0], sizes = [288, 128], strides = [1, 1]} : vector<360x128xbf16> to vector<288x128xbf16>
    %c4 = arith.constant 4 : index
    %c0_26 = arith.constant 0 : index
    %c0_27 = arith.constant 0 : index
    %66 = vector.load %arg2[%c4, %c0_26, %c0_27] : memref<9x128x128xbf16, #tpu.memory_space<vmem>>, vector<1x128x128xbf16>
    %67 = vector.shape_cast %66 : vector<1x128x128xbf16> to vector<128x128xbf16>
    %cst_28 = arith.constant dense<0.000000e+00> : vector<288x128xf32>
    %68 = tpu.matmul %65, %67, %cst_28 {dimension_numbers = #tpu.dot_dimension_numbers<[1], [0], [0], [1], [0, 0, 1, 1], [], []>} : vector<288x128xbf16>, vector<128x128xbf16>, vector<288x128xf32> -> vector<288x128xf32>
    %69 = arith.addf %64, %68 : vector<288x128xf32>
    %70 = vector.extract_strided_slice %43 {offsets = [20, 0], sizes = [288, 128], strides = [1, 1]} : vector<360x128xbf16> to vector<288x128xbf16>
    %c5 = arith.constant 5 : index
    %c0_29 = arith.constant 0 : index
    %c0_30 = arith.constant 0 : index
    %71 = vector.load %arg2[%c5, %c0_29, %c0_30] : memref<9x128x128xbf16, #tpu.memory_space<vmem>>, vector<1x128x128xbf16>
    %72 = vector.shape_cast %71 : vector<1x128x128xbf16> to vector<128x128xbf16>
    %cst_31 = arith.constant dense<0.000000e+00> : vector<288x128xf32>
    %73 = tpu.matmul %70, %72, %cst_31 {dimension_numbers = #tpu.dot_dimension_numbers<[1], [0], [0], [1], [0, 0, 1, 1], [], []>} : vector<288x128xbf16>, vector<128x128xbf16>, vector<288x128xf32> -> vector<288x128xf32>
    %74 = arith.addf %69, %73 : vector<288x128xf32>
    %75 = vector.extract_strided_slice %43 {offsets = [36, 0], sizes = [288, 128], strides = [1, 1]} : vector<360x128xbf16> to vector<288x128xbf16>
    %c6 = arith.constant 6 : index
    %c0_32 = arith.constant 0 : index
    %c0_33 = arith.constant 0 : index
    %76 = vector.load %arg2[%c6, %c0_32, %c0_33] : memref<9x128x128xbf16, #tpu.memory_space<vmem>>, vector<1x128x128xbf16>
    %77 = vector.shape_cast %76 : vector<1x128x128xbf16> to vector<128x128xbf16>
    %cst_34 = arith.constant dense<0.000000e+00> : vector<288x128xf32>
    %78 = tpu.matmul %75, %77, %cst_34 {dimension_numbers = #tpu.dot_dimension_numbers<[1], [0], [0], [1], [0, 0, 1, 1], [], []>} : vector<288x128xbf16>, vector<128x128xbf16>, vector<288x128xf32> -> vector<288x128xf32>
    %79 = arith.addf %74, %78 : vector<288x128xf32>
    %80 = vector.extract_strided_slice %43 {offsets = [37, 0], sizes = [288, 128], strides = [1, 1]} : vector<360x128xbf16> to vector<288x128xbf16>
    %c7 = arith.constant 7 : index
    %c0_35 = arith.constant 0 : index
    %c0_36 = arith.constant 0 : index
    %81 = vector.load %arg2[%c7, %c0_35, %c0_36] : memref<9x128x128xbf16, #tpu.memory_space<vmem>>, vector<1x128x128xbf16>
    %82 = vector.shape_cast %81 : vector<1x128x128xbf16> to vector<128x128xbf16>
    %cst_37 = arith.constant dense<0.000000e+00> : vector<288x128xf32>
    %83 = tpu.matmul %80, %82, %cst_37 {dimension_numbers = #tpu.dot_dimension_numbers<[1], [0], [0], [1], [0, 0, 1, 1], [], []>} : vector<288x128xbf16>, vector<128x128xbf16>, vector<288x128xf32> -> vector<288x128xf32>
    %84 = arith.addf %79, %83 : vector<288x128xf32>
    %85 = vector.extract_strided_slice %43 {offsets = [38, 0], sizes = [288, 128], strides = [1, 1]} : vector<360x128xbf16> to vector<288x128xbf16>
    %c8 = arith.constant 8 : index
    %c0_38 = arith.constant 0 : index
    %c0_39 = arith.constant 0 : index
    %86 = vector.load %arg2[%c8, %c0_38, %c0_39] : memref<9x128x128xbf16, #tpu.memory_space<vmem>>, vector<1x128x128xbf16>
    %87 = vector.shape_cast %86 : vector<1x128x128xbf16> to vector<128x128xbf16>
    %cst_40 = arith.constant dense<0.000000e+00> : vector<288x128xf32>
    %88 = tpu.matmul %85, %87, %cst_40 {dimension_numbers = #tpu.dot_dimension_numbers<[1], [0], [0], [1], [0, 0, 1, 1], [], []>} : vector<288x128xbf16>, vector<128x128xbf16>, vector<288x128xf32> -> vector<288x128xf32>
    %89 = arith.addf %84, %88 : vector<288x128xf32>
    %90 = tpu.iota {dimensions = array<i32: 0>} : vector<288x1xi32>
    %c18_i32_41 = arith.constant 18 : i32
    %c0_i32_42 = arith.constant 0 : i32
    %91 = arith.cmpi eq, %c18_i32_41, %c0_i32_42 : i32
    %c1_i32_43 = arith.constant 1 : i32
    %92 = arith.select %91, %c1_i32_43, %c18_i32_41 : i32
    %93 = vector.broadcast %92 : i32 to vector<288x1xi32>
    %94 = arith.remsi %90, %93 : vector<288x1xi32>
    %c0_i32_44 = arith.constant 0 : i32
    %95 = vector.broadcast %c0_i32_44 : i32 to vector<288x1xi32>
    %96 = arith.cmpi ne, %94, %95 : vector<288x1xi32>
    %c0_i32_45 = arith.constant 0 : i32
    %97 = vector.broadcast %c0_i32_45 : i32 to vector<288x1xi32>
    %98 = arith.cmpi slt, %94, %97 : vector<288x1xi32>
    %c0_i32_46 = arith.constant 0 : i32
    %99 = arith.cmpi slt, %92, %c0_i32_46 : i32
    %100 = vector.broadcast %99 : i1 to vector<288x1xi1>
    %101 = vector.broadcast %100 : vector<288x1xi1> to vector<288x1xi1>
    %102 = arith.xori %98, %101 : vector<288x1xi1>
    %103 = arith.andi %102, %96 : vector<288x1xi1>
    %104 = vector.broadcast %92 : i32 to vector<288x1xi32>
    %105 = arith.addi %94, %104 : vector<288x1xi32>
    %106 = arith.select %103, %105, %94 : vector<288x1xi1>, vector<288x1xi32>
    %c16_i32_47 = arith.constant 16 : i32
    %107 = vector.broadcast %c16_i32_47 : i32 to vector<288x1xi32>
    %108 = arith.cmpi slt, %106, %107 : vector<288x1xi32>
    %cst_48 = arith.constant 0.000000e+00 : f32
    %109 = vector.shape_cast %108 : vector<288x1xi1> to vector<288x1xi1>
    %110 = vector.broadcast %109 : vector<288x1xi1> to vector<288x128xi1>
    %111 = vector.broadcast %cst_48 : f32 to vector<288x128xf32>
    %112 = arith.select %110, %89, %111 : vector<288x128xi1>, vector<288x128xf32>
    %cst_49 = arith.constant dense<0.000000e+00> : vector<128xf32>
    %113 = vector.multi_reduction <add>, %112, %cst_49 [0] : vector<288x128xf32> to vector<128xf32>
    %114 = vector.shape_cast %113 : vector<128xf32> to vector<1x128xf32>
    %c0_50 = arith.constant 0 : index
    %c0_51 = arith.constant 0 : index
    %c0_52 = arith.constant 0 : index
    %115 = vector.load %arg6[%c0_50, %c0_51, %c0_52] : memref<1x2x128xf32, #tpu.memory_space<vmem>>, vector<1x1x128xf32>
    %116 = vector.shape_cast %115 : vector<1x1x128xf32> to vector<1x128xf32>
    %117 = vector.shape_cast %114 : vector<1x128xf32> to vector<1x1x128xf32>
    tpu.vector_store %arg6[%c0_50, %c0_51, %c0_52], %117 {strides = array<i32>} : memref<1x2x128xf32, #tpu.memory_space<vmem>>, vector<1x1x128xf32>,
    %118 = arith.mulf %112, %112 : vector<288x128xf32>
    %cst_53 = arith.constant dense<0.000000e+00> : vector<128xf32>
    %119 = vector.multi_reduction <add>, %118, %cst_53 [0] : vector<288x128xf32> to vector<128xf32>
    %120 = vector.shape_cast %119 : vector<128xf32> to vector<1x128xf32>
    %c0_54 = arith.constant 0 : index
    %c1_55 = arith.constant 1 : index
    %c0_56 = arith.constant 0 : index
    %121 = vector.load %arg6[%c0_54, %c1_55, %c0_56] : memref<1x2x128xf32, #tpu.memory_space<vmem>>, vector<1x1x128xf32>
    %122 = vector.shape_cast %121 : vector<1x1x128xf32> to vector<1x128xf32>
    %123 = vector.shape_cast %120 : vector<1x128xf32> to vector<1x1x128xf32>
    tpu.vector_store %arg6[%c0_54, %c1_55, %c0_56], %123 {strides = array<i32>} : memref<1x2x128xf32, #tpu.memory_space<vmem>>, vector<1x1x128xf32>,
    %cst_57 = arith.constant 0.000000e+00 : bf16
    %124 = vector.broadcast %cst_57 : bf16 to vector<1x360x128xbf16>
    %c0_58 = arith.constant 0 : index
    %c0_59 = arith.constant 0 : index
    %c0_60 = arith.constant 0 : index
    %125 = vector.load %arg5[%c0_58, %c0_59, %c0_60] : memref<1x360x128xbf16, #tpu.memory_space<vmem>>, vector<1x360x128xbf16>
    tpu.vector_store %arg5[%c0_58, %c0_59, %c0_60], %124 {strides = array<i32>} : memref<1x360x128xbf16, #tpu.memory_space<vmem>>, vector<1x360x128xbf16>,
    %126 = arith.truncf %112 : vector<288x128xf32> to vector<288x128xbf16>
    %c0_61 = arith.constant 0 : index
    %c19 = arith.constant 19 : index
    %c0_62 = arith.constant 0 : index
    %127 = vector.load %arg5[%c0_61, %c19, %c0_62] : memref<1x360x128xbf16, #tpu.memory_space<vmem>>, vector<1x288x128xbf16>
    %128 = vector.shape_cast %127 : vector<1x288x128xbf16> to vector<288x128xbf16>
    %129 = vector.shape_cast %126 : vector<288x128xbf16> to vector<1x288x128xbf16>
    tpu.vector_store %arg5[%c0_61, %c19, %c0_62], %129 {strides = array<i32>} : memref<1x360x128xbf16, #tpu.memory_space<vmem>>, vector<1x288x128xbf16>,
    return
  }
  func.func @transform_0(%arg0: i32) -> (i32, i32, i32) {
    %c0_i32 = arith.constant 0 : i32
    %c0_i32_0 = arith.constant 0 : i32
    %c0_i32_1 = arith.constant 0 : i32
    return %arg0, %c0_i32, %c0_i32_0 : i32, i32, i32
  }
  func.func @transform_1(%arg0: i32) -> (i32, i32, i32) {
    %c0_i32 = arith.constant 0 : i32
    %c0_i32_0 = arith.constant 0 : i32
    %c0_i32_1 = arith.constant 0 : i32
    %c0_i32_2 = arith.constant 0 : i32
    return %c0_i32, %c0_i32_0, %c0_i32_1 : i32, i32, i32
  }
  func.func @transform_2(%arg0: i32) -> (i32, i32) {
    %c0_i32 = arith.constant 0 : i32
    %c0_i32_0 = arith.constant 0 : i32
    %c0_i32_1 = arith.constant 0 : i32
    return %c0_i32, %c0_i32_0 : i32, i32
  }
  func.func @transform_3(%arg0: i32) -> (i32, i32) {
    %c0_i32 = arith.constant 0 : i32
    %c0_i32_0 = arith.constant 0 : i32
    %c0_i32_1 = arith.constant 0 : i32
    return %c0_i32, %c0_i32_0 : i32, i32
  }
  func.func @transform_4(%arg0: i32) -> (i32, i32, i32) {
    %c0_i32 = arith.constant 0 : i32
    %c0_i32_0 = arith.constant 0 : i32
    %c0_i32_1 = arith.constant 0 : i32
    return %arg0, %c0_i32, %c0_i32_0 : i32, i32, i32
  }
  func.func @transform_5(%arg0: i32) -> (i32, i32, i32) {
    %c0_i32 = arith.constant 0 : i32
    %c0_i32_0 = arith.constant 0 : i32
    %c0_i32_1 = arith.constant 0 : i32
    return %arg0, %c0_i32, %c0_i32_0 : i32, i32, i32
  }
}

module attributes {stable_mosaic.version = 11 : i64} {
  func.func @_conv_stats_kernel(%arg0: i32, %arg1: memref<1x360x8xbf16, #tpu.memory_space<vmem>>, %arg2: memref<9x8x128xbf16, #tpu.memory_space<vmem>>, %arg3: memref<1x8xf32, #tpu.memory_space<vmem>>, %arg4: memref<1x8xf32, #tpu.memory_space<vmem>>, %arg5: memref<1x360x128xbf16, #tpu.memory_space<vmem>>, %arg6: memref<1x2x128xf32, #tpu.memory_space<vmem>>) attributes {dimension_semantics = [#tpu.dimension_semantics<parallel>], iteration_bounds = array<i64: 2>, scalar_prefetch = 0 : i64, scratch_operands = 0 : i64, tpu.core_type = #tpu.core_type<tc>, window_params = [{transform_indices = @transform_0, window_bounds = array<i64: 1, 360, 8>}, {pipeline_mode = #tpu.pipeline_mode<synchronous>, transform_indices = @transform_1, window_bounds = array<i64: 9, 8, 128>}, {pipeline_mode = #tpu.pipeline_mode<synchronous>, transform_indices = @transform_2, window_bounds = array<i64: 1, 8>}, {pipeline_mode = #tpu.pipeline_mode<synchronous>, transform_indices = @transform_3, window_bounds = array<i64: 1, 8>}, {transform_indices = @transform_4, window_bounds = array<i64: 1, 360, 128>}, {transform_indices = @transform_5, window_bounds = array<i64: 1, 2, 128>}]} {
    %c0 = arith.constant 0 : index
    %c0_0 = arith.constant 0 : index
    %c0_1 = arith.constant 0 : index
    %0 = vector.load %arg1[%c0, %c0_0, %c0_1] : memref<1x360x8xbf16, #tpu.memory_space<vmem>>, vector<1x360x8xbf16>
    %1 = vector.shape_cast %0 : vector<1x360x8xbf16> to vector<360x8xbf16>
    %cst = arith.constant 0.000000e+00 : f32
    %2 = vector.broadcast %cst : f32 to vector<288x128xf32>
    %3 = vector.extract_strided_slice %1 {offsets = [0, 0], sizes = [288, 8], strides = [1, 1]} : vector<360x8xbf16> to vector<288x8xbf16>
    %c0_2 = arith.constant 0 : index
    %c0_3 = arith.constant 0 : index
    %c0_4 = arith.constant 0 : index
    %4 = vector.load %arg2[%c0_2, %c0_3, %c0_4] : memref<9x8x128xbf16, #tpu.memory_space<vmem>>, vector<1x8x128xbf16>
    %5 = vector.shape_cast %4 : vector<1x8x128xbf16> to vector<8x128xbf16>
    %cst_5 = arith.constant dense<0.000000e+00> : vector<288x128xf32>
    %6 = tpu.matmul %3, %5, %cst_5 {dimension_numbers = #tpu.dot_dimension_numbers<[1], [0], [0], [1], [0, 0, 1, 1], [], []>} : vector<288x8xbf16>, vector<8x128xbf16>, vector<288x128xf32> -> vector<288x128xf32>
    %7 = arith.addf %2, %6 : vector<288x128xf32>
    %8 = vector.extract_strided_slice %1 {offsets = [1, 0], sizes = [288, 8], strides = [1, 1]} : vector<360x8xbf16> to vector<288x8xbf16>
    %c1 = arith.constant 1 : index
    %c0_6 = arith.constant 0 : index
    %c0_7 = arith.constant 0 : index
    %9 = vector.load %arg2[%c1, %c0_6, %c0_7] : memref<9x8x128xbf16, #tpu.memory_space<vmem>>, vector<1x8x128xbf16>
    %10 = vector.shape_cast %9 : vector<1x8x128xbf16> to vector<8x128xbf16>
    %cst_8 = arith.constant dense<0.000000e+00> : vector<288x128xf32>
    %11 = tpu.matmul %8, %10, %cst_8 {dimension_numbers = #tpu.dot_dimension_numbers<[1], [0], [0], [1], [0, 0, 1, 1], [], []>} : vector<288x8xbf16>, vector<8x128xbf16>, vector<288x128xf32> -> vector<288x128xf32>
    %12 = arith.addf %7, %11 : vector<288x128xf32>
    %13 = vector.extract_strided_slice %1 {offsets = [2, 0], sizes = [288, 8], strides = [1, 1]} : vector<360x8xbf16> to vector<288x8xbf16>
    %c2 = arith.constant 2 : index
    %c0_9 = arith.constant 0 : index
    %c0_10 = arith.constant 0 : index
    %14 = vector.load %arg2[%c2, %c0_9, %c0_10] : memref<9x8x128xbf16, #tpu.memory_space<vmem>>, vector<1x8x128xbf16>
    %15 = vector.shape_cast %14 : vector<1x8x128xbf16> to vector<8x128xbf16>
    %cst_11 = arith.constant dense<0.000000e+00> : vector<288x128xf32>
    %16 = tpu.matmul %13, %15, %cst_11 {dimension_numbers = #tpu.dot_dimension_numbers<[1], [0], [0], [1], [0, 0, 1, 1], [], []>} : vector<288x8xbf16>, vector<8x128xbf16>, vector<288x128xf32> -> vector<288x128xf32>
    %17 = arith.addf %12, %16 : vector<288x128xf32>
    %18 = vector.extract_strided_slice %1 {offsets = [18, 0], sizes = [288, 8], strides = [1, 1]} : vector<360x8xbf16> to vector<288x8xbf16>
    %c3 = arith.constant 3 : index
    %c0_12 = arith.constant 0 : index
    %c0_13 = arith.constant 0 : index
    %19 = vector.load %arg2[%c3, %c0_12, %c0_13] : memref<9x8x128xbf16, #tpu.memory_space<vmem>>, vector<1x8x128xbf16>
    %20 = vector.shape_cast %19 : vector<1x8x128xbf16> to vector<8x128xbf16>
    %cst_14 = arith.constant dense<0.000000e+00> : vector<288x128xf32>
    %21 = tpu.matmul %18, %20, %cst_14 {dimension_numbers = #tpu.dot_dimension_numbers<[1], [0], [0], [1], [0, 0, 1, 1], [], []>} : vector<288x8xbf16>, vector<8x128xbf16>, vector<288x128xf32> -> vector<288x128xf32>
    %22 = arith.addf %17, %21 : vector<288x128xf32>
    %23 = vector.extract_strided_slice %1 {offsets = [19, 0], sizes = [288, 8], strides = [1, 1]} : vector<360x8xbf16> to vector<288x8xbf16>
    %c4 = arith.constant 4 : index
    %c0_15 = arith.constant 0 : index
    %c0_16 = arith.constant 0 : index
    %24 = vector.load %arg2[%c4, %c0_15, %c0_16] : memref<9x8x128xbf16, #tpu.memory_space<vmem>>, vector<1x8x128xbf16>
    %25 = vector.shape_cast %24 : vector<1x8x128xbf16> to vector<8x128xbf16>
    %cst_17 = arith.constant dense<0.000000e+00> : vector<288x128xf32>
    %26 = tpu.matmul %23, %25, %cst_17 {dimension_numbers = #tpu.dot_dimension_numbers<[1], [0], [0], [1], [0, 0, 1, 1], [], []>} : vector<288x8xbf16>, vector<8x128xbf16>, vector<288x128xf32> -> vector<288x128xf32>
    %27 = arith.addf %22, %26 : vector<288x128xf32>
    %28 = vector.extract_strided_slice %1 {offsets = [20, 0], sizes = [288, 8], strides = [1, 1]} : vector<360x8xbf16> to vector<288x8xbf16>
    %c5 = arith.constant 5 : index
    %c0_18 = arith.constant 0 : index
    %c0_19 = arith.constant 0 : index
    %29 = vector.load %arg2[%c5, %c0_18, %c0_19] : memref<9x8x128xbf16, #tpu.memory_space<vmem>>, vector<1x8x128xbf16>
    %30 = vector.shape_cast %29 : vector<1x8x128xbf16> to vector<8x128xbf16>
    %cst_20 = arith.constant dense<0.000000e+00> : vector<288x128xf32>
    %31 = tpu.matmul %28, %30, %cst_20 {dimension_numbers = #tpu.dot_dimension_numbers<[1], [0], [0], [1], [0, 0, 1, 1], [], []>} : vector<288x8xbf16>, vector<8x128xbf16>, vector<288x128xf32> -> vector<288x128xf32>
    %32 = arith.addf %27, %31 : vector<288x128xf32>
    %33 = vector.extract_strided_slice %1 {offsets = [36, 0], sizes = [288, 8], strides = [1, 1]} : vector<360x8xbf16> to vector<288x8xbf16>
    %c6 = arith.constant 6 : index
    %c0_21 = arith.constant 0 : index
    %c0_22 = arith.constant 0 : index
    %34 = vector.load %arg2[%c6, %c0_21, %c0_22] : memref<9x8x128xbf16, #tpu.memory_space<vmem>>, vector<1x8x128xbf16>
    %35 = vector.shape_cast %34 : vector<1x8x128xbf16> to vector<8x128xbf16>
    %cst_23 = arith.constant dense<0.000000e+00> : vector<288x128xf32>
    %36 = tpu.matmul %33, %35, %cst_23 {dimension_numbers = #tpu.dot_dimension_numbers<[1], [0], [0], [1], [0, 0, 1, 1], [], []>} : vector<288x8xbf16>, vector<8x128xbf16>, vector<288x128xf32> -> vector<288x128xf32>
    %37 = arith.addf %32, %36 : vector<288x128xf32>
    %38 = vector.extract_strided_slice %1 {offsets = [37, 0], sizes = [288, 8], strides = [1, 1]} : vector<360x8xbf16> to vector<288x8xbf16>
    %c7 = arith.constant 7 : index
    %c0_24 = arith.constant 0 : index
    %c0_25 = arith.constant 0 : index
    %39 = vector.load %arg2[%c7, %c0_24, %c0_25] : memref<9x8x128xbf16, #tpu.memory_space<vmem>>, vector<1x8x128xbf16>
    %40 = vector.shape_cast %39 : vector<1x8x128xbf16> to vector<8x128xbf16>
    %cst_26 = arith.constant dense<0.000000e+00> : vector<288x128xf32>
    %41 = tpu.matmul %38, %40, %cst_26 {dimension_numbers = #tpu.dot_dimension_numbers<[1], [0], [0], [1], [0, 0, 1, 1], [], []>} : vector<288x8xbf16>, vector<8x128xbf16>, vector<288x128xf32> -> vector<288x128xf32>
    %42 = arith.addf %37, %41 : vector<288x128xf32>
    %43 = vector.extract_strided_slice %1 {offsets = [38, 0], sizes = [288, 8], strides = [1, 1]} : vector<360x8xbf16> to vector<288x8xbf16>
    %c8 = arith.constant 8 : index
    %c0_27 = arith.constant 0 : index
    %c0_28 = arith.constant 0 : index
    %44 = vector.load %arg2[%c8, %c0_27, %c0_28] : memref<9x8x128xbf16, #tpu.memory_space<vmem>>, vector<1x8x128xbf16>
    %45 = vector.shape_cast %44 : vector<1x8x128xbf16> to vector<8x128xbf16>
    %cst_29 = arith.constant dense<0.000000e+00> : vector<288x128xf32>
    %46 = tpu.matmul %43, %45, %cst_29 {dimension_numbers = #tpu.dot_dimension_numbers<[1], [0], [0], [1], [0, 0, 1, 1], [], []>} : vector<288x8xbf16>, vector<8x128xbf16>, vector<288x128xf32> -> vector<288x128xf32>
    %47 = arith.addf %42, %46 : vector<288x128xf32>
    %48 = tpu.iota {dimensions = array<i32: 0>} : vector<288x1xi32>
    %c18_i32 = arith.constant 18 : i32
    %c0_i32 = arith.constant 0 : i32
    %49 = arith.cmpi eq, %c18_i32, %c0_i32 : i32
    %c1_i32 = arith.constant 1 : i32
    %50 = arith.select %49, %c1_i32, %c18_i32 : i32
    %51 = vector.broadcast %50 : i32 to vector<288x1xi32>
    %52 = arith.remsi %48, %51 : vector<288x1xi32>
    %c0_i32_30 = arith.constant 0 : i32
    %53 = vector.broadcast %c0_i32_30 : i32 to vector<288x1xi32>
    %54 = arith.cmpi ne, %52, %53 : vector<288x1xi32>
    %c0_i32_31 = arith.constant 0 : i32
    %55 = vector.broadcast %c0_i32_31 : i32 to vector<288x1xi32>
    %56 = arith.cmpi slt, %52, %55 : vector<288x1xi32>
    %c0_i32_32 = arith.constant 0 : i32
    %57 = arith.cmpi slt, %50, %c0_i32_32 : i32
    %58 = vector.broadcast %57 : i1 to vector<288x1xi1>
    %59 = vector.broadcast %58 : vector<288x1xi1> to vector<288x1xi1>
    %60 = arith.xori %56, %59 : vector<288x1xi1>
    %61 = arith.andi %60, %54 : vector<288x1xi1>
    %62 = vector.broadcast %50 : i32 to vector<288x1xi32>
    %63 = arith.addi %52, %62 : vector<288x1xi32>
    %64 = arith.select %61, %63, %52 : vector<288x1xi1>, vector<288x1xi32>
    %c16_i32 = arith.constant 16 : i32
    %65 = vector.broadcast %c16_i32 : i32 to vector<288x1xi32>
    %66 = arith.cmpi slt, %64, %65 : vector<288x1xi32>
    %cst_33 = arith.constant 0.000000e+00 : f32
    %67 = vector.shape_cast %66 : vector<288x1xi1> to vector<288x1xi1>
    %68 = vector.broadcast %67 : vector<288x1xi1> to vector<288x128xi1>
    %69 = vector.broadcast %cst_33 : f32 to vector<288x128xf32>
    %70 = arith.select %68, %47, %69 : vector<288x128xi1>, vector<288x128xf32>
    %cst_34 = arith.constant dense<0.000000e+00> : vector<128xf32>
    %71 = vector.multi_reduction <add>, %70, %cst_34 [0] : vector<288x128xf32> to vector<128xf32>
    %72 = vector.shape_cast %71 : vector<128xf32> to vector<1x128xf32>
    %c0_35 = arith.constant 0 : index
    %c0_36 = arith.constant 0 : index
    %c0_37 = arith.constant 0 : index
    %73 = vector.load %arg6[%c0_35, %c0_36, %c0_37] : memref<1x2x128xf32, #tpu.memory_space<vmem>>, vector<1x1x128xf32>
    %74 = vector.shape_cast %73 : vector<1x1x128xf32> to vector<1x128xf32>
    %75 = vector.shape_cast %72 : vector<1x128xf32> to vector<1x1x128xf32>
    tpu.vector_store %arg6[%c0_35, %c0_36, %c0_37], %75 {strides = array<i32>} : memref<1x2x128xf32, #tpu.memory_space<vmem>>, vector<1x1x128xf32>,
    %76 = arith.mulf %70, %70 : vector<288x128xf32>
    %cst_38 = arith.constant dense<0.000000e+00> : vector<128xf32>
    %77 = vector.multi_reduction <add>, %76, %cst_38 [0] : vector<288x128xf32> to vector<128xf32>
    %78 = vector.shape_cast %77 : vector<128xf32> to vector<1x128xf32>
    %c0_39 = arith.constant 0 : index
    %c1_40 = arith.constant 1 : index
    %c0_41 = arith.constant 0 : index
    %79 = vector.load %arg6[%c0_39, %c1_40, %c0_41] : memref<1x2x128xf32, #tpu.memory_space<vmem>>, vector<1x1x128xf32>
    %80 = vector.shape_cast %79 : vector<1x1x128xf32> to vector<1x128xf32>
    %81 = vector.shape_cast %78 : vector<1x128xf32> to vector<1x1x128xf32>
    tpu.vector_store %arg6[%c0_39, %c1_40, %c0_41], %81 {strides = array<i32>} : memref<1x2x128xf32, #tpu.memory_space<vmem>>, vector<1x1x128xf32>,
    %cst_42 = arith.constant 0.000000e+00 : bf16
    %82 = vector.broadcast %cst_42 : bf16 to vector<1x360x128xbf16>
    %c0_43 = arith.constant 0 : index
    %c0_44 = arith.constant 0 : index
    %c0_45 = arith.constant 0 : index
    %83 = vector.load %arg5[%c0_43, %c0_44, %c0_45] : memref<1x360x128xbf16, #tpu.memory_space<vmem>>, vector<1x360x128xbf16>
    tpu.vector_store %arg5[%c0_43, %c0_44, %c0_45], %82 {strides = array<i32>} : memref<1x360x128xbf16, #tpu.memory_space<vmem>>, vector<1x360x128xbf16>,
    %84 = arith.truncf %70 : vector<288x128xf32> to vector<288x128xbf16>
    %c0_46 = arith.constant 0 : index
    %c19 = arith.constant 19 : index
    %c0_47 = arith.constant 0 : index
    %85 = vector.load %arg5[%c0_46, %c19, %c0_47] : memref<1x360x128xbf16, #tpu.memory_space<vmem>>, vector<1x288x128xbf16>
    %86 = vector.shape_cast %85 : vector<1x288x128xbf16> to vector<288x128xbf16>
    %87 = vector.shape_cast %84 : vector<288x128xbf16> to vector<1x288x128xbf16>
    tpu.vector_store %arg5[%c0_46, %c19, %c0_47], %87 {strides = array<i32>} : memref<1x360x128xbf16, #tpu.memory_space<vmem>>, vector<1x288x128xbf16>,
    return
  }
  func.func @transform_0(%arg0: i32) -> (i32, i32, i32) {
    %c0_i32 = arith.constant 0 : i32
    %c0_i32_0 = arith.constant 0 : i32
    %c0_i32_1 = arith.constant 0 : i32
    return %arg0, %c0_i32, %c0_i32_0 : i32, i32, i32
  }
  func.func @transform_1(%arg0: i32) -> (i32, i32, i32) {
    %c0_i32 = arith.constant 0 : i32
    %c0_i32_0 = arith.constant 0 : i32
    %c0_i32_1 = arith.constant 0 : i32
    %c0_i32_2 = arith.constant 0 : i32
    return %c0_i32, %c0_i32_0, %c0_i32_1 : i32, i32, i32
  }
  func.func @transform_2(%arg0: i32) -> (i32, i32) {
    %c0_i32 = arith.constant 0 : i32
    %c0_i32_0 = arith.constant 0 : i32
    %c0_i32_1 = arith.constant 0 : i32
    return %c0_i32, %c0_i32_0 : i32, i32
  }
  func.func @transform_3(%arg0: i32) -> (i32, i32) {
    %c0_i32 = arith.constant 0 : i32
    %c0_i32_0 = arith.constant 0 : i32
    %c0_i32_1 = arith.constant 0 : i32
    return %c0_i32, %c0_i32_0 : i32, i32
  }
  func.func @transform_4(%arg0: i32) -> (i32, i32, i32) {
    %c0_i32 = arith.constant 0 : i32
    %c0_i32_0 = arith.constant 0 : i32
    %c0_i32_1 = arith.constant 0 : i32
    return %arg0, %c0_i32, %c0_i32_0 : i32, i32, i32
  }
  func.func @transform_5(%arg0: i32) -> (i32, i32, i32) {
    %c0_i32 = arith.constant 0 : i32
    %c0_i32_0 = arith.constant 0 : i32
    %c0_i32_1 = arith.constant 0 : i32
    return %arg0, %c0_i32, %c0_i32_0 : i32, i32, i32
  }
}

</mosaic_0001>

<llo_original>
// kernel: _double_conv_impl.5
$region0: #{_double_conv_impl.5}
  #allocation0 [shape = 'u32[]', space=smem, size = 0x4, offset = 0x4, fixed_abs, tag = 'smem constant byte address 0x4 - core index']
  #allocation1 [shape = 'u32[144,128]{1,0:T(1,128)}', space=vmem, size = 0x12000, scoped, tag = 'internal scratch']
  %s0 = inlined_call_operand.vmem [shape: bf16[2,360,128], index: 0, kind: input, shape index: {}, may-alias: {0,3}]
  %s1 = inlined_call_operand.vmem [shape: f32[1,128], index: 1, kind: input, shape index: {}]
  %s2 = inlined_call_operand.vmem [shape: f32[1,128], index: 2, kind: input, shape index: {}]
  %s3 = inlined_call_operand.vmem [shape: bf16[2,360,128], index: 3, kind: output, shape index: {}, may-alias: {0,3}]
  %s4 = sld [smem:[#allocation0]]
  $region45: #{_double_conv_impl.5} parent=0
    _
  %s6 = ssub.s32 1, %s4
  %s7 = scalar_select 0, %s6, %s4
  loop: start=0, step=1, limit=4
  $region2: #{_double_conv_impl.5} parent=0 // loop_pre_header
    _
  $region3: #{_double_conv_impl.5} parent=0 // loop_header
    %s9 = sphi 0, %s13
    %p10 = scmp.ge.s32.totalorder %s9, 4
    %s19 = sphi 0, %s21
    %s22 = sphi 0, %s19
    %s23 = sphi 0, %s22
    %s39 = sphi 0, %s23
    %s43 = sphi 0, %s43
    %s45 = sphi 0, %s43
    %s46 = sphi 0, %s45
    %s60 = sphi 0, %s46
    %s64 = sphi 0, %s64
    %s66 = sphi 0, %s64
    %s67 = sphi 0, %s66
    %s81 = sphi 0, %s67
    %s87 = sphi 0, %s89
    %s90 = sphi 0, %s87
    %s91 = sphi 0, %s90
    %s107 = sphi 0, %s91
  $region4: #{_double_conv_impl.5} parent=0 // loop_header_branch
    %12 = sbr.rel (%p10) target = $region8
  $region5: #{_double_conv_impl.5} parent=0 // loop_body
    %s14 = ssub.s32 %s9, 1
    %s15 = ssub.s32 %s9, 2
    %s16 = sadd.s32 %s9, 1
    %s17 = ssub.s32 %s9, %s16
    %p18 = scmp.eq.s32.totalorder %s17, 0
    %s20 = sadd.s32 %s19, 1
    %s21 = scalar_select %p18, %s19, %s20
    %p24 = pneg %p18
    %p25 = scmp.eq.s32.totalorder %s9, 1
    %p26 = por %p24, %p25
    %p27 = scmp.ne.s32.totalorder %s19, %s22
    %p28 = scmp.eq.s32.totalorder %s9, 0
    %p29 = por %p27, %p28
    %p30 = scmp.ne.s32.totalorder %s19, %s22
    %p31 = scmp.eq.s32.totalorder %s14, 1
    %p32 = por %p30, %p31
    %p33 = scmp.ne.s32.totalorder %s22, %s23
    %p34 = scmp.eq.s32.totalorder %s14, 0
    %p35 = por %p33, %p34
    %p36 = scmp.ne.s32.totalorder %s22, %s23
    %p37 = scmp.eq.s32.totalorder %s15, 1
    %p38 = por %p36, %p37
    %p40 = scmp.ne.s32.totalorder %s23, %s39
    %p41 = scmp.eq.s32.totalorder %s15, 0
    %p42 = por %p40, %p41
    %s44 = sadd.s32 %s43, 1
    %p47 = scmp.eq.s32.totalorder %s9, 1
    %p48 = scmp.ne.s32.totalorder %s43, %s45
    %p49 = scmp.eq.s32.totalorder %s9, 0
    %p50 = por %p48, %p49
    %p51 = scmp.ne.s32.totalorder %s43, %s45
    %p52 = scmp.eq.s32.totalorder %s14, 1
    %p53 = por %p51, %p52
    %p54 = scmp.ne.s32.totalorder %s45, %s46
    %p55 = scmp.eq.s32.totalorder %s14, 0
    %p56 = por %p54, %p55
    %p57 = scmp.ne.s32.totalorder %s45, %s46
    %p58 = scmp.eq.s32.totalorder %s15, 1
    %p59 = por %p57, %p58
    %p61 = scmp.ne.s32.totalorder %s46, %s60
    %p62 = scmp.eq.s32.totalorder %s15, 0
    %p63 = por %p61, %p62
    %s65 = sadd.s32 %s64, 1
    %p68 = scmp.eq.s32.totalorder %s9, 1
    %p69 = scmp.ne.s32.totalorder %s64, %s66
    %p70 = scmp.eq.s32.totalorder %s9, 0
    %p71 = por %p69, %p70
    %p72 = scmp.ne.s32.totalorder %s64, %s66
    %p73 = scmp.eq.s32.totalorder %s14, 1
    %p74 = por %p72, %p73
    %p75 = scmp.ne.s32.totalorder %s66, %s67
    %p76 = scmp.eq.s32.totalorder %s14, 0
    %p77 = por %p75, %p76
    %p78 = scmp.ne.s32.totalorder %s66, %s67
    %p79 = scmp.eq.s32.totalorder %s15, 1
    %p80 = por %p78, %p79
    %p82 = scmp.ne.s32.totalorder %s67, %s81
    %p83 = scmp.eq.s32.totalorder %s15, 0
    %p84 = por %p82, %p83
    %s85 = ssub.s32 %s9, %s16
    %p86 = scmp.eq.s32.totalorder %s85, 0
    %s88 = sadd.s32 %s87, 1
    %s89 = scalar_select %p86, %s87, %s88
    %p92 = pneg %p86
    %p93 = scmp.eq.s32.totalorder %s9, 1
    %p94 = por %p92, %p93
    %p95 = scmp.ne.s32.totalorder %s87, %s90
    %p96 = scmp.eq.s32.totalorder %s9, 0
    %p97 = por %p95, %p96
    %p98 = scmp.ne.s32.totalorder %s87, %s90
    %p99 = scmp.eq.s32.totalorder %s14, 1
    %p100 = por %p98, %p99
    %p101 = scmp.ne.s32.totalorder %s90, %s91
    %p102 = scmp.eq.s32.totalorder %s14, 0
    %p103 = por %p101, %p102
    %p104 = scmp.ne.s32.totalorder %s90, %s91
    %p105 = scmp.eq.s32.totalorder %s15, 1
    %p106 = por %p104, %p105
    %p108 = scmp.ne.s32.totalorder %s91, %s107
    %p109 = scmp.eq.s32.totalorder %s15, 0
    %p110 = por %p108, %p109
    %p111 = scmp.le.s32.totalorder 1, %s9
    %p112 = scmp.lt.s32.totalorder %s9, 3
    %p113 = pnand %p111, %p112
    %p114 = pneg %p113
    // Predicated region
    $region9: #{_double_conv_impl.5} parent=5 // pred_check
      _
    $region10: #{_double_conv_impl.5} parent=5 // pred_check_branch
      %116 = sbr.rel (%p113) target = $region12
    $region11: #{_double_conv_impl.5} parent=5 // pred_region
      %s117 = ssub.s32 %s9, 1
      // Predicated region
      $region13: #{_double_conv_impl.5} parent=11 // pred_check
        %p118 = pneg %p56
      $region14: #{_double_conv_impl.5} parent=11 // pred_check_branch
        %120 = sbr.rel (%p118) target = $region16
      $region15: #{_double_conv_impl.5} parent=11 // pred_region
        _
      $region16: #{_double_conv_impl.5} parent=11 // pred_fallthru
        _
      // Predicated region
      $region17: #{_double_conv_impl.5} parent=11 // pred_check
        %p121 = pneg %p77
      $region18: #{_double_conv_impl.5} parent=11 // pred_check_branch
        %123 = sbr.rel (%p121) target = $region20
      $region19: #{_double_conv_impl.5} parent=11 // pred_region
        _
      $region20: #{_double_conv_impl.5} parent=11 // pred_fallthru
        _
    $region12: #{_double_conv_impl.5} parent=5 // pred_fallthru
      _
    %p124 = scmp.lt.s32.totalorder %s9, 2
    // Predicated region
    $region21: #{_double_conv_impl.5} parent=5 // pred_check
      %p125 = pneg %p124
    $region22: #{_double_conv_impl.5} parent=5 // pred_check_branch
      %127 = sbr.rel (%p125) target = $region24
    $region23: #{_double_conv_impl.5} parent=5 // pred_region
      // Predicated region
      $region25: #{_double_conv_impl.5} parent=23 // pred_check
        %p128 = pneg %p29
      $region26: #{_double_conv_impl.5} parent=23 // pred_check_branch
        %130 = sbr.rel (%p128) target = $region28
      $region27: #{_double_conv_impl.5} parent=23 // pred_region
        %p131 = scmp.lt.s32.totalorder %s9, 1
        %s132 = scalar_select %p131, %s9, 1
        %s133 = smul.addr %s132, 45
        %s134 = smul.addr %s133, 4
        %s135 = scalar_lea.vmem %s0, %s134
      $region28: #{_double_conv_impl.5} parent=23 // pred_fallthru
        _
    $region24: #{_double_conv_impl.5} parent=5 // pred_fallthru
      _
    %p136 = scmp.le.s32.totalorder 1, %s9
    %p137 = scmp.lt.s32.totalorder %s9, 3
    %p138 = pnand %p136, %p137
    %p139 = pneg %p138
    // Predicated region
    $region29: #{_double_conv_impl.5} parent=5 // pred_check
      _
    $region30: #{_double_conv_impl.5} parent=5 // pred_check_branch
      %141 = sbr.rel (%p138) target = $region32
    $region31: #{_double_conv_impl.5} parent=5 // pred_region
      %s142 = ssub.s32 %s9, 1
      %p143 = scmp.lt.s32.totalorder %s14, 1
      %s144 = scalar_select %p143, %s14, 1
      %s145 = smul.addr %s144, 45
      %s146 = smul.addr %s145, 4
      %s147 = scalar_lea.vmem %s0, %s146
      %p148 = pneg %p35
      %p149 = pneg %p32
      %p150 = pneg %p56
      %p151 = pneg %p53
      %p152 = pneg %p77
      %p153 = pneg %p74
      %p154 = pneg %p103
      %p155 = pneg %p100
      %p156 = scmp.lt.s32.totalorder %s14, 1
      %s157 = scalar_select %p156, %s14, 1
      %s158 = smul.addr %s157, 45
      %s159 = smul.addr %s158, 4
      %s160 = scalar_lea.vmem %s3, %s159
      %p161 = scmp.lt.s32.totalorder %s14, 1
      %s162 = scalar_select %p161, %s14, 1
      %s163 = smul.addr %s162, 45
      %s164 = smul.addr %s163, 4
      %s165 = scalar_lea.vmem %s0, %s164
      %p166 = scmp.lt.s32.totalorder %s14, 1
      %s167 = scalar_select %p166, %s14, 1
      %s168 = smul.addr %s167, 45
      %s169 = smul.addr %s168, 4
      %s170 = scalar_lea.vmem %s3, %s169
      %v171 = vld [vmem:[%s165] sm:$0xf]
      %v172 = vld [vmem:[%s165 + $0x4] sm:$0xf]
      %v173 = vld [vmem:[%s165 + $0x8] sm:$0xf]
      %v174 = vld [vmem:[%s165 + $0xc] sm:$0xf]
      %v175 = vld [vmem:[%s165 + $0x10] sm:$0xf]
      %v176 = vld [vmem:[%s165 + $0x14] sm:$0xf]
      %v177 = vld [vmem:[%s165 + $0x18] sm:$0xf]
      %v178 = vld [vmem:[%s165 + $0x1c] sm:$0xf]
      %v179 = vld [vmem:[%s165 + $0x20] sm:$0xf]
      %v180 = vld [vmem:[%s165 + $0x24] sm:$0xf]
      %v181 = vld [vmem:[%s165 + $0x28] sm:$0xf]
      %v182 = vld [vmem:[%s165 + $0x2c] sm:$0xf]
      %v183 = vld [vmem:[%s165 + $0x30] sm:$0xf]
      %v184 = vld [vmem:[%s165 + $0x34] sm:$0xf]
      %v185 = vld [vmem:[%s165 + $0x38] sm:$0xf]
      %v186 = vld [vmem:[%s165 + $0x3c] sm:$0xf]
      %v187 = vld [vmem:[%s165 + $0x40] sm:$0xf]
      %v188 = vld [vmem:[%s165 + $0x44] sm:$0xf]
      %v189 = vld [vmem:[%s165 + $0x48] sm:$0xf]
      %v190 = vld [vmem:[%s165 + $0x4c] sm:$0xf]
      %v191 = vld [vmem:[%s165 + $0x50] sm:$0xf]
      %v192 = vld [vmem:[%s165 + $0x54] sm:$0xf]
      %v193 = vld [vmem:[%s165 + $0x58] sm:$0xf]
      %v194 = vld [vmem:[%s165 + $0x5c] sm:$0xf]
      %v195 = vld [vmem:[%s165 + $0x60] sm:$0xf]
      %v196 = vld [vmem:[%s165 + $0x64] sm:$0xf]
      %v197 = vld [vmem:[%s165 + $0x68] sm:$0xf]
      %v198 = vld [vmem:[%s165 + $0x6c] sm:$0xf]
      %v199 = vld [vmem:[%s165 + $0x70] sm:$0xf]
      %v200 = vld [vmem:[%s165 + $0x74] sm:$0xf]
      %v201 = vld [vmem:[%s165 + $0x78] sm:$0xf]
      %v202 = vld [vmem:[%s165 + $0x7c] sm:$0xf]
      %v203 = vld [vmem:[%s165 + $0x80] sm:$0xf]
      %v204 = vld [vmem:[%s165 + $0x84] sm:$0xf]
      %v205 = vld [vmem:[%s165 + $0x88] sm:$0xf]
      %v206 = vld [vmem:[%s165 + $0x8c] sm:$0xf]
      %v207 = vld [vmem:[%s165 + $0x90] sm:$0xf]
      %v208 = vld [vmem:[%s165 + $0x94] sm:$0xf]
      %v209 = vld [vmem:[%s165 + $0x98] sm:$0xf]
      %v210 = vld [vmem:[%s165 + $0x9c] sm:$0xf]
      %v211 = vld [vmem:[%s165 + $0xa0] sm:$0xf]
      %v212 = vld [vmem:[%s165 + $0xa4] sm:$0xf]
      %v213 = vld [vmem:[%s165 + $0xa8] sm:$0xf]
      %v214 = vld [vmem:[%s165 + $0xac] sm:$0xf]
      %v215 = vld [vmem:[%s165 + $0xb0] sm:$0xf]
      %v216 = vunpack.c.l.bf16 %v171
      %v217 = vunpack.c.l.bf16 %v172
      %v218 = vunpack.c.l.bf16 %v173
      %v219 = vunpack.c.l.bf16 %v174
      %v220 = vunpack.c.l.bf16 %v175
      %v221 = vunpack.c.l.bf16 %v176
      %v222 = vunpack.c.l.bf16 %v177
      %v223 = vunpack.c.l.bf16 %v178
      %v224 = vunpack.c.l.bf16 %v179
      %v225 = vunpack.c.l.bf16 %v180
      %v226 = vunpack.c.l.bf16 %v181
      %v227 = vunpack.c.l.bf16 %v182
      %v228 = vunpack.c.l.bf16 %v183
      %v229 = vunpack.c.l.bf16 %v184
      %v230 = vunpack.c.l.bf16 %v185
      %v231 = vunpack.c.l.bf16 %v186
      %v232 = vunpack.c.l.bf16 %v187
      %v233 = vunpack.c.l.bf16 %v188
      %v234 = vunpack.c.l.bf16 %v189
      %v235 = vunpack.c.l.bf16 %v190
      %v236 = vunpack.c.l.bf16 %v191
      %v237 = vunpack.c.l.bf16 %v192
      %v238 = vunpack.c.l.bf16 %v193
      %v239 = vunpack.c.l.bf16 %v194
      %v240 = vunpack.c.l.bf16 %v195
      %v241 = vunpack.c.l.bf16 %v196
      %v242 = vunpack.c.l.bf16 %v197
      %v243 = vunpack.c.l.bf16 %v198
      %v244 = vunpack.c.l.bf16 %v199
      %v245 = vunpack.c.l.bf16 %v200
      %v246 = vunpack.c.l.bf16 %v201
      %v247 = vunpack.c.l.bf16 %v202
      %v248 = vunpack.c.l.bf16 %v203
      %v249 = vunpack.c.l.bf16 %v204
      %v250 = vunpack.c.l.bf16 %v205
      %v251 = vunpack.c.l.bf16 %v206
      %v252 = vunpack.c.l.bf16 %v207
      %v253 = vunpack.c.l.bf16 %v208
      %v254 = vunpack.c.l.bf16 %v209
      %v255 = vunpack.c.l.bf16 %v210
      %v256 = vunpack.c.l.bf16 %v211
      %v257 = vunpack.c.l.bf16 %v212
      %v258 = vunpack.c.l.bf16 %v213
      %v259 = vunpack.c.l.bf16 %v214
      %v260 = vunpack.c.l.bf16 %v215
      %v261 = vld [vmem:[%s1] sm:$0x1]
      %v263 = vlaneseq
      %v264 = vshrl.u32 %v263, 7
      %v265 = vsub.s32 0, %v264
      %v266 = vrot.slane %v261, %v265
      %v268 = vmul.f32 %v216, %v266
      %v269 = vmul.f32 %v217, %v266
      %v270 = vmul.f32 %v218, %v266
      %v271 = vmul.f32 %v219, %v266
      %v272 = vmul.f32 %v220, %v266
      %v273 = vmul.f32 %v221, %v266
      %v274 = vmul.f32 %v222, %v266
      %v275 = vmul.f32 %v223, %v266
      %v276 = vmul.f32 %v224, %v266
      %v277 = vmul.f32 %v225, %v266
      %v278 = vmul.f32 %v226, %v266
      %v279 = vmul.f32 %v227, %v266
      %v280 = vmul.f32 %v228, %v266
      %v281 = vmul.f32 %v229, %v266
      %v282 = vmul.f32 %v230, %v266
      %v283 = vmul.f32 %v231, %v266
      %v284 = vmul.f32 %v232, %v266
      %v285 = vmul.f32 %v233, %v266
      %v286 = vmul.f32 %v234, %v266
      %v287 = vmul.f32 %v235, %v266
      %v288 = vmul.f32 %v236, %v266
      %v289 = vmul.f32 %v237, %v266
      %v290 = vmul.f32 %v238, %v266
      %v291 = vmul.f32 %v239, %v266
      %v292 = vmul.f32 %v240, %v266
      %v293 = vmul.f32 %v241, %v266
      %v294 = vmul.f32 %v242, %v266
      %v295 = vmul.f32 %v243, %v266
      %v296 = vmul.f32 %v244, %v266
      %v297 = vmul.f32 %v245, %v266
      %v298 = vmul.f32 %v246, %v266
      %v299 = vmul.f32 %v247, %v266
      %v300 = vmul.f32 %v248, %v266
      %v301 = vmul.f32 %v249, %v266
      %v302 = vmul.f32 %v250, %v266
      %v303 = vmul.f32 %v251, %v266
      %v304 = vmul.f32 %v252, %v266
      %v305 = vmul.f32 %v253, %v266
      %v306 = vmul.f32 %v254, %v266
      %v307 = vmul.f32 %v255, %v266
      %v308 = vmul.f32 %v256, %v266
      %v309 = vmul.f32 %v257, %v266
      %v310 = vmul.f32 %v258, %v266
      %v311 = vmul.f32 %v259, %v266
      %v312 = vmul.f32 %v260, %v266
      %v313 = vld [vmem:[%s2] sm:$0x1]
      %v315 = vlaneseq
      %v316 = vshrl.u32 %v315, 7
      %v317 = vsub.s32 0, %v316
      %v318 = vrot.slane %v313, %v317
      %v320 = vadd.f32 %v268, %v318
      %v321 = vadd.f32 %v269, %v318
      %v322 = vadd.f32 %v270, %v318
      %v323 = vadd.f32 %v271, %v318
      %v324 = vadd.f32 %v272, %v318
      %v325 = vadd.f32 %v273, %v318
      %v326 = vadd.f32 %v274, %v318
      %v327 = vadd.f32 %v275, %v318
      %v328 = vadd.f32 %v276, %v318
      %v329 = vadd.f32 %v277, %v318
      %v330 = vadd.f32 %v278, %v318
      %v331 = vadd.f32 %v279, %v318
      %v332 = vadd.f32 %v280, %v318
      %v333 = vadd.f32 %v281, %v318
      %v334 = vadd.f32 %v282, %v318
      %v335 = vadd.f32 %v283, %v318
      %v336 = vadd.f32 %v284, %v318
      %v337 = vadd.f32 %v285, %v318
      %v338 = vadd.f32 %v286, %v318
      %v339 = vadd.f32 %v287, %v318
      %v340 = vadd.f32 %v288, %v318
      %v341 = vadd.f32 %v289, %v318
      %v342 = vadd.f32 %v290, %v318
      %v343 = vadd.f32 %v291, %v318
      %v344 = vadd.f32 %v292, %v318
      %v345 = vadd.f32 %v293, %v318
      %v346 = vadd.f32 %v294, %v318
      %v347 = vadd.f32 %v295, %v318
      %v348 = vadd.f32 %v296, %v318
      %v349 = vadd.f32 %v297, %v318
      %v350 = vadd.f32 %v298, %v318
      %v351 = vadd.f32 %v299, %v318
      %v352 = vadd.f32 %v300, %v318
      %v353 = vadd.f32 %v301, %v318
      %v354 = vadd.f32 %v302, %v318
      %v355 = vadd.f32 %v303, %v318
      %v356 = vadd.f32 %v304, %v318
      %v357 = vadd.f32 %v305, %v318
      %v358 = vadd.f32 %v306, %v318
      %v359 = vadd.f32 %v307, %v318
      %v360 = vadd.f32 %v308, %v318
      %v361 = vadd.f32 %v309, %v318
      %v362 = vadd.f32 %v310, %v318
      %v363 = vadd.f32 %v311, %v318
      %v364 = vadd.f32 %v312, %v318
      %v365 = vmax.f32 %v320, 0.0
      %v366 = vmax.f32 %v321, 0.0
      %v367 = vmax.f32 %v322, 0.0
      %v368 = vmax.f32 %v323, 0.0
      %v369 = vmax.f32 %v324, 0.0
      %v370 = vmax.f32 %v325, 0.0
      %v371 = vmax.f32 %v326, 0.0
      %v372 = vmax.f32 %v327, 0.0
      %v373 = vmax.f32 %v328, 0.0
      %v374 = vmax.f32 %v329, 0.0
      %v375 = vmax.f32 %v330, 0.0
      %v376 = vmax.f32 %v331, 0.0
      %v377 = vmax.f32 %v332, 0.0
      %v378 = vmax.f32 %v333, 0.0
      %v379 = vmax.f32 %v334, 0.0
      %v380 = vmax.f32 %v335, 0.0
      %v381 = vmax.f32 %v336, 0.0
      %v382 = vmax.f32 %v337, 0.0
      %v383 = vmax.f32 %v338, 0.0
      %v384 = vmax.f32 %v339, 0.0
      %v385 = vmax.f32 %v340, 0.0
      %v386 = vmax.f32 %v341, 0.0
      %v387 = vmax.f32 %v342, 0.0
      %v388 = vmax.f32 %v343, 0.0
      %v389 = vmax.f32 %v344, 0.0
      %v390 = vmax.f32 %v345, 0.0
      %v391 = vmax.f32 %v346, 0.0
      %v392 = vmax.f32 %v347, 0.0
      %v393 = vmax.f32 %v348, 0.0
      %v394 = vmax.f32 %v349, 0.0
      %v395 = vmax.f32 %v350, 0.0
      %v396 = vmax.f32 %v351, 0.0
      %v397 = vmax.f32 %v352, 0.0
      %v398 = vmax.f32 %v353, 0.0
      %v399 = vmax.f32 %v354, 0.0
      %v400 = vmax.f32 %v355, 0.0
      %v401 = vmax.f32 %v356, 0.0
      %v402 = vmax.f32 %v357, 0.0
      %v403 = vmax.f32 %v358, 0.0
      %v404 = vmax.f32 %v359, 0.0
      %v405 = vmax.f32 %v360, 0.0
      %v406 = vmax.f32 %v361, 0.0
      %v407 = vmax.f32 %v362, 0.0
      %v408 = vmax.f32 %v363, 0.0
      %v409 = vmax.f32 %v364, 0.0
      %v410 = vpack.c.bf16 %v366, %v365
      %v411 = vpack.c.bf16 %v368, %v367
      %v412 = vpack.c.bf16 %v370, %v369
      %v413 = vpack.c.bf16 %v372, %v371
      %v414 = vpack.c.bf16 %v374, %v373
      %v415 = vpack.c.bf16 %v376, %v375
      %v416 = vpack.c.bf16 %v378, %v377
      %v417 = vpack.c.bf16 %v380, %v379
      %v418 = vpack.c.bf16 %v382, %v381
      %v419 = vpack.c.bf16 %v384, %v383
      %v420 = vpack.c.bf16 %v386, %v385
      %v421 = vpack.c.bf16 %v388, %v387
      %v422 = vpack.c.bf16 %v390, %v389
      %v423 = vpack.c.bf16 %v392, %v391
      %v424 = vpack.c.bf16 %v394, %v393
      %v425 = vpack.c.bf16 %v396, %v395
      %v426 = vpack.c.bf16 %v398, %v397
      %v427 = vpack.c.bf16 %v400, %v399
      %v428 = vpack.c.bf16 %v402, %v401
      %v429 = vpack.c.bf16 %v404, %v403
      %v430 = vpack.c.bf16 %v406, %v405
      %v431 = vpack.c.bf16 %v408, %v407
      %v432 = vpack.c.bf16 %v409, %v409
      %v456 = vunpack.c.l.b16 %v410
      %v457 = vunpack.c.h.b16 %v410
      %v458 = vunpack.c.l.b16 %v411
      %v459 = vunpack.c.h.b16 %v411
      %v460 = vunpack.c.l.b16 %v412
      %v461 = vunpack.c.h.b16 %v412
      %v462 = vunpack.c.l.b16 %v413
      %v463 = vunpack.c.h.b16 %v413
      %v464 = vunpack.c.l.b16 %v414
      %v465 = vunpack.c.h.b16 %v414
      %v466 = vunpack.c.l.b16 %v415
      %v467 = vunpack.c.h.b16 %v415
      %v468 = vunpack.c.l.b16 %v416
      %v469 = vunpack.c.h.b16 %v416
      %v470 = vunpack.c.l.b16 %v417
      %v471 = vunpack.c.h.b16 %v417
      %v472 = vunpack.c.l.b16 %v418
      %v473 = vunpack.c.h.b16 %v418
      %v474 = vunpack.c.l.b16 %v419
      %v475 = vunpack.c.h.b16 %v419
      %v476 = vunpack.c.l.b16 %v420
      %v477 = vunpack.c.h.b16 %v420
      %v478 = vunpack.c.l.b16 %v421
      %v479 = vunpack.c.h.b16 %v421
      %v480 = vunpack.c.l.b16 %v422
      %v481 = vunpack.c.h.b16 %v422
      %v482 = vunpack.c.l.b16 %v423
      %v483 = vunpack.c.h.b16 %v423
      %v484 = vunpack.c.l.b16 %v424
      %v485 = vunpack.c.h.b16 %v424
      %v486 = vunpack.c.l.b16 %v425
      %v487 = vunpack.c.h.b16 %v425
      %v488 = vunpack.c.l.b16 %v426
      %v489 = vunpack.c.h.b16 %v426
      %v490 = vunpack.c.l.b16 %v427
      %v491 = vunpack.c.h.b16 %v427
      %v492 = vunpack.c.l.b16 %v428
      %v493 = vunpack.c.h.b16 %v428
      %v494 = vunpack.c.l.b16 %v429
      %v495 = vunpack.c.h.b16 %v429
      %v496 = vunpack.c.l.b16 %v430
      %v497 = vunpack.c.h.b16 %v430
      %v498 = vunpack.c.l.b16 %v431
      %v499 = vunpack.c.h.b16 %v431
      %v500 = vunpack.c.l.b16 %v432
      %v501 = vpack.c.b16 %v456, %v456
      %v502 = vpack.c.b16 %v457, %v457
      %v503 = vpack.c.b16 %v458, %v458
      %v504 = vpack.c.b16 %v459, %v459
      %v505 = vpack.c.b16 %v460, %v460
      %v506 = vpack.c.b16 %v461, %v461
      %v507 = vpack.c.b16 %v462, %v462
      %v508 = vpack.c.b16 %v463, %v463
      %v509 = vpack.c.b16 %v464, %v464
      %v510 = vpack.c.b16 %v465, %v465
      %v511 = vpack.c.b16 %v466, %v466
      %v512 = vpack.c.b16 %v467, %v467
      %v513 = vpack.c.b16 %v468, %v468
      %v514 = vpack.c.b16 %v469, %v469
      %v515 = vpack.c.b16 %v470, %v470
      %v516 = vpack.c.b16 %v471, %v471
      %v517 = vpack.c.b16 %v472, %v472
      %v518 = vpack.c.b16 %v473, %v473
      %v519 = vpack.c.b16 %v474, %v474
      %v520 = vpack.c.b16 %v475, %v475
      %v521 = vpack.c.b16 %v476, %v476
      %v522 = vpack.c.b16 %v477, %v477
      %v523 = vpack.c.b16 %v478, %v478
      %v524 = vpack.c.b16 %v479, %v479
      %v525 = vpack.c.b16 %v480, %v480
      %v526 = vpack.c.b16 %v481, %v481
      %v527 = vpack.c.b16 %v482, %v482
      %v528 = vpack.c.b16 %v483, %v483
      %v529 = vpack.c.b16 %v484, %v484
      %v530 = vpack.c.b16 %v485, %v485
      %v531 = vpack.c.b16 %v486, %v486
      %v532 = vpack.c.b16 %v487, %v487
      %v533 = vpack.c.b16 %v488, %v488
      %v534 = vpack.c.b16 %v489, %v489
      %v535 = vpack.c.b16 %v490, %v490
      %v536 = vpack.c.b16 %v491, %v491
      %v537 = vpack.c.b16 %v492, %v492
      %v538 = vpack.c.b16 %v493, %v493
      %v539 = vpack.c.b16 %v494, %v494
      %v540 = vpack.c.b16 %v495, %v495
      %v541 = vpack.c.b16 %v496, %v496
      %v542 = vpack.c.b16 %v497, %v497
      %v543 = vpack.c.b16 %v498, %v498
      %v544 = vpack.c.b16 %v499, %v499
      %v545 = vpack.c.b16 %v500, %v500
      %591 = vst [vmem:[%s170] sm:$0xf] %v501
      %592 = vst [vmem:[%s170 + $0x4] sm:$0xf] %v502
      %593 = vst [vmem:[%s170 + $0x8] sm:$0xf] %v503
      %594 = vst [vmem:[%s170 + $0xc] sm:$0xf] %v504
      %595 = vst [vmem:[%s170 + $0x10] sm:$0xf] %v505
      %596 = vst [vmem:[%s170 + $0x14] sm:$0xf] %v506
      %597 = vst [vmem:[%s170 + $0x18] sm:$0xf] %v507
      %598 = vst [vmem:[%s170 + $0x1c] sm:$0xf] %v508
      %599 = vst [vmem:[%s170 + $0x20] sm:$0xf] %v509
      %600 = vst [vmem:[%s170 + $0x24] sm:$0xf] %v510
      %601 = vst [vmem:[%s170 + $0x28] sm:$0xf] %v511
      %602 = vst [vmem:[%s170 + $0x2c] sm:$0xf] %v512
      %603 = vst [vmem:[%s170 + $0x30] sm:$0xf] %v513
      %604 = vst [vmem:[%s170 + $0x34] sm:$0xf] %v514
      %605 = vst [vmem:[%s170 + $0x38] sm:$0xf] %v515
      %606 = vst [vmem:[%s170 + $0x3c] sm:$0xf] %v516
      %607 = vst [vmem:[%s170 + $0x40] sm:$0xf] %v517
      %608 = vst [vmem:[%s170 + $0x44] sm:$0xf] %v518
      %609 = vst [vmem:[%s170 + $0x48] sm:$0xf] %v519
      %610 = vst [vmem:[%s170 + $0x4c] sm:$0xf] %v520
      %611 = vst [vmem:[%s170 + $0x50] sm:$0xf] %v521
      %612 = vst [vmem:[%s170 + $0x54] sm:$0xf] %v522
      %613 = vst [vmem:[%s170 + $0x58] sm:$0xf] %v523
      %614 = vst [vmem:[%s170 + $0x5c] sm:$0xf] %v524
      %615 = vst [vmem:[%s170 + $0x60] sm:$0xf] %v525
      %616 = vst [vmem:[%s170 + $0x64] sm:$0xf] %v526
      %617 = vst [vmem:[%s170 + $0x68] sm:$0xf] %v527
      %618 = vst [vmem:[%s170 + $0x6c] sm:$0xf] %v528
      %619 = vst [vmem:[%s170 + $0x70] sm:$0xf] %v529
      %620 = vst [vmem:[%s170 + $0x74] sm:$0xf] %v530
      %621 = vst [vmem:[%s170 + $0x78] sm:$0xf] %v531
      %622 = vst [vmem:[%s170 + $0x7c] sm:$0xf] %v532
      %623 = vst [vmem:[%s170 + $0x80] sm:$0xf] %v533
      %624 = vst [vmem:[%s170 + $0x84] sm:$0xf] %v534
      %625 = vst [vmem:[%s170 + $0x88] sm:$0xf] %v535
      %626 = vst [vmem:[%s170 + $0x8c] sm:$0xf] %v536
      %627 = vst [vmem:[%s170 + $0x90] sm:$0xf] %v537
      %628 = vst [vmem:[%s170 + $0x94] sm:$0xf] %v538
      %629 = vst [vmem:[%s170 + $0x98] sm:$0xf] %v539
      %630 = vst [vmem:[%s170 + $0x9c] sm:$0xf] %v540
      %631 = vst [vmem:[%s170 + $0xa0] sm:$0xf] %v541
      %632 = vst [vmem:[%s170 + $0xa4] sm:$0xf] %v542
      %633 = vst [vmem:[%s170 + $0xa8] sm:$0xf] %v543
      %634 = vst [vmem:[%s170 + $0xac] sm:$0xf] %v544
      %635 = vst [vmem:[%s170 + $0xb0] sm:$0xf] %v545
      %p636 = scmp.lt.s32.totalorder %s14, 1
      %s637 = scalar_select %p636, %s14, 1
      %s638 = smul.addr %s637, 45
      %s639 = smul.addr %s638, 4
      %s640 = scalar_lea.vmem %s3, %s639
      // Predicated region
      $region33: #{_double_conv_impl.5} parent=31 // pred_check
        %p641 = pneg %p100
      $region34: #{_double_conv_impl.5} parent=31 // pred_check_branch
        %643 = sbr.rel (%p641) target = $region36
      $region35: #{_double_conv_impl.5} parent=31 // pred_region
        _
      $region36: #{_double_conv_impl.5} parent=31 // pred_fallthru
        _
    $region32: #{_double_conv_impl.5} parent=5 // pred_fallthru
      _
    %p644 = scmp.le.s32.totalorder 2, %s9
    // Predicated region
    $region37: #{_double_conv_impl.5} parent=5 // pred_check
      %p645 = pneg %p644
    $region38: #{_double_conv_impl.5} parent=5 // pred_check_branch
      %647 = sbr.rel (%p645) target = $region40
    $region39: #{_double_conv_impl.5} parent=5 // pred_region
      %s648 = ssub.s32 %s9, 2
      // Predicated region
      $region41: #{_double_conv_impl.5} parent=39 // pred_check
        %p649 = pneg %p106
      $region42: #{_double_conv_impl.5} parent=39 // pred_check_branch
        %651 = sbr.rel (%p649) target = $region44
      $region43: #{_double_conv_impl.5} parent=39 // pred_region
        %p652 = scmp.lt.s32.totalorder %s15, 1
        %s653 = scalar_select %p652, %s15, 1
        %s654 = smul.addr %s653, 45
        %s655 = smul.addr %s654, 4
        %s656 = scalar_lea.vmem %s3, %s655
      $region44: #{_double_conv_impl.5} parent=39 // pred_fallthru
        _
    $region40: #{_double_conv_impl.5} parent=5 // pred_fallthru
      _
  $region6: #{_double_conv_impl.5} parent=0 // loop_footer
    %s13 = sadd.s32 1, %s9
  $region7: #{_double_conv_impl.5} parent=0 // loop_footer_branch
    %8 = sbr.rel target = $region3
  $region8: #{_double_conv_impl.5} parent=0 // loop_exit
    _

// kernel: _double_conv_impl.3
$region0: #{_double_conv_impl.3}
  #allocation0 [shape = 'u32[]', space=smem, size = 0x4, offset = 0x4, fixed_abs, tag = 'smem constant byte address 0x4 - core index']
  #allocation1 [shape = 'u32[144,128]{1,0:T(1,128)}', space=vmem, size = 0x12000, scoped, tag = 'internal scratch']
  %s0 = inlined_call_operand.vmem [shape: bf16[2,360,8], index: 0, kind: input, shape index: {}]
  %s1 = inlined_call_operand.vmem [shape: bf16[9,8,128], index: 1, kind: input, shape index: {}]
  %s2 = inlined_call_operand.vmem [shape: f32[1,8], index: 2, kind: input, shape index: {}]
  %s3 = inlined_call_operand.vmem [shape: f32[1,8], index: 3, kind: input, shape index: {}]
  %s4 = inlined_call_operand.vmem [shape: bf16[2,360,128], index: 4, kind: output, shape index: {0}]
  %s5 = inlined_call_operand.vmem [shape: f32[2,2,128], index: 5, kind: output, shape index: {1}]
  %6 = xla_tuple %s4, %s5
  %s7 = sld [smem:[#allocation0]]
  $region57: #{_double_conv_impl.3} parent=0
    _
  %s9 = ssub.s32 1, %s7
  %s10 = scalar_select 0, %s9, %s7
  loop: start=0, step=1, limit=4
  $region2: #{_double_conv_impl.3} parent=0 // loop_pre_header
    _
  $region3: #{_double_conv_impl.3} parent=0 // loop_header
    %s12 = sphi 0, %s16
    %p13 = scmp.ge.s32.totalorder %s12, 4
    %s22 = sphi 0, %s24
    %s25 = sphi 0, %s22
    %s26 = sphi 0, %s25
    %s42 = sphi 0, %s26
    %s46 = sphi 0, %s46
    %s48 = sphi 0, %s46
    %s49 = sphi 0, %s48
    %s63 = sphi 0, %s49
    %s67 = sphi 0, %s67
    %s69 = sphi 0, %s67
    %s70 = sphi 0, %s69
    %s84 = sphi 0, %s70
    %s88 = sphi 0, %s88
    %s90 = sphi 0, %s88
    %s91 = sphi 0, %s90
    %s105 = sphi 0, %s91
    %s111 = sphi 0, %s113
    %s114 = sphi 0, %s111
    %s115 = sphi 0, %s114
    %s131 = sphi 0, %s115
    %s137 = sphi 0, %s139
    %s140 = sphi 0, %s137
    %s141 = sphi 0, %s140
    %s157 = sphi 0, %s141
  $region4: #{_double_conv_impl.3} parent=0 // loop_header_branch
    %15 = sbr.rel (%p13) target = $region8
  $region5: #{_double_conv_impl.3} parent=0 // loop_body
    %s17 = ssub.s32 %s12, 1
    %s18 = ssub.s32 %s12, 2
    %s19 = sadd.s32 %s12, 1
    %s20 = ssub.s32 %s12, %s19
    %p21 = scmp.eq.s32.totalorder %s20, 0
    %s23 = sadd.s32 %s22, 1
    %s24 = scalar_select %p21, %s22, %s23
    %p27 = pneg %p21
    %p28 = scmp.eq.s32.totalorder %s12, 1
    %p29 = por %p27, %p28
    %p30 = scmp.ne.s32.totalorder %s22, %s25
    %p31 = scmp.eq.s32.totalorder %s12, 0
    %p32 = por %p30, %p31
    %p33 = scmp.ne.s32.totalorder %s22, %s25
    %p34 = scmp.eq.s32.totalorder %s17, 1
    %p35 = por %p33, %p34
    %p36 = scmp.ne.s32.totalorder %s25, %s26
    %p37 = scmp.eq.s32.totalorder %s17, 0
    %p38 = por %p36, %p37
    %p39 = scmp.ne.s32.totalorder %s25, %s26
    %p40 = scmp.eq.s32.totalorder %s18, 1
    %p41 = por %p39, %p40
    %p43 = scmp.ne.s32.totalorder %s26, %s42
    %p44 = scmp.eq.s32.totalorder %s18, 0
    %p45 = por %p43, %p44
    %s47 = sadd.s32 %s46, 1
    %p50 = scmp.eq.s32.totalorder %s12, 1
    %p51 = scmp.ne.s32.totalorder %s46, %s48
    %p52 = scmp.eq.s32.totalorder %s12, 0
    %p53 = por %p51, %p52
    %p54 = scmp.ne.s32.totalorder %s46, %s48
    %p55 = scmp.eq.s32.totalorder %s17, 1
    %p56 = por %p54, %p55
    %p57 = scmp.ne.s32.totalorder %s48, %s49
    %p58 = scmp.eq.s32.totalorder %s17, 0
    %p59 = por %p57, %p58
    %p60 = scmp.ne.s32.totalorder %s48, %s49
    %p61 = scmp.eq.s32.totalorder %s18, 1
    %p62 = por %p60, %p61
    %p64 = scmp.ne.s32.totalorder %s49, %s63
    %p65 = scmp.eq.s32.totalorder %s18, 0
    %p66 = por %p64, %p65
    %s68 = sadd.s32 %s67, 1
    %p71 = scmp.eq.s32.totalorder %s12, 1
    %p72 = scmp.ne.s32.totalorder %s67, %s69
    %p73 = scmp.eq.s32.totalorder %s12, 0
    %p74 = por %p72, %p73
    %p75 = scmp.ne.s32.totalorder %s67, %s69
    %p76 = scmp.eq.s32.totalorder %s17, 1
    %p77 = por %p75, %p76
    %p78 = scmp.ne.s32.totalorder %s69, %s70
    %p79 = scmp.eq.s32.totalorder %s17, 0
    %p80 = por %p78, %p79
    %p81 = scmp.ne.s32.totalorder %s69, %s70
    %p82 = scmp.eq.s32.totalorder %s18, 1
    %p83 = por %p81, %p82
    %p85 = scmp.ne.s32.totalorder %s70, %s84
    %p86 = scmp.eq.s32.totalorder %s18, 0
    %p87 = por %p85, %p86
    %s89 = sadd.s32 %s88, 1
    %p92 = scmp.eq.s32.totalorder %s12, 1
    %p93 = scmp.ne.s32.totalorder %s88, %s90
    %p94 = scmp.eq.s32.totalorder %s12, 0
    %p95 = por %p93, %p94
    %p96 = scmp.ne.s32.totalorder %s88, %s90
    %p97 = scmp.eq.s32.totalorder %s17, 1
    %p98 = por %p96, %p97
    %p99 = scmp.ne.s32.totalorder %s90, %s91
    %p100 = scmp.eq.s32.totalorder %s17, 0
    %p101 = por %p99, %p100
    %p102 = scmp.ne.s32.totalorder %s90, %s91
    %p103 = scmp.eq.s32.totalorder %s18, 1
    %p104 = por %p102, %p103
    %p106 = scmp.ne.s32.totalorder %s91, %s105
    %p107 = scmp.eq.s32.totalorder %s18, 0
    %p108 = por %p106, %p107
    %s109 = ssub.s32 %s12, %s19
    %p110 = scmp.eq.s32.totalorder %s109, 0
    %s112 = sadd.s32 %s111, 1
    %s113 = scalar_select %p110, %s111, %s112
    %p116 = pneg %p110
    %p117 = scmp.eq.s32.totalorder %s12, 1
    %p118 = por %p116, %p117
    %p119 = scmp.ne.s32.totalorder %s111, %s114
    %p120 = scmp.eq.s32.totalorder %s12, 0
    %p121 = por %p119, %p120
    %p122 = scmp.ne.s32.totalorder %s111, %s114
    %p123 = scmp.eq.s32.totalorder %s17, 1
    %p124 = por %p122, %p123
    %p125 = scmp.ne.s32.totalorder %s114, %s115
    %p126 = scmp.eq.s32.totalorder %s17, 0
    %p127 = por %p125, %p126
    %p128 = scmp.ne.s32.totalorder %s114, %s115
    %p129 = scmp.eq.s32.totalorder %s18, 1
    %p130 = por %p128, %p129
    %p132 = scmp.ne.s32.totalorder %s115, %s131
    %p133 = scmp.eq.s32.totalorder %s18, 0
    %p134 = por %p132, %p133
    %s135 = ssub.s32 %s12, %s19
    %p136 = scmp.eq.s32.totalorder %s135, 0
    %s138 = sadd.s32 %s137, 1
    %s139 = scalar_select %p136, %s137, %s138
    %p142 = pneg %p136
    %p143 = scmp.eq.s32.totalorder %s12, 1
    %p144 = por %p142, %p143
    %p145 = scmp.ne.s32.totalorder %s137, %s140
    %p146 = scmp.eq.s32.totalorder %s12, 0
    %p147 = por %p145, %p146
    %p148 = scmp.ne.s32.totalorder %s137, %s140
    %p149 = scmp.eq.s32.totalorder %s17, 1
    %p150 = por %p148, %p149
    %p151 = scmp.ne.s32.totalorder %s140, %s141
    %p152 = scmp.eq.s32.totalorder %s17, 0
    %p153 = por %p151, %p152
    %p154 = scmp.ne.s32.totalorder %s140, %s141
    %p155 = scmp.eq.s32.totalorder %s18, 1
    %p156 = por %p154, %p155
    %p158 = scmp.ne.s32.totalorder %s141, %s157
    %p159 = scmp.eq.s32.totalorder %s18, 0
    %p160 = por %p158, %p159
    %p161 = scmp.le.s32.totalorder 1, %s12
    %p162 = scmp.lt.s32.totalorder %s12, 3
    %p163 = pnand %p161, %p162
    %p164 = pneg %p163
    // Predicated region
    $region9: #{_double_conv_impl.3} parent=5 // pred_check
      _
    $region10: #{_double_conv_impl.3} parent=5 // pred_check_branch
      %166 = sbr.rel (%p163) target = $region12
    $region11: #{_double_conv_impl.3} parent=5 // pred_region
      %s167 = ssub.s32 %s12, 1
      // Predicated region
      $region13: #{_double_conv_impl.3} parent=11 // pred_check
        %p168 = pneg %p59
      $region14: #{_double_conv_impl.3} parent=11 // pred_check_branch
        %170 = sbr.rel (%p168) target = $region16
      $region15: #{_double_conv_impl.3} parent=11 // pred_region
        _
      $region16: #{_double_conv_impl.3} parent=11 // pred_fallthru
        _
      // Predicated region
      $region17: #{_double_conv_impl.3} parent=11 // pred_check
        %p171 = pneg %p80
      $region18: #{_double_conv_impl.3} parent=11 // pred_check_branch
        %173 = sbr.rel (%p171) target = $region20
      $region19: #{_double_conv_impl.3} parent=11 // pred_region
        _
      $region20: #{_double_conv_impl.3} parent=11 // pred_fallthru
        _
      // Predicated region
      $region21: #{_double_conv_impl.3} parent=11 // pred_check
        %p174 = pneg %p101
      $region22: #{_double_conv_impl.3} parent=11 // pred_check_branch
        %176 = sbr.rel (%p174) target = $region24
      $region23: #{_double_conv_impl.3} parent=11 // pred_region
        _
      $region24: #{_double_conv_impl.3} parent=11 // pred_fallthru
        _
    $region12: #{_double_conv_impl.3} parent=5 // pred_fallthru
      _
    %p177 = scmp.lt.s32.totalorder %s12, 2
    // Predicated region
    $region25: #{_double_conv_impl.3} parent=5 // pred_check
      %p178 = pneg %p177
    $region26: #{_double_conv_impl.3} parent=5 // pred_check_branch
      %180 = sbr.rel (%p178) target = $region28
    $region27: #{_double_conv_impl.3} parent=5 // pred_region
      // Predicated region
      $region29: #{_double_conv_impl.3} parent=27 // pred_check
        %p181 = pneg %p32
      $region30: #{_double_conv_impl.3} parent=27 // pred_check_branch
        %183 = sbr.rel (%p181) target = $region32
      $region31: #{_double_conv_impl.3} parent=27 // pred_region
        %p184 = scmp.lt.s32.totalorder %s12, 1
        %s185 = scalar_select %p184, %s12, 1
        %s186 = smul.addr %s185, 45
        %s187 = smul.addr %s186, 4
        %s188 = scalar_lea.vmem %s0, %s187
      $region32: #{_double_conv_impl.3} parent=27 // pred_fallthru
        _
    $region28: #{_double_conv_impl.3} parent=5 // pred_fallthru
      _
    %p189 = scmp.le.s32.totalorder 1, %s12
    %p190 = scmp.lt.s32.totalorder %s12, 3
    %p191 = pnand %p189, %p190
    %p192 = pneg %p191
    // Predicated region
    $region33: #{_double_conv_impl.3} parent=5 // pred_check
      _
    $region34: #{_double_conv_impl.3} parent=5 // pred_check_branch
      %194 = sbr.rel (%p191) target = $region36
    $region35: #{_double_conv_impl.3} parent=5 // pred_region
      %s195 = ssub.s32 %s12, 1
      %p196 = scmp.lt.s32.totalorder %s17, 1
      %s197 = scalar_select %p196, %s17, 1
      %s198 = smul.addr %s197, 45
      %s199 = smul.addr %s198, 4
      %s200 = scalar_lea.vmem %s0, %s199
      %p201 = pneg %p38
      %p202 = pneg %p35
      %p203 = pneg %p59
      %p204 = pneg %p56
      %p205 = pneg %p80
      %p206 = pneg %p77
      %p207 = pneg %p101
      %p208 = pneg %p98
      %p209 = pneg %p127
      %p210 = pneg %p124
      %p211 = scmp.lt.s32.totalorder %s17, 1
      %s212 = scalar_select %p211, %s17, 1
      %s213 = smul.addr %s212, 45
      %s214 = smul.addr %s213, 4
      %s215 = scalar_lea.vmem %s4, %s214
      %p216 = pneg %p153
      %p217 = pneg %p150
      %p218 = scmp.lt.s32.totalorder %s17, 1
      %s219 = scalar_select %p218, %s17, 1
      %s220 = smul.addr %s219, 2
      %s221 = scalar_lea.vmem %s5, %s220
      %p222 = scmp.lt.s32.totalorder %s17, 1
      %s223 = scalar_select %p222, %s17, 1
      %s224 = smul.addr %s223, 45
      %s225 = smul.addr %s224, 4
      %s226 = scalar_lea.vmem %s0, %s225
      %p227 = scmp.lt.s32.totalorder %s17, 1
      %s228 = scalar_select %p227, %s17, 1
      %s229 = smul.addr %s228, 45
      %s230 = smul.addr %s229, 4
      %s231 = scalar_lea.vmem %s4, %s230
      %p232 = scmp.lt.s32.totalorder %s17, 1
      %s233 = scalar_select %p232, %s17, 1
      %s234 = smul.addr %s233, 2
      %s235 = scalar_lea.vmem %s5, %s234
      %v237 = vld [vmem:[%s226] sm:$0xf]
      %v238 = vld [vmem:[%s226 + $0x4] sm:$0xf]
      %v239 = vld [vmem:[%s226 + $0x8] sm:$0xf]
      %v240 = vld [vmem:[%s226 + $0xc] sm:$0xf]
      %v241 = vld [vmem:[%s226 + $0x10] sm:$0xf]
      %v242 = vld [vmem:[%s226 + $0x14] sm:$0xf]
      %v243 = vld [vmem:[%s226 + $0x18] sm:$0xf]
      %v244 = vld [vmem:[%s226 + $0x1c] sm:$0xf]
      %v245 = vld [vmem:[%s226 + $0x20] sm:$0xf]
      %v246 = vld [vmem:[%s226 + $0x24] sm:$0xf]
      %v247 = vld [vmem:[%s226 + $0x28] sm:$0xf]
      %v248 = vld [vmem:[%s226 + $0x2c] sm:$0xf]
      %v249 = vld [vmem:[%s226 + $0x30] sm:$0xf]
      %v250 = vld [vmem:[%s226 + $0x34] sm:$0xf]
      %v251 = vld [vmem:[%s226 + $0x38] sm:$0xf]
      %v252 = vld [vmem:[%s226 + $0x3c] sm:$0xf]
      %v253 = vld [vmem:[%s226 + $0x40] sm:$0xf]
      %v254 = vld [vmem:[%s226 + $0x44] sm:$0xf]
      %v255 = vld [vmem:[%s226 + $0x48] sm:$0xf]
      %v256 = vld [vmem:[%s226 + $0x4c] sm:$0xf]
      %v257 = vld [vmem:[%s226 + $0x50] sm:$0xf]
      %v258 = vld [vmem:[%s226 + $0x54] sm:$0xf]
      %v259 = vld [vmem:[%s226 + $0x58] sm:$0xf]
      %v260 = vld [vmem:[%s226 + $0x5c] sm:$0xf]
      %v261 = vld [vmem:[%s226 + $0x60] sm:$0xf]
      %v262 = vld [vmem:[%s226 + $0x64] sm:$0xf]
      %v263 = vld [vmem:[%s226 + $0x68] sm:$0xf]
      %v264 = vld [vmem:[%s226 + $0x6c] sm:$0xf]
      %v265 = vld [vmem:[%s226 + $0x70] sm:$0xf]
      %v266 = vld [vmem:[%s226 + $0x74] sm:$0xf]
      %v267 = vld [vmem:[%s226 + $0x78] sm:$0xf]
      %v268 = vld [vmem:[%s226 + $0x7c] sm:$0xf]
      %v269 = vld [vmem:[%s226 + $0x80] sm:$0xf]
      %v270 = vld [vmem:[%s226 + $0x84] sm:$0xf]
      %v271 = vld [vmem:[%s226 + $0x88] sm:$0xf]
      %v272 = vld [vmem:[%s226 + $0x8c] sm:$0xf]
      %v273 = vld [vmem:[%s226 + $0x90] sm:$0xf]
      %v274 = vld [vmem:[%s226 + $0x94] sm:$0xf]
      %v275 = vld [vmem:[%s226 + $0x98] sm:$0xf]
      %v276 = vld [vmem:[%s226 + $0x9c] sm:$0xf]
      %v277 = vld [vmem:[%s226 + $0xa0] sm:$0xf]
      %v278 = vld [vmem:[%s1] sm:$0xf]
      %s279 = scalar_lea.vmem %s1, 4
      %v280 = vld [vmem:[%s279] sm:$0xf]
      %v318 = vunpack.c.l.b16 %v237
      %v319 = vunpack.c.l.b16 %v238
      %v320 = vunpack.c.l.b16 %v239
      %v321 = vunpack.c.l.b16 %v240
      %v322 = vunpack.c.l.b16 %v241
      %v323 = vunpack.c.l.b16 %v242
      %v324 = vunpack.c.l.b16 %v243
      %v325 = vunpack.c.l.b16 %v244
      %v326 = vunpack.c.l.b16 %v245
      %v327 = vunpack.c.l.b16 %v246
      %v328 = vunpack.c.l.b16 %v247
      %v329 = vunpack.c.l.b16 %v248
      %v330 = vunpack.c.l.b16 %v249
      %v331 = vunpack.c.l.b16 %v250
      %v332 = vunpack.c.l.b16 %v251
      %v333 = vunpack.c.l.b16 %v252
      %v334 = vunpack.c.l.b16 %v253
      %v335 = vunpack.c.l.b16 %v254
      %v336 = vunpack.c.l.b16 %v255
      %v337 = vunpack.c.l.b16 %v256
      %v338 = vunpack.c.l.b16 %v257
      %v339 = vunpack.c.l.b16 %v258
      %v340 = vunpack.c.l.b16 %v259
      %v341 = vunpack.c.l.b16 %v260
      %v342 = vunpack.c.l.b16 %v261
      %v343 = vunpack.c.l.b16 %v262
      %v344 = vunpack.c.l.b16 %v263
      %v345 = vunpack.c.l.b16 %v264
      %v346 = vunpack.c.l.b16 %v265
      %v347 = vunpack.c.l.b16 %v266
      %v348 = vunpack.c.l.b16 %v267
      %v349 = vunpack.c.l.b16 %v268
      %v350 = vunpack.c.l.b16 %v269
      %v351 = vunpack.c.l.b16 %v270
      %v352 = vunpack.c.l.b16 %v271
      %v353 = vunpack.c.l.b16 %v272
      %v354 = vunpack.c.l.b16 %v273
      %v355 = vpack.c.b16 %v319, %v318
      %v356 = vpack.c.b16 %v321, %v320
      %v357 = vpack.c.b16 %v323, %v322
      %v358 = vpack.c.b16 %v325, %v324
      %v359 = vpack.c.b16 %v327, %v326
      %v360 = vpack.c.b16 %v329, %v328
      %v361 = vpack.c.b16 %v331, %v330
      %v362 = vpack.c.b16 %v333, %v332
      %v363 = vpack.c.b16 %v335, %v334
      %v364 = vpack.c.b16 %v337, %v336
      %v365 = vpack.c.b16 %v339, %v338
      %v366 = vpack.c.b16 %v341, %v340
      %v367 = vpack.c.b16 %v343, %v342
      %v368 = vpack.c.b16 %v345, %v344
      %v369 = vpack.c.b16 %v347, %v346
      %v370 = vpack.c.b16 %v349, %v348
      %v371 = vpack.c.b16 %v351, %v350
      %v372 = vpack.c.b16 %v353, %v352
      %v373 = vpack.c.b16 %v354, %v354
      %vm374 = vsmask.f32 7424
      %v376 = vshrl.u32 %v355, 16
      %v378 = vshll.u32 %v355, 16
      %v380 = vrot.slane %v378, 1
      %v381 = vor.u32 %v376, %v380
      %v383 = vshll.u32 %v356, 16
      %v385 = vrot.slane %v383, 1
      %v386 = vsel %vm374, %v381, %v385
      %v387 = vshrl.u32 %v356, 16
      %v389 = vor.u32 %v387, %v385
      %v391 = vshll.u32 %v357, 16
      %v393 = vrot.slane %v391, 1
      %v394 = vsel %vm374, %v389, %v393
      %v395 = vshrl.u32 %v357, 16
      %v397 = vor.u32 %v395, %v393
      %v399 = vshll.u32 %v358, 16
      %v401 = vrot.slane %v399, 1
      %v402 = vsel %vm374, %v397, %v401
      %v403 = vshrl.u32 %v358, 16
      %v405 = vor.u32 %v403, %v401
      %v407 = vshll.u32 %v359, 16
      %v409 = vrot.slane %v407, 1
      %v410 = vsel %vm374, %v405, %v409
      %v411 = vshrl.u32 %v359, 16
      %v413 = vor.u32 %v411, %v409
      %v415 = vshll.u32 %v360, 16
      %v417 = vrot.slane %v415, 1
      %v418 = vsel %vm374, %v413, %v417
      %v419 = vshrl.u32 %v360, 16
      %v421 = vor.u32 %v419, %v417
      %v423 = vshll.u32 %v361, 16
      %v425 = vrot.slane %v423, 1
      %v426 = vsel %vm374, %v421, %v425
      %v427 = vshrl.u32 %v361, 16
      %v429 = vor.u32 %v427, %v425
      %v431 = vshll.u32 %v362, 16
      %v433 = vrot.slane %v431, 1
      %v434 = vsel %vm374, %v429, %v433
      %v435 = vshrl.u32 %v362, 16
      %v437 = vor.u32 %v435, %v433
      %v439 = vshll.u32 %v363, 16
      %v441 = vrot.slane %v439, 1
      %v442 = vsel %vm374, %v437, %v441
      %v443 = vshrl.u32 %v363, 16
      %v445 = vor.u32 %v443, %v441
      %v447 = vshll.u32 %v364, 16
      %v449 = vrot.slane %v447, 1
      %v450 = vsel %vm374, %v445, %v449
      %v451 = vshrl.u32 %v364, 16
      %v453 = vor.u32 %v451, %v449
      %v455 = vshll.u32 %v365, 16
      %v457 = vrot.slane %v455, 1
      %v458 = vsel %vm374, %v453, %v457
      %v459 = vshrl.u32 %v365, 16
      %v461 = vor.u32 %v459, %v457
      %v463 = vshll.u32 %v366, 16
      %v465 = vrot.slane %v463, 1
      %v466 = vsel %vm374, %v461, %v465
      %v467 = vshrl.u32 %v366, 16
      %v469 = vor.u32 %v467, %v465
      %v471 = vshll.u32 %v367, 16
      %v473 = vrot.slane %v471, 1
      %v474 = vsel %vm374, %v469, %v473
      %v475 = vshrl.u32 %v367, 16
      %v477 = vor.u32 %v475, %v473
      %v479 = vshll.u32 %v368, 16
      %v481 = vrot.slane %v479, 1
      %v482 = vsel %vm374, %v477, %v481
      %v483 = vshrl.u32 %v368, 16
      %v485 = vor.u32 %v483, %v481
      %v487 = vshll.u32 %v369, 16
      %v489 = vrot.slane %v487, 1
      %v490 = vsel %vm374, %v485, %v489
      %v491 = vshrl.u32 %v369, 16
      %v493 = vor.u32 %v491, %v489
      %v495 = vshll.u32 %v370, 16
      %v497 = vrot.slane %v495, 1
      %v498 = vsel %vm374, %v493, %v497
      %v499 = vshrl.u32 %v370, 16
      %v501 = vor.u32 %v499, %v497
      %v503 = vshll.u32 %v371, 16
      %v505 = vrot.slane %v503, 1
      %v506 = vsel %vm374, %v501, %v505
      %v507 = vshrl.u32 %v371, 16
      %v509 = vor.u32 %v507, %v505
      %v511 = vshll.u32 %v372, 16
      %v513 = vrot.slane %v511, 1
      %v514 = vsel %vm374, %v509, %v513
      %v515 = vshrl.u32 %v372, 16
      %v517 = vor.u32 %v515, %v513
      %v519 = vshll.u32 %v373, 16
      %v521 = vrot.slane %v519, 1
      %v522 = vsel %vm374, %v517, %v521
      %vm523 = vcmask 64512
      %v525 = vsel %vm523, %v386, 0
      %v528 = vsel %vm523, %v394, 0
      %v531 = vsel %vm523, %v402, 0
      %v534 = vsel %vm523, %v410, 0
      %v537 = vsel %vm523, %v418, 0
      %v540 = vsel %vm523, %v426, 0
      %v543 = vsel %vm523, %v434, 0
      %v546 = vsel %vm523, %v442, 0
      %v549 = vsel %vm523, %v450, 0
      %v552 = vsel %vm523, %v458, 0
      %v555 = vsel %vm523, %v466, 0
      %v558 = vsel %vm523, %v474, 0
      %v561 = vsel %vm523, %v482, 0
      %v564 = vsel %vm523, %v490, 0
      %v567 = vsel %vm523, %v498, 0
      %v570 = vsel %vm523, %v506, 0
      %v573 = vsel %vm523, %v514, 0
      %v576 = vsel %vm523, %v522, 0
      %vm578 = vcmask 1043456
      %v580 = vsel %vm578, %v280, 0
      %582 = vmatprep.subr.bf16.mxu0 0
      %583 = vmatpush1.bf16.msra.mxu0 %v580
      %584 = vmatprep.subr.bf16.mxu0 0
      %585 = vmatpush1.bf16.msra.mxu0 0
      %586 = vmatprep.subr.bf16.mxu0 0
      %587 = vmatpush1.bf16.msra.mxu0 0
      %588 = vmatprep.subr.bf16.mxu0 0
      %589 = vmatpush1.bf16.msra.mxu0 0
      %590 = vmatprep.subr.bf16.mxu0 0
      %591 = vmatpush1.bf16.msra.mxu0 0
      %592 = vmatprep.subr.bf16.mxu0 0
      %593 = vmatpush1.bf16.msra.mxu0 0
      %594 = vmatprep.subr.bf16.mxu0 0
      %595 = vmatpush1.bf16.msra.mxu0 0
      %596 = vmatprep.subr.bf16.mxu0 0
      %597 = vmatpush1.bf16.msra.mxu0 0
      %598 = vmatprep.subr.bf16.mxu0 0
      %599 = vmatpush1.bf16.msra.mxu0 0
      %600 = vmatprep.subr.bf16.mxu0 0
      %601 = vmatpush1.bf16.msra.mxu0 0
      %602 = vmatprep.subr.bf16.mxu0 0
      %603 = vmatpush1.bf16.msra.mxu0 0
      %604 = vmatprep.subr.bf16.mxu0 0
      %605 = vmatpush1.bf16.msra.mxu0 0
      %606 = vmatprep.subr.bf16.mxu0 0
      %607 = vmatpush1.bf16.msra.mxu0 0
      %608 = vmatprep.subr.bf16.mxu0 0
      %609 = vmatpush1.bf16.msra.mxu0 0
      %610 = vmatprep.subr.bf16.mxu0 0
      %611 = vmatpush1.bf16.msra.mxu0 0
      %612 = vmatprep.subr.bf16.mxu0 0
      %613 = vmatpush1.bf16.msra.mxu0 0
      %614 = vmatprep.mubr.bf16.mxu0 0
      %615 = vmatmul.mubr.bf16.gmra.mrb[0].mxu0 %v525
      %v616 = vpop.f32.mrb[0].mxu0
      %v617 = vadd.f32 0.0, %v616
      %v618 = vpop.f32.mrb[0].mxu0
      %v619 = vpop.f32.mrb[0].mxu0
      %v620 = vadd.f32 0.0, %v619
      %v621 = vpop.f32.mrb[0].mxu0
      %622 = vmatprep.mubr.bf16.mxu0 0
      %623 = vmatmul.mubr.bf16.gmra.mrb[0].mxu0 %v528
      %v624 = vpop.f32.mrb[0].mxu0
      %v625 = vadd.f32 0.0, %v624
      %v626 = vpop.f32.mrb[0].mxu0
      %v627 = vpop.f32.mrb[0].mxu0
      %v628 = vadd.f32 0.0, %v627
      %v629 = vpop.f32.mrb[0].mxu0
      %630 = vmatprep.mubr.bf16.mxu0 0
      %631 = vmatmul.mubr.bf16.gmra.mrb[0].mxu0 %v531
      %v632 = vpop.f32.mrb[0].mxu0
      %v633 = vadd.f32 0.0, %v632
      %v634 = vpop.f32.mrb[0].mxu0
      %v635 = vpop.f32.mrb[0].mxu0
      %v636 = vadd.f32 0.0, %v635
      %v637 = vpop.f32.mrb[0].mxu0
      %638 = vmatprep.mubr.bf16.mxu0 0
      %639 = vmatmul.mubr.bf16.gmra.mrb[0].mxu0 %v534
      %v640 = vpop.f32.mrb[0].mxu0
      %v641 = vadd.f32 0.0, %v640
      %v642 = vpop.f32.mrb[0].mxu0
      %v643 = vpop.f32.mrb[0].mxu0
      %v644 = vadd.f32 0.0, %v643
      %v645 = vpop.f32.mrb[0].mxu0
      %646 = vmatprep.mubr.bf16.mxu0 0
      %647 = vmatmul.mubr.bf16.gmra.mrb[0].mxu0 %v537
      %v648 = vpop.f32.mrb[0].mxu0
      %v649 = vadd.f32 0.0, %v648
      %v650 = vpop.f32.mrb[0].mxu0
      %v651 = vpop.f32.mrb[0].mxu0
      %v652 = vadd.f32 0.0, %v651
      %v653 = vpop.f32.mrb[0].mxu0
      %654 = vmatprep.mubr.bf16.mxu0 0
      %655 = vmatmul.mubr.bf16.gmra.mrb[0].mxu0 %v540
      %v656 = vpop.f32.mrb[0].mxu0
      %v657 = vadd.f32 0.0, %v656
      %v658 = vpop.f32.mrb[0].mxu0
      %v659 = vpop.f32.mrb[0].mxu0
      %v660 = vadd.f32 0.0, %v659
      %v661 = vpop.f32.mrb[0].mxu0
      %662 = vmatprep.mubr.bf16.mxu0 0
      %663 = vmatmul.mubr.bf16.gmra.mrb[0].mxu0 %v543
      %v664 = vpop.f32.mrb[0].mxu0
      %v665 = vadd.f32 0.0, %v664
      %v666 = vpop.f32.mrb[0].mxu0
      %v667 = vpop.f32.mrb[0].mxu0
      %v668 = vadd.f32 0.0, %v667
      %v669 = vpop.f32.mrb[0].mxu0
      %670 = vmatprep.mubr.bf16.mxu0 0
      %671 = vmatmul.mubr.bf16.gmra.mrb[0].mxu0 %v546
      %v672 = vpop.f32.mrb[0].mxu0
      %v673 = vadd.f32 0.0, %v672
      %v674 = vpop.f32.mrb[0].mxu0
      %v675 = vpop.f32.mrb[0].mxu0
      %v676 = vadd.f32 0.0, %v675
      %v677 = vpop.f32.mrb[0].mxu0
      %678 = vmatprep.mubr.bf16.mxu0 0
      %679 = vmatmul.mubr.bf16.gmra.mrb[0].mxu0 %v549
      %v680 = vpop.f32.mrb[0].mxu0
      %v681 = vadd.f32 0.0, %v680
      %v682 = vpop.f32.mrb[0].mxu0
      %v683 = vpop.f32.mrb[0].mxu0
      %v684 = vadd.f32 0.0, %v683
      %v685 = vpop.f32.mrb[0].mxu0
      %686 = vmatprep.mubr.bf16.mxu0 0
      %687 = vmatmul.mubr.bf16.gmra.mrb[0].mxu0 %v552
      %v688 = vpop.f32.mrb[0].mxu0
      %v689 = vadd.f32 0.0, %v688
      %v690 = vpop.f32.mrb[0].mxu0
      %v691 = vpop.f32.mrb[0].mxu0
      %v692 = vadd.f32 0.0, %v691
      %v693 = vpop.f32.mrb[0].mxu0
      %694 = vmatprep.mubr.bf16.mxu0 0
      %695 = vmatmul.mubr.bf16.gmra.mrb[0].mxu0 %v555
      %v696 = vpop.f32.mrb[0].mxu0
      %v697 = vadd.f32 0.0, %v696
      %v698 = vpop.f32.mrb[0].mxu0
      %v699 = vpop.f32.mrb[0].mxu0
      %v700 = vadd.f32 0.0, %v699
      %v701 = vpop.f32.mrb[0].mxu0
      %702 = vmatprep.mubr.bf16.mxu0 0
      %703 = vmatmul.mubr.bf16.gmra.mrb[0].mxu0 %v558
      %v704 = vpop.f32.mrb[0].mxu0
      %v705 = vadd.f32 0.0, %v704
      %v706 = vpop.f32.mrb[0].mxu0
      %v707 = vpop.f32.mrb[0].mxu0
      %v708 = vadd.f32 0.0, %v707
      %v709 = vpop.f32.mrb[0].mxu0
      %710 = vmatprep.mubr.bf16.mxu0 0
      %711 = vmatmul.mubr.bf16.gmra.mrb[0].mxu0 %v561
      %v712 = vpop.f32.mrb[0].mxu0
      %v713 = vadd.f32 0.0, %v712
      %v714 = vpop.f32.mrb[0].mxu0
      %v715 = vpop.f32.mrb[0].mxu0
      %v716 = vadd.f32 0.0, %v715
      %v717 = vpop.f32.mrb[0].mxu0
      %718 = vmatprep.mubr.bf16.mxu0 0
      %719 = vmatmul.mubr.bf16.gmra.mrb[0].mxu0 %v564
      %v720 = vpop.f32.mrb[0].mxu0
      %v721 = vadd.f32 0.0, %v720
      %v722 = vpop.f32.mrb[0].mxu0
      %v723 = vpop.f32.mrb[0].mxu0
      %v724 = vadd.f32 0.0, %v723
      %v725 = vpop.f32.mrb[0].mxu0
      %726 = vmatprep.mubr.bf16.mxu0 0
      %727 = vmatmul.mubr.bf16.gmra.mrb[0].mxu0 %v567
      %v728 = vpop.f32.mrb[0].mxu0
      %v729 = vadd.f32 0.0, %v728
      %v730 = vpop.f32.mrb[0].mxu0
      %v731 = vpop.f32.mrb[0].mxu0
      %v732 = vadd.f32 0.0, %v731
      %v733 = vpop.f32.mrb[0].mxu0
      %734 = vmatprep.mubr.bf16.mxu0 0
      %735 = vmatmul.mubr.bf16.gmra.mrb[0].mxu0 %v570
      %v736 = vpop.f32.mrb[0].mxu0
      %v737 = vadd.f32 0.0, %v736
      %v738 = vpop.f32.mrb[0].mxu0
      %v739 = vpop.f32.mrb[0].mxu0
      %v740 = vadd.f32 0.0, %v739
      %v741 = vpop.f32.mrb[0].mxu0
      %742 = vmatprep.mubr.bf16.mxu0 0
      %743 = vmatmul.mubr.bf16.gmra.mrb[0].mxu0 %v573
      %v744 = vpop.f32.mrb[0].mxu0
      %v745 = vadd.f32 0.0, %v744
      %v746 = vpop.f32.mrb[0].mxu0
      %v747 = vpop.f32.mrb[0].mxu0
      %v748 = vadd.f32 0.0, %v747
      %v749 = vpop.f32.mrb[0].mxu0
      %750 = vmatprep.mubr.bf16.mxu0 0
      %751 = vmatmul.mubr.bf16.gmra.mrb[0].mxu0 %v576
      %v752 = vpop.f32.mrb[0].mxu0
      %v753 = vadd.f32 0.0, %v752
      %v754 = vpop.f32.mrb[0].mxu0
      %v755 = vpop.f32.mrb[0].mxu0
      %v756 = vadd.f32 0.0, %v755
      %v757 = vpop.f32.mrb[0].mxu0
      %758 = vdwg.mxu0
      %v759 = vsel %vm523, %v355, 0
      %v761 = vsel %vm523, %v356, 0
      %v763 = vsel %vm523, %v357, 0
      %v765 = vsel %vm523, %v358, 0
      %v767 = vsel %vm523, %v359, 0
      %v769 = vsel %vm523, %v360, 0
      %v771 = vsel %vm523, %v361, 0
      %v773 = vsel %vm523, %v362, 0
      %v775 = vsel %vm523, %v363, 0
      %v777 = vsel %vm523, %v364, 0
      %v779 = vsel %vm523, %v365, 0
      %v781 = vsel %vm523, %v366, 0
      %v783 = vsel %vm523, %v367, 0
      %v785 = vsel %vm523, %v368, 0
      %v787 = vsel %vm523, %v369, 0
      %v789 = vsel %vm523, %v370, 0
      %v791 = vsel %vm523, %v371, 0
      %v793 = vsel %vm523, %v372, 0
      %v796 = vsel %vm578, %v278, 0
      %798 = vmatprep.subr.bf16.mxu0 0
      %799 = vmatpush1.bf16.msra.mxu0 %v796
      %800 = vmatprep.subr.bf16.mxu0 0
      %801 = vmatpush1.bf16.msra.mxu0 0
      %802 = vmatprep.subr.bf16.mxu0 0
      %803 = vmatpush1.bf16.msra.mxu0 0
      %804 = vmatprep.subr.bf16.mxu0 0
      %805 = vmatpush1.bf16.msra.mxu0 0
      %806 = vmatprep.subr.bf16.mxu0 0
      %807 = vmatpush1.bf16.msra.mxu0 0
      %808 = vmatprep.subr.bf16.mxu0 0
      %809 = vmatpush1.bf16.msra.mxu0 0
      %810 = vmatprep.subr.bf16.mxu0 0
      %811 = vmatpush1.bf16.msra.mxu0 0
      %812 = vmatprep.subr.bf16.mxu0 0
      %813 = vmatpush1.bf16.msra.mxu0 0
      %814 = vmatprep.subr.bf16.mxu0 0
      %815 = vmatpush1.bf16.msra.mxu0 0
      %816 = vmatprep.subr.bf16.mxu0 0
      %817 = vmatpush1.bf16.msra.mxu0 0
      %818 = vmatprep.subr.bf16.mxu0 0
      %819 = vmatpush1.bf16.msra.mxu0 0
      %820 = vmatprep.subr.bf16.mxu0 0
      %821 = vmatpush1.bf16.msra.mxu0 0
      %822 = vmatprep.subr.bf16.mxu0 0
      %823 = vmatpush1.bf16.msra.mxu0 0
      %824 = vmatprep.subr.bf16.mxu0 0
      %825 = vmatpush1.bf16.msra.mxu0 0
      %826 = vmatprep.subr.bf16.mxu0 0
      %827 = vmatpush1.bf16.msra.mxu0 0
      %828 = vmatprep.subr.bf16.mxu0 0
      %829 = vmatpush1.bf16.msra.mxu0 0
      %830 = vmatprep.mubr.bf16.mxu0 0
      %831 = vmatmul.mubr.bf16.gmra.mrb[0].mxu0 %v759
      %v832 = vpop.f32.mrb[0].mxu0
      %v833 = vadd.f32 %v617, %v832
      %v834 = vpop.f32.mrb[0].mxu0
      %v835 = vpop.f32.mrb[0].mxu0
      %v836 = vadd.f32 %v620, %v835
      %v837 = vpop.f32.mrb[0].mxu0
      %838 = vmatprep.mubr.bf16.mxu0 0
      %839 = vmatmul.mubr.bf16.gmra.mrb[0].mxu0 %v761
      %v840 = vpop.f32.mrb[0].mxu0
      %v841 = vadd.f32 %v625, %v840
      %v842 = vpop.f32.mrb[0].mxu0
      %v843 = vpop.f32.mrb[0].mxu0
      %v844 = vadd.f32 %v628, %v843
      %v845 = vpop.f32.mrb[0].mxu0
      %846 = vmatprep.mubr.bf16.mxu0 0
      %847 = vmatmul.mubr.bf16.gmra.mrb[0].mxu0 %v763
      %v848 = vpop.f32.mrb[0].mxu0
      %v849 = vadd.f32 %v633, %v848
      %v850 = vpop.f32.mrb[0].mxu0
      %v851 = vpop.f32.mrb[0].mxu0
      %v852 = vadd.f32 %v636, %v851
      %v853 = vpop.f32.mrb[0].mxu0
      %854 = vmatprep.mubr.bf16.mxu0 0
      %855 = vmatmul.mubr.bf16.gmra.mrb[0].mxu0 %v765
      %v856 = vpop.f32.mrb[0].mxu0
      %v857 = vadd.f32 %v641, %v856
      %v858 = vpop.f32.mrb[0].mxu0
      %v859 = vpop.f32.mrb[0].mxu0
      %v860 = vadd.f32 %v644, %v859
      %v861 = vpop.f32.mrb[0].mxu0
      %862 = vmatprep.mubr.bf16.mxu0 0
      %863 = vmatmul.mubr.bf16.gmra.mrb[0].mxu0 %v767
      %v864 = vpop.f32.mrb[0].mxu0
      %v865 = vadd.f32 %v649, %v864
      %v866 = vpop.f32.mrb[0].mxu0
      %v867 = vpop.f32.mrb[0].mxu0
      %v868 = vadd.f32 %v652, %v867
      %v869 = vpop.f32.mrb[0].mxu0
      %870 = vmatprep.mubr.bf16.mxu0 0
      %871 = vmatmul.mubr.bf16.gmra.mrb[0].mxu0 %v769
      %v872 = vpop.f32.mrb[0].mxu0
      %v873 = vadd.f32 %v657, %v872
      %v874 = vpop.f32.mrb[0].mxu0
      %v875 = vpop.f32.mrb[0].mxu0
      %v876 = vadd.f32 %v660, %v875
      %v877 = vpop.f32.mrb[0].mxu0
      %878 = vmatprep.mubr.bf16.mxu0 0
      %879 = vmatmul.mubr.bf16.gmra.mrb[0].mxu0 %v771
      %v880 = vpop.f32.mrb[0].mxu0
      %v881 = vadd.f32 %v665, %v880
      %v882 = vpop.f32.mrb[0].mxu0
      %v883 = vpop.f32.mrb[0].mxu0
      %v884 = vadd.f32 %v668, %v883
      %v885 = vpop.f32.mrb[0].mxu0
      %886 = vmatprep.mubr.bf16.mxu0 0
      %887 = vmatmul.mubr.bf16.gmra.mrb[0].mxu0 %v773
      %v888 = vpop.f32.mrb[0].mxu0
      %v889 = vadd.f32 %v673, %v888
      %v890 = vpop.f32.mrb[0].mxu0
      %v891 = vpop.f32.mrb[0].mxu0
      %v892 = vadd.f32 %v676, %v891
      %v893 = vpop.f32.mrb[0].mxu0
      %894 = vmatprep.mubr.bf16.mxu0 0
      %895 = vmatmul.mubr.bf16.gmra.mrb[0].mxu0 %v775
      %v896 = vpop.f32.mrb[0].mxu0
      %v897 = vadd.f32 %v681, %v896
      %v898 = vpop.f32.mrb[0].mxu0
      %v899 = vpop.f32.mrb[0].mxu0
      %v900 = vadd.f32 %v684, %v899
      %v901 = vpop.f32.mrb[0].mxu0
      %902 = vmatprep.mubr.bf16.mxu0 0
      %903 = vmatmul.mubr.bf16.gmra.mrb[0].mxu0 %v777
      %v904 = vpop.f32.mrb[0].mxu0
      %v905 = vadd.f32 %v689, %v904
      %v906 = vpop.f32.mrb[0].mxu0
      %v907 = vpop.f32.mrb[0].mxu0
      %v908 = vadd.f32 %v692, %v907
      %v909 = vpop.f32.mrb[0].mxu0
      %910 = vmatprep.mubr.bf16.mxu0 0
      %911 = vmatmul.mubr.bf16.gmra.mrb[0].mxu0 %v779
      %v912 = vpop.f32.mrb[0].mxu0
      %v913 = vadd.f32 %v697, %v912
      %v914 = vpop.f32.mrb[0].mxu0
      %v915 = vpop.f32.mrb[0].mxu0
      %v916 = vadd.f32 %v700, %v915
      %v917 = vpop.f32.mrb[0].mxu0
      %918 = vmatprep.mubr.bf16.mxu0 0
      %919 = vmatmul.mubr.bf16.gmra.mrb[0].mxu0 %v781
      %v920 = vpop.f32.mrb[0].mxu0
      %v921 = vadd.f32 %v705, %v920
      %v922 = vpop.f32.mrb[0].mxu0
      %v923 = vpop.f32.mrb[0].mxu0
      %v924 = vadd.f32 %v708, %v923
      %v925 = vpop.f32.mrb[0].mxu0
      %926 = vmatprep.mubr.bf16.mxu0 0
      %927 = vmatmul.mubr.bf16.gmra.mrb[0].mxu0 %v783
      %v928 = vpop.f32.mrb[0].mxu0
      %v929 = vadd.f32 %v713, %v928
      %v930 = vpop.f32.mrb[0].mxu0
      %v931 = vpop.f32.mrb[0].mxu0
      %v932 = vadd.f32 %v716, %v931
      %v933 = vpop.f32.mrb[0].mxu0
      %934 = vmatprep.mubr.bf16.mxu0 0
      %935 = vmatmul.mubr.bf16.gmra.mrb[0].mxu0 %v785
      %v936 = vpop.f32.mrb[0].mxu0
      %v937 = vadd.f32 %v721, %v936
      %v938 = vpop.f32.mrb[0].mxu0
      %v939 = vpop.f32.mrb[0].mxu0
      %v940 = vadd.f32 %v724, %v939
      %v941 = vpop.f32.mrb[0].mxu0
      %942 = vmatprep.mubr.bf16.mxu0 0
      %943 = vmatmul.mubr.bf16.gmra.mrb[0].mxu0 %v787
      %v944 = vpop.f32.mrb[0].mxu0
      %v945 = vadd.f32 %v729, %v944
      %v946 = vpop.f32.mrb[0].mxu0
      %v947 = vpop.f32.mrb[0].mxu0
      %v948 = vadd.f32 %v732, %v947
      %v949 = vpop.f32.mrb[0].mxu0
      %950 = vmatprep.mubr.bf16.mxu0 0
      %951 = vmatmul.mubr.bf16.gmra.mrb[0].mxu0 %v789
      %v952 = vpop.f32.mrb[0].mxu0
      %v953 = vadd.f32 %v737, %v952
      %v954 = vpop.f32.mrb[0].mxu0
      %v955 = vpop.f32.mrb[0].mxu0
      %v956 = vadd.f32 %v740, %v955
      %v957 = vpop.f32.mrb[0].mxu0
      %958 = vmatprep.mubr.bf16.mxu0 0
      %959 = vmatmul.mubr.bf16.gmra.mrb[0].mxu0 %v791
      %v960 = vpop.f32.mrb[0].mxu0
      %v961 = vadd.f32 %v745, %v960
      %v962 = vpop.f32.mrb[0].mxu0
      %v963 = vpop.f32.mrb[0].mxu0
      %v964 = vadd.f32 %v748, %v963
      %v965 = vpop.f32.mrb[0].mxu0
      %966 = vmatprep.mubr.bf16.mxu0 0
      %967 = vmatmul.mubr.bf16.gmra.mrb[0].mxu0 %v793
      %v968 = vpop.f32.mrb[0].mxu0
      %v969 = vadd.f32 %v753, %v968
      %v970 = vpop.f32.mrb[0].mxu0
      %v971 = vpop.f32.mrb[0].mxu0
      %v972 = vadd.f32 %v756, %v971
      %v973 = vpop.f32.mrb[0].mxu0
      %974 = vdwg.mxu0
      %s975 = scalar_lea.vmem %s1, 8
      %v976 = vld [vmem:[%s975] sm:$0xf]
      %vm977 = vcmask 1046528
      %v978 = vrot.slane %v355, 1
      %v979 = vrot.slane %v356, 1
      %v980 = vsel %vm977, %v978, %v979
      %v981 = vrot.slane %v357, 1
      %v982 = vsel %vm977, %v979, %v981
      %v983 = vrot.slane %v358, 1
      %v984 = vsel %vm977, %v981, %v983
      %v985 = vrot.slane %v359, 1
      %v986 = vsel %vm977, %v983, %v985
      %v987 = vrot.slane %v360, 1
      %v988 = vsel %vm977, %v985, %v987
      %v989 = vrot.slane %v361, 1
      %v990 = vsel %vm977, %v987, %v989
      %v991 = vrot.slane %v362, 1
      %v992 = vsel %vm977, %v989, %v991
      %v993 = vrot.slane %v363, 1
      %v994 = vsel %vm977, %v991, %v993
      %v995 = vrot.slane %v364, 1
      %v996 = vsel %vm977, %v993, %v995
      %v997 = vrot.slane %v365, 1
      %v998 = vsel %vm977, %v995, %v997
      %v999 = vrot.slane %v366, 1
      %v1000 = vsel %vm977, %v997, %v999
      %v1001 = vrot.slane %v367, 1
      %v1002 = vsel %vm977, %v999, %v1001
      %v1003 = vrot.slane %v368, 1
      %v1004 = vsel %vm977, %v1001, %v1003
      %v1005 = vrot.slane %v369, 1
      %v1006 = vsel %vm977, %v1003, %v1005
      %v1007 = vrot.slane %v370, 1
      %v1008 = vsel %vm977, %v1005, %v1007
      %v1009 = vrot.slane %v371, 1
      %v1010 = vsel %vm977, %v1007, %v1009
      %v1011 = vrot.slane %v372, 1
      %v1012 = vsel %vm977, %v1009, %v1011
      %v1013 = vrot.slane %v373, 1
      %v1014 = vsel %vm977, %v1011, %v1013
      %v1016 = vsel %vm523, %v980, 0
      %v1019 = vsel %vm523, %v982, 0
      %v1022 = vsel %vm523, %v984, 0
      %v1025 = vsel %vm523, %v986, 0
      %v1028 = vsel %vm523, %v988, 0
      %v1031 = vsel %vm523, %v990, 0
      %v1034 = vsel %vm523, %v992, 0
      %v1037 = vsel %vm523, %v994, 0
      %v1040 = vsel %vm523, %v996, 0
      %v1043 = vsel %vm523, %v998, 0
      %v1046 = vsel %vm523, %v1000, 0
      %v1049 = vsel %vm523, %v1002, 0
      %v1052 = vsel %vm523, %v1004, 0
      %v1055 = vsel %vm523, %v1006, 0
      %v1058 = vsel %vm523, %v1008, 0
      %v1061 = vsel %vm523, %v1010, 0
      %v1064 = vsel %vm523, %v1012, 0
      %v1067 = vsel %vm523, %v1014, 0
      %v1070 = vsel %vm578, %v976, 0
      %1072 = vmatprep.subr.bf16.mxu0 0
      %1073 = vmatpush1.bf16.msra.mxu0 %v1070
      %1074 = vmatprep.subr.bf16.mxu0 0
      %1075 = vmatpush1.bf16.msra.mxu0 0
      %1076 = vmatprep.subr.bf16.mxu0 0
      %1077 = vmatpush1.bf16.msra.mxu0 0
      %1078 = vmatprep.subr.bf16.mxu0 0
      %1079 = vmatpush1.bf16.msra.mxu0 0
      %1080 = vmatprep.subr.bf16.mxu0 0
      %1081 = vmatpush1.bf16.msra.mxu0 0
      %1082 = vmatprep.subr.bf16.mxu0 0
      %1083 = vmatpush1.bf16.msra.mxu0 0
      %1084 = vmatprep.subr.bf16.mxu0 0
      %1085 = vmatpush1.bf16.msra.mxu0 0
      %1086 = vmatprep.subr.bf16.mxu0 0
      %1087 = vmatpush1.bf16.msra.mxu0 0
      %1088 = vmatprep.subr.bf16.mxu0 0
      %1089 = vmatpush1.bf16.msra.mxu0 0
      %1090 = vmatprep.subr.bf16.mxu0 0
      %1091 = vmatpush1.bf16.msra.mxu0 0
      %1092 = vmatprep.subr.bf16.mxu0 0
      %1093 = vmatpush1.bf16.msra.mxu0 0
      %1094 = vmatprep.subr.bf16.mxu0 0
      %1095 = vmatpush1.bf16.msra.mxu0 0
      %1096 = vmatprep.subr.bf16.mxu0 0
      %1097 = vmatpush1.bf16.msra.mxu0 0
      %1098 = vmatprep.subr.bf16.mxu0 0
      %1099 = vmatpush1.bf16.msra.mxu0 0
      %1100 = vmatprep.subr.bf16.mxu0 0
      %1101 = vmatpush1.bf16.msra.mxu0 0
      %1102 = vmatprep.subr.bf16.mxu0 0
      %1103 = vmatpush1.bf16.msra.mxu0 0
      %1104 = vmatprep.mubr.bf16.mxu0 0
      %1105 = vmatmul.mubr.bf16.gmra.mrb[0].mxu0 %v1016
      %v1106 = vpop.f32.mrb[0].mxu0
      %v1107 = vadd.f32 0.0, %v1106
      %v1108 = vpop.f32.mrb[0].mxu0
      %v1109 = vpop.f32.mrb[0].mxu0
      %v1110 = vadd.f32 0.0, %v1109
      %v1111 = vpop.f32.mrb[0].mxu0
      %1112 = vmatprep.mubr.bf16.mxu0 0
      %1113 = vmatmul.mubr.bf16.gmra.mrb[0].mxu0 %v1019
      %v1114 = vpop.f32.mrb[0].mxu0
      %v1115 = vadd.f32 0.0, %v1114
      %v1116 = vpop.f32.mrb[0].mxu0
      %v1117 = vpop.f32.mrb[0].mxu0
      %v1118 = vadd.f32 0.0, %v1117
      %v1119 = vpop.f32.mrb[0].mxu0
      %1120 = vmatprep.mubr.bf16.mxu0 0
      %1121 = vmatmul.mubr.bf16.gmra.mrb[0].mxu0 %v1022
      %v1122 = vpop.f32.mrb[0].mxu0
      %v1123 = vadd.f32 0.0, %v1122
      %v1124 = vpop.f32.mrb[0].mxu0
      %v1125 = vpop.f32.mrb[0].mxu0
      %v1126 = vadd.f32 0.0, %v1125
      %v1127 = vpop.f32.mrb[0].mxu0
      %1128 = vmatprep.mubr.bf16.mxu0 0
      %1129 = vmatmul.mubr.bf16.gmra.mrb[0].mxu0 %v1025
      %v1130 = vpop.f32.mrb[0].mxu0
      %v1131 = vadd.f32 0.0, %v1130
      %v1132 = vpop.f32.mrb[0].mxu0
      %v1133 = vpop.f32.mrb[0].mxu0
      %v1134 = vadd.f32 0.0, %v1133
      %v1135 = vpop.f32.mrb[0].mxu0
      %1136 = vmatprep.mubr.bf16.mxu0 0
      %1137 = vmatmul.mubr.bf16.gmra.mrb[0].mxu0 %v1028
      %v1138 = vpop.f32.mrb[0].mxu0
      %v1139 = vadd.f32 0.0, %v1138
      %v1140 = vpop.f32.mrb[0].mxu0
      %v1141 = vpop.f32.mrb[0].mxu0
      %v1142 = vadd.f32 0.0, %v1141
      %v1143 = vpop.f32.mrb[0].mxu0
      %1144 = vmatprep.mubr.bf16.mxu0 0
      %1145 = vmatmul.mubr.bf16.gmra.mrb[0].mxu0 %v1031
      %v1146 = vpop.f32.mrb[0].mxu0
      %v1147 = vadd.f32 0.0, %v1146
      %v1148 = vpop.f32.mrb[0].mxu0
      %v1149 = vpop.f32.mrb[0].mxu0
      %v1150 = vadd.f32 0.0, %v1149
      %v1151 = vpop.f32.mrb[0].mxu0
      %1152 = vmatprep.mubr.bf16.mxu0 0
      %1153 = vmatmul.mubr.bf16.gmra.mrb[0].mxu0 %v1034
      %v1154 = vpop.f32.mrb[0].mxu0
      %v1155 = vadd.f32 0.0, %v1154
      %v1156 = vpop.f32.mrb[0].mxu0
      %v1157 = vpop.f32.mrb[0].mxu0
      %v1158 = vadd.f32 0.0, %v1157
      %v1159 = vpop.f32.mrb[0].mxu0
      %1160 = vmatprep.mubr.bf16.mxu0 0
      %1161 = vmatmul.mubr.bf16.gmra.mrb[0].mxu0 %v1037
      %v1162 = vpop.f32.mrb[0].mxu0
      %v1163 = vadd.f32 0.0, %v1162
      %v1164 = vpop.f32.mrb[0].mxu0
      %v1165 = vpop.f32.mrb[0].mxu0
      %v1166 = vadd.f32 0.0, %v1165
      %v1167 = vpop.f32.mrb[0].mxu0
      %1168 = vmatprep.mubr.bf16.mxu0 0
      %1169 = vmatmul.mubr.bf16.gmra.mrb[0].mxu0 %v1040
      %v1170 = vpop.f32.mrb[0].mxu0
      %v1171 = vadd.f32 0.0, %v1170
      %v1172 = vpop.f32.mrb[0].mxu0
      %v1173 = vpop.f32.mrb[0].mxu0
      %v1174 = vadd.f32 0.0, %v1173
      %v1175 = vpop.f32.mrb[0].mxu0
      %1176 = vmatprep.mubr.bf16.mxu0 0
      %1177 = vmatmul.mubr.bf16.gmra.mrb[0].mxu0 %v1043
      %v1178 = vpop.f32.mrb[0].mxu0
      %v1179 = vadd.f32 0.0, %v1178
      %v1180 = vpop.f32.mrb[0].mxu0
      %v1181 = vpop.f32.mrb[0].mxu0
      %v1182 = vadd.f32 0.0, %v1181
      %v1183 = vpop.f32.mrb[0].mxu0
      %1184 = vmatprep.mubr.bf16.mxu0 0
      %1185 = vmatmul.mubr.bf16.gmra.mrb[0].mxu0 %v1046
      %v1186 = vpop.f32.mrb[0].mxu0
      %v1187 = vadd.f32 0.0, %v1186
      %v1188 = vpop.f32.mrb[0].mxu0
      %v1189 = vpop.f32.mrb[0].mxu0
      %v1190 = vadd.f32 0.0, %v1189
      %v1191 = vpop.f32.mrb[0].mxu0
      %1192 = vmatprep.mubr.bf16.mxu0 0
      %1193 = vmatmul.mubr.bf16.gmra.mrb[0].mxu0 %v1049
      %v1194 = vpop.f32.mrb[0].mxu0
      %v1195 = vadd.f32 0.0, %v1194
      %v1196 = vpop.f32.mrb[0].mxu0
      %v1197 = vpop.f32.mrb[0].mxu0
      %v1198 = vadd.f32 0.0, %v1197
      %v1199 = vpop.f32.mrb[0].mxu0
      %1200 = vmatprep.mubr.bf16.mxu0 0
      %1201 = vmatmul.mubr.bf16.gmra.mrb[0].mxu0 %v1052
      %v1202 = vpop.f32.mrb[0].mxu0
      %v1203 = vadd.f32 0.0, %v1202
      %v1204 = vpop.f32.mrb[0].mxu0
      %v1205 = vpop.f32.mrb[0].mxu0
      %v1206 = vadd.f32 0.0, %v1205
      %v1207 = vpop.f32.mrb[0].mxu0
      %1208 = vmatprep.mubr.bf16.mxu0 0
      %1209 = vmatmul.mubr.bf16.gmra.mrb[0].mxu0 %v1055
      %v1210 = vpop.f32.mrb[0].mxu0
      %v1211 = vadd.f32 0.0, %v1210
      %v1212 = vpop.f32.mrb[0].mxu0
      %v1213 = vpop.f32.mrb[0].mxu0
      %v1214 = vadd.f32 0.0, %v1213
      %v1215 = vpop.f32.mrb[0].mxu0
      %1216 = vmatprep.mubr.bf16.mxu0 0
      %1217 = vmatmul.mubr.bf16.gmra.mrb[0].mxu0 %v1058
      %v1218 = vpop.f32.mrb[0].mxu0
      %v1219 = vadd.f32 0.0, %v1218
      %v1220 = vpop.f32.mrb[0].mxu0
      %v1221 = vpop.f32.mrb[0].mxu0
      %v1222 = vadd.f32 0.0, %v1221
      %v1223 = vpop.f32.mrb[0].mxu0
      %1224 = vmatprep.mubr.bf16.mxu0 0
      %1225 = vmatmul.mubr.bf16.gmra.mrb[0].mxu0 %v1061
      %v1226 = vpop.f32.mrb[0].mxu0
      %v1227 = vadd.f32 0.0, %v1226
      %v1228 = vpop.f32.mrb[0].mxu0
      %v1229 = vpop.f32.mrb[0].mxu0
      %v1230 = vadd.f32 0.0, %v1229
      %v1231 = vpop.f32.mrb[0].mxu0
      %1232 = vmatprep.mubr.bf16.mxu0 0
      %1233 = vmatmul.mubr.bf16.gmra.mrb[0].mxu0 %v1064
      %v1234 = vpop.f32.mrb[0].mxu0
      %v1235 = vadd.f32 0.0, %v1234
      %v1236 = vpop.f32.mrb[0].mxu0
      %v1237 = vpop.f32.mrb[0].mxu0
      %v1238 = vadd.f32 0.0, %v1237
      %v1239 = vpop.f32.mrb[0].mxu0
      %1240 = vmatprep.mubr.bf16.mxu0 0
      %1241 = vmatmul.mubr.bf16.gmra.mrb[0].mxu0 %v1067
      %v1242 = vpop.f32.mrb[0].mxu0
      %v1243 = vadd.f32 0.0, %v1242
      %v1244 = vpop.f32.mrb[0].mxu0
      %v1245 = vpop.f32.mrb[0].mxu0
      %v1246 = vadd.f32 0.0, %v1245
      %v1247 = vpop.f32.mrb[0].mxu0
      %1248 = vdwg.mxu0
      %v1249 = vadd.f32 %v833, %v1107
      %v1250 = vadd.f32 %v836, %v1110
      %v1251 = vadd.f32 %v841, %v1115
      %v1252 = vadd.f32 %v844, %v1118
      %v1253 = vadd.f32 %v849, %v1123
      %v1254 = vadd.f32 %v852, %v1126
      %v1255 = vadd.f32 %v857, %v1131
      %v1256 = vadd.f32 %v860, %v1134
      %v1257 = vadd.f32 %v865, %v1139
      %v1258 = vadd.f32 %v868, %v1142
      %v1259 = vadd.f32 %v873, %v1147
      %v1260 = vadd.f32 %v876, %v1150
      %v1261 = vadd.f32 %v881, %v1155
      %v1262 = vadd.f32 %v884, %v1158
      %v1263 = vadd.f32 %v889, %v1163
      %v1264 = vadd.f32 %v892, %v1166
      %v1265 = vadd.f32 %v897, %v1171
      %v1266 = vadd.f32 %v900, %v1174
      %v1267 = vadd.f32 %v905, %v1179
      %v1268 = vadd.f32 %v908, %v1182
      %v1269 = vadd.f32 %v913, %v1187
      %v1270 = vadd.f32 %v916, %v1190
      %v1271 = vadd.f32 %v921, %v1195
      %v1272 = vadd.f32 %v924, %v1198
      %v1273 = vadd.f32 %v929, %v1203
      %v1274 = vadd.f32 %v932, %v1206
      %v1275 = vadd.f32 %v937, %v1211
      %v1276 = vadd.f32 %v940, %v1214
      %v1277 = vadd.f32 %v945, %v1219
      %v1278 = vadd.f32 %v948, %v1222
      %v1279 = vadd.f32 %v953, %v1227
      %v1280 = vadd.f32 %v956, %v1230
      %v1281 = vadd.f32 %v961, %v1235
      %v1282 = vadd.f32 %v964, %v1238
      %v1283 = vadd.f32 %v969, %v1243
      %v1284 = vadd.f32 %v972, %v1246
      %s1285 = scalar_lea.vmem %s1, 12
      %v1286 = vld [vmem:[%s1285] sm:$0xf]
      %v1289 = vunpack.c.l.b16 %v274
      %v1290 = vunpack.c.l.b16 %v275
      %v1291 = vpack.c.b16 %v1289, %v354
      %v1292 = vpack.c.b16 %v1290, %v1290
      %v1293 = vrot.slane %v1291, 1
      %v1294 = vsel %vm977, %v1011, %v1293
      %v1295 = vrot.slane %v1292, 1
      %v1296 = vsel %vm977, %v1293, %v1295
      %v1298 = vsel %vm523, %v1294, 0
      %v1301 = vsel %vm523, %v1296, 0
      %v1304 = vsel %vm578, %v1286, 0
      %1306 = vmatprep.subr.bf16.mxu0 0
      %1307 = vmatpush1.bf16.msra.mxu0 %v1304
      %1308 = vmatprep.subr.bf16.mxu0 0
      %1309 = vmatpush1.bf16.msra.mxu0 0
      %1310 = vmatprep.subr.bf16.mxu0 0
      %1311 = vmatpush1.bf16.msra.mxu0 0
      %1312 = vmatprep.subr.bf16.mxu0 0
      %1313 = vmatpush1.bf16.msra.mxu0 0
      %1314 = vmatprep.subr.bf16.mxu0 0
      %1315 = vmatpush1.bf16.msra.mxu0 0
      %1316 = vmatprep.subr.bf16.mxu0 0
      %1317 = vmatpush1.bf16.msra.mxu0 0
      %1318 = vmatprep.subr.bf16.mxu0 0
      %1319 = vmatpush1.bf16.msra.mxu0 0
      %1320 = vmatprep.subr.bf16.mxu0 0
      %1321 = vmatpush1.bf16.msra.mxu0 0
      %1322 = vmatprep.subr.bf16.mxu0 0
      %1323 = vmatpush1.bf16.msra.mxu0 0
      %1324 = vmatprep.subr.bf16.mxu0 0
      %1325 = vmatpush1.bf16.msra.mxu0 0
      %1326 = vmatprep.subr.bf16.mxu0 0
      %1327 = vmatpush1.bf16.msra.mxu0 0
      %1328 = vmatprep.subr.bf16.mxu0 0
      %1329 = vmatpush1.bf16.msra.mxu0 0
      %1330 = vmatprep.subr.bf16.mxu0 0
      %1331 = vmatpush1.bf16.msra.mxu0 0
      %1332 = vmatprep.subr.bf16.mxu0 0
      %1333 = vmatpush1.bf16.msra.mxu0 0
      %1334 = vmatprep.subr.bf16.mxu0 0
      %1335 = vmatpush1.bf16.msra.mxu0 0
      %1336 = vmatprep.subr.bf16.mxu0 0
      %1337 = vmatpush1.bf16.msra.mxu0 0
      %1338 = vmatprep.mubr.bf16.mxu0 0
      %1339 = vmatmul.mubr.bf16.gmra.mrb[0].mxu0 %v1019
      %v1340 = vpop.f32.mrb[0].mxu0
      %v1341 = vadd.f32 0.0, %v1340
      %v1342 = vpop.f32.mrb[0].mxu0
      %v1343 = vpop.f32.mrb[0].mxu0
      %v1344 = vadd.f32 0.0, %v1343
      %v1345 = vpop.f32.mrb[0].mxu0
      %1346 = vmatprep.mubr.bf16.mxu0 0
      %1347 = vmatmul.mubr.bf16.gmra.mrb[0].mxu0 %v1022
      %v1348 = vpop.f32.mrb[0].mxu0
      %v1349 = vadd.f32 0.0, %v1348
      %v1350 = vpop.f32.mrb[0].mxu0
      %v1351 = vpop.f32.mrb[0].mxu0
      %v1352 = vadd.f32 0.0, %v1351
      %v1353 = vpop.f32.mrb[0].mxu0
      %1354 = vmatprep.mubr.bf16.mxu0 0
      %1355 = vmatmul.mubr.bf16.gmra.mrb[0].mxu0 %v1025
      %v1356 = vpop.f32.mrb[0].mxu0
      %v1357 = vadd.f32 0.0, %v1356
      %v1358 = vpop.f32.mrb[0].mxu0
      %v1359 = vpop.f32.mrb[0].mxu0
      %v1360 = vadd.f32 0.0, %v1359
      %v1361 = vpop.f32.mrb[0].mxu0
      %1362 = vmatprep.mubr.bf16.mxu0 0
      %1363 = vmatmul.mubr.bf16.gmra.mrb[0].mxu0 %v1028
      %v1364 = vpop.f32.mrb[0].mxu0
      %v1365 = vadd.f32 0.0, %v1364
      %v1366 = vpop.f32.mrb[0].mxu0
      %v1367 = vpop.f32.mrb[0].mxu0
      %v1368 = vadd.f32 0.0, %v1367
      %v1369 = vpop.f32.mrb[0].mxu0
      %1370 = vmatprep.mubr.bf16.mxu0 0
      %1371 = vmatmul.mubr.bf16.gmra.mrb[0].mxu0 %v1031
      %v1372 = vpop.f32.mrb[0].mxu0
      %v1373 = vadd.f32 0.0, %v1372
      %v1374 = vpop.f32.mrb[0].mxu0
      %v1375 = vpop.f32.mrb[0].mxu0
      %v1376 = vadd.f32 0.0, %v1375
      %v1377 = vpop.f32.mrb[0].mxu0
      %1378 = vmatprep.mubr.bf16.mxu0 0
      %1379 = vmatmul.mubr.bf16.gmra.mrb[0].mxu0 %v1034
      %v1380 = vpop.f32.mrb[0].mxu0
      %v1381 = vadd.f32 0.0, %v1380
      %v1382 = vpop.f32.mrb[0].mxu0
      %v1383 = vpop.f32.mrb[0].mxu0
      %v1384 = vadd.f32 0.0, %v1383
      %v1385 = vpop.f32.mrb[0].mxu0
      %1386 = vmatprep.mubr.bf16.mxu0 0
      %1387 = vmatmul.mubr.bf16.gmra.mrb[0].mxu0 %v1037
      %v1388 = vpop.f32.mrb[0].mxu0
      %v1389 = vadd.f32 0.0, %v1388
      %v1390 = vpop.f32.mrb[0].mxu0
      %v1391 = vpop.f32.mrb[0].mxu0
      %v1392 = vadd.f32 0.0, %v1391
      %v1393 = vpop.f32.mrb[0].mxu0
      %1394 = vmatprep.mubr.bf16.mxu0 0
      %1395 = vmatmul.mubr.bf16.gmra.mrb[0].mxu0 %v1040
      %v1396 = vpop.f32.mrb[0].mxu0
      %v1397 = vadd.f32 0.0, %v1396
      %v1398 = vpop.f32.mrb[0].mxu0
      %v1399 = vpop.f32.mrb[0].mxu0
      %v1400 = vadd.f32 0.0, %v1399
      %v1401 = vpop.f32.mrb[0].mxu0
      %1402 = vmatprep.mubr.bf16.mxu0 0
      %1403 = vmatmul.mubr.bf16.gmra.mrb[0].mxu0 %v1043
      %v1404 = vpop.f32.mrb[0].mxu0
      %v1405 = vadd.f32 0.0, %v1404
      %v1406 = vpop.f32.mrb[0].mxu0
      %v1407 = vpop.f32.mrb[0].mxu0
      %v1408 = vadd.f32 0.0, %v1407
      %v1409 = vpop.f32.mrb[0].mxu0
      %1410 = vmatprep.mubr.bf16.mxu0 0
      %1411 = vmatmul.mubr.bf16.gmra.mrb[0].mxu0 %v1046
      %v1412 = vpop.f32.mrb[0].mxu0
      %v1413 = vadd.f32 0.0, %v1412
      %v1414 = vpop.f32.mrb[0].mxu0
      %v1415 = vpop.f32.mrb[0].mxu0
      %v1416 = vadd.f32 0.0, %v1415
      %v1417 = vpop.f32.mrb[0].mxu0
      %1418 = vmatprep.mubr.bf16.mxu0 0
      %1419 = vmatmul.mubr.bf16.gmra.mrb[0].mxu0 %v1049
      %v1420 = vpop.f32.mrb[0].mxu0
      %v1421 = vadd.f32 0.0, %v1420
      %v1422 = vpop.f32.mrb[0].mxu0
      %v1423 = vpop.f32.mrb[0].mxu0
      %v1424 = vadd.f32 0.0, %v1423
      %v1425 = vpop.f32.mrb[0].mxu0
      %1426 = vmatprep.mubr.bf16.mxu0 0
      %1427 = vmatmul.mubr.bf16.gmra.mrb[0].mxu0 %v1052
      %v1428 = vpop.f32.mrb[0].mxu0
      %v1429 = vadd.f32 0.0, %v1428
      %v1430 = vpop.f32.mrb[0].mxu0
      %v1431 = vpop.f32.mrb[0].mxu0
      %v1432 = vadd.f32 0.0, %v1431
      %v1433 = vpop.f32.mrb[0].mxu0
      %1434 = vmatprep.mubr.bf16.mxu0 0
      %1435 = vmatmul.mubr.bf16.gmra.mrb[0].mxu0 %v1055
      %v1436 = vpop.f32.mrb[0].mxu0
      %v1437 = vadd.f32 0.0, %v1436
      %v1438 = vpop.f32.mrb[0].mxu0
      %v1439 = vpop.f32.mrb[0].mxu0
      %v1440 = vadd.f32 0.0, %v1439
      %v1441 = vpop.f32.mrb[0].mxu0
      %1442 = vmatprep.mubr.bf16.mxu0 0
      %1443 = vmatmul.mubr.bf16.gmra.mrb[0].mxu0 %v1058
      %v1444 = vpop.f32.mrb[0].mxu0
      %v1445 = vadd.f32 0.0, %v1444
      %v1446 = vpop.f32.mrb[0].mxu0
      %v1447 = vpop.f32.mrb[0].mxu0
      %v1448 = vadd.f32 0.0, %v1447
      %v1449 = vpop.f32.mrb[0].mxu0
      %1450 = vmatprep.mubr.bf16.mxu0 0
      %1451 = vmatmul.mubr.bf16.gmra.mrb[0].mxu0 %v1061
      %v1452 = vpop.f32.mrb[0].mxu0
      %v1453 = vadd.f32 0.0, %v1452
      %v1454 = vpop.f32.mrb[0].mxu0
      %v1455 = vpop.f32.mrb[0].mxu0
      %v1456 = vadd.f32 0.0, %v1455
      %v1457 = vpop.f32.mrb[0].mxu0
      %1458 = vmatprep.mubr.bf16.mxu0 0
      %1459 = vmatmul.mubr.bf16.gmra.mrb[0].mxu0 %v1064
      %v1460 = vpop.f32.mrb[0].mxu0
      %v1461 = vadd.f32 0.0, %v1460
      %v1462 = vpop.f32.mrb[0].mxu0
      %v1463 = vpop.f32.mrb[0].mxu0
      %v1464 = vadd.f32 0.0, %v1463
      %v1465 = vpop.f32.mrb[0].mxu0
      %1466 = vmatprep.mubr.bf16.mxu0 0
      %1467 = vmatmul.mubr.bf16.gmra.mrb[0].mxu0 %v1298
      %v1468 = vpop.f32.mrb[0].mxu0
      %v1469 = vadd.f32 0.0, %v1468
      %v1470 = vpop.f32.mrb[0].mxu0
      %v1471 = vpop.f32.mrb[0].mxu0
      %v1472 = vadd.f32 0.0, %v1471
      %v1473 = vpop.f32.mrb[0].mxu0
      %1474 = vmatprep.mubr.bf16.mxu0 0
      %1475 = vmatmul.mubr.bf16.gmra.mrb[0].mxu0 %v1301
      %v1476 = vpop.f32.mrb[0].mxu0
      %v1477 = vadd.f32 0.0, %v1476
      %v1478 = vpop.f32.mrb[0].mxu0
      %v1479 = vpop.f32.mrb[0].mxu0
      %v1480 = vadd.f32 0.0, %v1479
      %v1481 = vpop.f32.mrb[0].mxu0
      %1482 = vdwg.mxu0
      %v1483 = vadd.f32 %v1249, %v1341
      %v1484 = vadd.f32 %v1250, %v1344
      %v1485 = vadd.f32 %v1251, %v1349
      %v1486 = vadd.f32 %v1252, %v1352
      %v1487 = vadd.f32 %v1253, %v1357
      %v1488 = vadd.f32 %v1254, %v1360
      %v1489 = vadd.f32 %v1255, %v1365
      %v1490 = vadd.f32 %v1256, %v1368
      %v1491 = vadd.f32 %v1257, %v1373
      %v1492 = vadd.f32 %v1258, %v1376
      %v1493 = vadd.f32 %v1259, %v1381
      %v1494 = vadd.f32 %v1260, %v1384
      %v1495 = vadd.f32 %v1261, %v1389
      %v1496 = vadd.f32 %v1262, %v1392
      %v1497 = vadd.f32 %v1263, %v1397
      %v1498 = vadd.f32 %v1264, %v1400
      %v1499 = vadd.f32 %v1265, %v1405
      %v1500 = vadd.f32 %v1266, %v1408
      %v1501 = vadd.f32 %v1267, %v1413
      %v1502 = vadd.f32 %v1268, %v1416
      %v1503 = vadd.f32 %v1269, %v1421
      %v1504 = vadd.f32 %v1270, %v1424
      %v1505 = vadd.f32 %v1271, %v1429
      %v1506 = vadd.f32 %v1272, %v1432
      %v1507 = vadd.f32 %v1273, %v1437
      %v1508 = vadd.f32 %v1274, %v1440
      %v1509 = vadd.f32 %v1275, %v1445
      %v1510 = vadd.f32 %v1276, %v1448
      %v1511 = vadd.f32 %v1277, %v1453
      %v1512 = vadd.f32 %v1278, %v1456
      %v1513 = vadd.f32 %v1279, %v1461
      %v1514 = vadd.f32 %v1280, %v1464
      %v1515 = vadd.f32 %v1281, %v1469
      %v1516 = vadd.f32 %v1282, %v1472
      %v1517 = vadd.f32 %v1283, %v1477
      %v1518 = vadd.f32 %v1284, %v1480
      %s1519 = scalar_lea.vmem %s1, 16
      %v1520 = vld [vmem:[%s1519] sm:$0xf]
      %vm1521 = vsmask.f32 6400
      %v1522 = vrot.slane %v387, 1
      %v1523 = vrot.slane %v383, 2
      %v1524 = vor.u32 %v1522, %v1523
      %v1525 = vrot.slane %v395, 1
      %v1526 = vrot.slane %v391, 2
      %v1527 = vor.u32 %v1525, %v1526
      %v1528 = vsel %vm1521, %v1524, %v1527
      %v1529 = vrot.slane %v403, 1
      %v1530 = vrot.slane %v399, 2
      %v1531 = vor.u32 %v1529, %v1530
      %v1532 = vsel %vm1521, %v1527, %v1531
      %v1533 = vrot.slane %v411, 1
      %v1534 = vrot.slane %v407, 2
      %v1535 = vor.u32 %v1533, %v1534
      %v1536 = vsel %vm1521, %v1531, %v1535
      %v1537 = vrot.slane %v419, 1
      %v1538 = vrot.slane %v415, 2
      %v1539 = vor.u32 %v1537, %v1538
      %v1540 = vsel %vm1521, %v1535, %v1539
      %v1541 = vrot.slane %v427, 1
      %v1542 = vrot.slane %v423, 2
      %v1543 = vor.u32 %v1541, %v1542
      %v1544 = vsel %vm1521, %v1539, %v1543
      %v1545 = vrot.slane %v435, 1
      %v1546 = vrot.slane %v431, 2
      %v1547 = vor.u32 %v1545, %v1546
      %v1548 = vsel %vm1521, %v1543, %v1547
      %v1549 = vrot.slane %v443, 1
      %v1550 = vrot.slane %v439, 2
      %v1551 = vor.u32 %v1549, %v1550
      %v1552 = vsel %vm1521, %v1547, %v1551
      %v1553 = vrot.slane %v451, 1
      %v1554 = vrot.slane %v447, 2
      %v1555 = vor.u32 %v1553, %v1554
      %v1556 = vsel %vm1521, %v1551, %v1555
      %v1557 = vrot.slane %v459, 1
      %v1558 = vrot.slane %v455, 2
      %v1559 = vor.u32 %v1557, %v1558
      %v1560 = vsel %vm1521, %v1555, %v1559
      %v1561 = vrot.slane %v467, 1
      %v1562 = vrot.slane %v463, 2
      %v1563 = vor.u32 %v1561, %v1562
      %v1564 = vsel %vm1521, %v1559, %v1563
      %v1565 = vrot.slane %v475, 1
      %v1566 = vrot.slane %v471, 2
      %v1567 = vor.u32 %v1565, %v1566
      %v1568 = vsel %vm1521, %v1563, %v1567
      %v1569 = vrot.slane %v483, 1
      %v1570 = vrot.slane %v479, 2
      %v1571 = vor.u32 %v1569, %v1570
      %v1572 = vsel %vm1521, %v1567, %v1571
      %v1573 = vrot.slane %v491, 1
      %v1574 = vrot.slane %v487, 2
      %v1575 = vor.u32 %v1573, %v1574
      %v1576 = vsel %vm1521, %v1571, %v1575
      %v1577 = vrot.slane %v499, 1
      %v1578 = vrot.slane %v495, 2
      %v1579 = vor.u32 %v1577, %v1578
      %v1580 = vsel %vm1521, %v1575, %v1579
      %v1581 = vrot.slane %v507, 1
      %v1582 = vrot.slane %v503, 2
      %v1583 = vor.u32 %v1581, %v1582
      %v1584 = vsel %vm1521, %v1579, %v1583
      %v1585 = vrot.slane %v515, 1
      %v1586 = vrot.slane %v511, 2
      %v1587 = vor.u32 %v1585, %v1586
      %v1588 = vsel %vm1521, %v1583, %v1587
      %v1590 = vshrl.u32 %v1291, 16
      %v1592 = vrot.slane %v1590, 1
      %v1593 = vshll.u32 %v1291, 16
      %v1595 = vrot.slane %v1593, 2
      %v1596 = vor.u32 %v1592, %v1595
      %v1597 = vsel %vm1521, %v1587, %v1596
      %v1599 = vshrl.u32 %v1292, 16
      %v1601 = vrot.slane %v1599, 1
      %v1602 = vshll.u32 %v1292, 16
      %v1604 = vrot.slane %v1602, 2
      %v1605 = vor.u32 %v1601, %v1604
      %v1606 = vsel %vm1521, %v1596, %v1605
      %v1608 = vsel %vm523, %v1528, 0
      %v1611 = vsel %vm523, %v1532, 0
      %v1614 = vsel %vm523, %v1536, 0
      %v1617 = vsel %vm523, %v1540, 0
      %v1620 = vsel %vm523, %v1544, 0
      %v1623 = vsel %vm523, %v1548, 0
      %v1626 = vsel %vm523, %v1552, 0
      %v1629 = vsel %vm523, %v1556, 0
      %v1632 = vsel %vm523, %v1560, 0
      %v1635 = vsel %vm523, %v1564, 0
      %v1638 = vsel %vm523, %v1568, 0
      %v1641 = vsel %vm523, %v1572, 0
      %v1644 = vsel %vm523, %v1576, 0
      %v1647 = vsel %vm523, %v1580, 0
      %v1650 = vsel %vm523, %v1584, 0
      %v1653 = vsel %vm523, %v1588, 0
      %v1656 = vsel %vm523, %v1597, 0
      %v1659 = vsel %vm523, %v1606, 0
      %v1662 = vsel %vm578, %v1520, 0
      %1664 = vmatprep.subr.bf16.mxu0 0
      %1665 = vmatpush1.bf16.msra.mxu0 %v1662
      %1666 = vmatprep.subr.bf16.mxu0 0
      %1667 = vmatpush1.bf16.msra.mxu0 0
      %1668 = vmatprep.subr.bf16.mxu0 0
      %1669 = vmatpush1.bf16.msra.mxu0 0
      %1670 = vmatprep.subr.bf16.mxu0 0
      %1671 = vmatpush1.bf16.msra.mxu0 0
      %1672 = vmatprep.subr.bf16.mxu0 0
      %1673 = vmatpush1.bf16.msra.mxu0 0
      %1674 = vmatprep.subr.bf16.mxu0 0
      %1675 = vmatpush1.bf16.msra.mxu0 0
      %1676 = vmatprep.subr.bf16.mxu0 0
      %1677 = vmatpush1.bf16.msra.mxu0 0
      %1678 = vmatprep.subr.bf16.mxu0 0
      %1679 = vmatpush1.bf16.msra.mxu0 0
      %1680 = vmatprep.subr.bf16.mxu0 0
      %1681 = vmatpush1.bf16.msra.mxu0 0
      %1682 = vmatprep.subr.bf16.mxu0 0
      %1683 = vmatpush1.bf16.msra.mxu0 0
      %1684 = vmatprep.subr.bf16.mxu0 0
      %1685 = vmatpush1.bf16.msra.mxu0 0
      %1686 = vmatprep.subr.bf16.mxu0 0
      %1687 = vmatpush1.bf16.msra.mxu0 0
      %1688 = vmatprep.subr.bf16.mxu0 0
      %1689 = vmatpush1.bf16.msra.mxu0 0
      %1690 = vmatprep.subr.bf16.mxu0 0
      %1691 = vmatpush1.bf16.msra.mxu0 0
      %1692 = vmatprep.subr.bf16.mxu0 0
      %1693 = vmatpush1.bf16.msra.mxu0 0
      %1694 = vmatprep.subr.bf16.mxu0 0
      %1695 = vmatpush1.bf16.msra.mxu0 0
      %1696 = vmatprep.mubr.bf16.mxu0 0
      %1697 = vmatmul.mubr.bf16.gmra.mrb[0].mxu0 %v1608
      %v1698 = vpop.f32.mrb[0].mxu0
      %v1699 = vadd.f32 0.0, %v1698
      %v1700 = vpop.f32.mrb[0].mxu0
      %v1701 = vpop.f32.mrb[0].mxu0
      %v1702 = vadd.f32 0.0, %v1701
      %v1703 = vpop.f32.mrb[0].mxu0
      %1704 = vmatprep.mubr.bf16.mxu0 0
      %1705 = vmatmul.mubr.bf16.gmra.mrb[0].mxu0 %v1611
      %v1706 = vpop.f32.mrb[0].mxu0
      %v1707 = vadd.f32 0.0, %v1706
      %v1708 = vpop.f32.mrb[0].mxu0
      %v1709 = vpop.f32.mrb[0].mxu0
      %v1710 = vadd.f32 0.0, %v1709
      %v1711 = vpop.f32.mrb[0].mxu0
      %1712 = vmatprep.mubr.bf16.mxu0 0
      %1713 = vmatmul.mubr.bf16.gmra.mrb[0].mxu0 %v1614
      %v1714 = vpop.f32.mrb[0].mxu0
      %v1715 = vadd.f32 0.0, %v1714
      %v1716 = vpop.f32.mrb[0].mxu0
      %v1717 = vpop.f32.mrb[0].mxu0
      %v1718 = vadd.f32 0.0, %v1717
      %v1719 = vpop.f32.mrb[0].mxu0
      %1720 = vmatprep.mubr.bf16.mxu0 0
      %1721 = vmatmul.mubr.bf16.gmra.mrb[0].mxu0 %v1617
      %v1722 = vpop.f32.mrb[0].mxu0
      %v1723 = vadd.f32 0.0, %v1722
      %v1724 = vpop.f32.mrb[0].mxu0
      %v1725 = vpop.f32.mrb[0].mxu0
      %v1726 = vadd.f32 0.0, %v1725
      %v1727 = vpop.f32.mrb[0].mxu0
      %1728 = vmatprep.mubr.bf16.mxu0 0
      %1729 = vmatmul.mubr.bf16.gmra.mrb[0].mxu0 %v1620
      %v1730 = vpop.f32.mrb[0].mxu0
      %v1731 = vadd.f32 0.0, %v1730
      %v1732 = vpop.f32.mrb[0].mxu0
      %v1733 = vpop.f32.mrb[0].mxu0
      %v1734 = vadd.f32 0.0, %v1733
      %v1735 = vpop.f32.mrb[0].mxu0
      %1736 = vmatprep.mubr.bf16.mxu0 0
      %1737 = vmatmul.mubr.bf16.gmra.mrb[0].mxu0 %v1623
      %v1738 = vpop.f32.mrb[0].mxu0
      %v1739 = vadd.f32 0.0, %v1738
      %v1740 = vpop.f32.mrb[0].mxu0
      %v1741 = vpop.f32.mrb[0].mxu0
      %v1742 = vadd.f32 0.0, %v1741
      %v1743 = vpop.f32.mrb[0].mxu0
      %1744 = vmatprep.mubr.bf16.mxu0 0
      %1745 = vmatmul.mubr.bf16.gmra.mrb[0].mxu0 %v1626
      %v1746 = vpop.f32.mrb[0].mxu0
      %v1747 = vadd.f32 0.0, %v1746
      %v1748 = vpop.f32.mrb[0].mxu0
      %v1749 = vpop.f32.mrb[0].mxu0
      %v1750 = vadd.f32 0.0, %v1749
      %v1751 = vpop.f32.mrb[0].mxu0
      %1752 = vmatprep.mubr.bf16.mxu0 0
      %1753 = vmatmul.mubr.bf16.gmra.mrb[0].mxu0 %v1629
      %v1754 = vpop.f32.mrb[0].mxu0
      %v1755 = vadd.f32 0.0, %v1754
      %v1756 = vpop.f32.mrb[0].mxu0
      %v1757 = vpop.f32.mrb[0].mxu0
      %v1758 = vadd.f32 0.0, %v1757
      %v1759 = vpop.f32.mrb[0].mxu0
      %1760 = vmatprep.mubr.bf16.mxu0 0
      %1761 = vmatmul.mubr.bf16.gmra.mrb[0].mxu0 %v1632
      %v1762 = vpop.f32.mrb[0].mxu0
      %v1763 = vadd.f32 0.0, %v1762
      %v1764 = vpop.f32.mrb[0].mxu0
      %v1765 = vpop.f32.mrb[0].mxu0
      %v1766 = vadd.f32 0.0, %v1765
      %v1767 = vpop.f32.mrb[0].mxu0
      %1768 = vmatprep.mubr.bf16.mxu0 0
      %1769 = vmatmul.mubr.bf16.gmra.mrb[0].mxu0 %v1635
      %v1770 = vpop.f32.mrb[0].mxu0
      %v1771 = vadd.f32 0.0, %v1770
      %v1772 = vpop.f32.mrb[0].mxu0
      %v1773 = vpop.f32.mrb[0].mxu0
      %v1774 = vadd.f32 0.0, %v1773
      %v1775 = vpop.f32.mrb[0].mxu0
      %1776 = vmatprep.mubr.bf16.mxu0 0
      %1777 = vmatmul.mubr.bf16.gmra.mrb[0].mxu0 %v1638
      %v1778 = vpop.f32.mrb[0].mxu0
      %v1779 = vadd.f32 0.0, %v1778
      %v1780 = vpop.f32.mrb[0].mxu0
      %v1781 = vpop.f32.mrb[0].mxu0
      %v1782 = vadd.f32 0.0, %v1781
      %v1783 = vpop.f32.mrb[0].mxu0
      %1784 = vmatprep.mubr.bf16.mxu0 0
      %1785 = vmatmul.mubr.bf16.gmra.mrb[0].mxu0 %v1641
      %v1786 = vpop.f32.mrb[0].mxu0
      %v1787 = vadd.f32 0.0, %v1786
      %v1788 = vpop.f32.mrb[0].mxu0
      %v1789 = vpop.f32.mrb[0].mxu0
      %v1790 = vadd.f32 0.0, %v1789
      %v1791 = vpop.f32.mrb[0].mxu0
      %1792 = vmatprep.mubr.bf16.mxu0 0
      %1793 = vmatmul.mubr.bf16.gmra.mrb[0].mxu0 %v1644
      %v1794 = vpop.f32.mrb[0].mxu0
      %v1795 = vadd.f32 0.0, %v1794
      %v1796 = vpop.f32.mrb[0].mxu0
      %v1797 = vpop.f32.mrb[0].mxu0
      %v1798 = vadd.f32 0.0, %v1797
      %v1799 = vpop.f32.mrb[0].mxu0
      %1800 = vmatprep.mubr.bf16.mxu0 0
      %1801 = vmatmul.mubr.bf16.gmra.mrb[0].mxu0 %v1647
      %v1802 = vpop.f32.mrb[0].mxu0
      %v1803 = vadd.f32 0.0, %v1802
      %v1804 = vpop.f32.mrb[0].mxu0
      %v1805 = vpop.f32.mrb[0].mxu0
      %v1806 = vadd.f32 0.0, %v1805
      %v1807 = vpop.f32.mrb[0].mxu0
      %1808 = vmatprep.mubr.bf16.mxu0 0
      %1809 = vmatmul.mubr.bf16.gmra.mrb[0].mxu0 %v1650
      %v1810 = vpop.f32.mrb[0].mxu0
      %v1811 = vadd.f32 0.0, %v1810
      %v1812 = vpop.f32.mrb[0].mxu0
      %v1813 = vpop.f32.mrb[0].mxu0
      %v1814 = vadd.f32 0.0, %v1813
      %v1815 = vpop.f32.mrb[0].mxu0
      %1816 = vmatprep.mubr.bf16.mxu0 0
      %1817 = vmatmul.mubr.bf16.gmra.mrb[0].mxu0 %v1653
      %v1818 = vpop.f32.mrb[0].mxu0
      %v1819 = vadd.f32 0.0, %v1818
      %v1820 = vpop.f32.mrb[0].mxu0
      %v1821 = vpop.f32.mrb[0].mxu0
      %v1822 = vadd.f32 0.0, %v1821
      %v1823 = vpop.f32.mrb[0].mxu0
      %1824 = vmatprep.mubr.bf16.mxu0 0
      %1825 = vmatmul.mubr.bf16.gmra.mrb[0].mxu0 %v1656
      %v1826 = vpop.f32.mrb[0].mxu0
      %v1827 = vadd.f32 0.0, %v1826
      %v1828 = vpop.f32.mrb[0].mxu0
      %v1829 = vpop.f32.mrb[0].mxu0
      %v1830 = vadd.f32 0.0, %v1829
      %v1831 = vpop.f32.mrb[0].mxu0
      %1832 = vmatprep.mubr.bf16.mxu0 0
      %1833 = vmatmul.mubr.bf16.gmra.mrb[0].mxu0 %v1659
      %v1834 = vpop.f32.mrb[0].mxu0
      %v1835 = vadd.f32 0.0, %v1834
      %v1836 = vpop.f32.mrb[0].mxu0
      %v1837 = vpop.f32.mrb[0].mxu0
      %v1838 = vadd.f32 0.0, %v1837
      %v1839 = vpop.f32.mrb[0].mxu0
      %1840 = vdwg.mxu0
      %v1841 = vadd.f32 %v1483, %v1699
      %v1842 = vadd.f32 %v1484, %v1702
      %v1843 = vadd.f32 %v1485, %v1707
      %v1844 = vadd.f32 %v1486, %v1710
      %v1845 = vadd.f32 %v1487, %v1715
      %v1846 = vadd.f32 %v1488, %v1718
      %v1847 = vadd.f32 %v1489, %v1723
      %v1848 = vadd.f32 %v1490, %v1726
      %v1849 = vadd.f32 %v1491, %v1731
      %v1850 = vadd.f32 %v1492, %v1734
      %v1851 = vadd.f32 %v1493, %v1739
      %v1852 = vadd.f32 %v1494, %v1742
      %v1853 = vadd.f32 %v1495, %v1747
      %v1854 = vadd.f32 %v1496, %v1750
      %v1855 = vadd.f32 %v1497, %v1755
      %v1856 = vadd.f32 %v1498, %v1758
      %v1857 = vadd.f32 %v1499, %v1763
      %v1858 = vadd.f32 %v1500, %v1766
      %v1859 = vadd.f32 %v1501, %v1771
      %v1860 = vadd.f32 %v1502, %v1774
      %v1861 = vadd.f32 %v1503, %v1779
      %v1862 = vadd.f32 %v1504, %v1782
      %v1863 = vadd.f32 %v1505, %v1787
      %v1864 = vadd.f32 %v1506, %v1790
      %v1865 = vadd.f32 %v1507, %v1795
      %v1866 = vadd.f32 %v1508, %v1798
      %v1867 = vadd.f32 %v1509, %v1803
      %v1868 = vadd.f32 %v1510, %v1806
      %v1869 = vadd.f32 %v1511, %v1811
      %v1870 = vadd.f32 %v1512, %v1814
      %v1871 = vadd.f32 %v1513, %v1819
      %v1872 = vadd.f32 %v1514, %v1822
      %v1873 = vadd.f32 %v1515, %v1827
      %v1874 = vadd.f32 %v1516, %v1830
      %v1875 = vadd.f32 %v1517, %v1835
      %v1876 = vadd.f32 %v1518, %v1838
      %s1877 = scalar_lea.vmem %s1, 20
      %v1878 = vld [vmem:[%s1877] sm:$0xf]
      %vm1879 = vcmask 1045504
      %v1880 = vrot.slane %v356, 2
      %v1881 = vrot.slane %v357, 2
      %v1882 = vsel %vm1879, %v1880, %v1881
      %v1883 = vrot.slane %v358, 2
      %v1884 = vsel %vm1879, %v1881, %v1883
      %v1885 = vrot.slane %v359, 2
      %v1886 = vsel %vm1879, %v1883, %v1885
      %v1887 = vrot.slane %v360, 2
      %v1888 = vsel %vm1879, %v1885, %v1887
      %v1889 = vrot.slane %v361, 2
      %v1890 = vsel %vm1879, %v1887, %v1889
      %v1891 = vrot.slane %v362, 2
      %v1892 = vsel %vm1879, %v1889, %v1891
      %v1893 = vrot.slane %v363, 2
      %v1894 = vsel %vm1879, %v1891, %v1893
      %v1895 = vrot.slane %v364, 2
      %v1896 = vsel %vm1879, %v1893, %v1895
      %v1897 = vrot.slane %v365, 2
      %v1898 = vsel %vm1879, %v1895, %v1897
      %v1899 = vrot.slane %v366, 2
      %v1900 = vsel %vm1879, %v1897, %v1899
      %v1901 = vrot.slane %v367, 2
      %v1902 = vsel %vm1879, %v1899, %v1901
      %v1903 = vrot.slane %v368, 2
      %v1904 = vsel %vm1879, %v1901, %v1903
      %v1905 = vrot.slane %v369, 2
      %v1906 = vsel %vm1879, %v1903, %v1905
      %v1907 = vrot.slane %v370, 2
      %v1908 = vsel %vm1879, %v1905, %v1907
      %v1909 = vrot.slane %v371, 2
      %v1910 = vsel %vm1879, %v1907, %v1909
      %v1911 = vrot.slane %v372, 2
      %v1912 = vsel %vm1879, %v1909, %v1911
      %v1913 = vrot.slane %v1291, 2
      %v1914 = vsel %vm1879, %v1911, %v1913
      %v1915 = vrot.slane %v1292, 2
      %v1916 = vsel %vm1879, %v1913, %v1915
      %v1918 = vsel %vm523, %v1882, 0
      %v1921 = vsel %vm523, %v1884, 0
      %v1924 = vsel %vm523, %v1886, 0
      %v1927 = vsel %vm523, %v1888, 0
      %v1930 = vsel %vm523, %v1890, 0
      %v1933 = vsel %vm523, %v1892, 0
      %v1936 = vsel %vm523, %v1894, 0
      %v1939 = vsel %vm523, %v1896, 0
      %v1942 = vsel %vm523, %v1898, 0
      %v1945 = vsel %vm523, %v1900, 0
      %v1948 = vsel %vm523, %v1902, 0
      %v1951 = vsel %vm523, %v1904, 0
      %v1954 = vsel %vm523, %v1906, 0
      %v1957 = vsel %vm523, %v1908, 0
      %v1960 = vsel %vm523, %v1910, 0
      %v1963 = vsel %vm523, %v1912, 0
      %v1966 = vsel %vm523, %v1914, 0
      %v1969 = vsel %vm523, %v1916, 0
      %v1972 = vsel %vm578, %v1878, 0
      %1974 = vmatprep.subr.bf16.mxu0 0
      %1975 = vmatpush1.bf16.msra.mxu0 %v1972
      %1976 = vmatprep.subr.bf16.mxu0 0
      %1977 = vmatpush1.bf16.msra.mxu0 0
      %1978 = vmatprep.subr.bf16.mxu0 0
      %1979 = vmatpush1.bf16.msra.mxu0 0
      %1980 = vmatprep.subr.bf16.mxu0 0
      %1981 = vmatpush1.bf16.msra.mxu0 0
      %1982 = vmatprep.subr.bf16.mxu0 0
      %1983 = vmatpush1.bf16.msra.mxu0 0
      %1984 = vmatprep.subr.bf16.mxu0 0
      %1985 = vmatpush1.bf16.msra.mxu0 0
      %1986 = vmatprep.subr.bf16.mxu0 0
      %1987 = vmatpush1.bf16.msra.mxu0 0
      %1988 = vmatprep.subr.bf16.mxu0 0
      %1989 = vmatpush1.bf16.msra.mxu0 0
      %1990 = vmatprep.subr.bf16.mxu0 0
      %1991 = vmatpush1.bf16.msra.mxu0 0
      %1992 = vmatprep.subr.bf16.mxu0 0
      %1993 = vmatpush1.bf16.msra.mxu0 0
      %1994 = vmatprep.subr.bf16.mxu0 0
      %1995 = vmatpush1.bf16.msra.mxu0 0
      %1996 = vmatprep.subr.bf16.mxu0 0
      %1997 = vmatpush1.bf16.msra.mxu0 0
      %1998 = vmatprep.subr.bf16.mxu0 0
      %1999 = vmatpush1.bf16.msra.mxu0 0
      %2000 = vmatprep.subr.bf16.mxu0 0
      %2001 = vmatpush1.bf16.msra.mxu0 0
      %2002 = vmatprep.subr.bf16.mxu0 0
      %2003 = vmatpush1.bf16.msra.mxu0 0
      %2004 = vmatprep.subr.bf16.mxu0 0
      %2005 = vmatpush1.bf16.msra.mxu0 0
      %2006 = vmatprep.mubr.bf16.mxu0 0
      %2007 = vmatmul.mubr.bf16.gmra.mrb[0].mxu0 %v1918
      %v2008 = vpop.f32.mrb[0].mxu0
      %v2009 = vadd.f32 0.0, %v2008
      %v2010 = vpop.f32.mrb[0].mxu0
      %v2011 = vpop.f32.mrb[0].mxu0
      %v2012 = vadd.f32 0.0, %v2011
      %v2013 = vpop.f32.mrb[0].mxu0
      %2014 = vmatprep.mubr.bf16.mxu0 0
      %2015 = vmatmul.mubr.bf16.gmra.mrb[0].mxu0 %v1921
      %v2016 = vpop.f32.mrb[0].mxu0
      %v2017 = vadd.f32 0.0, %v2016
      %v2018 = vpop.f32.mrb[0].mxu0
      %v2019 = vpop.f32.mrb[0].mxu0
      %v2020 = vadd.f32 0.0, %v2019
      %v2021 = vpop.f32.mrb[0].mxu0
      %2022 = vmatprep.mubr.bf16.mxu0 0
      %2023 = vmatmul.mubr.bf16.gmra.mrb[0].mxu0 %v1924
      %v2024 = vpop.f32.mrb[0].mxu0
      %v2025 = vadd.f32 0.0, %v2024
      %v2026 = vpop.f32.mrb[0].mxu0
      %v2027 = vpop.f32.mrb[0].mxu0
      %v2028 = vadd.f32 0.0, %v2027
      %v2029 = vpop.f32.mrb[0].mxu0
      %2030 = vmatprep.mubr.bf16.mxu0 0
      %2031 = vmatmul.mubr.bf16.gmra.mrb[0].mxu0 %v1927
      %v2032 = vpop.f32.mrb[0].mxu0
      %v2033 = vadd.f32 0.0, %v2032
      %v2034 = vpop.f32.mrb[0].mxu0
      %v2035 = vpop.f32.mrb[0].mxu0
      %v2036 = vadd.f32 0.0, %v2035
      %v2037 = vpop.f32.mrb[0].mxu0
      %2038 = vmatprep.mubr.bf16.mxu0 0
      %2039 = vmatmul.mubr.bf16.gmra.mrb[0].mxu0 %v1930
      %v2040 = vpop.f32.mrb[0].mxu0
      %v2041 = vadd.f32 0.0, %v2040
      %v2042 = vpop.f32.mrb[0].mxu0
      %v2043 = vpop.f32.mrb[0].mxu0
      %v2044 = vadd.f32 0.0, %v2043
      %v2045 = vpop.f32.mrb[0].mxu0
      %2046 = vmatprep.mubr.bf16.mxu0 0
      %2047 = vmatmul.mubr.bf16.gmra.mrb[0].mxu0 %v1933
      %v2048 = vpop.f32.mrb[0].mxu0
      %v2049 = vadd.f32 0.0, %v2048
      %v2050 = vpop.f32.mrb[0].mxu0
      %v2051 = vpop.f32.mrb[0].mxu0
      %v2052 = vadd.f32 0.0, %v2051
      %v2053 = vpop.f32.mrb[0].mxu0
      %2054 = vmatprep.mubr.bf16.mxu0 0
      %2055 = vmatmul.mubr.bf16.gmra.mrb[0].mxu0 %v1936
      %v2056 = vpop.f32.mrb[0].mxu0
      %v2057 = vadd.f32 0.0, %v2056
      %v2058 = vpop.f32.mrb[0].mxu0
      %v2059 = vpop.f32.mrb[0].mxu0
      %v2060 = vadd.f32 0.0, %v2059
      %v2061 = vpop.f32.mrb[0].mxu0
      %2062 = vmatprep.mubr.bf16.mxu0 0
      %2063 = vmatmul.mubr.bf16.gmra.mrb[0].mxu0 %v1939
      %v2064 = vpop.f32.mrb[0].mxu0
      %v2065 = vadd.f32 0.0, %v2064
      %v2066 = vpop.f32.mrb[0].mxu0
      %v2067 = vpop.f32.mrb[0].mxu0
      %v2068 = vadd.f32 0.0, %v2067
      %v2069 = vpop.f32.mrb[0].mxu0
      %2070 = vmatprep.mubr.bf16.mxu0 0
      %2071 = vmatmul.mubr.bf16.gmra.mrb[0].mxu0 %v1942
      %v2072 = vpop.f32.mrb[0].mxu0
      %v2073 = vadd.f32 0.0, %v2072
      %v2074 = vpop.f32.mrb[0].mxu0
      %v2075 = vpop.f32.mrb[0].mxu0
      %v2076 = vadd.f32 0.0, %v2075
      %v2077 = vpop.f32.mrb[0].mxu0
      %2078 = vmatprep.mubr.bf16.mxu0 0
      %2079 = vmatmul.mubr.bf16.gmra.mrb[0].mxu0 %v1945
      %v2080 = vpop.f32.mrb[0].mxu0
      %v2081 = vadd.f32 0.0, %v2080
      %v2082 = vpop.f32.mrb[0].mxu0
      %v2083 = vpop.f32.mrb[0].mxu0
      %v2084 = vadd.f32 0.0, %v2083
      %v2085 = vpop.f32.mrb[0].mxu0
      %2086 = vmatprep.mubr.bf16.mxu0 0
      %2087 = vmatmul.mubr.bf16.gmra.mrb[0].mxu0 %v1948
      %v2088 = vpop.f32.mrb[0].mxu0
      %v2089 = vadd.f32 0.0, %v2088
      %v2090 = vpop.f32.mrb[0].mxu0
      %v2091 = vpop.f32.mrb[0].mxu0
      %v2092 = vadd.f32 0.0, %v2091
      %v2093 = vpop.f32.mrb[0].mxu0
      %2094 = vmatprep.mubr.bf16.mxu0 0
      %2095 = vmatmul.mubr.bf16.gmra.mrb[0].mxu0 %v1951
      %v2096 = vpop.f32.mrb[0].mxu0
      %v2097 = vadd.f32 0.0, %v2096
      %v2098 = vpop.f32.mrb[0].mxu0
      %v2099 = vpop.f32.mrb[0].mxu0
      %v2100 = vadd.f32 0.0, %v2099
      %v2101 = vpop.f32.mrb[0].mxu0
      %2102 = vmatprep.mubr.bf16.mxu0 0
      %2103 = vmatmul.mubr.bf16.gmra.mrb[0].mxu0 %v1954
      %v2104 = vpop.f32.mrb[0].mxu0
      %v2105 = vadd.f32 0.0, %v2104
      %v2106 = vpop.f32.mrb[0].mxu0
      %v2107 = vpop.f32.mrb[0].mxu0
      %v2108 = vadd.f32 0.0, %v2107
      %v2109 = vpop.f32.mrb[0].mxu0
      %2110 = vmatprep.mubr.bf16.mxu0 0
      %2111 = vmatmul.mubr.bf16.gmra.mrb[0].mxu0 %v1957
      %v2112 = vpop.f32.mrb[0].mxu0
      %v2113 = vadd.f32 0.0, %v2112
      %v2114 = vpop.f32.mrb[0].mxu0
      %v2115 = vpop.f32.mrb[0].mxu0
      %v2116 = vadd.f32 0.0, %v2115
      %v2117 = vpop.f32.mrb[0].mxu0
      %2118 = vmatprep.mubr.bf16.mxu0 0
      %2119 = vmatmul.mubr.bf16.gmra.mrb[0].mxu0 %v1960
      %v2120 = vpop.f32.mrb[0].mxu0
      %v2121 = vadd.f32 0.0, %v2120
      %v2122 = vpop.f32.mrb[0].mxu0
      %v2123 = vpop.f32.mrb[0].mxu0
      %v2124 = vadd.f32 0.0, %v2123
      %v2125 = vpop.f32.mrb[0].mxu0
      %2126 = vmatprep.mubr.bf16.mxu0 0
      %2127 = vmatmul.mubr.bf16.gmra.mrb[0].mxu0 %v1963
      %v2128 = vpop.f32.mrb[0].mxu0
      %v2129 = vadd.f32 0.0, %v2128
      %v2130 = vpop.f32.mrb[0].mxu0
      %v2131 = vpop.f32.mrb[0].mxu0
      %v2132 = vadd.f32 0.0, %v2131
      %v2133 = vpop.f32.mrb[0].mxu0
      %2134 = vmatprep.mubr.bf16.mxu0 0
      %2135 = vmatmul.mubr.bf16.gmra.mrb[0].mxu0 %v1966
      %v2136 = vpop.f32.mrb[0].mxu0
      %v2137 = vadd.f32 0.0, %v2136
      %v2138 = vpop.f32.mrb[0].mxu0
      %v2139 = vpop.f32.mrb[0].mxu0
      %v2140 = vadd.f32 0.0, %v2139
      %v2141 = vpop.f32.mrb[0].mxu0
      %2142 = vmatprep.mubr.bf16.mxu0 0
      %2143 = vmatmul.mubr.bf16.gmra.mrb[0].mxu0 %v1969
      %v2144 = vpop.f32.mrb[0].mxu0
      %v2145 = vadd.f32 0.0, %v2144
      %v2146 = vpop.f32.mrb[0].mxu0
      %v2147 = vpop.f32.mrb[0].mxu0
      %v2148 = vadd.f32 0.0, %v2147
      %v2149 = vpop.f32.mrb[0].mxu0
      %2150 = vdwg.mxu0
      %v2151 = vadd.f32 %v1841, %v2009
      %v2152 = vadd.f32 %v1842, %v2012
      %v2153 = vadd.f32 %v1843, %v2017
      %v2154 = vadd.f32 %v1844, %v2020
      %v2155 = vadd.f32 %v1845, %v2025
      %v2156 = vadd.f32 %v1846, %v2028
      %v2157 = vadd.f32 %v1847, %v2033
      %v2158 = vadd.f32 %v1848, %v2036
      %v2159 = vadd.f32 %v1849, %v2041
      %v2160 = vadd.f32 %v1850, %v2044
      %v2161 = vadd.f32 %v1851, %v2049
      %v2162 = vadd.f32 %v1852, %v2052
      %v2163 = vadd.f32 %v1853, %v2057
      %v2164 = vadd.f32 %v1854, %v2060
      %v2165 = vadd.f32 %v1855, %v2065
      %v2166 = vadd.f32 %v1856, %v2068
      %v2167 = vadd.f32 %v1857, %v2073
      %v2168 = vadd.f32 %v1858, %v2076
      %v2169 = vadd.f32 %v1859, %v2081
      %v2170 = vadd.f32 %v1860, %v2084
      %v2171 = vadd.f32 %v1861, %v2089
      %v2172 = vadd.f32 %v1862, %v2092
      %v2173 = vadd.f32 %v1863, %v2097
      %v2174 = vadd.f32 %v1864, %v2100
      %v2175 = vadd.f32 %v1865, %v2105
      %v2176 = vadd.f32 %v1866, %v2108
      %v2177 = vadd.f32 %v1867, %v2113
      %v2178 = vadd.f32 %v1868, %v2116
      %v2179 = vadd.f32 %v1869, %v2121
      %v2180 = vadd.f32 %v1870, %v2124
      %v2181 = vadd.f32 %v1871, %v2129
      %v2182 = vadd.f32 %v1872, %v2132
      %v2183 = vadd.f32 %v1873, %v2137
      %v2184 = vadd.f32 %v1874, %v2140
      %v2185 = vadd.f32 %v1875, %v2145
      %v2186 = vadd.f32 %v1876, %v2148
      %s2187 = scalar_lea.vmem %s1, 24
      %v2188 = vld [vmem:[%s2187] sm:$0xf]
      %v2191 = vunpack.c.l.b16 %v276
      %v2192 = vunpack.c.l.b16 %v277
      %v2193 = vpack.c.b16 %v2191, %v1290
      %v2194 = vpack.c.b16 %v2192, %v2192
      %v2195 = vrot.slane %v2193, 2
      %v2196 = vsel %vm1879, %v1913, %v2195
      %v2197 = vrot.slane %v2194, 2
      %v2198 = vsel %vm1879, %v2195, %v2197
      %v2200 = vsel %vm523, %v2196, 0
      %v2203 = vsel %vm523, %v2198, 0
      %v2206 = vsel %vm578, %v2188, 0
      %2208 = vmatprep.subr.bf16.mxu0 0
      %2209 = vmatpush1.bf16.msra.mxu0 %v2206
      %2210 = vmatprep.subr.bf16.mxu0 0
      %2211 = vmatpush1.bf16.msra.mxu0 0
      %2212 = vmatprep.subr.bf16.mxu0 0
      %2213 = vmatpush1.bf16.msra.mxu0 0
      %2214 = vmatprep.subr.bf16.mxu0 0
      %2215 = vmatpush1.bf16.msra.mxu0 0
      %2216 = vmatprep.subr.bf16.mxu0 0
      %2217 = vmatpush1.bf16.msra.mxu0 0
      %2218 = vmatprep.subr.bf16.mxu0 0
      %2219 = vmatpush1.bf16.msra.mxu0 0
      %2220 = vmatprep.subr.bf16.mxu0 0
      %2221 = vmatpush1.bf16.msra.mxu0 0
      %2222 = vmatprep.subr.bf16.mxu0 0
      %2223 = vmatpush1.bf16.msra.mxu0 0
      %2224 = vmatprep.subr.bf16.mxu0 0
      %2225 = vmatpush1.bf16.msra.mxu0 0
      %2226 = vmatprep.subr.bf16.mxu0 0
      %2227 = vmatpush1.bf16.msra.mxu0 0
      %2228 = vmatprep.subr.bf16.mxu0 0
      %2229 = vmatpush1.bf16.msra.mxu0 0
      %2230 = vmatprep.subr.bf16.mxu0 0
      %2231 = vmatpush1.bf16.msra.mxu0 0
      %2232 = vmatprep.subr.bf16.mxu0 0
      %2233 = vmatpush1.bf16.msra.mxu0 0
      %2234 = vmatprep.subr.bf16.mxu0 0
      %2235 = vmatpush1.bf16.msra.mxu0 0
      %2236 = vmatprep.subr.bf16.mxu0 0
      %2237 = vmatpush1.bf16.msra.mxu0 0
      %2238 = vmatprep.subr.bf16.mxu0 0
      %2239 = vmatpush1.bf16.msra.mxu0 0
      %2240 = vmatprep.mubr.bf16.mxu0 0
      %2241 = vmatmul.mubr.bf16.gmra.mrb[0].mxu0 %v1921
      %v2242 = vpop.f32.mrb[0].mxu0
      %v2243 = vadd.f32 0.0, %v2242
      %v2244 = vpop.f32.mrb[0].mxu0
      %v2245 = vpop.f32.mrb[0].mxu0
      %v2246 = vadd.f32 0.0, %v2245
      %v2247 = vpop.f32.mrb[0].mxu0
      %2248 = vmatprep.mubr.bf16.mxu0 0
      %2249 = vmatmul.mubr.bf16.gmra.mrb[0].mxu0 %v1924
      %v2250 = vpop.f32.mrb[0].mxu0
      %v2251 = vadd.f32 0.0, %v2250
      %v2252 = vpop.f32.mrb[0].mxu0
      %v2253 = vpop.f32.mrb[0].mxu0
      %v2254 = vadd.f32 0.0, %v2253
      %v2255 = vpop.f32.mrb[0].mxu0
      %2256 = vmatprep.mubr.bf16.mxu0 0
      %2257 = vmatmul.mubr.bf16.gmra.mrb[0].mxu0 %v1927
      %v2258 = vpop.f32.mrb[0].mxu0
      %v2259 = vadd.f32 0.0, %v2258
      %v2260 = vpop.f32.mrb[0].mxu0
      %v2261 = vpop.f32.mrb[0].mxu0
      %v2262 = vadd.f32 0.0, %v2261
      %v2263 = vpop.f32.mrb[0].mxu0
      %2264 = vmatprep.mubr.bf16.mxu0 0
      %2265 = vmatmul.mubr.bf16.gmra.mrb[0].mxu0 %v1930
      %v2266 = vpop.f32.mrb[0].mxu0
      %v2267 = vadd.f32 0.0, %v2266
      %v2268 = vpop.f32.mrb[0].mxu0
      %v2269 = vpop.f32.mrb[0].mxu0
      %v2270 = vadd.f32 0.0, %v2269
      %v2271 = vpop.f32.mrb[0].mxu0
      %2272 = vmatprep.mubr.bf16.mxu0 0
      %2273 = vmatmul.mubr.bf16.gmra.mrb[0].mxu0 %v1933
      %v2274 = vpop.f32.mrb[0].mxu0
      %v2275 = vadd.f32 0.0, %v2274
      %v2276 = vpop.f32.mrb[0].mxu0
      %v2277 = vpop.f32.mrb[0].mxu0
      %v2278 = vadd.f32 0.0, %v2277
      %v2279 = vpop.f32.mrb[0].mxu0
      %2280 = vmatprep.mubr.bf16.mxu0 0
      %2281 = vmatmul.mubr.bf16.gmra.mrb[0].mxu0 %v1936
      %v2282 = vpop.f32.mrb[0].mxu0
      %v2283 = vadd.f32 0.0, %v2282
      %v2284 = vpop.f32.mrb[0].mxu0
      %v2285 = vpop.f32.mrb[0].mxu0
      %v2286 = vadd.f32 0.0, %v2285
      %v2287 = vpop.f32.mrb[0].mxu0
      %2288 = vmatprep.mubr.bf16.mxu0 0
      %2289 = vmatmul.mubr.bf16.gmra.mrb[0].mxu0 %v1939
      %v2290 = vpop.f32.mrb[0].mxu0
      %v2291 = vadd.f32 0.0, %v2290
      %v2292 = vpop.f32.mrb[0].mxu0
      %v2293 = vpop.f32.mrb[0].mxu0
      %v2294 = vadd.f32 0.0, %v2293
      %v2295 = vpop.f32.mrb[0].mxu0
      %2296 = vmatprep.mubr.bf16.mxu0 0
      %2297 = vmatmul.mubr.bf16.gmra.mrb[0].mxu0 %v1942
      %v2298 = vpop.f32.mrb[0].mxu0
      %v2299 = vadd.f32 0.0, %v2298
      %v2300 = vpop.f32.mrb[0].mxu0
      %v2301 = vpop.f32.mrb[0].mxu0
      %v2302 = vadd.f32 0.0, %v2301
      %v2303 = vpop.f32.mrb[0].mxu0
      %2304 = vmatprep.mubr.bf16.mxu0 0
      %2305 = vmatmul.mubr.bf16.gmra.mrb[0].mxu0 %v1945
      %v2306 = vpop.f32.mrb[0].mxu0
      %v2307 = vadd.f32 0.0, %v2306
      %v2308 = vpop.f32.mrb[0].mxu0
      %v2309 = vpop.f32.mrb[0].mxu0
      %v2310 = vadd.f32 0.0, %v2309
      %v2311 = vpop.f32.mrb[0].mxu0
      %2312 = vmatprep.mubr.bf16.mxu0 0
      %2313 = vmatmul.mubr.bf16.gmra.mrb[0].mxu0 %v1948
      %v2314 = vpop.f32.mrb[0].mxu0
      %v2315 = vadd.f32 0.0, %v2314
      %v2316 = vpop.f32.mrb[0].mxu0
      %v2317 = vpop.f32.mrb[0].mxu0
      %v2318 = vadd.f32 0.0, %v2317
      %v2319 = vpop.f32.mrb[0].mxu0
      %2320 = vmatprep.mubr.bf16.mxu0 0
      %2321 = vmatmul.mubr.bf16.gmra.mrb[0].mxu0 %v1951
      %v2322 = vpop.f32.mrb[0].mxu0
      %v2323 = vadd.f32 0.0, %v2322
      %v2324 = vpop.f32.mrb[0].mxu0
      %v2325 = vpop.f32.mrb[0].mxu0
      %v2326 = vadd.f32 0.0, %v2325
      %v2327 = vpop.f32.mrb[0].mxu0
      %2328 = vmatprep.mubr.bf16.mxu0 0
      %2329 = vmatmul.mubr.bf16.gmra.mrb[0].mxu0 %v1954
      %v2330 = vpop.f32.mrb[0].mxu0
      %v2331 = vadd.f32 0.0, %v2330
      %v2332 = vpop.f32.mrb[0].mxu0
      %v2333 = vpop.f32.mrb[0].mxu0
      %v2334 = vadd.f32 0.0, %v2333
      %v2335 = vpop.f32.mrb[0].mxu0
      %2336 = vmatprep.mubr.bf16.mxu0 0
      %2337 = vmatmul.mubr.bf16.gmra.mrb[0].mxu0 %v1957
      %v2338 = vpop.f32.mrb[0].mxu0
      %v2339 = vadd.f32 0.0, %v2338
      %v2340 = vpop.f32.mrb[0].mxu0
      %v2341 = vpop.f32.mrb[0].mxu0
      %v2342 = vadd.f32 0.0, %v2341
      %v2343 = vpop.f32.mrb[0].mxu0
      %2344 = vmatprep.mubr.bf16.mxu0 0
      %2345 = vmatmul.mubr.bf16.gmra.mrb[0].mxu0 %v1960
      %v2346 = vpop.f32.mrb[0].mxu0
      %v2347 = vadd.f32 0.0, %v2346
      %v2348 = vpop.f32.mrb[0].mxu0
      %v2349 = vpop.f32.mrb[0].mxu0
      %v2350 = vadd.f32 0.0, %v2349
      %v2351 = vpop.f32.mrb[0].mxu0
      %2352 = vmatprep.mubr.bf16.mxu0 0
      %2353 = vmatmul.mubr.bf16.gmra.mrb[0].mxu0 %v1963
      %v2354 = vpop.f32.mrb[0].mxu0
      %v2355 = vadd.f32 0.0, %v2354
      %v2356 = vpop.f32.mrb[0].mxu0
      %v2357 = vpop.f32.mrb[0].mxu0
      %v2358 = vadd.f32 0.0, %v2357
      %v2359 = vpop.f32.mrb[0].mxu0
      %2360 = vmatprep.mubr.bf16.mxu0 0
      %2361 = vmatmul.mubr.bf16.gmra.mrb[0].mxu0 %v1966
      %v2362 = vpop.f32.mrb[0].mxu0
      %v2363 = vadd.f32 0.0, %v2362
      %v2364 = vpop.f32.mrb[0].mxu0
      %v2365 = vpop.f32.mrb[0].mxu0
      %v2366 = vadd.f32 0.0, %v2365
      %v2367 = vpop.f32.mrb[0].mxu0
      %2368 = vmatprep.mubr.bf16.mxu0 0
      %2369 = vmatmul.mubr.bf16.gmra.mrb[0].mxu0 %v2200
      %v2370 = vpop.f32.mrb[0].mxu0
      %v2371 = vadd.f32 0.0, %v2370
      %v2372 = vpop.f32.mrb[0].mxu0
      %v2373 = vpop.f32.mrb[0].mxu0
      %v2374 = vadd.f32 0.0, %v2373
      %v2375 = vpop.f32.mrb[0].mxu0
      %2376 = vmatprep.mubr.bf16.mxu0 0
      %2377 = vmatmul.mubr.bf16.gmra.mrb[0].mxu0 %v2203
      %v2378 = vpop.f32.mrb[0].mxu0
      %v2379 = vadd.f32 0.0, %v2378
      %v2380 = vpop.f32.mrb[0].mxu0
      %v2381 = vpop.f32.mrb[0].mxu0
      %v2382 = vadd.f32 0.0, %v2381
      %v2383 = vpop.f32.mrb[0].mxu0
      %2384 = vdwg.mxu0
      %v2385 = vadd.f32 %v2151, %v2243
      %v2386 = vadd.f32 %v2152, %v2246
      %v2387 = vadd.f32 %v2153, %v2251
      %v2388 = vadd.f32 %v2154, %v2254
      %v2389 = vadd.f32 %v2155, %v2259
      %v2390 = vadd.f32 %v2156, %v2262
      %v2391 = vadd.f32 %v2157, %v2267
      %v2392 = vadd.f32 %v2158, %v2270
      %v2393 = vadd.f32 %v2159, %v2275
      %v2394 = vadd.f32 %v2160, %v2278
      %v2395 = vadd.f32 %v2161, %v2283
      %v2396 = vadd.f32 %v2162, %v2286
      %v2397 = vadd.f32 %v2163, %v2291
      %v2398 = vadd.f32 %v2164, %v2294
      %v2399 = vadd.f32 %v2165, %v2299
      %v2400 = vadd.f32 %v2166, %v2302
      %v2401 = vadd.f32 %v2167, %v2307
      %v2402 = vadd.f32 %v2168, %v2310
      %v2403 = vadd.f32 %v2169, %v2315
      %v2404 = vadd.f32 %v2170, %v2318
      %v2405 = vadd.f32 %v2171, %v2323
      %v2406 = vadd.f32 %v2172, %v2326
      %v2407 = vadd.f32 %v2173, %v2331
      %v2408 = vadd.f32 %v2174, %v2334
      %v2409 = vadd.f32 %v2175, %v2339
      %v2410 = vadd.f32 %v2176, %v2342
      %v2411 = vadd.f32 %v2177, %v2347
      %v2412 = vadd.f32 %v2178, %v2350
      %v2413 = vadd.f32 %v2179, %v2355
      %v2414 = vadd.f32 %v2180, %v2358
      %v2415 = vadd.f32 %v2181, %v2363
      %v2416 = vadd.f32 %v2182, %v2366
      %v2417 = vadd.f32 %v2183, %v2371
      %v2418 = vadd.f32 %v2184, %v2374
      %v2419 = vadd.f32 %v2185, %v2379
      %v2420 = vadd.f32 %v2186, %v2382
      %s2421 = scalar_lea.vmem %s1, 28
      %v2422 = vld [vmem:[%s2421] sm:$0xf]
      %vm2423 = vsmask.f32 5376
      %v2424 = vrot.slane %v395, 2
      %v2425 = vrot.slane %v391, 3
      %v2426 = vor.u32 %v2424, %v2425
      %v2427 = vrot.slane %v403, 2
      %v2428 = vrot.slane %v399, 3
      %v2429 = vor.u32 %v2427, %v2428
      %v2430 = vsel %vm2423, %v2426, %v2429
      %v2431 = vrot.slane %v411, 2
      %v2432 = vrot.slane %v407, 3
      %v2433 = vor.u32 %v2431, %v2432
      %v2434 = vsel %vm2423, %v2429, %v2433
      %v2435 = vrot.slane %v419, 2
      %v2436 = vrot.slane %v415, 3
      %v2437 = vor.u32 %v2435, %v2436
      %v2438 = vsel %vm2423, %v2433, %v2437
      %v2439 = vrot.slane %v427, 2
      %v2440 = vrot.slane %v423, 3
      %v2441 = vor.u32 %v2439, %v2440
      %v2442 = vsel %vm2423, %v2437, %v2441
      %v2443 = vrot.slane %v435, 2
      %v2444 = vrot.slane %v431, 3
      %v2445 = vor.u32 %v2443, %v2444
      %v2446 = vsel %vm2423, %v2441, %v2445
      %v2447 = vrot.slane %v443, 2
      %v2448 = vrot.slane %v439, 3
      %v2449 = vor.u32 %v2447, %v2448
      %v2450 = vsel %vm2423, %v2445, %v2449
      %v2451 = vrot.slane %v451, 2
      %v2452 = vrot.slane %v447, 3
      %v2453 = vor.u32 %v2451, %v2452
      %v2454 = vsel %vm2423, %v2449, %v2453
      %v2455 = vrot.slane %v459, 2
      %v2456 = vrot.slane %v455, 3
      %v2457 = vor.u32 %v2455, %v2456
      %v2458 = vsel %vm2423, %v2453, %v2457
      %v2459 = vrot.slane %v467, 2
      %v2460 = vrot.slane %v463, 3
      %v2461 = vor.u32 %v2459, %v2460
      %v2462 = vsel %vm2423, %v2457, %v2461
      %v2463 = vrot.slane %v475, 2
      %v2464 = vrot.slane %v471, 3
      %v2465 = vor.u32 %v2463, %v2464
      %v2466 = vsel %vm2423, %v2461, %v2465
      %v2467 = vrot.slane %v483, 2
      %v2468 = vrot.slane %v479, 3
      %v2469 = vor.u32 %v2467, %v2468
      %v2470 = vsel %vm2423, %v2465, %v2469
      %v2471 = vrot.slane %v491, 2
      %v2472 = vrot.slane %v487, 3
      %v2473 = vor.u32 %v2471, %v2472
      %v2474 = vsel %vm2423, %v2469, %v2473
      %v2475 = vrot.slane %v499, 2
      %v2476 = vrot.slane %v495, 3
      %v2477 = vor.u32 %v2475, %v2476
      %v2478 = vsel %vm2423, %v2473, %v2477
      %v2479 = vrot.slane %v507, 2
      %v2480 = vrot.slane %v503, 3
      %v2481 = vor.u32 %v2479, %v2480
      %v2482 = vsel %vm2423, %v2477, %v2481
      %v2483 = vrot.slane %v515, 2
      %v2484 = vrot.slane %v511, 3
      %v2485 = vor.u32 %v2483, %v2484
      %v2486 = vsel %vm2423, %v2481, %v2485
      %v2487 = vrot.slane %v1590, 2
      %v2488 = vrot.slane %v1593, 3
      %v2489 = vor.u32 %v2487, %v2488
      %v2490 = vsel %vm2423, %v2485, %v2489
      %v2492 = vshrl.u32 %v2193, 16
      %v2494 = vrot.slane %v2492, 2
      %v2495 = vshll.u32 %v2193, 16
      %v2497 = vrot.slane %v2495, 3
      %v2498 = vor.u32 %v2494, %v2497
      %v2499 = vsel %vm2423, %v2489, %v2498
      %v2501 = vshrl.u32 %v2194, 16
      %v2503 = vrot.slane %v2501, 2
      %v2504 = vshll.u32 %v2194, 16
      %v2506 = vrot.slane %v2504, 3
      %v2507 = vor.u32 %v2503, %v2506
      %v2508 = vsel %vm2423, %v2498, %v2507
      %v2510 = vsel %vm523, %v2430, 0
      %v2513 = vsel %vm523, %v2434, 0
      %v2516 = vsel %vm523, %v2438, 0
      %v2519 = vsel %vm523, %v2442, 0
      %v2522 = vsel %vm523, %v2446, 0
      %v2525 = vsel %vm523, %v2450, 0
      %v2528 = vsel %vm523, %v2454, 0
      %v2531 = vsel %vm523, %v2458, 0
      %v2534 = vsel %vm523, %v2462, 0
      %v2537 = vsel %vm523, %v2466, 0
      %v2540 = vsel %vm523, %v2470, 0
      %v2543 = vsel %vm523, %v2474, 0
      %v2546 = vsel %vm523, %v2478, 0
      %v2549 = vsel %vm523, %v2482, 0
      %v2552 = vsel %vm523, %v2486, 0
      %v2555 = vsel %vm523, %v2490, 0
      %v2558 = vsel %vm523, %v2499, 0
      %v2561 = vsel %vm523, %v2508, 0
      %v2564 = vsel %vm578, %v2422, 0
      %2566 = vmatprep.subr.bf16.mxu0 0
      %2567 = vmatpush1.bf16.msra.mxu0 %v2564
      %2568 = vmatprep.subr.bf16.mxu0 0
      %2569 = vmatpush1.bf16.msra.mxu0 0
      %2570 = vmatprep.subr.bf16.mxu0 0
      %2571 = vmatpush1.bf16.msra.mxu0 0
      %2572 = vmatprep.subr.bf16.mxu0 0
      %2573 = vmatpush1.bf16.msra.mxu0 0
      %2574 = vmatprep.subr.bf16.mxu0 0
      %2575 = vmatpush1.bf16.msra.mxu0 0
      %2576 = vmatprep.subr.bf16.mxu0 0
      %2577 = vmatpush1.bf16.msra.mxu0 0
      %2578 = vmatprep.subr.bf16.mxu0 0
      %2579 = vmatpush1.bf16.msra.mxu0 0
      %2580 = vmatprep.subr.bf16.mxu0 0
      %2581 = vmatpush1.bf16.msra.mxu0 0
      %2582 = vmatprep.subr.bf16.mxu0 0
      %2583 = vmatpush1.bf16.msra.mxu0 0
      %2584 = vmatprep.subr.bf16.mxu0 0
      %2585 = vmatpush1.bf16.msra.mxu0 0
      %2586 = vmatprep.subr.bf16.mxu0 0
      %2587 = vmatpush1.bf16.msra.mxu0 0
      %2588 = vmatprep.subr.bf16.mxu0 0
      %2589 = vmatpush1.bf16.msra.mxu0 0
      %2590 = vmatprep.subr.bf16.mxu0 0
      %2591 = vmatpush1.bf16.msra.mxu0 0
      %2592 = vmatprep.subr.bf16.mxu0 0
      %2593 = vmatpush1.bf16.msra.mxu0 0
      %2594 = vmatprep.subr.bf16.mxu0 0
      %2595 = vmatpush1.bf16.msra.mxu0 0
      %2596 = vmatprep.subr.bf16.mxu0 0
      %2597 = vmatpush1.bf16.msra.mxu0 0
      %2598 = vmatprep.mubr.bf16.mxu0 0
      %2599 = vmatmul.mubr.bf16.gmra.mrb[0].mxu0 %v2510
      %v2600 = vpop.f32.mrb[0].mxu0
      %v2601 = vadd.f32 0.0, %v2600
      %v2602 = vpop.f32.mrb[0].mxu0
      %v2603 = vpop.f32.mrb[0].mxu0
      %v2604 = vadd.f32 0.0, %v2603
      %v2605 = vpop.f32.mrb[0].mxu0
      %2606 = vmatprep.mubr.bf16.mxu0 0
      %2607 = vmatmul.mubr.bf16.gmra.mrb[0].mxu0 %v2513
      %v2608 = vpop.f32.mrb[0].mxu0
      %v2609 = vadd.f32 0.0, %v2608
      %v2610 = vpop.f32.mrb[0].mxu0
      %v2611 = vpop.f32.mrb[0].mxu0
      %v2612 = vadd.f32 0.0, %v2611
      %v2613 = vpop.f32.mrb[0].mxu0
      %2614 = vmatprep.mubr.bf16.mxu0 0
      %2615 = vmatmul.mubr.bf16.gmra.mrb[0].mxu0 %v2516
      %v2616 = vpop.f32.mrb[0].mxu0
      %v2617 = vadd.f32 0.0, %v2616
      %v2618 = vpop.f32.mrb[0].mxu0
      %v2619 = vpop.f32.mrb[0].mxu0
      %v2620 = vadd.f32 0.0, %v2619
      %v2621 = vpop.f32.mrb[0].mxu0
      %2622 = vmatprep.mubr.bf16.mxu0 0
      %2623 = vmatmul.mubr.bf16.gmra.mrb[0].mxu0 %v2519
      %v2624 = vpop.f32.mrb[0].mxu0
      %v2625 = vadd.f32 0.0, %v2624
      %v2626 = vpop.f32.mrb[0].mxu0
      %v2627 = vpop.f32.mrb[0].mxu0
      %v2628 = vadd.f32 0.0, %v2627
      %v2629 = vpop.f32.mrb[0].mxu0
      %2630 = vmatprep.mubr.bf16.mxu0 0
      %2631 = vmatmul.mubr.bf16.gmra.mrb[0].mxu0 %v2522
      %v2632 = vpop.f32.mrb[0].mxu0
      %v2633 = vadd.f32 0.0, %v2632
      %v2634 = vpop.f32.mrb[0].mxu0
      %v2635 = vpop.f32.mrb[0].mxu0
      %v2636 = vadd.f32 0.0, %v2635
      %v2637 = vpop.f32.mrb[0].mxu0
      %2638 = vmatprep.mubr.bf16.mxu0 0
      %2639 = vmatmul.mubr.bf16.gmra.mrb[0].mxu0 %v2525
      %v2640 = vpop.f32.mrb[0].mxu0
      %v2641 = vadd.f32 0.0, %v2640
      %v2642 = vpop.f32.mrb[0].mxu0
      %v2643 = vpop.f32.mrb[0].mxu0
      %v2644 = vadd.f32 0.0, %v2643
      %v2645 = vpop.f32.mrb[0].mxu0
      %2646 = vmatprep.mubr.bf16.mxu0 0
      %2647 = vmatmul.mubr.bf16.gmra.mrb[0].mxu0 %v2528
      %v2648 = vpop.f32.mrb[0].mxu0
      %v2649 = vadd.f32 0.0, %v2648
      %v2650 = vpop.f32.mrb[0].mxu0
      %v2651 = vpop.f32.mrb[0].mxu0
      %v2652 = vadd.f32 0.0, %v2651
      %v2653 = vpop.f32.mrb[0].mxu0
      %2654 = vmatprep.mubr.bf16.mxu0 0
      %2655 = vmatmul.mubr.bf16.gmra.mrb[0].mxu0 %v2531
      %v2656 = vpop.f32.mrb[0].mxu0
      %v2657 = vadd.f32 0.0, %v2656
      %v2658 = vpop.f32.mrb[0].mxu0
      %v2659 = vpop.f32.mrb[0].mxu0
      %v2660 = vadd.f32 0.0, %v2659
      %v2661 = vpop.f32.mrb[0].mxu0
      %2662 = vmatprep.mubr.bf16.mxu0 0
      %2663 = vmatmul.mubr.bf16.gmra.mrb[0].mxu0 %v2534
      %v2664 = vpop.f32.mrb[0].mxu0
      %v2665 = vadd.f32 0.0, %v2664
      %v2666 = vpop.f32.mrb[0].mxu0
      %v2667 = vpop.f32.mrb[0].mxu0
      %v2668 = vadd.f32 0.0, %v2667
      %v2669 = vpop.f32.mrb[0].mxu0
      %2670 = vmatprep.mubr.bf16.mxu0 0
      %2671 = vmatmul.mubr.bf16.gmra.mrb[0].mxu0 %v2537
      %v2672 = vpop.f32.mrb[0].mxu0
      %v2673 = vadd.f32 0.0, %v2672
      %v2674 = vpop.f32.mrb[0].mxu0
      %v2675 = vpop.f32.mrb[0].mxu0
      %v2676 = vadd.f32 0.0, %v2675
      %v2677 = vpop.f32.mrb[0].mxu0
      %2678 = vmatprep.mubr.bf16.mxu0 0
      %2679 = vmatmul.mubr.bf16.gmra.mrb[0].mxu0 %v2540
      %v2680 = vpop.f32.mrb[0].mxu0
      %v2681 = vadd.f32 0.0, %v2680
      %v2682 = vpop.f32.mrb[0].mxu0
      %v2683 = vpop.f32.mrb[0].mxu0
      %v2684 = vadd.f32 0.0, %v2683
      %v2685 = vpop.f32.mrb[0].mxu0
      %2686 = vmatprep.mubr.bf16.mxu0 0
      %2687 = vmatmul.mubr.bf16.gmra.mrb[0].mxu0 %v2543
      %v2688 = vpop.f32.mrb[0].mxu0
      %v2689 = vadd.f32 0.0, %v2688
      %v2690 = vpop.f32.mrb[0].mxu0
      %v2691 = vpop.f32.mrb[0].mxu0
      %v2692 = vadd.f32 0.0, %v2691
      %v2693 = vpop.f32.mrb[0].mxu0
      %2694 = vmatprep.mubr.bf16.mxu0 0
      %2695 = vmatmul.mubr.bf16.gmra.mrb[0].mxu0 %v2546
      %v2696 = vpop.f32.mrb[0].mxu0
      %v2697 = vadd.f32 0.0, %v2696
      %v2698 = vpop.f32.mrb[0].mxu0
      %v2699 = vpop.f32.mrb[0].mxu0
      %v2700 = vadd.f32 0.0, %v2699
      %v2701 = vpop.f32.mrb[0].mxu0
      %2702 = vmatprep.mubr.bf16.mxu0 0
      %2703 = vmatmul.mubr.bf16.gmra.mrb[0].mxu0 %v2549
      %v2704 = vpop.f32.mrb[0].mxu0
      %v2705 = vadd.f32 0.0, %v2704
      %v2706 = vpop.f32.mrb[0].mxu0
      %v2707 = vpop.f32.mrb[0].mxu0
      %v2708 = vadd.f32 0.0, %v2707
      %v2709 = vpop.f32.mrb[0].mxu0
      %2710 = vmatprep.mubr.bf16.mxu0 0
      %2711 = vmatmul.mubr.bf16.gmra.mrb[0].mxu0 %v2552
      %v2712 = vpop.f32.mrb[0].mxu0
      %v2713 = vadd.f32 0.0, %v2712
      %v2714 = vpop.f32.mrb[0].mxu0
      %v2715 = vpop.f32.mrb[0].mxu0
      %v2716 = vadd.f32 0.0, %v2715
      %v2717 = vpop.f32.mrb[0].mxu0
      %2718 = vmatprep.mubr.bf16.mxu0 0
      %2719 = vmatmul.mubr.bf16.gmra.mrb[0].mxu0 %v2555
      %v2720 = vpop.f32.mrb[0].mxu0
      %v2721 = vadd.f32 0.0, %v2720
      %v2722 = vpop.f32.mrb[0].mxu0
      %v2723 = vpop.f32.mrb[0].mxu0
      %v2724 = vadd.f32 0.0, %v2723
      %v2725 = vpop.f32.mrb[0].mxu0
      %2726 = vmatprep.mubr.bf16.mxu0 0
      %2727 = vmatmul.mubr.bf16.gmra.mrb[0].mxu0 %v2558
      %v2728 = vpop.f32.mrb[0].mxu0
      %v2729 = vadd.f32 0.0, %v2728
      %v2730 = vpop.f32.mrb[0].mxu0
      %v2731 = vpop.f32.mrb[0].mxu0
      %v2732 = vadd.f32 0.0, %v2731
      %v2733 = vpop.f32.mrb[0].mxu0
      %2734 = vmatprep.mubr.bf16.mxu0 0
      %2735 = vmatmul.mubr.bf16.gmra.mrb[0].mxu0 %v2561
      %v2736 = vpop.f32.mrb[0].mxu0
      %v2737 = vadd.f32 0.0, %v2736
      %v2738 = vpop.f32.mrb[0].mxu0
      %v2739 = vpop.f32.mrb[0].mxu0
      %v2740 = vadd.f32 0.0, %v2739
      %v2741 = vpop.f32.mrb[0].mxu0
      %2742 = vdwg.mxu0
      %v2743 = vadd.f32 %v2385, %v2601
      %v2744 = vadd.f32 %v2386, %v2604
      %v2745 = vadd.f32 %v2387, %v2609
      %v2746 = vadd.f32 %v2388, %v2612
      %v2747 = vadd.f32 %v2389, %v2617
      %v2748 = vadd.f32 %v2390, %v2620
      %v2749 = vadd.f32 %v2391, %v2625
      %v2750 = vadd.f32 %v2392, %v2628
      %v2751 = vadd.f32 %v2393, %v2633
      %v2752 = vadd.f32 %v2394, %v2636
      %v2753 = vadd.f32 %v2395, %v2641
      %v2754 = vadd.f32 %v2396, %v2644
      %v2755 = vadd.f32 %v2397, %v2649
      %v2756 = vadd.f32 %v2398, %v2652
      %v2757 = vadd.f32 %v2399, %v2657
      %v2758 = vadd.f32 %v2400, %v2660
      %v2759 = vadd.f32 %v2401, %v2665
      %v2760 = vadd.f32 %v2402, %v2668
      %v2761 = vadd.f32 %v2403, %v2673
      %v2762 = vadd.f32 %v2404, %v2676
      %v2763 = vadd.f32 %v2405, %v2681
      %v2764 = vadd.f32 %v2406, %v2684
      %v2765 = vadd.f32 %v2407, %v2689
      %v2766 = vadd.f32 %v2408, %v2692
      %v2767 = vadd.f32 %v2409, %v2697
      %v2768 = vadd.f32 %v2410, %v2700
      %v2769 = vadd.f32 %v2411, %v2705
      %v2770 = vadd.f32 %v2412, %v2708
      %v2771 = vadd.f32 %v2413, %v2713
      %v2772 = vadd.f32 %v2414, %v2716
      %v2773 = vadd.f32 %v2415, %v2721
      %v2774 = vadd.f32 %v2416, %v2724
      %v2775 = vadd.f32 %v2417, %v2729
      %v2776 = vadd.f32 %v2418, %v2732
      %v2777 = vadd.f32 %v2419, %v2737
      %v2778 = vadd.f32 %v2420, %v2740
      %s2779 = scalar_lea.vmem %s1, 32
      %v2780 = vld [vmem:[%s2779] sm:$0xf]
      %vm2781 = vcmask 1044480
      %v2782 = vrot.slane %v357, 3
      %v2783 = vrot.slane %v358, 3
      %v2784 = vsel %vm2781, %v2782, %v2783
      %v2785 = vrot.slane %v359, 3
      %v2786 = vsel %vm2781, %v2783, %v2785
      %v2787 = vrot.slane %v360, 3
      %v2788 = vsel %vm2781, %v2785, %v2787
      %v2789 = vrot.slane %v361, 3
      %v2790 = vsel %vm2781, %v2787, %v2789
      %v2791 = vrot.slane %v362, 3
      %v2792 = vsel %vm2781, %v2789, %v2791
      %v2793 = vrot.slane %v363, 3
      %v2794 = vsel %vm2781, %v2791, %v2793
      %v2795 = vrot.slane %v364, 3
      %v2796 = vsel %vm2781, %v2793, %v2795
      %v2797 = vrot.slane %v365, 3
      %v2798 = vsel %vm2781, %v2795, %v2797
      %v2799 = vrot.slane %v366, 3
      %v2800 = vsel %vm2781, %v2797, %v2799
      %v2801 = vrot.slane %v367, 3
      %v2802 = vsel %vm2781, %v2799, %v2801
      %v2803 = vrot.slane %v368, 3
      %v2804 = vsel %vm2781, %v2801, %v2803
      %v2805 = vrot.slane %v369, 3
      %v2806 = vsel %vm2781, %v2803, %v2805
      %v2807 = vrot.slane %v370, 3
      %v2808 = vsel %vm2781, %v2805, %v2807
      %v2809 = vrot.slane %v371, 3
      %v2810 = vsel %vm2781, %v2807, %v2809
      %v2811 = vrot.slane %v372, 3
      %v2812 = vsel %vm2781, %v2809, %v2811
      %v2813 = vrot.slane %v1291, 3
      %v2814 = vsel %vm2781, %v2811, %v2813
      %v2815 = vrot.slane %v2193, 3
      %v2816 = vsel %vm2781, %v2813, %v2815
      %v2817 = vrot.slane %v2194, 3
      %v2818 = vsel %vm2781, %v2815, %v2817
      %v2820 = vsel %vm523, %v2784, 0
      %v2823 = vsel %vm523, %v2786, 0
      %v2826 = vsel %vm523, %v2788, 0
      %v2829 = vsel %vm523, %v2790, 0
      %v2832 = vsel %vm523, %v2792, 0
      %v2835 = vsel %vm523, %v2794, 0
      %v2838 = vsel %vm523, %v2796, 0
      %v2841 = vsel %vm523, %v2798, 0
      %v2844 = vsel %vm523, %v2800, 0
      %v2847 = vsel %vm523, %v2802, 0
      %v2850 = vsel %vm523, %v2804, 0
      %v2853 = vsel %vm523, %v2806, 0
      %v2856 = vsel %vm523, %v2808, 0
      %v2859 = vsel %vm523, %v2810, 0
      %v2862 = vsel %vm523, %v2812, 0
      %v2865 = vsel %vm523, %v2814, 0
      %v2868 = vsel %vm523, %v2816, 0
      %v2871 = vsel %vm523, %v2818, 0
      %v2874 = vsel %vm578, %v2780, 0
      %2876 = vmatprep.subr.bf16.mxu0 0
      %2877 = vmatpush1.bf16.msra.mxu0 %v2874
      %2878 = vmatprep.subr.bf16.mxu0 0
      %2879 = vmatpush1.bf16.msra.mxu0 0
      %2880 = vmatprep.subr.bf16.mxu0 0
      %2881 = vmatpush1.bf16.msra.mxu0 0
      %2882 = vmatprep.subr.bf16.mxu0 0
      %2883 = vmatpush1.bf16.msra.mxu0 0
      %2884 = vmatprep.subr.bf16.mxu0 0
      %2885 = vmatpush1.bf16.msra.mxu0 0
      %2886 = vmatprep.subr.bf16.mxu0 0
      %2887 = vmatpush1.bf16.msra.mxu0 0
      %2888 = vmatprep.subr.bf16.mxu0 0
      %2889 = vmatpush1.bf16.msra.mxu0 0
      %2890 = vmatprep.subr.bf16.mxu0 0
      %2891 = vmatpush1.bf16.msra.mxu0 0
      %2892 = vmatprep.subr.bf16.mxu0 0
      %2893 = vmatpush1.bf16.msra.mxu0 0
      %2894 = vmatprep.subr.bf16.mxu0 0
      %2895 = vmatpush1.bf16.msra.mxu0 0
      %2896 = vmatprep.subr.bf16.mxu0 0
      %2897 = vmatpush1.bf16.msra.mxu0 0
      %2898 = vmatprep.subr.bf16.mxu0 0
      %2899 = vmatpush1.bf16.msra.mxu0 0
      %2900 = vmatprep.subr.bf16.mxu0 0
      %2901 = vmatpush1.bf16.msra.mxu0 0
      %2902 = vmatprep.subr.bf16.mxu0 0
      %2903 = vmatpush1.bf16.msra.mxu0 0
      %2904 = vmatprep.subr.bf16.mxu0 0
      %2905 = vmatpush1.bf16.msra.mxu0 0
      %2906 = vmatprep.subr.bf16.mxu0 0
      %2907 = vmatpush1.bf16.msra.mxu0 0
      %2908 = vmatprep.mubr.bf16.mxu0 0
      %2909 = vmatmul.mubr.bf16.gmra.mrb[0].mxu0 %v2820
      %v2910 = vpop.f32.mrb[0].mxu0
      %v2911 = vadd.f32 0.0, %v2910
      %v2912 = vpop.f32.mrb[0].mxu0
      %v2913 = vpop.f32.mrb[0].mxu0
      %v2914 = vadd.f32 0.0, %v2913
      %v2915 = vpop.f32.mrb[0].mxu0
      %2916 = vmatprep.mubr.bf16.mxu0 0
      %2917 = vmatmul.mubr.bf16.gmra.mrb[0].mxu0 %v2823
      %v2918 = vpop.f32.mrb[0].mxu0
      %v2919 = vadd.f32 0.0, %v2918
      %v2920 = vpop.f32.mrb[0].mxu0
      %v2921 = vpop.f32.mrb[0].mxu0
      %v2922 = vadd.f32 0.0, %v2921
      %v2923 = vpop.f32.mrb[0].mxu0
      %2924 = vmatprep.mubr.bf16.mxu0 0
      %2925 = vmatmul.mubr.bf16.gmra.mrb[0].mxu0 %v2826
      %v2926 = vpop.f32.mrb[0].mxu0
      %v2927 = vadd.f32 0.0, %v2926
      %v2928 = vpop.f32.mrb[0].mxu0
      %v2929 = vpop.f32.mrb[0].mxu0
      %v2930 = vadd.f32 0.0, %v2929
      %v2931 = vpop.f32.mrb[0].mxu0
      %2932 = vmatprep.mubr.bf16.mxu0 0
      %2933 = vmatmul.mubr.bf16.gmra.mrb[0].mxu0 %v2829
      %v2934 = vpop.f32.mrb[0].mxu0
      %v2935 = vadd.f32 0.0, %v2934
      %v2936 = vpop.f32.mrb[0].mxu0
      %v2937 = vpop.f32.mrb[0].mxu0
      %v2938 = vadd.f32 0.0, %v2937
      %v2939 = vpop.f32.mrb[0].mxu0
      %2940 = vmatprep.mubr.bf16.mxu0 0
      %2941 = vmatmul.mubr.bf16.gmra.mrb[0].mxu0 %v2832
      %v2942 = vpop.f32.mrb[0].mxu0
      %v2943 = vadd.f32 0.0, %v2942
      %v2944 = vpop.f32.mrb[0].mxu0
      %v2945 = vpop.f32.mrb[0].mxu0
      %v2946 = vadd.f32 0.0, %v2945
      %v2947 = vpop.f32.mrb[0].mxu0
      %2948 = vmatprep.mubr.bf16.mxu0 0
      %2949 = vmatmul.mubr.bf16.gmra.mrb[0].mxu0 %v2835
      %v2950 = vpop.f32.mrb[0].mxu0
      %v2951 = vadd.f32 0.0, %v2950
      %v2952 = vpop.f32.mrb[0].mxu0
      %v2953 = vpop.f32.mrb[0].mxu0
      %v2954 = vadd.f32 0.0, %v2953
      %v2955 = vpop.f32.mrb[0].mxu0
      %2956 = vmatprep.mubr.bf16.mxu0 0
      %2957 = vmatmul.mubr.bf16.gmra.mrb[0].mxu0 %v2838
      %v2958 = vpop.f32.mrb[0].mxu0
      %v2959 = vadd.f32 0.0, %v2958
      %v2960 = vpop.f32.mrb[0].mxu0
      %v2961 = vpop.f32.mrb[0].mxu0
      %v2962 = vadd.f32 0.0, %v2961
      %v2963 = vpop.f32.mrb[0].mxu0
      %2964 = vmatprep.mubr.bf16.mxu0 0
      %2965 = vmatmul.mubr.bf16.gmra.mrb[0].mxu0 %v2841
      %v2966 = vpop.f32.mrb[0].mxu0
      %v2967 = vadd.f32 0.0, %v2966
      %v2968 = vpop.f32.mrb[0].mxu0
      %v2969 = vpop.f32.mrb[0].mxu0
      %v2970 = vadd.f32 0.0, %v2969
      %v2971 = vpop.f32.mrb[0].mxu0
      %2972 = vmatprep.mubr.bf16.mxu0 0
      %2973 = vmatmul.mubr.bf16.gmra.mrb[0].mxu0 %v2844
      %v2974 = vpop.f32.mrb[0].mxu0
      %v2975 = vadd.f32 0.0, %v2974
      %v2976 = vpop.f32.mrb[0].mxu0
      %v2977 = vpop.f32.mrb[0].mxu0
      %v2978 = vadd.f32 0.0, %v2977
      %v2979 = vpop.f32.mrb[0].mxu0
      %2980 = vmatprep.mubr.bf16.mxu0 0
      %2981 = vmatmul.mubr.bf16.gmra.mrb[0].mxu0 %v2847
      %v2982 = vpop.f32.mrb[0].mxu0
      %v2983 = vadd.f32 0.0, %v2982
      %v2984 = vpop.f32.mrb[0].mxu0
      %v2985 = vpop.f32.mrb[0].mxu0
      %v2986 = vadd.f32 0.0, %v2985
      %v2987 = vpop.f32.mrb[0].mxu0
      %2988 = vmatprep.mubr.bf16.mxu0 0
      %2989 = vmatmul.mubr.bf16.gmra.mrb[0].mxu0 %v2850
      %v2990 = vpop.f32.mrb[0].mxu0
      %v2991 = vadd.f32 0.0, %v2990
      %v2992 = vpop.f32.mrb[0].mxu0
      %v2993 = vpop.f32.mrb[0].mxu0
      %v2994 = vadd.f32 0.0, %v2993
      %v2995 = vpop.f32.mrb[0].mxu0
      %2996 = vmatprep.mubr.bf16.mxu0 0
      %2997 = vmatmul.mubr.bf16.gmra.mrb[0].mxu0 %v2853
      %v2998 = vpop.f32.mrb[0].mxu0
      %v2999 = vadd.f32 0.0, %v2998
      %v3000 = vpop.f32.mrb[0].mxu0
      %v3001 = vpop.f32.mrb[0].mxu0
      %v3002 = vadd.f32 0.0, %v3001
      %v3003 = vpop.f32.mrb[0].mxu0
      %3004 = vmatprep.mubr.bf16.mxu0 0
      %3005 = vmatmul.mubr.bf16.gmra.mrb[0].mxu0 %v2856
      %v3006 = vpop.f32.mrb[0].mxu0
      %v3007 = vadd.f32 0.0, %v3006
      %v3008 = vpop.f32.mrb[0].mxu0
      %v3009 = vpop.f32.mrb[0].mxu0
      %v3010 = vadd.f32 0.0, %v3009
      %v3011 = vpop.f32.mrb[0].mxu0
      %3012 = vmatprep.mubr.bf16.mxu0 0
      %3013 = vmatmul.mubr.bf16.gmra.mrb[0].mxu0 %v2859
      %v3014 = vpop.f32.mrb[0].mxu0
      %v3015 = vadd.f32 0.0, %v3014
      %v3016 = vpop.f32.mrb[0].mxu0
      %v3017 = vpop.f32.mrb[0].mxu0
      %v3018 = vadd.f32 0.0, %v3017
      %v3019 = vpop.f32.mrb[0].mxu0
      %3020 = vmatprep.mubr.bf16.mxu0 0
      %3021 = vmatmul.mubr.bf16.gmra.mrb[0].mxu0 %v2862
      %v3022 = vpop.f32.mrb[0].mxu0
      %v3023 = vadd.f32 0.0, %v3022
      %v3024 = vpop.f32.mrb[0].mxu0
      %v3025 = vpop.f32.mrb[0].mxu0
      %v3026 = vadd.f32 0.0, %v3025
      %v3027 = vpop.f32.mrb[0].mxu0
      %3028 = vmatprep.mubr.bf16.mxu0 0
      %3029 = vmatmul.mubr.bf16.gmra.mrb[0].mxu0 %v2865
      %v3030 = vpop.f32.mrb[0].mxu0
      %v3031 = vadd.f32 0.0, %v3030
      %v3032 = vpop.f32.mrb[0].mxu0
      %v3033 = vpop.f32.mrb[0].mxu0
      %v3034 = vadd.f32 0.0, %v3033
      %v3035 = vpop.f32.mrb[0].mxu0
      %3036 = vmatprep.mubr.bf16.mxu0 0
      %3037 = vmatmul.mubr.bf16.gmra.mrb[0].mxu0 %v2868
      %v3038 = vpop.f32.mrb[0].mxu0
      %v3039 = vadd.f32 0.0, %v3038
      %v3040 = vpop.f32.mrb[0].mxu0
      %v3041 = vpop.f32.mrb[0].mxu0
      %v3042 = vadd.f32 0.0, %v3041
      %v3043 = vpop.f32.mrb[0].mxu0
      %3044 = vmatprep.mubr.bf16.mxu0 0
      %3045 = vmatmul.mubr.bf16.gmra.mrb[0].mxu0 %v2871
      %v3046 = vpop.f32.mrb[0].mxu0
      %v3047 = vadd.f32 0.0, %v3046
      %v3048 = vpop.f32.mrb[0].mxu0
      %v3049 = vpop.f32.mrb[0].mxu0
      %v3050 = vadd.f32 0.0, %v3049
      %v3051 = vpop.f32.mrb[0].mxu0
      %3052 = vdwg.mxu0
      %v3053 = vadd.f32 %v2743, %v2911
      %v3054 = vadd.f32 %v2744, %v2914
      %v3055 = vadd.f32 %v2745, %v2919
      %v3056 = vadd.f32 %v2746, %v2922
      %v3057 = vadd.f32 %v2747, %v2927
      %v3058 = vadd.f32 %v2748, %v2930
      %v3059 = vadd.f32 %v2749, %v2935
      %v3060 = vadd.f32 %v2750, %v2938
      %v3061 = vadd.f32 %v2751, %v2943
      %v3062 = vadd.f32 %v2752, %v2946
      %v3063 = vadd.f32 %v2753, %v2951
      %v3064 = vadd.f32 %v2754, %v2954
      %v3065 = vadd.f32 %v2755, %v2959
      %v3066 = vadd.f32 %v2756, %v2962
      %v3067 = vadd.f32 %v2757, %v2967
      %v3068 = vadd.f32 %v2758, %v2970
      %v3069 = vadd.f32 %v2759, %v2975
      %v3070 = vadd.f32 %v2760, %v2978
      %v3071 = vadd.f32 %v2761, %v2983
      %v3072 = vadd.f32 %v2762, %v2986
      %v3073 = vadd.f32 %v2763, %v2991
      %v3074 = vadd.f32 %v2764, %v2994
      %v3075 = vadd.f32 %v2765, %v2999
      %v3076 = vadd.f32 %v2766, %v3002
      %v3077 = vadd.f32 %v2767, %v3007
      %v3078 = vadd.f32 %v2768, %v3010
      %v3079 = vadd.f32 %v2769, %v3015
      %v3080 = vadd.f32 %v2770, %v3018
      %v3081 = vadd.f32 %v2771, %v3023
      %v3082 = vadd.f32 %v2772, %v3026
      %v3083 = vadd.f32 %v2773, %v3031
      %v3084 = vadd.f32 %v2774, %v3034
      %v3085 = vadd.f32 %v2775, %v3039
      %v3086 = vadd.f32 %v2776, %v3042
      %v3087 = vadd.f32 %v2777, %v3047
      %v3088 = vadd.f32 %v2778, %v3050
      %v3089 = vlaneseq
      %v3090 = vshrl.u32 %v3089, 7
      %v3091 = vadd.s32 %v3090, 8
      %v3092 = vadd.s32 %v3090, 16
      %v3093 = vadd.s32 %v3090, 24
      %v3094 = vadd.s32 %v3090, 32
      %v3095 = vadd.s32 %v3090, 40
      %v3096 = vadd.s32 %v3090, 48
      %v3097 = vadd.s32 %v3090, 56
      %v3098 = vadd.s32 %v3090, 64
      %v3099 = vadd.s32 %v3090, 72
      %v3100 = vadd.s32 %v3090, 80
      %v3101 = vadd.s32 %v3090, 88
      %v3102 = vadd.s32 %v3090, 96
      %v3103 = vadd.s32 %v3090, 104
      %v3104 = vadd.s32 %v3090, 112
      %v3105 = vadd.s32 %v3090, 120
      %v3106 = vadd.s32 %v3090, 128
      %v3107 = vadd.s32 %v3090, 136
      %v3108 = vadd.s32 %v3090, 144
      %v3109 = vadd.s32 %v3090, 152
      %v3110 = vadd.s32 %v3090, 160
      %v3111 = vadd.s32 %v3090, 168
      %v3112 = vadd.s32 %v3090, 176
      %v3113 = vadd.s32 %v3090, 184
      %v3114 = vadd.s32 %v3090, 192
      %v3115 = vadd.s32 %v3090, 200
      %v3116 = vadd.s32 %v3090, 208
      %v3117 = vadd.s32 %v3090, 216
      %v3118 = vadd.s32 %v3090, 224
      %v3119 = vadd.s32 %v3090, 232
      %v3120 = vadd.s32 %v3090, 240
      %v3121 = vadd.s32 %v3090, 248
      %v3122 = vadd.s32 %v3090, 256
      %v3123 = vadd.s32 %v3090, 264
      %v3124 = vadd.s32 %v3090, 272
      %v3125 = vadd.s32 %v3090, 280
      %vm3126 = vcmp.lt.s32.totalorder %v3090, 0
      %v3127 = vsub.s32 0, %v3090
      %v3128 = vsel %vm3126, %v3127, %v3090
      %v3129 = vmul.u32.u64.compose %v3128, 3817748708
      %v3130 = vextract.low.u32 %v3129
      %v3131 = vextract.high.u32 %v3129
      %v3132 = vshrl.u32 %v3131, 4
      %v3133 = vmul.u32 %v3132, 18
      %v3134 = vsub.s32 %v3128, %v3133
      %v3135 = vsub.s32 0, %v3134
      %v3136 = vsel %vm3126, %v3135, %v3134
      %vm3137 = vcmp.lt.s32.totalorder %v3091, 0
      %v3138 = vsub.s32 0, %v3091
      %v3139 = vsel %vm3137, %v3138, %v3091
      %v3140 = vmul.u32.u64.compose %v3139, 3817748708
      %v3141 = vextract.low.u32 %v3140
      %v3142 = vextract.high.u32 %v3140
      %v3143 = vshrl.u32 %v3142, 4
      %v3144 = vmul.u32 %v3143, 18
      %v3145 = vsub.s32 %v3139, %v3144
      %v3146 = vsub.s32 0, %v3145
      %v3147 = vsel %vm3137, %v3146, %v3145
      %vm3148 = vcmp.lt.s32.totalorder %v3092, 0
      %v3149 = vsub.s32 0, %v3092
      %v3150 = vsel %vm3148, %v3149, %v3092
      %v3151 = vmul.u32.u64.compose %v3150, 3817748708
      %v3152 = vextract.low.u32 %v3151
      %v3153 = vextract.high.u32 %v3151
      %v3154 = vshrl.u32 %v3153, 4
      %v3155 = vmul.u32 %v3154, 18
      %v3156 = vsub.s32 %v3150, %v3155
      %v3157 = vsub.s32 0, %v3156
      %v3158 = vsel %vm3148, %v3157, %v3156
      %vm3159 = vcmp.lt.s32.totalorder %v3093, 0
      %v3160 = vsub.s32 0, %v3093
      %v3161 = vsel %vm3159, %v3160, %v3093
      %v3162 = vmul.u32.u64.compose %v3161, 3817748708
      %v3163 = vextract.low.u32 %v3162
      %v3164 = vextract.high.u32 %v3162
      %v3165 = vshrl.u32 %v3164, 4
      %v3166 = vmul.u32 %v3165, 18
      %v3167 = vsub.s32 %v3161, %v3166
      %v3168 = vsub.s32 0, %v3167
      %v3169 = vsel %vm3159, %v3168, %v3167
      %vm3170 = vcmp.lt.s32.totalorder %v3094, 0
      %v3171 = vsub.s32 0, %v3094
      %v3172 = vsel %vm3170, %v3171, %v3094
      %v3173 = vmul.u32.u64.compose %v3172, 3817748708
      %v3174 = vextract.low.u32 %v3173
      %v3175 = vextract.high.u32 %v3173
      %v3176 = vshrl.u32 %v3175, 4
      %v3177 = vmul.u32 %v3176, 18
      %v3178 = vsub.s32 %v3172, %v3177
      %v3179 = vsub.s32 0, %v3178
      %v3180 = vsel %vm3170, %v3179, %v3178
      %vm3181 = vcmp.lt.s32.totalorder %v3095, 0
      %v3182 = vsub.s32 0, %v3095
      %v3183 = vsel %vm3181, %v3182, %v3095
      %v3184 = vmul.u32.u64.compose %v3183, 3817748708
      %v3185 = vextract.low.u32 %v3184
      %v3186 = vextract.high.u32 %v3184
      %v3187 = vshrl.u32 %v3186, 4
      %v3188 = vmul.u32 %v3187, 18
      %v3189 = vsub.s32 %v3183, %v3188
      %v3190 = vsub.s32 0, %v3189
      %v3191 = vsel %vm3181, %v3190, %v3189
      %vm3192 = vcmp.lt.s32.totalorder %v3096, 0
      %v3193 = vsub.s32 0, %v3096
      %v3194 = vsel %vm3192, %v3193, %v3096
      %v3195 = vmul.u32.u64.compose %v3194, 3817748708
      %v3196 = vextract.low.u32 %v3195
      %v3197 = vextract.high.u32 %v3195
      %v3198 = vshrl.u32 %v3197, 4
      %v3199 = vmul.u32 %v3198, 18
      %v3200 = vsub.s32 %v3194, %v3199
      %v3201 = vsub.s32 0, %v3200
      %v3202 = vsel %vm3192, %v3201, %v3200
      %vm3203 = vcmp.lt.s32.totalorder %v3097, 0
      %v3204 = vsub.s32 0, %v3097
      %v3205 = vsel %vm3203, %v3204, %v3097
      %v3206 = vmul.u32.u64.compose %v3205, 3817748708
      %v3207 = vextract.low.u32 %v3206
      %v3208 = vextract.high.u32 %v3206
      %v3209 = vshrl.u32 %v3208, 4
      %v3210 = vmul.u32 %v3209, 18
      %v3211 = vsub.s32 %v3205, %v3210
      %v3212 = vsub.s32 0, %v3211
      %v3213 = vsel %vm3203, %v3212, %v3211
      %vm3214 = vcmp.lt.s32.totalorder %v3098, 0
      %v3215 = vsub.s32 0, %v3098
      %v3216 = vsel %vm3214, %v3215, %v3098
      %v3217 = vmul.u32.u64.compose %v3216, 3817748708
      %v3218 = vextract.low.u32 %v3217
      %v3219 = vextract.high.u32 %v3217
      %v3220 = vshrl.u32 %v3219, 4
      %v3221 = vmul.u32 %v3220, 18
      %v3222 = vsub.s32 %v3216, %v3221
      %v3223 = vsub.s32 0, %v3222
      %v3224 = vsel %vm3214, %v3223, %v3222
      %vm3225 = vcmp.lt.s32.totalorder %v3099, 0
      %v3226 = vsub.s32 0, %v3099
      %v3227 = vsel %vm3225, %v3226, %v3099
      %v3228 = vmul.u32.u64.compose %v3227, 3817748708
      %v3229 = vextract.low.u32 %v3228
      %v3230 = vextract.high.u32 %v3228
      %v3231 = vshrl.u32 %v3230, 4
      %v3232 = vmul.u32 %v3231, 18
      %v3233 = vsub.s32 %v3227, %v3232
      %v3234 = vsub.s32 0, %v3233
      %v3235 = vsel %vm3225, %v3234, %v3233
      %vm3236 = vcmp.lt.s32.totalorder %v3100, 0
      %v3237 = vsub.s32 0, %v3100
      %v3238 = vsel %vm3236, %v3237, %v3100
      %v3239 = vmul.u32.u64.compose %v3238, 3817748708
      %v3240 = vextract.low.u32 %v3239
      %v3241 = vextract.high.u32 %v3239
      %v3242 = vshrl.u32 %v3241, 4
      %v3243 = vmul.u32 %v3242, 18
      %v3244 = vsub.s32 %v3238, %v3243
      %v3245 = vsub.s32 0, %v3244
      %v3246 = vsel %vm3236, %v3245, %v3244
      %vm3247 = vcmp.lt.s32.totalorder %v3101, 0
      %v3248 = vsub.s32 0, %v3101
      %v3249 = vsel %vm3247, %v3248, %v3101
      %v3250 = vmul.u32.u64.compose %v3249, 3817748708
      %v3251 = vextract.low.u32 %v3250
      %v3252 = vextract.high.u32 %v3250
      %v3253 = vshrl.u32 %v3252, 4
      %v3254 = vmul.u32 %v3253, 18
      %v3255 = vsub.s32 %v3249, %v3254
      %v3256 = vsub.s32 0, %v3255
      %v3257 = vsel %vm3247, %v3256, %v3255
      %vm3258 = vcmp.lt.s32.totalorder %v3102, 0
      %v3259 = vsub.s32 0, %v3102
      %v3260 = vsel %vm3258, %v3259, %v3102
      %v3261 = vmul.u32.u64.compose %v3260, 3817748708
      %v3262 = vextract.low.u32 %v3261
      %v3263 = vextract.high.u32 %v3261
      %v3264 = vshrl.u32 %v3263, 4
      %v3265 = vmul.u32 %v3264, 18
      %v3266 = vsub.s32 %v3260, %v3265
      %v3267 = vsub.s32 0, %v3266
      %v3268 = vsel %vm3258, %v3267, %v3266
      %vm3269 = vcmp.lt.s32.totalorder %v3103, 0
      %v3270 = vsub.s32 0, %v3103
      %v3271 = vsel %vm3269, %v3270, %v3103
      %v3272 = vmul.u32.u64.compose %v3271, 3817748708
      %v3273 = vextract.low.u32 %v3272
      %v3274 = vextract.high.u32 %v3272
      %v3275 = vshrl.u32 %v3274, 4
      %v3276 = vmul.u32 %v3275, 18
      %v3277 = vsub.s32 %v3271, %v3276
      %v3278 = vsub.s32 0, %v3277
      %v3279 = vsel %vm3269, %v3278, %v3277
      %vm3280 = vcmp.lt.s32.totalorder %v3104, 0
      %v3281 = vsub.s32 0, %v3104
      %v3282 = vsel %vm3280, %v3281, %v3104
      %v3283 = vmul.u32.u64.compose %v3282, 3817748708
      %v3284 = vextract.low.u32 %v3283
      %v3285 = vextract.high.u32 %v3283
      %v3286 = vshrl.u32 %v3285, 4
      %v3287 = vmul.u32 %v3286, 18
      %v3288 = vsub.s32 %v3282, %v3287
      %v3289 = vsub.s32 0, %v3288
      %v3290 = vsel %vm3280, %v3289, %v3288
      %vm3291 = vcmp.lt.s32.totalorder %v3105, 0
      %v3292 = vsub.s32 0, %v3105
      %v3293 = vsel %vm3291, %v3292, %v3105
      %v3294 = vmul.u32.u64.compose %v3293, 3817748708
      %v3295 = vextract.low.u32 %v3294
      %v3296 = vextract.high.u32 %v3294
      %v3297 = vshrl.u32 %v3296, 4
      %v3298 = vmul.u32 %v3297, 18
      %v3299 = vsub.s32 %v3293, %v3298
      %v3300 = vsub.s32 0, %v3299
      %v3301 = vsel %vm3291, %v3300, %v3299
      %vm3302 = vcmp.lt.s32.totalorder %v3106, 0
      %v3303 = vsub.s32 0, %v3106
      %v3304 = vsel %vm3302, %v3303, %v3106
      %v3305 = vmul.u32.u64.compose %v3304, 3817748708
      %v3306 = vextract.low.u32 %v3305
      %v3307 = vextract.high.u32 %v3305
      %v3308 = vshrl.u32 %v3307, 4
      %v3309 = vmul.u32 %v3308, 18
      %v3310 = vsub.s32 %v3304, %v3309
      %v3311 = vsub.s32 0, %v3310
      %v3312 = vsel %vm3302, %v3311, %v3310
      %vm3313 = vcmp.lt.s32.totalorder %v3107, 0
      %v3314 = vsub.s32 0, %v3107
      %v3315 = vsel %vm3313, %v3314, %v3107
      %v3316 = vmul.u32.u64.compose %v3315, 3817748708
      %v3317 = vextract.low.u32 %v3316
      %v3318 = vextract.high.u32 %v3316
      %v3319 = vshrl.u32 %v3318, 4
      %v3320 = vmul.u32 %v3319, 18
      %v3321 = vsub.s32 %v3315, %v3320
      %v3322 = vsub.s32 0, %v3321
      %v3323 = vsel %vm3313, %v3322, %v3321
      %vm3324 = vcmp.lt.s32.totalorder %v3108, 0
      %v3325 = vsub.s32 0, %v3108
      %v3326 = vsel %vm3324, %v3325, %v3108
      %v3327 = vmul.u32.u64.compose %v3326, 3817748708
      %v3328 = vextract.low.u32 %v3327
      %v3329 = vextract.high.u32 %v3327
      %v3330 = vshrl.u32 %v3329, 4
      %v3331 = vmul.u32 %v3330, 18
      %v3332 = vsub.s32 %v3326, %v3331
      %v3333 = vsub.s32 0, %v3332
      %v3334 = vsel %vm3324, %v3333, %v3332
      %vm3335 = vcmp.lt.s32.totalorder %v3109, 0
      %v3336 = vsub.s32 0, %v3109
      %v3337 = vsel %vm3335, %v3336, %v3109
      %v3338 = vmul.u32.u64.compose %v3337, 3817748708
      %v3339 = vextract.low.u32 %v3338
      %v3340 = vextract.high.u32 %v3338
      %v3341 = vshrl.u32 %v3340, 4
      %v3342 = vmul.u32 %v3341, 18
      %v3343 = vsub.s32 %v3337, %v3342
      %v3344 = vsub.s32 0, %v3343
      %v3345 = vsel %vm3335, %v3344, %v3343
      %vm3346 = vcmp.lt.s32.totalorder %v3110, 0
      %v3347 = vsub.s32 0, %v3110
      %v3348 = vsel %vm3346, %v3347, %v3110
      %v3349 = vmul.u32.u64.compose %v3348, 3817748708
      %v3350 = vextract.low.u32 %v3349
      %v3351 = vextract.high.u32 %v3349
      %v3352 = vshrl.u32 %v3351, 4
      %v3353 = vmul.u32 %v3352, 18
      %v3354 = vsub.s32 %v3348, %v3353
      %v3355 = vsub.s32 0, %v3354
      %v3356 = vsel %vm3346, %v3355, %v3354
      %vm3357 = vcmp.lt.s32.totalorder %v3111, 0
      %v3358 = vsub.s32 0, %v3111
      %v3359 = vsel %vm3357, %v3358, %v3111
      %v3360 = vmul.u32.u64.compose %v3359, 3817748708
      %v3361 = vextract.low.u32 %v3360
      %v3362 = vextract.high.u32 %v3360
      %v3363 = vshrl.u32 %v3362, 4
      %v3364 = vmul.u32 %v3363, 18
      %v3365 = vsub.s32 %v3359, %v3364
      %v3366 = vsub.s32 0, %v3365
      %v3367 = vsel %vm3357, %v3366, %v3365
      %vm3368 = vcmp.lt.s32.totalorder %v3112, 0
      %v3369 = vsub.s32 0, %v3112
      %v3370 = vsel %vm3368, %v3369, %v3112
      %v3371 = vmul.u32.u64.compose %v3370, 3817748708
      %v3372 = vextract.low.u32 %v3371
      %v3373 = vextract.high.u32 %v3371
      %v3374 = vshrl.u32 %v3373, 4
      %v3375 = vmul.u32 %v3374, 18
      %v3376 = vsub.s32 %v3370, %v3375
      %v3377 = vsub.s32 0, %v3376
      %v3378 = vsel %vm3368, %v3377, %v3376
      %vm3379 = vcmp.lt.s32.totalorder %v3113, 0
      %v3380 = vsub.s32 0, %v3113
      %v3381 = vsel %vm3379, %v3380, %v3113
      %v3382 = vmul.u32.u64.compose %v3381, 3817748708
      %v3383 = vextract.low.u32 %v3382
      %v3384 = vextract.high.u32 %v3382
      %v3385 = vshrl.u32 %v3384, 4
      %v3386 = vmul.u32 %v3385, 18
      %v3387 = vsub.s32 %v3381, %v3386
      %v3388 = vsub.s32 0, %v3387
      %v3389 = vsel %vm3379, %v3388, %v3387
      %vm3390 = vcmp.lt.s32.totalorder %v3114, 0
      %v3391 = vsub.s32 0, %v3114
      %v3392 = vsel %vm3390, %v3391, %v3114
      %v3393 = vmul.u32.u64.compose %v3392, 3817748708
      %v3394 = vextract.low.u32 %v3393
      %v3395 = vextract.high.u32 %v3393
      %v3396 = vshrl.u32 %v3395, 4
      %v3397 = vmul.u32 %v3396, 18
      %v3398 = vsub.s32 %v3392, %v3397
      %v3399 = vsub.s32 0, %v3398
      %v3400 = vsel %vm3390, %v3399, %v3398
      %vm3401 = vcmp.lt.s32.totalorder %v3115, 0
      %v3402 = vsub.s32 0, %v3115
      %v3403 = vsel %vm3401, %v3402, %v3115
      %v3404 = vmul.u32.u64.compose %v3403, 3817748708
      %v3405 = vextract.low.u32 %v3404
      %v3406 = vextract.high.u32 %v3404
      %v3407 = vshrl.u32 %v3406, 4
      %v3408 = vmul.u32 %v3407, 18
      %v3409 = vsub.s32 %v3403, %v3408
      %v3410 = vsub.s32 0, %v3409
      %v3411 = vsel %vm3401, %v3410, %v3409
      %vm3412 = vcmp.lt.s32.totalorder %v3116, 0
      %v3413 = vsub.s32 0, %v3116
      %v3414 = vsel %vm3412, %v3413, %v3116
      %v3415 = vmul.u32.u64.compose %v3414, 3817748708
      %v3416 = vextract.low.u32 %v3415
      %v3417 = vextract.high.u32 %v3415
      %v3418 = vshrl.u32 %v3417, 4
      %v3419 = vmul.u32 %v3418, 18
      %v3420 = vsub.s32 %v3414, %v3419
      %v3421 = vsub.s32 0, %v3420
      %v3422 = vsel %vm3412, %v3421, %v3420
      %vm3423 = vcmp.lt.s32.totalorder %v3117, 0
      %v3424 = vsub.s32 0, %v3117
      %v3425 = vsel %vm3423, %v3424, %v3117
      %v3426 = vmul.u32.u64.compose %v3425, 3817748708
      %v3427 = vextract.low.u32 %v3426
      %v3428 = vextract.high.u32 %v3426
      %v3429 = vshrl.u32 %v3428, 4
      %v3430 = vmul.u32 %v3429, 18
      %v3431 = vsub.s32 %v3425, %v3430
      %v3432 = vsub.s32 0, %v3431
      %v3433 = vsel %vm3423, %v3432, %v3431
      %vm3434 = vcmp.lt.s32.totalorder %v3118, 0
      %v3435 = vsub.s32 0, %v3118
      %v3436 = vsel %vm3434, %v3435, %v3118
      %v3437 = vmul.u32.u64.compose %v3436, 3817748708
      %v3438 = vextract.low.u32 %v3437
      %v3439 = vextract.high.u32 %v3437
      %v3440 = vshrl.u32 %v3439, 4
      %v3441 = vmul.u32 %v3440, 18
      %v3442 = vsub.s32 %v3436, %v3441
      %v3443 = vsub.s32 0, %v3442
      %v3444 = vsel %vm3434, %v3443, %v3442
      %vm3445 = vcmp.lt.s32.totalorder %v3119, 0
      %v3446 = vsub.s32 0, %v3119
      %v3447 = vsel %vm3445, %v3446, %v3119
      %v3448 = vmul.u32.u64.compose %v3447, 3817748708
      %v3449 = vextract.low.u32 %v3448
      %v3450 = vextract.high.u32 %v3448
      %v3451 = vshrl.u32 %v3450, 4
      %v3452 = vmul.u32 %v3451, 18
      %v3453 = vsub.s32 %v3447, %v3452
      %v3454 = vsub.s32 0, %v3453
      %v3455 = vsel %vm3445, %v3454, %v3453
      %vm3456 = vcmp.lt.s32.totalorder %v3120, 0
      %v3457 = vsub.s32 0, %v3120
      %v3458 = vsel %vm3456, %v3457, %v3120
      %v3459 = vmul.u32.u64.compose %v3458, 3817748708
      %v3460 = vextract.low.u32 %v3459
      %v3461 = vextract.high.u32 %v3459
      %v3462 = vshrl.u32 %v3461, 4
      %v3463 = vmul.u32 %v3462, 18
      %v3464 = vsub.s32 %v3458, %v3463
      %v3465 = vsub.s32 0, %v3464
      %v3466 = vsel %vm3456, %v3465, %v3464
      %vm3467 = vcmp.lt.s32.totalorder %v3121, 0
      %v3468 = vsub.s32 0, %v3121
      %v3469 = vsel %vm3467, %v3468, %v3121
      %v3470 = vmul.u32.u64.compose %v3469, 3817748708
      %v3471 = vextract.low.u32 %v3470
      %v3472 = vextract.high.u32 %v3470
      %v3473 = vshrl.u32 %v3472, 4
      %v3474 = vmul.u32 %v3473, 18
      %v3475 = vsub.s32 %v3469, %v3474
      %v3476 = vsub.s32 0, %v3475
      %v3477 = vsel %vm3467, %v3476, %v3475
      %vm3478 = vcmp.lt.s32.totalorder %v3122, 0
      %v3479 = vsub.s32 0, %v3122
      %v3480 = vsel %vm3478, %v3479, %v3122
      %v3481 = vmul.u32.u64.compose %v3480, 3817748708
      %v3482 = vextract.low.u32 %v3481
      %v3483 = vextract.high.u32 %v3481
      %v3484 = vshrl.u32 %v3483, 4
      %v3485 = vmul.u32 %v3484, 18
      %v3486 = vsub.s32 %v3480, %v3485
      %v3487 = vsub.s32 0, %v3486
      %v3488 = vsel %vm3478, %v3487, %v3486
      %vm3489 = vcmp.lt.s32.totalorder %v3123, 0
      %v3490 = vsub.s32 0, %v3123
      %v3491 = vsel %vm3489, %v3490, %v3123
      %v3492 = vmul.u32.u64.compose %v3491, 3817748708
      %v3493 = vextract.low.u32 %v3492
      %v3494 = vextract.high.u32 %v3492
      %v3495 = vshrl.u32 %v3494, 4
      %v3496 = vmul.u32 %v3495, 18
      %v3497 = vsub.s32 %v3491, %v3496
      %v3498 = vsub.s32 0, %v3497
      %v3499 = vsel %vm3489, %v3498, %v3497
      %vm3500 = vcmp.lt.s32.totalorder %v3124, 0
      %v3501 = vsub.s32 0, %v3124
      %v3502 = vsel %vm3500, %v3501, %v3124
      %v3503 = vmul.u32.u64.compose %v3502, 3817748708
      %v3504 = vextract.low.u32 %v3503
      %v3505 = vextract.high.u32 %v3503
      %v3506 = vshrl.u32 %v3505, 4
      %v3507 = vmul.u32 %v3506, 18
      %v3508 = vsub.s32 %v3502, %v3507
      %v3509 = vsub.s32 0, %v3508
      %v3510 = vsel %vm3500, %v3509, %v3508
      %vm3511 = vcmp.lt.s32.totalorder %v3125, 0
      %v3512 = vsub.s32 0, %v3125
      %v3513 = vsel %vm3511, %v3512, %v3125
      %v3514 = vmul.u32.u64.compose %v3513, 3817748708
      %v3515 = vextract.low.u32 %v3514
      %v3516 = vextract.high.u32 %v3514
      %v3517 = vshrl.u32 %v3516, 4
      %v3518 = vmul.u32 %v3517, 18
      %v3519 = vsub.s32 %v3513, %v3518
      %v3520 = vsub.s32 0, %v3519
      %v3521 = vsel %vm3511, %v3520, %v3519
      %vm3522 = vcmp.ne.s32.totalorder %v3136, 0
      %vm3523 = vcmp.ne.s32.totalorder %v3147, 0
      %vm3524 = vcmp.ne.s32.totalorder %v3158, 0
      %vm3525 = vcmp.ne.s32.totalorder %v3169, 0
      %vm3526 = vcmp.ne.s32.totalorder %v3180, 0
      %vm3527 = vcmp.ne.s32.totalorder %v3191, 0
      %vm3528 = vcmp.ne.s32.totalorder %v3202, 0
      %vm3529 = vcmp.ne.s32.totalorder %v3213, 0
      %vm3530 = vcmp.ne.s32.totalorder %v3224, 0
      %vm3531 = vcmp.ne.s32.totalorder %v3235, 0
      %vm3532 = vcmp.ne.s32.totalorder %v3246, 0
      %vm3533 = vcmp.ne.s32.totalorder %v3257, 0
      %vm3534 = vcmp.ne.s32.totalorder %v3268, 0
      %vm3535 = vcmp.ne.s32.totalorder %v3279, 0
      %vm3536 = vcmp.ne.s32.totalorder %v3290, 0
      %vm3537 = vcmp.ne.s32.totalorder %v3301, 0
      %vm3538 = vcmp.ne.s32.totalorder %v3312, 0
      %vm3539 = vcmp.ne.s32.totalorder %v3323, 0
      %vm3540 = vcmp.ne.s32.totalorder %v3334, 0
      %vm3541 = vcmp.ne.s32.totalorder %v3345, 0
      %vm3542 = vcmp.ne.s32.totalorder %v3356, 0
      %vm3543 = vcmp.ne.s32.totalorder %v3367, 0
      %vm3544 = vcmp.ne.s32.totalorder %v3378, 0
      %vm3545 = vcmp.ne.s32.totalorder %v3389, 0
      %vm3546 = vcmp.ne.s32.totalorder %v3400, 0
      %vm3547 = vcmp.ne.s32.totalorder %v3411, 0
      %vm3548 = vcmp.ne.s32.totalorder %v3422, 0
      %vm3549 = vcmp.ne.s32.totalorder %v3433, 0
      %vm3550 = vcmp.ne.s32.totalorder %v3444, 0
      %vm3551 = vcmp.ne.s32.totalorder %v3455, 0
      %vm3552 = vcmp.ne.s32.totalorder %v3466, 0
      %vm3553 = vcmp.ne.s32.totalorder %v3477, 0
      %vm3554 = vcmp.ne.s32.totalorder %v3488, 0
      %vm3555 = vcmp.ne.s32.totalorder %v3499, 0
      %vm3556 = vcmp.ne.s32.totalorder %v3510, 0
      %vm3557 = vcmp.ne.s32.totalorder %v3521, 0
      %vm3558 = vcmp.lt.s32.totalorder %v3136, 0
      %vm3559 = vcmp.lt.s32.totalorder %v3147, 0
      %vm3560 = vcmp.lt.s32.totalorder %v3158, 0
      %vm3561 = vcmp.lt.s32.totalorder %v3169, 0
      %vm3562 = vcmp.lt.s32.totalorder %v3180, 0
      %vm3563 = vcmp.lt.s32.totalorder %v3191, 0
      %vm3564 = vcmp.lt.s32.totalorder %v3202, 0
      %vm3565 = vcmp.lt.s32.totalorder %v3213, 0
      %vm3566 = vcmp.lt.s32.totalorder %v3224, 0
      %vm3567 = vcmp.lt.s32.totalorder %v3235, 0
      %vm3568 = vcmp.lt.s32.totalorder %v3246, 0
      %vm3569 = vcmp.lt.s32.totalorder %v3257, 0
      %vm3570 = vcmp.lt.s32.totalorder %v3268, 0
      %vm3571 = vcmp.lt.s32.totalorder %v3279, 0
      %vm3572 = vcmp.lt.s32.totalorder %v3290, 0
      %vm3573 = vcmp.lt.s32.totalorder %v3301, 0
      %vm3574 = vcmp.lt.s32.totalorder %v3312, 0
      %vm3575 = vcmp.lt.s32.totalorder %v3323, 0
      %vm3576 = vcmp.lt.s32.totalorder %v3334, 0
      %vm3577 = vcmp.lt.s32.totalorder %v3345, 0
      %vm3578 = vcmp.lt.s32.totalorder %v3356, 0
      %vm3579 = vcmp.lt.s32.totalorder %v3367, 0
      %vm3580 = vcmp.lt.s32.totalorder %v3378, 0
      %vm3581 = vcmp.lt.s32.totalorder %v3389, 0
      %vm3582 = vcmp.lt.s32.totalorder %v3400, 0
      %vm3583 = vcmp.lt.s32.totalorder %v3411, 0
      %vm3584 = vcmp.lt.s32.totalorder %v3422, 0
      %vm3585 = vcmp.lt.s32.totalorder %v3433, 0
      %vm3586 = vcmp.lt.s32.totalorder %v3444, 0
      %vm3587 = vcmp.lt.s32.totalorder %v3455, 0
      %vm3588 = vcmp.lt.s32.totalorder %v3466, 0
      %vm3589 = vcmp.lt.s32.totalorder %v3477, 0
      %vm3590 = vcmp.lt.s32.totalorder %v3488, 0
      %vm3591 = vcmp.lt.s32.totalorder %v3499, 0
      %vm3592 = vcmp.lt.s32.totalorder %v3510, 0
      %vm3593 = vcmp.lt.s32.totalorder %v3521, 0
      %vm3594 = vmand %vm3558, %vm3522
      %vm3595 = vmand %vm3559, %vm3523
      %vm3596 = vmand %vm3560, %vm3524
      %vm3597 = vmand %vm3561, %vm3525
      %vm3598 = vmand %vm3562, %vm3526
      %vm3599 = vmand %vm3563, %vm3527
      %vm3600 = vmand %vm3564, %vm3528
      %vm3601 = vmand %vm3565, %vm3529
      %vm3602 = vmand %vm3566, %vm3530
      %vm3603 = vmand %vm3567, %vm3531
      %vm3604 = vmand %vm3568, %vm3532
      %vm3605 = vmand %vm3569, %vm3533
      %vm3606 = vmand %vm3570, %vm3534
      %vm3607 = vmand %vm3571, %vm3535
      %vm3608 = vmand %vm3572, %vm3536
      %vm3609 = vmand %vm3573, %vm3537
      %vm3610 = vmand %vm3574, %vm3538
      %vm3611 = vmand %vm3575, %vm3539
      %vm3612 = vmand %vm3576, %vm3540
      %vm3613 = vmand %vm3577, %vm3541
      %vm3614 = vmand %vm3578, %vm3542
      %vm3615 = vmand %vm3579, %vm3543
      %vm3616 = vmand %vm3580, %vm3544
      %vm3617 = vmand %vm3581, %vm3545
      %vm3618 = vmand %vm3582, %vm3546
      %vm3619 = vmand %vm3583, %vm3547
      %vm3620 = vmand %vm3584, %vm3548
      %vm3621 = vmand %vm3585, %vm3549
      %vm3622 = vmand %vm3586, %vm3550
      %vm3623 = vmand %vm3587, %vm3551
      %vm3624 = vmand %vm3588, %vm3552
      %vm3625 = vmand %vm3589, %vm3553
      %vm3626 = vmand %vm3590, %vm3554
      %vm3627 = vmand %vm3591, %vm3555
      %vm3628 = vmand %vm3592, %vm3556
      %vm3629 = vmand %vm3593, %vm3557
      %v3630 = vadd.s32 %v3136, 18
      %v3631 = vadd.s32 %v3147, 18
      %v3632 = vadd.s32 %v3158, 18
      %v3633 = vadd.s32 %v3169, 18
      %v3634 = vadd.s32 %v3180, 18
      %v3635 = vadd.s32 %v3191, 18
      %v3636 = vadd.s32 %v3202, 18
      %v3637 = vadd.s32 %v3213, 18
      %v3638 = vadd.s32 %v3224, 18
      %v3639 = vadd.s32 %v3235, 18
      %v3640 = vadd.s32 %v3246, 18
      %v3641 = vadd.s32 %v3257, 18
      %v3642 = vadd.s32 %v3268, 18
      %v3643 = vadd.s32 %v3279, 18
      %v3644 = vadd.s32 %v3290, 18
      %v3645 = vadd.s32 %v3301, 18
      %v3646 = vadd.s32 %v3312, 18
      %v3647 = vadd.s32 %v3323, 18
      %v3648 = vadd.s32 %v3334, 18
      %v3649 = vadd.s32 %v3345, 18
      %v3650 = vadd.s32 %v3356, 18
      %v3651 = vadd.s32 %v3367, 18
      %v3652 = vadd.s32 %v3378, 18
      %v3653 = vadd.s32 %v3389, 18
      %v3654 = vadd.s32 %v3400, 18
      %v3655 = vadd.s32 %v3411, 18
      %v3656 = vadd.s32 %v3422, 18
      %v3657 = vadd.s32 %v3433, 18
      %v3658 = vadd.s32 %v3444, 18
      %v3659 = vadd.s32 %v3455, 18
      %v3660 = vadd.s32 %v3466, 18
      %v3661 = vadd.s32 %v3477, 18
      %v3662 = vadd.s32 %v3488, 18
      %v3663 = vadd.s32 %v3499, 18
      %v3664 = vadd.s32 %v3510, 18
      %v3665 = vadd.s32 %v3521, 18
      %v3666 = vsel %vm3594, %v3630, %v3136
      %v3667 = vsel %vm3595, %v3631, %v3147
      %v3668 = vsel %vm3596, %v3632, %v3158
      %v3669 = vsel %vm3597, %v3633, %v3169
      %v3670 = vsel %vm3598, %v3634, %v3180
      %v3671 = vsel %vm3599, %v3635, %v3191
      %v3672 = vsel %vm3600, %v3636, %v3202
      %v3673 = vsel %vm3601, %v3637, %v3213
      %v3674 = vsel %vm3602, %v3638, %v3224
      %v3675 = vsel %vm3603, %v3639, %v3235
      %v3676 = vsel %vm3604, %v3640, %v3246
      %v3677 = vsel %vm3605, %v3641, %v3257
      %v3678 = vsel %vm3606, %v3642, %v3268
      %v3679 = vsel %vm3607, %v3643, %v3279
      %v3680 = vsel %vm3608, %v3644, %v3290
      %v3681 = vsel %vm3609, %v3645, %v3301
      %v3682 = vsel %vm3610, %v3646, %v3312
      %v3683 = vsel %vm3611, %v3647, %v3323
      %v3684 = vsel %vm3612, %v3648, %v3334
      %v3685 = vsel %vm3613, %v3649, %v3345
      %v3686 = vsel %vm3614, %v3650, %v3356
      %v3687 = vsel %vm3615, %v3651, %v3367
      %v3688 = vsel %vm3616, %v3652, %v3378
      %v3689 = vsel %vm3617, %v3653, %v3389
      %v3690 = vsel %vm3618, %v3654, %v3400
      %v3691 = vsel %vm3619, %v3655, %v3411
      %v3692 = vsel %vm3620, %v3656, %v3422
      %v3693 = vsel %vm3621, %v3657, %v3433
      %v3694 = vsel %vm3622, %v3658, %v3444
      %v3695 = vsel %vm3623, %v3659, %v3455
      %v3696 = vsel %vm3624, %v3660, %v3466
      %v3697 = vsel %vm3625, %v3661, %v3477
      %v3698 = vsel %vm3626, %v3662, %v3488
      %v3699 = vsel %vm3627, %v3663, %v3499
      %v3700 = vsel %vm3628, %v3664, %v3510
      %v3701 = vsel %vm3629, %v3665, %v3521
      %vm3702 = vcmp.lt.s32.totalorder %v3666, 16
      %vm3703 = vcmp.lt.s32.totalorder %v3667, 16
      %vm3704 = vcmp.lt.s32.totalorder %v3668, 16
      %vm3705 = vcmp.lt.s32.totalorder %v3669, 16
      %vm3706 = vcmp.lt.s32.totalorder %v3670, 16
      %vm3707 = vcmp.lt.s32.totalorder %v3671, 16
      %vm3708 = vcmp.lt.s32.totalorder %v3672, 16
      %vm3709 = vcmp.lt.s32.totalorder %v3673, 16
      %vm3710 = vcmp.lt.s32.totalorder %v3674, 16
      %vm3711 = vcmp.lt.s32.totalorder %v3675, 16
      %vm3712 = vcmp.lt.s32.totalorder %v3676, 16
      %vm3713 = vcmp.lt.s32.totalorder %v3677, 16
      %vm3714 = vcmp.lt.s32.totalorder %v3678, 16
      %vm3715 = vcmp.lt.s32.totalorder %v3679, 16
      %vm3716 = vcmp.lt.s32.totalorder %v3680, 16
      %vm3717 = vcmp.lt.s32.totalorder %v3681, 16
      %vm3718 = vcmp.lt.s32.totalorder %v3682, 16
      %vm3719 = vcmp.lt.s32.totalorder %v3683, 16
      %vm3720 = vcmp.lt.s32.totalorder %v3684, 16
      %vm3721 = vcmp.lt.s32.totalorder %v3685, 16
      %vm3722 = vcmp.lt.s32.totalorder %v3686, 16
      %vm3723 = vcmp.lt.s32.totalorder %v3687, 16
      %vm3724 = vcmp.lt.s32.totalorder %v3688, 16
      %vm3725 = vcmp.lt.s32.totalorder %v3689, 16
      %vm3726 = vcmp.lt.s32.totalorder %v3690, 16
      %vm3727 = vcmp.lt.s32.totalorder %v3691, 16
      %vm3728 = vcmp.lt.s32.totalorder %v3692, 16
      %vm3729 = vcmp.lt.s32.totalorder %v3693, 16
      %vm3730 = vcmp.lt.s32.totalorder %v3694, 16
      %vm3731 = vcmp.lt.s32.totalorder %v3695, 16
      %vm3732 = vcmp.lt.s32.totalorder %v3696, 16
      %vm3733 = vcmp.lt.s32.totalorder %v3697, 16
      %vm3734 = vcmp.lt.s32.totalorder %v3698, 16
      %vm3735 = vcmp.lt.s32.totalorder %v3699, 16
      %vm3736 = vcmp.lt.s32.totalorder %v3700, 16
      %vm3737 = vcmp.lt.s32.totalorder %v3701, 16
      %v3738 = vsel %vm3702, 1, 0
      %v3739 = vsel %vm3703, 1, 0
      %v3740 = vsel %vm3704, 1, 0
      %v3741 = vsel %vm3705, 1, 0
      %v3742 = vsel %vm3706, 1, 0
      %v3743 = vsel %vm3707, 1, 0
      %v3744 = vsel %vm3708, 1, 0
      %v3745 = vsel %vm3709, 1, 0
      %v3746 = vsel %vm3710, 1, 0
      %v3747 = vsel %vm3711, 1, 0
      %v3748 = vsel %vm3712, 1, 0
      %v3749 = vsel %vm3713, 1, 0
      %v3750 = vsel %vm3714, 1, 0
      %v3751 = vsel %vm3715, 1, 0
      %v3752 = vsel %vm3716, 1, 0
      %v3753 = vsel %vm3717, 1, 0
      %v3754 = vsel %vm3718, 1, 0
      %v3755 = vsel %vm3719, 1, 0
      %v3756 = vsel %vm3720, 1, 0
      %v3757 = vsel %vm3721, 1, 0
      %v3758 = vsel %vm3722, 1, 0
      %v3759 = vsel %vm3723, 1, 0
      %v3760 = vsel %vm3724, 1, 0
      %v3761 = vsel %vm3725, 1, 0
      %v3762 = vsel %vm3726, 1, 0
      %v3763 = vsel %vm3727, 1, 0
      %v3764 = vsel %vm3728, 1, 0
      %v3765 = vsel %vm3729, 1, 0
      %v3766 = vsel %vm3730, 1, 0
      %v3767 = vsel %vm3731, 1, 0
      %v3768 = vsel %vm3732, 1, 0
      %v3769 = vsel %vm3733, 1, 0
      %v3770 = vsel %vm3734, 1, 0
      %v3771 = vsel %vm3735, 1, 0
      %v3772 = vsel %vm3736, 1, 0
      %v3773 = vsel %vm3737, 1, 0
      %vm3774 = vcmp.eq.s32.totalorder %v3738, 1
      %vm3775 = vcmp.eq.s32.totalorder %v3739, 1
      %vm3776 = vcmp.eq.s32.totalorder %v3740, 1
      %vm3777 = vcmp.eq.s32.totalorder %v3741, 1
      %vm3778 = vcmp.eq.s32.totalorder %v3742, 1
      %vm3779 = vcmp.eq.s32.totalorder %v3743, 1
      %vm3780 = vcmp.eq.s32.totalorder %v3744, 1
      %vm3781 = vcmp.eq.s32.totalorder %v3745, 1
      %vm3782 = vcmp.eq.s32.totalorder %v3746, 1
      %vm3783 = vcmp.eq.s32.totalorder %v3747, 1
      %vm3784 = vcmp.eq.s32.totalorder %v3748, 1
      %vm3785 = vcmp.eq.s32.totalorder %v3749, 1
      %vm3786 = vcmp.eq.s32.totalorder %v3750, 1
      %vm3787 = vcmp.eq.s32.totalorder %v3751, 1
      %vm3788 = vcmp.eq.s32.totalorder %v3752, 1
      %vm3789 = vcmp.eq.s32.totalorder %v3753, 1
      %vm3790 = vcmp.eq.s32.totalorder %v3754, 1
      %vm3791 = vcmp.eq.s32.totalorder %v3755, 1
      %vm3792 = vcmp.eq.s32.totalorder %v3756, 1
      %vm3793 = vcmp.eq.s32.totalorder %v3757, 1
      %vm3794 = vcmp.eq.s32.totalorder %v3758, 1
      %vm3795 = vcmp.eq.s32.totalorder %v3759, 1
      %vm3796 = vcmp.eq.s32.totalorder %v3760, 1
      %vm3797 = vcmp.eq.s32.totalorder %v3761, 1
      %vm3798 = vcmp.eq.s32.totalorder %v3762, 1
      %vm3799 = vcmp.eq.s32.totalorder %v3763, 1
      %vm3800 = vcmp.eq.s32.totalorder %v3764, 1
      %vm3801 = vcmp.eq.s32.totalorder %v3765, 1
      %vm3802 = vcmp.eq.s32.totalorder %v3766, 1
      %vm3803 = vcmp.eq.s32.totalorder %v3767, 1
      %vm3804 = vcmp.eq.s32.totalorder %v3768, 1
      %vm3805 = vcmp.eq.s32.totalorder %v3769, 1
      %vm3806 = vcmp.eq.s32.totalorder %v3770, 1
      %vm3807 = vcmp.eq.s32.totalorder %v3771, 1
      %vm3808 = vcmp.eq.s32.totalorder %v3772, 1
      %vm3809 = vcmp.eq.s32.totalorder %v3773, 1
      %v3810 = vsel %vm3774, %v3053, 0.0
      %v3811 = vsel %vm3775, %v3054, 0.0
      %v3812 = vsel %vm3776, %v3055, 0.0
      %v3813 = vsel %vm3777, %v3056, 0.0
      %v3814 = vsel %vm3778, %v3057, 0.0
      %v3815 = vsel %vm3779, %v3058, 0.0
      %v3816 = vsel %vm3780, %v3059, 0.0
      %v3817 = vsel %vm3781, %v3060, 0.0
      %v3818 = vsel %vm3782, %v3061, 0.0
      %v3819 = vsel %vm3783, %v3062, 0.0
      %v3820 = vsel %vm3784, %v3063, 0.0
      %v3821 = vsel %vm3785, %v3064, 0.0
      %v3822 = vsel %vm3786, %v3065, 0.0
      %v3823 = vsel %vm3787, %v3066, 0.0
      %v3824 = vsel %vm3788, %v3067, 0.0
      %v3825 = vsel %vm3789, %v3068, 0.0
      %v3826 = vsel %vm3790, %v3069, 0.0
      %v3827 = vsel %vm3791, %v3070, 0.0
      %v3828 = vsel %vm3792, %v3071, 0.0
      %v3829 = vsel %vm3793, %v3072, 0.0
      %v3830 = vsel %vm3794, %v3073, 0.0
      %v3831 = vsel %vm3795, %v3074, 0.0
      %v3832 = vsel %vm3796, %v3075, 0.0
      %v3833 = vsel %vm3797, %v3076, 0.0
      %v3834 = vsel %vm3798, %v3077, 0.0
      %v3835 = vsel %vm3799, %v3078, 0.0
      %v3836 = vsel %vm3800, %v3079, 0.0
      %v3837 = vsel %vm3801, %v3080, 0.0
      %v3838 = vsel %vm3802, %v3081, 0.0
      %v3839 = vsel %vm3803, %v3082, 0.0
      %v3840 = vsel %vm3804, %v3083, 0.0
      %v3841 = vsel %vm3805, %v3084, 0.0
      %v3842 = vsel %vm3806, %v3085, 0.0
      %v3843 = vsel %vm3807, %v3086, 0.0
      %v3844 = vsel %vm3808, %v3087, 0.0
      %v3845 = vsel %vm3809, %v3088, 0.0
      %v3846 = vadd.f32 %v3810, %v3811
      %v3847 = vadd.f32 %v3846, %v3812
      %v3848 = vadd.f32 %v3847, %v3813
      %v3849 = vadd.f32 %v3848, %v3814
      %v3850 = vadd.f32 %v3849, %v3815
      %v3851 = vadd.f32 %v3850, %v3816
      %v3852 = vadd.f32 %v3851, %v3817
      %v3853 = vadd.f32 %v3852, %v3818
      %v3854 = vadd.f32 %v3853, %v3819
      %v3855 = vadd.f32 %v3854, %v3820
      %v3856 = vadd.f32 %v3855, %v3821
      %v3857 = vadd.f32 %v3856, %v3822
      %v3858 = vadd.f32 %v3857, %v3823
      %v3859 = vadd.f32 %v3858, %v3824
      %v3860 = vadd.f32 %v3859, %v3825
      %v3861 = vadd.f32 %v3860, %v3826
      %v3862 = vadd.f32 %v3861, %v3827
      %v3863 = vadd.f32 %v3862, %v3828
      %v3864 = vadd.f32 %v3863, %v3829
      %v3865 = vadd.f32 %v3864, %v3830
      %v3866 = vadd.f32 %v3865, %v3831
      %v3867 = vadd.f32 %v3866, %v3832
      %v3868 = vadd.f32 %v3867, %v3833
      %v3869 = vadd.f32 %v3868, %v3834
      %v3870 = vadd.f32 %v3869, %v3835
      %v3871 = vadd.f32 %v3870, %v3836
      %v3872 = vadd.f32 %v3871, %v3837
      %v3873 = vadd.f32 %v3872, %v3838
      %v3874 = vadd.f32 %v3873, %v3839
      %v3875 = vadd.f32 %v3874, %v3840
      %v3876 = vadd.f32 %v3875, %v3841
      %v3877 = vadd.f32 %v3876, %v3842
      %v3878 = vadd.f32 %v3877, %v3843
      %v3879 = vadd.f32 %v3878, %v3844
      %v3880 = vadd.f32 %v3879, %v3845
      %v3881 = vrot.slane %v3880, 4
      %v3882 = vadd.f32 %v3880, %v3881
      %v3883 = vrot.slane %v3882, 2
      %v3884 = vadd.f32 %v3882, %v3883
      %v3885 = vrot.slane %v3884, 1
      %v3886 = vadd.f32 %v3884, %v3885
      %3887 = vst [vmem:[%s235] sm:$0x1] %v3886
      %v3888 = vmul.f32 %v3810, %v3810
      %v3889 = vmul.f32 %v3811, %v3811
      %v3890 = vmul.f32 %v3812, %v3812
      %v3891 = vmul.f32 %v3813, %v3813
      %v3892 = vmul.f32 %v3814, %v3814
      %v3893 = vmul.f32 %v3815, %v3815
      %v3894 = vmul.f32 %v3816, %v3816
      %v3895 = vmul.f32 %v3817, %v3817
      %v3896 = vmul.f32 %v3818, %v3818
      %v3897 = vmul.f32 %v3819, %v3819
      %v3898 = vmul.f32 %v3820, %v3820
      %v3899 = vmul.f32 %v3821, %v3821
      %v3900 = vmul.f32 %v3822, %v3822
      %v3901 = vmul.f32 %v3823, %v3823
      %v3902 = vmul.f32 %v3824, %v3824
      %v3903 = vmul.f32 %v3825, %v3825
      %v3904 = vmul.f32 %v3826, %v3826
      %v3905 = vmul.f32 %v3827, %v3827
      %v3906 = vmul.f32 %v3828, %v3828
      %v3907 = vmul.f32 %v3829, %v3829
      %v3908 = vmul.f32 %v3830, %v3830
      %v3909 = vmul.f32 %v3831, %v3831
      %v3910 = vmul.f32 %v3832, %v3832
      %v3911 = vmul.f32 %v3833, %v3833
      %v3912 = vmul.f32 %v3834, %v3834
      %v3913 = vmul.f32 %v3835, %v3835
      %v3914 = vmul.f32 %v3836, %v3836
      %v3915 = vmul.f32 %v3837, %v3837
      %v3916 = vmul.f32 %v3838, %v3838
      %v3917 = vmul.f32 %v3839, %v3839
      %v3918 = vmul.f32 %v3840, %v3840
      %v3919 = vmul.f32 %v3841, %v3841
      %v3920 = vmul.f32 %v3842, %v3842
      %v3921 = vmul.f32 %v3843, %v3843
      %v3922 = vmul.f32 %v3844, %v3844
      %v3923 = vmul.f32 %v3845, %v3845
      %v3924 = vadd.f32 %v3888, %v3889
      %v3925 = vadd.f32 %v3924, %v3890
      %v3926 = vadd.f32 %v3925, %v3891
      %v3927 = vadd.f32 %v3926, %v3892
      %v3928 = vadd.f32 %v3927, %v3893
      %v3929 = vadd.f32 %v3928, %v3894
      %v3930 = vadd.f32 %v3929, %v3895
      %v3931 = vadd.f32 %v3930, %v3896
      %v3932 = vadd.f32 %v3931, %v3897
      %v3933 = vadd.f32 %v3932, %v3898
      %v3934 = vadd.f32 %v3933, %v3899
      %v3935 = vadd.f32 %v3934, %v3900
      %v3936 = vadd.f32 %v3935, %v3901
      %v3937 = vadd.f32 %v3936, %v3902
      %v3938 = vadd.f32 %v3937, %v3903
      %v3939 = vadd.f32 %v3938, %v3904
      %v3940 = vadd.f32 %v3939, %v3905
      %v3941 = vadd.f32 %v3940, %v3906
      %v3942 = vadd.f32 %v3941, %v3907
      %v3943 = vadd.f32 %v3942, %v3908
      %v3944 = vadd.f32 %v3943, %v3909
      %v3945 = vadd.f32 %v3944, %v3910
      %v3946 = vadd.f32 %v3945, %v3911
      %v3947 = vadd.f32 %v3946, %v3912
      %v3948 = vadd.f32 %v3947, %v3913
      %v3949 = vadd.f32 %v3948, %v3914
      %v3950 = vadd.f32 %v3949, %v3915
      %v3951 = vadd.f32 %v3950, %v3916
      %v3952 = vadd.f32 %v3951, %v3917
      %v3953 = vadd.f32 %v3952, %v3918
      %v3954 = vadd.f32 %v3953, %v3919
      %v3955 = vadd.f32 %v3954, %v3920
      %v3956 = vadd.f32 %v3955, %v3921
      %v3957 = vadd.f32 %v3956, %v3922
      %v3958 = vadd.f32 %v3957, %v3923
      %v3959 = vrot.slane %v3958, 4
      %v3960 = vadd.f32 %v3958, %v3959
      %v3961 = vrot.slane %v3960, 2
      %v3962 = vadd.f32 %v3960, %v3961
      %v3963 = vrot.slane %v3962, 1
      %v3964 = vadd.f32 %v3962, %v3963
      %3965 = vst [vmem:[%s235 + $0x1] sm:$0x1] %v3964
      %3966 = vst [vmem:[%s231] sm:$0xf] 0
      %3967 = vst [vmem:[%s231 + $0x4] sm:$0xf] 0
      %3968 = vst [vmem:[%s231 + $0x8] sm:$0xf] 0
      %3969 = vst [vmem:[%s231 + $0xc] sm:$0xf] 0
      %3970 = vst [vmem:[%s231 + $0x10] sm:$0xf] 0
      %3971 = vst [vmem:[%s231 + $0x14] sm:$0xf] 0
      %3972 = vst [vmem:[%s231 + $0x18] sm:$0xf] 0
      %3973 = vst [vmem:[%s231 + $0x1c] sm:$0xf] 0
      %3974 = vst [vmem:[%s231 + $0x20] sm:$0xf] 0
      %3975 = vst [vmem:[%s231 + $0x24] sm:$0xf] 0
      %3976 = vst [vmem:[%s231 + $0x28] sm:$0xf] 0
      %3977 = vst [vmem:[%s231 + $0x2c] sm:$0xf] 0
      %3978 = vst [vmem:[%s231 + $0x30] sm:$0xf] 0
      %3979 = vst [vmem:[%s231 + $0x34] sm:$0xf] 0
      %3980 = vst [vmem:[%s231 + $0x38] sm:$0xf] 0
      %3981 = vst [vmem:[%s231 + $0x3c] sm:$0xf] 0
      %3982 = vst [vmem:[%s231 + $0x40] sm:$0xf] 0
      %3983 = vst [vmem:[%s231 + $0x44] sm:$0xf] 0
      %3984 = vst [vmem:[%s231 + $0x48] sm:$0xf] 0
      %3985 = vst [vmem:[%s231 + $0x4c] sm:$0xf] 0
      %3986 = vst [vmem:[%s231 + $0x50] sm:$0xf] 0
      %3987 = vst [vmem:[%s231 + $0x54] sm:$0xf] 0
      %3988 = vst [vmem:[%s231 + $0x58] sm:$0xf] 0
      %3989 = vst [vmem:[%s231 + $0x5c] sm:$0xf] 0
      %3990 = vst [vmem:[%s231 + $0x60] sm:$0xf] 0
      %3991 = vst [vmem:[%s231 + $0x64] sm:$0xf] 0
      %3992 = vst [vmem:[%s231 + $0x68] sm:$0xf] 0
      %3993 = vst [vmem:[%s231 + $0x6c] sm:$0xf] 0
      %3994 = vst [vmem:[%s231 + $0x70] sm:$0xf] 0
      %3995 = vst [vmem:[%s231 + $0x74] sm:$0xf] 0
      %3996 = vst [vmem:[%s231 + $0x78] sm:$0xf] 0
      %3997 = vst [vmem:[%s231 + $0x7c] sm:$0xf] 0
      %3998 = vst [vmem:[%s231 + $0x80] sm:$0xf] 0
      %3999 = vst [vmem:[%s231 + $0x84] sm:$0xf] 0
      %4000 = vst [vmem:[%s231 + $0x88] sm:$0xf] 0
      %4001 = vst [vmem:[%s231 + $0x8c] sm:$0xf] 0
      %4002 = vst [vmem:[%s231 + $0x90] sm:$0xf] 0
      %4003 = vst [vmem:[%s231 + $0x94] sm:$0xf] 0
      %4004 = vst [vmem:[%s231 + $0x98] sm:$0xf] 0
      %4005 = vst [vmem:[%s231 + $0x9c] sm:$0xf] 0
      %4006 = vst [vmem:[%s231 + $0xa0] sm:$0xf] 0
      %4007 = vst [vmem:[%s231 + $0xa4] sm:$0xf] 0
      %4008 = vst [vmem:[%s231 + $0xa8] sm:$0xf] 0
      %4009 = vst [vmem:[%s231 + $0xac] sm:$0xf] 0
      %4010 = vst [vmem:[%s231 + $0xb0] sm:$0xf] 0
      %v4011 = vpack.c.bf16 %v3811, %v3810
      %v4012 = vpack.c.bf16 %v3813, %v3812
      %v4013 = vpack.c.bf16 %v3815, %v3814
      %v4014 = vpack.c.bf16 %v3817, %v3816
      %v4015 = vpack.c.bf16 %v3819, %v3818
      %v4016 = vpack.c.bf16 %v3821, %v3820
      %v4017 = vpack.c.bf16 %v3823, %v3822
      %v4018 = vpack.c.bf16 %v3825, %v3824
      %v4019 = vpack.c.bf16 %v3827, %v3826
      %v4020 = vpack.c.bf16 %v3829, %v3828
      %v4021 = vpack.c.bf16 %v3831, %v3830
      %v4022 = vpack.c.bf16 %v3833, %v3832
      %v4023 = vpack.c.bf16 %v3835, %v3834
      %v4024 = vpack.c.bf16 %v3837, %v3836
      %v4025 = vpack.c.bf16 %v3839, %v3838
      %v4026 = vpack.c.bf16 %v3841, %v3840
      %v4027 = vpack.c.bf16 %v3843, %v3842
      %v4028 = vpack.c.bf16 %v3845, %v3844
      %v4047 = vunpack.c.l.b16 %v4011
      %v4048 = vunpack.c.h.b16 %v4011
      %v4049 = vunpack.c.l.b16 %v4012
      %v4050 = vunpack.c.h.b16 %v4012
      %v4051 = vunpack.c.l.b16 %v4013
      %v4052 = vunpack.c.h.b16 %v4013
      %v4053 = vunpack.c.l.b16 %v4014
      %v4054 = vunpack.c.h.b16 %v4014
      %v4055 = vunpack.c.l.b16 %v4015
      %v4056 = vunpack.c.h.b16 %v4015
      %v4057 = vunpack.c.l.b16 %v4016
      %v4058 = vunpack.c.h.b16 %v4016
      %v4059 = vunpack.c.l.b16 %v4017
      %v4060 = vunpack.c.h.b16 %v4017
      %v4061 = vunpack.c.l.b16 %v4018
      %v4062 = vunpack.c.h.b16 %v4018
      %v4063 = vunpack.c.l.b16 %v4019
      %v4064 = vunpack.c.h.b16 %v4019
      %v4065 = vunpack.c.l.b16 %v4020
      %v4066 = vunpack.c.h.b16 %v4020
      %v4067 = vunpack.c.l.b16 %v4021
      %v4068 = vunpack.c.h.b16 %v4021
      %v4069 = vunpack.c.l.b16 %v4022
      %v4070 = vunpack.c.h.b16 %v4022
      %v4071 = vunpack.c.l.b16 %v4023
      %v4072 = vunpack.c.h.b16 %v4023
      %v4073 = vunpack.c.l.b16 %v4024
      %v4074 = vunpack.c.h.b16 %v4024
      %v4075 = vunpack.c.l.b16 %v4025
      %v4076 = vunpack.c.h.b16 %v4025
      %v4077 = vunpack.c.l.b16 %v4026
      %v4078 = vunpack.c.h.b16 %v4026
      %v4079 = vunpack.c.l.b16 %v4027
      %v4080 = vunpack.c.h.b16 %v4027
      %v4081 = vunpack.c.l.b16 %v4028
      %v4082 = vunpack.c.h.b16 %v4028
      %v4083 = vpack.c.b16 %v4047, %v4047
      %v4084 = vpack.c.b16 %v4048, %v4048
      %v4085 = vpack.c.b16 %v4049, %v4049
      %v4086 = vpack.c.b16 %v4050, %v4050
      %v4087 = vpack.c.b16 %v4051, %v4051
      %v4088 = vpack.c.b16 %v4052, %v4052
      %v4089 = vpack.c.b16 %v4053, %v4053
      %v4090 = vpack.c.b16 %v4054, %v4054
      %v4091 = vpack.c.b16 %v4055, %v4055
      %v4092 = vpack.c.b16 %v4056, %v4056
      %v4093 = vpack.c.b16 %v4057, %v4057
      %v4094 = vpack.c.b16 %v4058, %v4058
      %v4095 = vpack.c.b16 %v4059, %v4059
      %v4096 = vpack.c.b16 %v4060, %v4060
      %v4097 = vpack.c.b16 %v4061, %v4061
      %v4098 = vpack.c.b16 %v4062, %v4062
      %v4099 = vpack.c.b16 %v4063, %v4063
      %v4100 = vpack.c.b16 %v4064, %v4064
      %v4101 = vpack.c.b16 %v4065, %v4065
      %v4102 = vpack.c.b16 %v4066, %v4066
      %v4103 = vpack.c.b16 %v4067, %v4067
      %v4104 = vpack.c.b16 %v4068, %v4068
      %v4105 = vpack.c.b16 %v4069, %v4069
      %v4106 = vpack.c.b16 %v4070, %v4070
      %v4107 = vpack.c.b16 %v4071, %v4071
      %v4108 = vpack.c.b16 %v4072, %v4072
      %v4109 = vpack.c.b16 %v4073, %v4073
      %v4110 = vpack.c.b16 %v4074, %v4074
      %v4111 = vpack.c.b16 %v4075, %v4075
      %v4112 = vpack.c.b16 %v4076, %v4076
      %v4113 = vpack.c.b16 %v4077, %v4077
      %v4114 = vpack.c.b16 %v4078, %v4078
      %v4115 = vpack.c.b16 %v4079, %v4079
      %v4116 = vpack.c.b16 %v4080, %v4080
      %v4117 = vpack.c.b16 %v4081, %v4081
      %v4118 = vpack.c.b16 %v4082, %v4082
      %vm4119 = vsmask.f32 1280
      %vm4120 = vsmask.f32 5392
      %vm4121 = vmor %vm4119, %vm4120
      %v4123 = vshrl.u32 %v4083, 16
      %v4125 = vrot.slane %v4123, 6
      %v4126 = vshll.u32 %v4083, 16
      %v4128 = vrot.slane %v4126, 7
      %v4129 = vor.u32 %v4125, %v4128
      %v4130 = vrot.slane %v4129, 4
      %v4132 = vshrl.u32 %v4084, 16
      %v4134 = vrot.slane %v4132, 6
      %v4135 = vshll.u32 %v4084, 16
      %v4137 = vrot.slane %v4135, 7
      %v4138 = vor.u32 %v4134, %v4137
      %v4139 = vsel %vm4121, %v4130, %v4138
      %v4140 = vrot.slane %v4138, 4
      %v4142 = vshrl.u32 %v4085, 16
      %v4144 = vrot.slane %v4142, 6
      %v4145 = vshll.u32 %v4085, 16
      %v4147 = vrot.slane %v4145, 7
      %v4148 = vor.u32 %v4144, %v4147
      %v4149 = vsel %vm4121, %v4140, %v4148
      %v4150 = vrot.slane %v4148, 4
      %v4152 = vshrl.u32 %v4086, 16
      %v4154 = vrot.slane %v4152, 6
      %v4155 = vshll.u32 %v4086, 16
      %v4157 = vrot.slane %v4155, 7
      %v4158 = vor.u32 %v4154, %v4157
      %v4159 = vsel %vm4121, %v4150, %v4158
      %v4160 = vrot.slane %v4158, 4
      %v4162 = vshrl.u32 %v4087, 16
      %v4164 = vrot.slane %v4162, 6
      %v4165 = vshll.u32 %v4087, 16
      %v4167 = vrot.slane %v4165, 7
      %v4168 = vor.u32 %v4164, %v4167
      %v4169 = vsel %vm4121, %v4160, %v4168
      %v4170 = vrot.slane %v4168, 4
      %v4172 = vshrl.u32 %v4088, 16
      %v4174 = vrot.slane %v4172, 6
      %v4175 = vshll.u32 %v4088, 16
      %v4177 = vrot.slane %v4175, 7
      %v4178 = vor.u32 %v4174, %v4177
      %v4179 = vsel %vm4121, %v4170, %v4178
      %v4180 = vrot.slane %v4178, 4
      %v4182 = vshrl.u32 %v4089, 16
      %v4184 = vrot.slane %v4182, 6
      %v4185 = vshll.u32 %v4089, 16
      %v4187 = vrot.slane %v4185, 7
      %v4188 = vor.u32 %v4184, %v4187
      %v4189 = vsel %vm4121, %v4180, %v4188
      %v4190 = vrot.slane %v4188, 4
      %v4192 = vshrl.u32 %v4090, 16
      %v4194 = vrot.slane %v4192, 6
      %v4195 = vshll.u32 %v4090, 16
      %v4197 = vrot.slane %v4195, 7
      %v4198 = vor.u32 %v4194, %v4197
      %v4199 = vsel %vm4121, %v4190, %v4198
      %v4200 = vrot.slane %v4198, 4
      %v4202 = vshrl.u32 %v4091, 16
      %v4204 = vrot.slane %v4202, 6
      %v4205 = vshll.u32 %v4091, 16
      %v4207 = vrot.slane %v4205, 7
      %v4208 = vor.u32 %v4204, %v4207
      %v4209 = vsel %vm4121, %v4200, %v4208
      %v4210 = vrot.slane %v4208, 4
      %v4212 = vshrl.u32 %v4092, 16
      %v4214 = vrot.slane %v4212, 6
      %v4215 = vshll.u32 %v4092, 16
      %v4217 = vrot.slane %v4215, 7
      %v4218 = vor.u32 %v4214, %v4217
      %v4219 = vsel %vm4121, %v4210, %v4218
      %v4220 = vrot.slane %v4218, 4
      %v4222 = vshrl.u32 %v4093, 16
      %v4224 = vrot.slane %v4222, 6
      %v4225 = vshll.u32 %v4093, 16
      %v4227 = vrot.slane %v4225, 7
      %v4228 = vor.u32 %v4224, %v4227
      %v4229 = vsel %vm4121, %v4220, %v4228
      %v4230 = vrot.slane %v4228, 4
      %v4232 = vshrl.u32 %v4094, 16
      %v4234 = vrot.slane %v4232, 6
      %v4235 = vshll.u32 %v4094, 16
      %v4237 = vrot.slane %v4235, 7
      %v4238 = vor.u32 %v4234, %v4237
      %v4239 = vsel %vm4121, %v4230, %v4238
      %v4240 = vrot.slane %v4238, 4
      %v4242 = vshrl.u32 %v4095, 16
      %v4244 = vrot.slane %v4242, 6
      %v4245 = vshll.u32 %v4095, 16
      %v4247 = vrot.slane %v4245, 7
      %v4248 = vor.u32 %v4244, %v4247
      %v4249 = vsel %vm4121, %v4240, %v4248
      %v4250 = vrot.slane %v4248, 4
      %v4252 = vshrl.u32 %v4096, 16
      %v4254 = vrot.slane %v4252, 6
      %v4255 = vshll.u32 %v4096, 16
      %v4257 = vrot.slane %v4255, 7
      %v4258 = vor.u32 %v4254, %v4257
      %v4259 = vsel %vm4121, %v4250, %v4258
      %v4260 = vrot.slane %v4258, 4
      %v4262 = vshrl.u32 %v4097, 16
      %v4264 = vrot.slane %v4262, 6
      %v4265 = vshll.u32 %v4097, 16
      %v4267 = vrot.slane %v4265, 7
      %v4268 = vor.u32 %v4264, %v4267
      %v4269 = vsel %vm4121, %v4260, %v4268
      %v4270 = vrot.slane %v4268, 4
      %v4272 = vshrl.u32 %v4098, 16
      %v4274 = vrot.slane %v4272, 6
      %v4275 = vshll.u32 %v4098, 16
      %v4277 = vrot.slane %v4275, 7
      %v4278 = vor.u32 %v4274, %v4277
      %v4279 = vsel %vm4121, %v4270, %v4278
      %v4280 = vrot.slane %v4278, 4
      %v4282 = vshrl.u32 %v4099, 16
      %v4284 = vrot.slane %v4282, 6
      %v4285 = vshll.u32 %v4099, 16
      %v4287 = vrot.slane %v4285, 7
      %v4288 = vor.u32 %v4284, %v4287
      %v4289 = vsel %vm4121, %v4280, %v4288
      %v4290 = vrot.slane %v4288, 4
      %v4292 = vshrl.u32 %v4100, 16
      %v4294 = vrot.slane %v4292, 6
      %v4295 = vshll.u32 %v4100, 16
      %v4297 = vrot.slane %v4295, 7
      %v4298 = vor.u32 %v4294, %v4297
      %v4299 = vsel %vm4121, %v4290, %v4298
      %v4300 = vrot.slane %v4298, 4
      %v4302 = vshrl.u32 %v4101, 16
      %v4304 = vrot.slane %v4302, 6
      %v4305 = vshll.u32 %v4101, 16
      %v4307 = vrot.slane %v4305, 7
      %v4308 = vor.u32 %v4304, %v4307
      %v4309 = vsel %vm4121, %v4300, %v4308
      %v4310 = vrot.slane %v4308, 4
      %v4312 = vshrl.u32 %v4102, 16
      %v4314 = vrot.slane %v4312, 6
      %v4315 = vshll.u32 %v4102, 16
      %v4317 = vrot.slane %v4315, 7
      %v4318 = vor.u32 %v4314, %v4317
      %v4319 = vsel %vm4121, %v4310, %v4318
      %v4320 = vrot.slane %v4318, 4
      %v4322 = vshrl.u32 %v4103, 16
      %v4324 = vrot.slane %v4322, 6
      %v4325 = vshll.u32 %v4103, 16
      %v4327 = vrot.slane %v4325, 7
      %v4328 = vor.u32 %v4324, %v4327
      %v4329 = vsel %vm4121, %v4320, %v4328
      %v4330 = vrot.slane %v4328, 4
      %v4332 = vshrl.u32 %v4104, 16
      %v4334 = vrot.slane %v4332, 6
      %v4335 = vshll.u32 %v4104, 16
      %v4337 = vrot.slane %v4335, 7
      %v4338 = vor.u32 %v4334, %v4337
      %v4339 = vsel %vm4121, %v4330, %v4338
      %v4340 = vrot.slane %v4338, 4
      %v4342 = vshrl.u32 %v4105, 16
      %v4344 = vrot.slane %v4342, 6
      %v4345 = vshll.u32 %v4105, 16
      %v4347 = vrot.slane %v4345, 7
      %v4348 = vor.u32 %v4344, %v4347
      %v4349 = vsel %vm4121, %v4340, %v4348
      %v4350 = vrot.slane %v4348, 4
      %v4352 = vshrl.u32 %v4106, 16
      %v4354 = vrot.slane %v4352, 6
      %v4355 = vshll.u32 %v4106, 16
      %v4357 = vrot.slane %v4355, 7
      %v4358 = vor.u32 %v4354, %v4357
      %v4359 = vsel %vm4121, %v4350, %v4358
      %v4360 = vrot.slane %v4358, 4
      %v4362 = vshrl.u32 %v4107, 16
      %v4364 = vrot.slane %v4362, 6
      %v4365 = vshll.u32 %v4107, 16
      %v4367 = vrot.slane %v4365, 7
      %v4368 = vor.u32 %v4364, %v4367
      %v4369 = vsel %vm4121, %v4360, %v4368
      %v4370 = vrot.slane %v4368, 4
      %v4372 = vshrl.u32 %v4108, 16
      %v4374 = vrot.slane %v4372, 6
      %v4375 = vshll.u32 %v4108, 16
      %v4377 = vrot.slane %v4375, 7
      %v4378 = vor.u32 %v4374, %v4377
      %v4379 = vsel %vm4121, %v4370, %v4378
      %v4380 = vrot.slane %v4378, 4
      %v4382 = vshrl.u32 %v4109, 16
      %v4384 = vrot.slane %v4382, 6
      %v4385 = vshll.u32 %v4109, 16
      %v4387 = vrot.slane %v4385, 7
      %v4388 = vor.u32 %v4384, %v4387
      %v4389 = vsel %vm4121, %v4380, %v4388
      %v4390 = vrot.slane %v4388, 4
      %v4392 = vshrl.u32 %v4110, 16
      %v4394 = vrot.slane %v4392, 6
      %v4395 = vshll.u32 %v4110, 16
      %v4397 = vrot.slane %v4395, 7
      %v4398 = vor.u32 %v4394, %v4397
      %v4399 = vsel %vm4121, %v4390, %v4398
      %v4400 = vrot.slane %v4398, 4
      %v4402 = vshrl.u32 %v4111, 16
      %v4404 = vrot.slane %v4402, 6
      %v4405 = vshll.u32 %v4111, 16
      %v4407 = vrot.slane %v4405, 7
      %v4408 = vor.u32 %v4404, %v4407
      %v4409 = vsel %vm4121, %v4400, %v4408
      %v4410 = vrot.slane %v4408, 4
      %v4412 = vshrl.u32 %v4112, 16
      %v4414 = vrot.slane %v4412, 6
      %v4415 = vshll.u32 %v4112, 16
      %v4417 = vrot.slane %v4415, 7
      %v4418 = vor.u32 %v4414, %v4417
      %v4419 = vsel %vm4121, %v4410, %v4418
      %v4420 = vrot.slane %v4418, 4
      %v4422 = vshrl.u32 %v4113, 16
      %v4424 = vrot.slane %v4422, 6
      %v4425 = vshll.u32 %v4113, 16
      %v4427 = vrot.slane %v4425, 7
      %v4428 = vor.u32 %v4424, %v4427
      %v4429 = vsel %vm4121, %v4420, %v4428
      %v4430 = vrot.slane %v4428, 4
      %v4432 = vshrl.u32 %v4114, 16
      %v4434 = vrot.slane %v4432, 6
      %v4435 = vshll.u32 %v4114, 16
      %v4437 = vrot.slane %v4435, 7
      %v4438 = vor.u32 %v4434, %v4437
      %v4439 = vsel %vm4121, %v4430, %v4438
      %v4440 = vrot.slane %v4438, 4
      %v4442 = vshrl.u32 %v4115, 16
      %v4444 = vrot.slane %v4442, 6
      %v4445 = vshll.u32 %v4115, 16
      %v4447 = vrot.slane %v4445, 7
      %v4448 = vor.u32 %v4444, %v4447
      %v4449 = vsel %vm4121, %v4440, %v4448
      %v4450 = vrot.slane %v4448, 4
      %v4452 = vshrl.u32 %v4116, 16
      %v4454 = vrot.slane %v4452, 6
      %v4455 = vshll.u32 %v4116, 16
      %v4457 = vrot.slane %v4455, 7
      %v4458 = vor.u32 %v4454, %v4457
      %v4459 = vsel %vm4121, %v4450, %v4458
      %v4460 = vrot.slane %v4458, 4
      %v4462 = vshrl.u32 %v4117, 16
      %v4464 = vrot.slane %v4462, 6
      %v4465 = vshll.u32 %v4117, 16
      %v4467 = vrot.slane %v4465, 7
      %v4468 = vor.u32 %v4464, %v4467
      %v4469 = vsel %vm4121, %v4460, %v4468
      %v4470 = vrot.slane %v4468, 4
      %v4472 = vshrl.u32 %v4118, 16
      %v4474 = vrot.slane %v4472, 6
      %v4475 = vshll.u32 %v4118, 16
      %v4477 = vrot.slane %v4475, 7
      %v4478 = vor.u32 %v4474, %v4477
      %v4479 = vsel %vm4121, %v4470, %v4478
      %v4480 = vrot.slane %v4478, 4
      %vm4518 = vcmask 1043457
      %vm4519 = vsmask.f32 7942
      %vm4520 = vmand %vm4518, %vm4519
      %v4521 = vld [vmem:[%s231 + $0x8] sm:$0xe]
      %v4522 = vsel %vm4520, %v4129, %v4521
      %4523 = vst [vmem:[%s231 + $0x8] sm:$0xe] %v4522
      %4524 = vst [vmem:[%s231 + $0xc] sm:$0xf] %v4139
      %4525 = vst [vmem:[%s231 + $0x10] sm:$0xf] %v4149
      %4526 = vst [vmem:[%s231 + $0x14] sm:$0xf] %v4159
      %4527 = vst [vmem:[%s231 + $0x18] sm:$0xf] %v4169
      %4528 = vst [vmem:[%s231 + $0x1c] sm:$0xf] %v4179
      %4529 = vst [vmem:[%s231 + $0x20] sm:$0xf] %v4189
      %4530 = vst [vmem:[%s231 + $0x24] sm:$0xf] %v4199
      %4531 = vst [vmem:[%s231 + $0x28] sm:$0xf] %v4209
      %4532 = vst [vmem:[%s231 + $0x2c] sm:$0xf] %v4219
      %4533 = vst [vmem:[%s231 + $0x30] sm:$0xf] %v4229
      %4534 = vst [vmem:[%s231 + $0x34] sm:$0xf] %v4239
      %4535 = vst [vmem:[%s231 + $0x38] sm:$0xf] %v4249
      %4536 = vst [vmem:[%s231 + $0x3c] sm:$0xf] %v4259
      %4537 = vst [vmem:[%s231 + $0x40] sm:$0xf] %v4269
      %4538 = vst [vmem:[%s231 + $0x44] sm:$0xf] %v4279
      %4539 = vst [vmem:[%s231 + $0x48] sm:$0xf] %v4289
      %4540 = vst [vmem:[%s231 + $0x4c] sm:$0xf] %v4299
      %4541 = vst [vmem:[%s231 + $0x50] sm:$0xf] %v4309
      %4542 = vst [vmem:[%s231 + $0x54] sm:$0xf] %v4319
      %4543 = vst [vmem:[%s231 + $0x58] sm:$0xf] %v4329
      %4544 = vst [vmem:[%s231 + $0x5c] sm:$0xf] %v4339
      %4545 = vst [vmem:[%s231 + $0x60] sm:$0xf] %v4349
      %4546 = vst [vmem:[%s231 + $0x64] sm:$0xf] %v4359
      %4547 = vst [vmem:[%s231 + $0x68] sm:$0xf] %v4369
      %4548 = vst [vmem:[%s231 + $0x6c] sm:$0xf] %v4379
      %4549 = vst [vmem:[%s231 + $0x70] sm:$0xf] %v4389
      %4550 = vst [vmem:[%s231 + $0x74] sm:$0xf] %v4399
      %4551 = vst [vmem:[%s231 + $0x78] sm:$0xf] %v4409
      %4552 = vst [vmem:[%s231 + $0x7c] sm:$0xf] %v4419
      %4553 = vst [vmem:[%s231 + $0x80] sm:$0xf] %v4429
      %4554 = vst [vmem:[%s231 + $0x84] sm:$0xf] %v4439
      %4555 = vst [vmem:[%s231 + $0x88] sm:$0xf] %v4449
      %4556 = vst [vmem:[%s231 + $0x8c] sm:$0xf] %v4459
      %4557 = vst [vmem:[%s231 + $0x90] sm:$0xf] %v4469
      %4558 = vst [vmem:[%s231 + $0x94] sm:$0xf] %v4479
      %vm4559 = vcmask 1041408
      %vm4560 = vmand %vm4559, %vm4119
      %v4561 = vld [vmem:[%s231 + $0x98] sm:$0x3]
      %v4562 = vsel %vm4560, %v4480, %v4561
      %4563 = vst [vmem:[%s231 + $0x98] sm:$0x3] %v4562
      %p4564 = scmp.lt.s32.totalorder %s17, 1
      %s4565 = scalar_select %p4564, %s17, 1
      %s4566 = smul.addr %s4565, 45
      %s4567 = smul.addr %s4566, 4
      %s4568 = scalar_lea.vmem %s4, %s4567
      %p4569 = scmp.lt.s32.totalorder %s17, 1
      %s4570 = scalar_select %p4569, %s17, 1
      %s4571 = smul.addr %s4570, 2
      %s4572 = scalar_lea.vmem %s5, %s4571
      // Predicated region
      $region37: #{_double_conv_impl.3} parent=35 // pred_check
        %p4573 = pneg %p124
      $region38: #{_double_conv_impl.3} parent=35 // pred_check_branch
        %4575 = sbr.rel (%p4573) target = $region40
      $region39: #{_double_conv_impl.3} parent=35 // pred_region
        _
      $region40: #{_double_conv_impl.3} parent=35 // pred_fallthru
        _
      // Predicated region
      $region41: #{_double_conv_impl.3} parent=35 // pred_check
        %p4576 = pneg %p150
      $region42: #{_double_conv_impl.3} parent=35 // pred_check_branch
        %4578 = sbr.rel (%p4576) target = $region44
      $region43: #{_double_conv_impl.3} parent=35 // pred_region
        _
      $region44: #{_double_conv_impl.3} parent=35 // pred_fallthru
        _
    $region36: #{_double_conv_impl.3} parent=5 // pred_fallthru
      _
    %p4579 = scmp.le.s32.totalorder 2, %s12
    // Predicated region
    $region45: #{_double_conv_impl.3} parent=5 // pred_check
      %p4580 = pneg %p4579
    $region46: #{_double_conv_impl.3} parent=5 // pred_check_branch
      %4582 = sbr.rel (%p4580) target = $region48
    $region47: #{_double_conv_impl.3} parent=5 // pred_region
      %s4583 = ssub.s32 %s12, 2
      // Predicated region
      $region49: #{_double_conv_impl.3} parent=47 // pred_check
        %p4584 = pneg %p130
      $region50: #{_double_conv_impl.3} parent=47 // pred_check_branch
        %4586 = sbr.rel (%p4584) target = $region52
      $region51: #{_double_conv_impl.3} parent=47 // pred_region
        %p4587 = scmp.lt.s32.totalorder %s18, 1
        %s4588 = scalar_select %p4587, %s18, 1
        %s4589 = smul.addr %s4588, 45
        %s4590 = smul.addr %s4589, 4
        %s4591 = scalar_lea.vmem %s4, %s4590
      $region52: #{_double_conv_impl.3} parent=47 // pred_fallthru
        _
      // Predicated region
      $region53: #{_double_conv_impl.3} parent=47 // pred_check
        %p4592 = pneg %p156
      $region54: #{_double_conv_impl.3} parent=47 // pred_check_branch
        %4594 = sbr.rel (%p4592) target = $region56
      $region55: #{_double_conv_impl.3} parent=47 // pred_region
        %p4595 = scmp.lt.s32.totalorder %s18, 1
        %s4596 = scalar_select %p4595, %s18, 1
        %s4597 = smul.addr %s4596, 2
        %s4598 = scalar_lea.vmem %s5, %s4597
      $region56: #{_double_conv_impl.3} parent=47 // pred_fallthru
        _
    $region48: #{_double_conv_impl.3} parent=5 // pred_fallthru
      _
  $region6: #{_double_conv_impl.3} parent=0 // loop_footer
    %s16 = sadd.s32 1, %s12
  $region7: #{_double_conv_impl.3} parent=0 // loop_footer_branch
    %11 = sbr.rel target = $region3
  $region8: #{_double_conv_impl.3} parent=0 // loop_exit
    _

// kernel: _double_conv_impl.4
$region0: #{_double_conv_impl.4}
  #allocation0 [shape = 'u32[]', space=smem, size = 0x4, offset = 0x4, fixed_abs, tag = 'smem constant byte address 0x4 - core index']
  #allocation1 [shape = 'u32[144,128]{1,0:T(1,128)}', space=vmem, size = 0x12000, scoped, tag = 'internal scratch']
  %s0 = inlined_call_operand.vmem [shape: bf16[2,360,128], index: 0, kind: input, shape index: {}]
  %s1 = inlined_call_operand.vmem [shape: bf16[9,128,128], index: 1, kind: input, shape index: {}]
  %s2 = inlined_call_operand.vmem [shape: f32[1,128], index: 2, kind: input, shape index: {}]
  %s3 = inlined_call_operand.vmem [shape: f32[1,128], index: 3, kind: input, shape index: {}]
  %s4 = inlined_call_operand.vmem [shape: bf16[2,360,128], index: 4, kind: output, shape index: {0}]
  %s5 = inlined_call_operand.vmem [shape: f32[2,2,128], index: 5, kind: output, shape index: {1}]
  %6 = xla_tuple %s4, %s5
  %s7 = sld [smem:[#allocation0]]
  $region57: #{_double_conv_impl.4} parent=0
    _
  %s9 = ssub.s32 1, %s7
  %s10 = scalar_select 0, %s9, %s7
  loop: start=0, step=1, limit=4
  $region2: #{_double_conv_impl.4} parent=0 // loop_pre_header
    _
  $region3: #{_double_conv_impl.4} parent=0 // loop_header
    %s12 = sphi 0, %s16
    %p13 = scmp.ge.s32.totalorder %s12, 4
    %s22 = sphi 0, %s24
    %s25 = sphi 0, %s22
    %s26 = sphi 0, %s25
    %s42 = sphi 0, %s26
    %s46 = sphi 0, %s46
    %s48 = sphi 0, %s46
    %s49 = sphi 0, %s48
    %s63 = sphi 0, %s49
    %s67 = sphi 0, %s67
    %s69 = sphi 0, %s67
    %s70 = sphi 0, %s69
    %s84 = sphi 0, %s70
    %s88 = sphi 0, %s88
    %s90 = sphi 0, %s88
    %s91 = sphi 0, %s90
    %s105 = sphi 0, %s91
    %s111 = sphi 0, %s113
    %s114 = sphi 0, %s111
    %s115 = sphi 0, %s114
    %s131 = sphi 0, %s115
    %s137 = sphi 0, %s139
    %s140 = sphi 0, %s137
    %s141 = sphi 0, %s140
    %s157 = sphi 0, %s141
  $region4: #{_double_conv_impl.4} parent=0 // loop_header_branch
    %15 = sbr.rel (%p13) target = $region8
  $region5: #{_double_conv_impl.4} parent=0 // loop_body
    %s17 = ssub.s32 %s12, 1
    %s18 = ssub.s32 %s12, 2
    %s19 = sadd.s32 %s12, 1
    %s20 = ssub.s32 %s12, %s19
    %p21 = scmp.eq.s32.totalorder %s20, 0
    %s23 = sadd.s32 %s22, 1
    %s24 = scalar_select %p21, %s22, %s23
    %p27 = pneg %p21
    %p28 = scmp.eq.s32.totalorder %s12, 1
    %p29 = por %p27, %p28
    %p30 = scmp.ne.s32.totalorder %s22, %s25
    %p31 = scmp.eq.s32.totalorder %s12, 0
    %p32 = por %p30, %p31
    %p33 = scmp.ne.s32.totalorder %s22, %s25
    %p34 = scmp.eq.s32.totalorder %s17, 1
    %p35 = por %p33, %p34
    %p36 = scmp.ne.s32.totalorder %s25, %s26
    %p37 = scmp.eq.s32.totalorder %s17, 0
    %p38 = por %p36, %p37
    %p39 = scmp.ne.s32.totalorder %s25, %s26
    %p40 = scmp.eq.s32.totalorder %s18, 1
    %p41 = por %p39, %p40
    %p43 = scmp.ne.s32.totalorder %s26, %s42
    %p44 = scmp.eq.s32.totalorder %s18, 0
    %p45 = por %p43, %p44
    %s47 = sadd.s32 %s46, 1
    %p50 = scmp.eq.s32.totalorder %s12, 1
    %p51 = scmp.ne.s32.totalorder %s46, %s48
    %p52 = scmp.eq.s32.totalorder %s12, 0
    %p53 = por %p51, %p52
    %p54 = scmp.ne.s32.totalorder %s46, %s48
    %p55 = scmp.eq.s32.totalorder %s17, 1
    %p56 = por %p54, %p55
    %p57 = scmp.ne.s32.totalorder %s48, %s49
    %p58 = scmp.eq.s32.totalorder %s17, 0
    %p59 = por %p57, %p58
    %p60 = scmp.ne.s32.totalorder %s48, %s49
    %p61 = scmp.eq.s32.totalorder %s18, 1
    %p62 = por %p60, %p61
    %p64 = scmp.ne.s32.totalorder %s49, %s63
    %p65 = scmp.eq.s32.totalorder %s18, 0
    %p66 = por %p64, %p65
    %s68 = sadd.s32 %s67, 1
    %p71 = scmp.eq.s32.totalorder %s12, 1
    %p72 = scmp.ne.s32.totalorder %s67, %s69
    %p73 = scmp.eq.s32.totalorder %s12, 0
    %p74 = por %p72, %p73
    %p75 = scmp.ne.s32.totalorder %s67, %s69
    %p76 = scmp.eq.s32.totalorder %s17, 1
    %p77 = por %p75, %p76
    %p78 = scmp.ne.s32.totalorder %s69, %s70
    %p79 = scmp.eq.s32.totalorder %s17, 0
    %p80 = por %p78, %p79
    %p81 = scmp.ne.s32.totalorder %s69, %s70
    %p82 = scmp.eq.s32.totalorder %s18, 1
    %p83 = por %p81, %p82
    %p85 = scmp.ne.s32.totalorder %s70, %s84
    %p86 = scmp.eq.s32.totalorder %s18, 0
    %p87 = por %p85, %p86
    %s89 = sadd.s32 %s88, 1
    %p92 = scmp.eq.s32.totalorder %s12, 1
    %p93 = scmp.ne.s32.totalorder %s88, %s90
    %p94 = scmp.eq.s32.totalorder %s12, 0
    %p95 = por %p93, %p94
    %p96 = scmp.ne.s32.totalorder %s88, %s90
    %p97 = scmp.eq.s32.totalorder %s17, 1
    %p98 = por %p96, %p97
    %p99 = scmp.ne.s32.totalorder %s90, %s91
    %p100 = scmp.eq.s32.totalorder %s17, 0
    %p101 = por %p99, %p100
    %p102 = scmp.ne.s32.totalorder %s90, %s91
    %p103 = scmp.eq.s32.totalorder %s18, 1
    %p104 = por %p102, %p103
    %p106 = scmp.ne.s32.totalorder %s91, %s105
    %p107 = scmp.eq.s32.totalorder %s18, 0
    %p108 = por %p106, %p107
    %s109 = ssub.s32 %s12, %s19
    %p110 = scmp.eq.s32.totalorder %s109, 0
    %s112 = sadd.s32 %s111, 1
    %s113 = scalar_select %p110, %s111, %s112
    %p116 = pneg %p110
    %p117 = scmp.eq.s32.totalorder %s12, 1
    %p118 = por %p116, %p117
    %p119 = scmp.ne.s32.totalorder %s111, %s114
    %p120 = scmp.eq.s32.totalorder %s12, 0
    %p121 = por %p119, %p120
    %p122 = scmp.ne.s32.totalorder %s111, %s114
    %p123 = scmp.eq.s32.totalorder %s17, 1
    %p124 = por %p122, %p123
    %p125 = scmp.ne.s32.totalorder %s114, %s115
    %p126 = scmp.eq.s32.totalorder %s17, 0
    %p127 = por %p125, %p126
    %p128 = scmp.ne.s32.totalorder %s114, %s115
    %p129 = scmp.eq.s32.totalorder %s18, 1
    %p130 = por %p128, %p129
    %p132 = scmp.ne.s32.totalorder %s115, %s131
    %p133 = scmp.eq.s32.totalorder %s18, 0
    %p134 = por %p132, %p133
    %s135 = ssub.s32 %s12, %s19
    %p136 = scmp.eq.s32.totalorder %s135, 0
    %s138 = sadd.s32 %s137, 1
    %s139 = scalar_select %p136, %s137, %s138
    %p142 = pneg %p136
    %p143 = scmp.eq.s32.totalorder %s12, 1
    %p144 = por %p142, %p143
    %p145 = scmp.ne.s32.totalorder %s137, %s140
    %p146 = scmp.eq.s32.totalorder %s12, 0
    %p147 = por %p145, %p146
    %p148 = scmp.ne.s32.totalorder %s137, %s140
    %p149 = scmp.eq.s32.totalorder %s17, 1
    %p150 = por %p148, %p149
    %p151 = scmp.ne.s32.totalorder %s140, %s141
    %p152 = scmp.eq.s32.totalorder %s17, 0
    %p153 = por %p151, %p152
    %p154 = scmp.ne.s32.totalorder %s140, %s141
    %p155 = scmp.eq.s32.totalorder %s18, 1
    %p156 = por %p154, %p155
    %p158 = scmp.ne.s32.totalorder %s141, %s157
    %p159 = scmp.eq.s32.totalorder %s18, 0
    %p160 = por %p158, %p159
    %p161 = scmp.le.s32.totalorder 1, %s12
    %p162 = scmp.lt.s32.totalorder %s12, 3
    %p163 = pnand %p161, %p162
    %p164 = pneg %p163
    // Predicated region
    $region9: #{_double_conv_impl.4} parent=5 // pred_check
      _
    $region10: #{_double_conv_impl.4} parent=5 // pred_check_branch
      %166 = sbr.rel (%p163) target = $region12
    $region11: #{_double_conv_impl.4} parent=5 // pred_region
      %s167 = ssub.s32 %s12, 1
      // Predicated region
      $region13: #{_double_conv_impl.4} parent=11 // pred_check
        %p168 = pneg %p59
      $region14: #{_double_conv_impl.4} parent=11 // pred_check_branch
        %170 = sbr.rel (%p168) target = $region16
      $region15: #{_double_conv_impl.4} parent=11 // pred_region
        _
      $region16: #{_double_conv_impl.4} parent=11 // pred_fallthru
        _
      // Predicated region
      $region17: #{_double_conv_impl.4} parent=11 // pred_check
        %p171 = pneg %p80
      $region18: #{_double_conv_impl.4} parent=11 // pred_check_branch
        %173 = sbr.rel (%p171) target = $region20
      $region19: #{_double_conv_impl.4} parent=11 // pred_region
        _
      $region20: #{_double_conv_impl.4} parent=11 // pred_fallthru
        _
      // Predicated region
      $region21: #{_double_conv_impl.4} parent=11 // pred_check
        %p174 = pneg %p101
      $region22: #{_double_conv_impl.4} parent=11 // pred_check_branch
        %176 = sbr.rel (%p174) target = $region24
      $region23: #{_double_conv_impl.4} parent=11 // pred_region
        _
      $region24: #{_double_conv_impl.4} parent=11 // pred_fallthru
        _
    $region12: #{_double_conv_impl.4} parent=5 // pred_fallthru
      _
    %p177 = scmp.lt.s32.totalorder %s12, 2
    // Predicated region
    $region25: #{_double_conv_impl.4} parent=5 // pred_check
      %p178 = pneg %p177
    $region26: #{_double_conv_impl.4} parent=5 // pred_check_branch
      %180 = sbr.rel (%p178) target = $region28
    $region27: #{_double_conv_impl.4} parent=5 // pred_region
      // Predicated region
      $region29: #{_double_conv_impl.4} parent=27 // pred_check
        %p181 = pneg %p32
      $region30: #{_double_conv_impl.4} parent=27 // pred_check_branch
        %183 = sbr.rel (%p181) target = $region32
      $region31: #{_double_conv_impl.4} parent=27 // pred_region
        %p184 = scmp.lt.s32.totalorder %s12, 1
        %s185 = scalar_select %p184, %s12, 1
        %s186 = smul.addr %s185, 45
        %s187 = smul.addr %s186, 4
        %s188 = scalar_lea.vmem %s0, %s187
      $region32: #{_double_conv_impl.4} parent=27 // pred_fallthru
        _
    $region28: #{_double_conv_impl.4} parent=5 // pred_fallthru
      _
    %p189 = scmp.le.s32.totalorder 1, %s12
    %p190 = scmp.lt.s32.totalorder %s12, 3
    %p191 = pnand %p189, %p190
    %p192 = pneg %p191
    // Predicated region
    $region33: #{_double_conv_impl.4} parent=5 // pred_check
      _
    $region34: #{_double_conv_impl.4} parent=5 // pred_check_branch
      %194 = sbr.rel (%p191) target = $region36
    $region35: #{_double_conv_impl.4} parent=5 // pred_region
      %s195 = ssub.s32 %s12, 1
      %p196 = scmp.lt.s32.totalorder %s17, 1
      %s197 = scalar_select %p196, %s17, 1
      %s198 = smul.addr %s197, 45
      %s199 = smul.addr %s198, 4
      %s200 = scalar_lea.vmem %s0, %s199
      %p201 = pneg %p38
      %p202 = pneg %p35
      %p203 = pneg %p59
      %p204 = pneg %p56
      %p205 = pneg %p80
      %p206 = pneg %p77
      %p207 = pneg %p101
      %p208 = pneg %p98
      %p209 = pneg %p127
      %p210 = pneg %p124
      %p211 = scmp.lt.s32.totalorder %s17, 1
      %s212 = scalar_select %p211, %s17, 1
      %s213 = smul.addr %s212, 45
      %s214 = smul.addr %s213, 4
      %s215 = scalar_lea.vmem %s4, %s214
      %p216 = pneg %p153
      %p217 = pneg %p150
      %p218 = scmp.lt.s32.totalorder %s17, 1
      %s219 = scalar_select %p218, %s17, 1
      %s220 = smul.addr %s219, 2
      %s221 = scalar_lea.vmem %s5, %s220
      %p222 = scmp.lt.s32.totalorder %s17, 1
      %s223 = scalar_select %p222, %s17, 1
      %s224 = smul.addr %s223, 45
      %s225 = smul.addr %s224, 4
      %s226 = scalar_lea.vmem %s0, %s225
      %p227 = scmp.lt.s32.totalorder %s17, 1
      %s228 = scalar_select %p227, %s17, 1
      %s229 = smul.addr %s228, 45
      %s230 = smul.addr %s229, 4
      %s231 = scalar_lea.vmem %s4, %s230
      %p232 = scmp.lt.s32.totalorder %s17, 1
      %s233 = scalar_select %p232, %s17, 1
      %s234 = smul.addr %s233, 2
      %s235 = scalar_lea.vmem %s5, %s234
      %v237 = vld [vmem:[%s226] sm:$0xf]
      %v238 = vld [vmem:[%s226 + $0x4] sm:$0xf]
      %v239 = vld [vmem:[%s226 + $0x8] sm:$0xf]
      %v240 = vld [vmem:[%s226 + $0xc] sm:$0xf]
      %v241 = vld [vmem:[%s226 + $0x10] sm:$0xf]
      %v242 = vld [vmem:[%s226 + $0x14] sm:$0xf]
      %v243 = vld [vmem:[%s226 + $0x18] sm:$0xf]
      %v244 = vld [vmem:[%s226 + $0x1c] sm:$0xf]
      %v245 = vld [vmem:[%s226 + $0x20] sm:$0xf]
      %v246 = vld [vmem:[%s226 + $0x24] sm:$0xf]
      %v247 = vld [vmem:[%s226 + $0x28] sm:$0xf]
      %v248 = vld [vmem:[%s226 + $0x2c] sm:$0xf]
      %v249 = vld [vmem:[%s226 + $0x30] sm:$0xf]
      %v250 = vld [vmem:[%s226 + $0x34] sm:$0xf]
      %v251 = vld [vmem:[%s226 + $0x38] sm:$0xf]
      %v252 = vld [vmem:[%s226 + $0x3c] sm:$0xf]
      %v253 = vld [vmem:[%s226 + $0x40] sm:$0xf]
      %v254 = vld [vmem:[%s226 + $0x44] sm:$0xf]
      %v255 = vld [vmem:[%s226 + $0x48] sm:$0xf]
      %v256 = vld [vmem:[%s226 + $0x4c] sm:$0xf]
      %v257 = vld [vmem:[%s226 + $0x50] sm:$0xf]
      %v258 = vld [vmem:[%s226 + $0x54] sm:$0xf]
      %v259 = vld [vmem:[%s226 + $0x58] sm:$0xf]
      %v260 = vld [vmem:[%s226 + $0x5c] sm:$0xf]
      %v261 = vld [vmem:[%s226 + $0x60] sm:$0xf]
      %v262 = vld [vmem:[%s226 + $0x64] sm:$0xf]
      %v263 = vld [vmem:[%s226 + $0x68] sm:$0xf]
      %v264 = vld [vmem:[%s226 + $0x6c] sm:$0xf]
      %v265 = vld [vmem:[%s226 + $0x70] sm:$0xf]
      %v266 = vld [vmem:[%s226 + $0x74] sm:$0xf]
      %v267 = vld [vmem:[%s226 + $0x78] sm:$0xf]
      %v268 = vld [vmem:[%s226 + $0x7c] sm:$0xf]
      %v269 = vld [vmem:[%s226 + $0x80] sm:$0xf]
      %v270 = vld [vmem:[%s226 + $0x84] sm:$0xf]
      %v271 = vld [vmem:[%s226 + $0x88] sm:$0xf]
      %v272 = vld [vmem:[%s226 + $0x8c] sm:$0xf]
      %v273 = vld [vmem:[%s226 + $0x90] sm:$0xf]
      %v274 = vld [vmem:[%s226 + $0x94] sm:$0xf]
      %v275 = vld [vmem:[%s226 + $0x98] sm:$0xf]
      %v276 = vld [vmem:[%s226 + $0x9c] sm:$0xf]
      %v277 = vld [vmem:[%s226 + $0xa0] sm:$0xf]
      %v278 = vld [vmem:[%s226 + $0xa4] sm:$0xf]
      %v279 = vlaneseq
      %v280 = vshrl.u32 %v279, 7
      %v281 = vadd.s32 %v280, 8
      %v282 = vadd.s32 %v280, 16
      %v283 = vadd.s32 %v280, 24
      %v284 = vadd.s32 %v280, 32
      %v285 = vadd.s32 %v280, 40
      %v286 = vadd.s32 %v280, 48
      %v287 = vadd.s32 %v280, 56
      %v288 = vadd.s32 %v280, 64
      %v289 = vadd.s32 %v280, 72
      %v290 = vadd.s32 %v280, 80
      %v291 = vadd.s32 %v280, 88
      %v292 = vadd.s32 %v280, 96
      %v293 = vadd.s32 %v280, 104
      %v294 = vadd.s32 %v280, 112
      %v295 = vadd.s32 %v280, 120
      %v296 = vadd.s32 %v280, 128
      %v297 = vadd.s32 %v280, 136
      %v298 = vadd.s32 %v280, 144
      %v299 = vadd.s32 %v280, 152
      %v300 = vadd.s32 %v280, 160
      %v301 = vadd.s32 %v280, 168
      %v302 = vadd.s32 %v280, 176
      %v303 = vadd.s32 %v280, 184
      %v304 = vadd.s32 %v280, 192
      %v305 = vadd.s32 %v280, 200
      %v306 = vadd.s32 %v280, 208
      %v307 = vadd.s32 %v280, 216
      %v308 = vadd.s32 %v280, 224
      %v309 = vadd.s32 %v280, 232
      %v310 = vadd.s32 %v280, 240
      %v311 = vadd.s32 %v280, 248
      %v312 = vadd.s32 %v280, 256
      %v313 = vadd.s32 %v280, 264
      %v314 = vadd.s32 %v280, 272
      %v315 = vadd.s32 %v280, 280
      %v316 = vadd.s32 %v280, 288
      %v317 = vadd.s32 %v280, 296
      %v318 = vadd.s32 %v280, 304
      %v319 = vadd.s32 %v280, 312
      %v320 = vadd.s32 %v280, 320
      %v321 = vadd.s32 %v280, 328
      %vm322 = vcmp.lt.s32.totalorder %v280, 0
      %v323 = vsub.s32 0, %v280
      %v324 = vsel %vm322, %v323, %v280
      %v325 = vmul.u32.u64.compose %v324, 3817748708
      %v326 = vextract.low.u32 %v325
      %v327 = vextract.high.u32 %v325
      %v328 = vshrl.u32 %v327, 4
      %v329 = vmul.u32 %v328, 18
      %v330 = vsub.s32 %v324, %v329
      %v331 = vsub.s32 0, %v330
      %v332 = vsel %vm322, %v331, %v330
      %vm333 = vcmp.lt.s32.totalorder %v281, 0
      %v334 = vsub.s32 0, %v281
      %v335 = vsel %vm333, %v334, %v281
      %v336 = vmul.u32.u64.compose %v335, 3817748708
      %v337 = vextract.low.u32 %v336
      %v338 = vextract.high.u32 %v336
      %v339 = vshrl.u32 %v338, 4
      %v340 = vmul.u32 %v339, 18
      %v341 = vsub.s32 %v335, %v340
      %v342 = vsub.s32 0, %v341
      %v343 = vsel %vm333, %v342, %v341
      %vm344 = vcmp.lt.s32.totalorder %v282, 0
      %v345 = vsub.s32 0, %v282
      %v346 = vsel %vm344, %v345, %v282
      %v347 = vmul.u32.u64.compose %v346, 3817748708
      %v348 = vextract.low.u32 %v347
      %v349 = vextract.high.u32 %v347
      %v350 = vshrl.u32 %v349, 4
      %v351 = vmul.u32 %v350, 18
      %v352 = vsub.s32 %v346, %v351
      %v353 = vsub.s32 0, %v352
      %v354 = vsel %vm344, %v353, %v352
      %vm355 = vcmp.lt.s32.totalorder %v283, 0
      %v356 = vsub.s32 0, %v283
      %v357 = vsel %vm355, %v356, %v283
      %v358 = vmul.u32.u64.compose %v357, 3817748708
      %v359 = vextract.low.u32 %v358
      %v360 = vextract.high.u32 %v358
      %v361 = vshrl.u32 %v360, 4
      %v362 = vmul.u32 %v361, 18
      %v363 = vsub.s32 %v357, %v362
      %v364 = vsub.s32 0, %v363
      %v365 = vsel %vm355, %v364, %v363
      %vm366 = vcmp.lt.s32.totalorder %v284, 0
      %v367 = vsub.s32 0, %v284
      %v368 = vsel %vm366, %v367, %v284
      %v369 = vmul.u32.u64.compose %v368, 3817748708
      %v370 = vextract.low.u32 %v369
      %v371 = vextract.high.u32 %v369
      %v372 = vshrl.u32 %v371, 4
      %v373 = vmul.u32 %v372, 18
      %v374 = vsub.s32 %v368, %v373
      %v375 = vsub.s32 0, %v374
      %v376 = vsel %vm366, %v375, %v374
      %vm377 = vcmp.lt.s32.totalorder %v285, 0
      %v378 = vsub.s32 0, %v285
      %v379 = vsel %vm377, %v378, %v285
      %v380 = vmul.u32.u64.compose %v379, 3817748708
      %v381 = vextract.low.u32 %v380
      %v382 = vextract.high.u32 %v380
      %v383 = vshrl.u32 %v382, 4
      %v384 = vmul.u32 %v383, 18
      %v385 = vsub.s32 %v379, %v384
      %v386 = vsub.s32 0, %v385
      %v387 = vsel %vm377, %v386, %v385
      %vm388 = vcmp.lt.s32.totalorder %v286, 0
      %v389 = vsub.s32 0, %v286
      %v390 = vsel %vm388, %v389, %v286
      %v391 = vmul.u32.u64.compose %v390, 3817748708
      %v392 = vextract.low.u32 %v391
      %v393 = vextract.high.u32 %v391
      %v394 = vshrl.u32 %v393, 4
      %v395 = vmul.u32 %v394, 18
      %v396 = vsub.s32 %v390, %v395
      %v397 = vsub.s32 0, %v396
      %v398 = vsel %vm388, %v397, %v396
      %vm399 = vcmp.lt.s32.totalorder %v287, 0
      %v400 = vsub.s32 0, %v287
      %v401 = vsel %vm399, %v400, %v287
      %v402 = vmul.u32.u64.compose %v401, 3817748708
      %v403 = vextract.low.u32 %v402
      %v404 = vextract.high.u32 %v402
      %v405 = vshrl.u32 %v404, 4
      %v406 = vmul.u32 %v405, 18
      %v407 = vsub.s32 %v401, %v406
      %v408 = vsub.s32 0, %v407
      %v409 = vsel %vm399, %v408, %v407
      %vm410 = vcmp.lt.s32.totalorder %v288, 0
      %v411 = vsub.s32 0, %v288
      %v412 = vsel %vm410, %v411, %v288
      %v413 = vmul.u32.u64.compose %v412, 3817748708
      %v414 = vextract.low.u32 %v413
      %v415 = vextract.high.u32 %v413
      %v416 = vshrl.u32 %v415, 4
      %v417 = vmul.u32 %v416, 18
      %v418 = vsub.s32 %v412, %v417
      %v419 = vsub.s32 0, %v418
      %v420 = vsel %vm410, %v419, %v418
      %vm421 = vcmp.lt.s32.totalorder %v289, 0
      %v422 = vsub.s32 0, %v289
      %v423 = vsel %vm421, %v422, %v289
      %v424 = vmul.u32.u64.compose %v423, 3817748708
      %v425 = vextract.low.u32 %v424
      %v426 = vextract.high.u32 %v424
      %v427 = vshrl.u32 %v426, 4
      %v428 = vmul.u32 %v427, 18
      %v429 = vsub.s32 %v423, %v428
      %v430 = vsub.s32 0, %v429
      %v431 = vsel %vm421, %v430, %v429
      %vm432 = vcmp.lt.s32.totalorder %v290, 0
      %v433 = vsub.s32 0, %v290
      %v434 = vsel %vm432, %v433, %v290
      %v435 = vmul.u32.u64.compose %v434, 3817748708
      %v436 = vextract.low.u32 %v435
      %v437 = vextract.high.u32 %v435
      %v438 = vshrl.u32 %v437, 4
      %v439 = vmul.u32 %v438, 18
      %v440 = vsub.s32 %v434, %v439
      %v441 = vsub.s32 0, %v440
      %v442 = vsel %vm432, %v441, %v440
      %vm443 = vcmp.lt.s32.totalorder %v291, 0
      %v444 = vsub.s32 0, %v291
      %v445 = vsel %vm443, %v444, %v291
      %v446 = vmul.u32.u64.compose %v445, 3817748708
      %v447 = vextract.low.u32 %v446
      %v448 = vextract.high.u32 %v446
      %v449 = vshrl.u32 %v448, 4
      %v450 = vmul.u32 %v449, 18
      %v451 = vsub.s32 %v445, %v450
      %v452 = vsub.s32 0, %v451
      %v453 = vsel %vm443, %v452, %v451
      %vm454 = vcmp.lt.s32.totalorder %v292, 0
      %v455 = vsub.s32 0, %v292
      %v456 = vsel %vm454, %v455, %v292
      %v457 = vmul.u32.u64.compose %v456, 3817748708
      %v458 = vextract.low.u32 %v457
      %v459 = vextract.high.u32 %v457
      %v460 = vshrl.u32 %v459, 4
      %v461 = vmul.u32 %v460, 18
      %v462 = vsub.s32 %v456, %v461
      %v463 = vsub.s32 0, %v462
      %v464 = vsel %vm454, %v463, %v462
      %vm465 = vcmp.lt.s32.totalorder %v293, 0
      %v466 = vsub.s32 0, %v293
      %v467 = vsel %vm465, %v466, %v293
      %v468 = vmul.u32.u64.compose %v467, 3817748708
      %v469 = vextract.low.u32 %v468
      %v470 = vextract.high.u32 %v468
      %v471 = vshrl.u32 %v470, 4
      %v472 = vmul.u32 %v471, 18
      %v473 = vsub.s32 %v467, %v472
      %v474 = vsub.s32 0, %v473
      %v475 = vsel %vm465, %v474, %v473
      %vm476 = vcmp.lt.s32.totalorder %v294, 0
      %v477 = vsub.s32 0, %v294
      %v478 = vsel %vm476, %v477, %v294
      %v479 = vmul.u32.u64.compose %v478, 3817748708
      %v480 = vextract.low.u32 %v479
      %v481 = vextract.high.u32 %v479
      %v482 = vshrl.u32 %v481, 4
      %v483 = vmul.u32 %v482, 18
      %v484 = vsub.s32 %v478, %v483
      %v485 = vsub.s32 0, %v484
      %v486 = vsel %vm476, %v485, %v484
      %vm487 = vcmp.lt.s32.totalorder %v295, 0
      %v488 = vsub.s32 0, %v295
      %v489 = vsel %vm487, %v488, %v295
      %v490 = vmul.u32.u64.compose %v489, 3817748708
      %v491 = vextract.low.u32 %v490
      %v492 = vextract.high.u32 %v490
      %v493 = vshrl.u32 %v492, 4
      %v494 = vmul.u32 %v493, 18
      %v495 = vsub.s32 %v489, %v494
      %v496 = vsub.s32 0, %v495
      %v497 = vsel %vm487, %v496, %v495
      %vm498 = vcmp.lt.s32.totalorder %v296, 0
      %v499 = vsub.s32 0, %v296
      %v500 = vsel %vm498, %v499, %v296
      %v501 = vmul.u32.u64.compose %v500, 3817748708
      %v502 = vextract.low.u32 %v501
      %v503 = vextract.high.u32 %v501
      %v504 = vshrl.u32 %v503, 4
      %v505 = vmul.u32 %v504, 18
      %v506 = vsub.s32 %v500, %v505
      %v507 = vsub.s32 0, %v506
      %v508 = vsel %vm498, %v507, %v506
      %vm509 = vcmp.lt.s32.totalorder %v297, 0
      %v510 = vsub.s32 0, %v297
      %v511 = vsel %vm509, %v510, %v297
      %v512 = vmul.u32.u64.compose %v511, 3817748708
      %v513 = vextract.low.u32 %v512
      %v514 = vextract.high.u32 %v512
      %v515 = vshrl.u32 %v514, 4
      %v516 = vmul.u32 %v515, 18
      %v517 = vsub.s32 %v511, %v516
      %v518 = vsub.s32 0, %v517
      %v519 = vsel %vm509, %v518, %v517
      %vm520 = vcmp.lt.s32.totalorder %v298, 0
      %v521 = vsub.s32 0, %v298
      %v522 = vsel %vm520, %v521, %v298
      %v523 = vmul.u32.u64.compose %v522, 3817748708
      %v524 = vextract.low.u32 %v523
      %v525 = vextract.high.u32 %v523
      %v526 = vshrl.u32 %v525, 4
      %v527 = vmul.u32 %v526, 18
      %v528 = vsub.s32 %v522, %v527
      %v529 = vsub.s32 0, %v528
      %v530 = vsel %vm520, %v529, %v528
      %vm531 = vcmp.lt.s32.totalorder %v299, 0
      %v532 = vsub.s32 0, %v299
      %v533 = vsel %vm531, %v532, %v299
      %v534 = vmul.u32.u64.compose %v533, 3817748708
      %v535 = vextract.low.u32 %v534
      %v536 = vextract.high.u32 %v534
      %v537 = vshrl.u32 %v536, 4
      %v538 = vmul.u32 %v537, 18
      %v539 = vsub.s32 %v533, %v538
      %v540 = vsub.s32 0, %v539
      %v541 = vsel %vm531, %v540, %v539
      %vm542 = vcmp.lt.s32.totalorder %v300, 0
      %v543 = vsub.s32 0, %v300
      %v544 = vsel %vm542, %v543, %v300
      %v545 = vmul.u32.u64.compose %v544, 3817748708
      %v546 = vextract.low.u32 %v545
      %v547 = vextract.high.u32 %v545
      %v548 = vshrl.u32 %v547, 4
      %v549 = vmul.u32 %v548, 18
      %v550 = vsub.s32 %v544, %v549
      %v551 = vsub.s32 0, %v550
      %v552 = vsel %vm542, %v551, %v550
      %vm553 = vcmp.lt.s32.totalorder %v301, 0
      %v554 = vsub.s32 0, %v301
      %v555 = vsel %vm553, %v554, %v301
      %v556 = vmul.u32.u64.compose %v555, 3817748708
      %v557 = vextract.low.u32 %v556
      %v558 = vextract.high.u32 %v556
      %v559 = vshrl.u32 %v558, 4
      %v560 = vmul.u32 %v559, 18
      %v561 = vsub.s32 %v555, %v560
      %v562 = vsub.s32 0, %v561
      %v563 = vsel %vm553, %v562, %v561
      %vm564 = vcmp.lt.s32.totalorder %v302, 0
      %v565 = vsub.s32 0, %v302
      %v566 = vsel %vm564, %v565, %v302
      %v567 = vmul.u32.u64.compose %v566, 3817748708
      %v568 = vextract.low.u32 %v567
      %v569 = vextract.high.u32 %v567
      %v570 = vshrl.u32 %v569, 4
      %v571 = vmul.u32 %v570, 18
      %v572 = vsub.s32 %v566, %v571
      %v573 = vsub.s32 0, %v572
      %v574 = vsel %vm564, %v573, %v572
      %vm575 = vcmp.lt.s32.totalorder %v303, 0
      %v576 = vsub.s32 0, %v303
      %v577 = vsel %vm575, %v576, %v303
      %v578 = vmul.u32.u64.compose %v577, 3817748708
      %v579 = vextract.low.u32 %v578
      %v580 = vextract.high.u32 %v578
      %v581 = vshrl.u32 %v580, 4
      %v582 = vmul.u32 %v581, 18
      %v583 = vsub.s32 %v577, %v582
      %v584 = vsub.s32 0, %v583
      %v585 = vsel %vm575, %v584, %v583
      %vm586 = vcmp.lt.s32.totalorder %v304, 0
      %v587 = vsub.s32 0, %v304
      %v588 = vsel %vm586, %v587, %v304
      %v589 = vmul.u32.u64.compose %v588, 3817748708
      %v590 = vextract.low.u32 %v589
      %v591 = vextract.high.u32 %v589
      %v592 = vshrl.u32 %v591, 4
      %v593 = vmul.u32 %v592, 18
      %v594 = vsub.s32 %v588, %v593
      %v595 = vsub.s32 0, %v594
      %v596 = vsel %vm586, %v595, %v594
      %vm597 = vcmp.lt.s32.totalorder %v305, 0
      %v598 = vsub.s32 0, %v305
      %v599 = vsel %vm597, %v598, %v305
      %v600 = vmul.u32.u64.compose %v599, 3817748708
      %v601 = vextract.low.u32 %v600
      %v602 = vextract.high.u32 %v600
      %v603 = vshrl.u32 %v602, 4
      %v604 = vmul.u32 %v603, 18
      %v605 = vsub.s32 %v599, %v604
      %v606 = vsub.s32 0, %v605
      %v607 = vsel %vm597, %v606, %v605
      %vm608 = vcmp.lt.s32.totalorder %v306, 0
      %v609 = vsub.s32 0, %v306
      %v610 = vsel %vm608, %v609, %v306
      %v611 = vmul.u32.u64.compose %v610, 3817748708
      %v612 = vextract.low.u32 %v611
      %v613 = vextract.high.u32 %v611
      %v614 = vshrl.u32 %v613, 4
      %v615 = vmul.u32 %v614, 18
      %v616 = vsub.s32 %v610, %v615
      %v617 = vsub.s32 0, %v616
      %v618 = vsel %vm608, %v617, %v616
      %vm619 = vcmp.lt.s32.totalorder %v307, 0
      %v620 = vsub.s32 0, %v307
      %v621 = vsel %vm619, %v620, %v307
      %v622 = vmul.u32.u64.compose %v621, 3817748708
      %v623 = vextract.low.u32 %v622
      %v624 = vextract.high.u32 %v622
      %v625 = vshrl.u32 %v624, 4
      %v626 = vmul.u32 %v625, 18
      %v627 = vsub.s32 %v621, %v626
      %v628 = vsub.s32 0, %v627
      %v629 = vsel %vm619, %v628, %v627
      %vm630 = vcmp.lt.s32.totalorder %v308, 0
      %v631 = vsub.s32 0, %v308
      %v632 = vsel %vm630, %v631, %v308
      %v633 = vmul.u32.u64.compose %v632, 3817748708
      %v634 = vextract.low.u32 %v633
      %v635 = vextract.high.u32 %v633
      %v636 = vshrl.u32 %v635, 4
      %v637 = vmul.u32 %v636, 18
      %v638 = vsub.s32 %v632, %v637
      %v639 = vsub.s32 0, %v638
      %v640 = vsel %vm630, %v639, %v638
      %vm641 = vcmp.lt.s32.totalorder %v309, 0
      %v642 = vsub.s32 0, %v309
      %v643 = vsel %vm641, %v642, %v309
      %v644 = vmul.u32.u64.compose %v643, 3817748708
      %v645 = vextract.low.u32 %v644
      %v646 = vextract.high.u32 %v644
      %v647 = vshrl.u32 %v646, 4
      %v648 = vmul.u32 %v647, 18
      %v649 = vsub.s32 %v643, %v648
      %v650 = vsub.s32 0, %v649
      %v651 = vsel %vm641, %v650, %v649
      %vm652 = vcmp.lt.s32.totalorder %v310, 0
      %v653 = vsub.s32 0, %v310
      %v654 = vsel %vm652, %v653, %v310
      %v655 = vmul.u32.u64.compose %v654, 3817748708
      %v656 = vextract.low.u32 %v655
      %v657 = vextract.high.u32 %v655
      %v658 = vshrl.u32 %v657, 4
      %v659 = vmul.u32 %v658, 18
      %v660 = vsub.s32 %v654, %v659
      %v661 = vsub.s32 0, %v660
      %v662 = vsel %vm652, %v661, %v660
      %vm663 = vcmp.lt.s32.totalorder %v311, 0
      %v664 = vsub.s32 0, %v311
      %v665 = vsel %vm663, %v664, %v311
      %v666 = vmul.u32.u64.compose %v665, 3817748708
      %v667 = vextract.low.u32 %v666
      %v668 = vextract.high.u32 %v666
      %v669 = vshrl.u32 %v668, 4
      %v670 = vmul.u32 %v669, 18
      %v671 = vsub.s32 %v665, %v670
      %v672 = vsub.s32 0, %v671
      %v673 = vsel %vm663, %v672, %v671
      %vm674 = vcmp.lt.s32.totalorder %v312, 0
      %v675 = vsub.s32 0, %v312
      %v676 = vsel %vm674, %v675, %v312
      %v677 = vmul.u32.u64.compose %v676, 3817748708
      %v678 = vextract.low.u32 %v677
      %v679 = vextract.high.u32 %v677
      %v680 = vshrl.u32 %v679, 4
      %v681 = vmul.u32 %v680, 18
      %v682 = vsub.s32 %v676, %v681
      %v683 = vsub.s32 0, %v682
      %v684 = vsel %vm674, %v683, %v682
      %vm685 = vcmp.lt.s32.totalorder %v313, 0
      %v686 = vsub.s32 0, %v313
      %v687 = vsel %vm685, %v686, %v313
      %v688 = vmul.u32.u64.compose %v687, 3817748708
      %v689 = vextract.low.u32 %v688
      %v690 = vextract.high.u32 %v688
      %v691 = vshrl.u32 %v690, 4
      %v692 = vmul.u32 %v691, 18
      %v693 = vsub.s32 %v687, %v692
      %v694 = vsub.s32 0, %v693
      %v695 = vsel %vm685, %v694, %v693
      %vm696 = vcmp.lt.s32.totalorder %v314, 0
      %v697 = vsub.s32 0, %v314
      %v698 = vsel %vm696, %v697, %v314
      %v699 = vmul.u32.u64.compose %v698, 3817748708
      %v700 = vextract.low.u32 %v699
      %v701 = vextract.high.u32 %v699
      %v702 = vshrl.u32 %v701, 4
      %v703 = vmul.u32 %v702, 18
      %v704 = vsub.s32 %v698, %v703
      %v705 = vsub.s32 0, %v704
      %v706 = vsel %vm696, %v705, %v704
      %vm707 = vcmp.lt.s32.totalorder %v315, 0
      %v708 = vsub.s32 0, %v315
      %v709 = vsel %vm707, %v708, %v315
      %v710 = vmul.u32.u64.compose %v709, 3817748708
      %v711 = vextract.low.u32 %v710
      %v712 = vextract.high.u32 %v710
      %v713 = vshrl.u32 %v712, 4
      %v714 = vmul.u32 %v713, 18
      %v715 = vsub.s32 %v709, %v714
      %v716 = vsub.s32 0, %v715
      %v717 = vsel %vm707, %v716, %v715
      %vm718 = vcmp.lt.s32.totalorder %v316, 0
      %v719 = vsub.s32 0, %v316
      %v720 = vsel %vm718, %v719, %v316
      %v721 = vmul.u32.u64.compose %v720, 3817748708
      %v722 = vextract.low.u32 %v721
      %v723 = vextract.high.u32 %v721
      %v724 = vshrl.u32 %v723, 4
      %v725 = vmul.u32 %v724, 18
      %v726 = vsub.s32 %v720, %v725
      %v727 = vsub.s32 0, %v726
      %v728 = vsel %vm718, %v727, %v726
      %vm729 = vcmp.lt.s32.totalorder %v317, 0
      %v730 = vsub.s32 0, %v317
      %v731 = vsel %vm729, %v730, %v317
      %v732 = vmul.u32.u64.compose %v731, 3817748708
      %v733 = vextract.low.u32 %v732
      %v734 = vextract.high.u32 %v732
      %v735 = vshrl.u32 %v734, 4
      %v736 = vmul.u32 %v735, 18
      %v737 = vsub.s32 %v731, %v736
      %v738 = vsub.s32 0, %v737
      %v739 = vsel %vm729, %v738, %v737
      %vm740 = vcmp.lt.s32.totalorder %v318, 0
      %v741 = vsub.s32 0, %v318
      %v742 = vsel %vm740, %v741, %v318
      %v743 = vmul.u32.u64.compose %v742, 3817748708
      %v744 = vextract.low.u32 %v743
      %v745 = vextract.high.u32 %v743
      %v746 = vshrl.u32 %v745, 4
      %v747 = vmul.u32 %v746, 18
      %v748 = vsub.s32 %v742, %v747
      %v749 = vsub.s32 0, %v748
      %v750 = vsel %vm740, %v749, %v748
      %vm751 = vcmp.lt.s32.totalorder %v319, 0
      %v752 = vsub.s32 0, %v319
      %v753 = vsel %vm751, %v752, %v319
      %v754 = vmul.u32.u64.compose %v753, 3817748708
      %v755 = vextract.low.u32 %v754
      %v756 = vextract.high.u32 %v754
      %v757 = vshrl.u32 %v756, 4
      %v758 = vmul.u32 %v757, 18
      %v759 = vsub.s32 %v753, %v758
      %v760 = vsub.s32 0, %v759
      %v761 = vsel %vm751, %v760, %v759
      %vm762 = vcmp.lt.s32.totalorder %v320, 0
      %v763 = vsub.s32 0, %v320
      %v764 = vsel %vm762, %v763, %v320
      %v765 = vmul.u32.u64.compose %v764, 3817748708
      %v766 = vextract.low.u32 %v765
      %v767 = vextract.high.u32 %v765
      %v768 = vshrl.u32 %v767, 4
      %v769 = vmul.u32 %v768, 18
      %v770 = vsub.s32 %v764, %v769
      %v771 = vsub.s32 0, %v770
      %v772 = vsel %vm762, %v771, %v770
      %vm773 = vcmp.lt.s32.totalorder %v321, 0
      %v774 = vsub.s32 0, %v321
      %v775 = vsel %vm773, %v774, %v321
      %v776 = vmul.u32.u64.compose %v775, 3817748708
      %v777 = vextract.low.u32 %v776
      %v778 = vextract.high.u32 %v776
      %v779 = vshrl.u32 %v778, 4
      %v780 = vmul.u32 %v779, 18
      %v781 = vsub.s32 %v775, %v780
      %v782 = vsub.s32 0, %v781
      %v783 = vsel %vm773, %v782, %v781
      %vm784 = vcmp.ne.s32.totalorder %v332, 0
      %vm785 = vcmp.ne.s32.totalorder %v343, 0
      %vm786 = vcmp.ne.s32.totalorder %v354, 0
      %vm787 = vcmp.ne.s32.totalorder %v365, 0
      %vm788 = vcmp.ne.s32.totalorder %v376, 0
      %vm789 = vcmp.ne.s32.totalorder %v387, 0
      %vm790 = vcmp.ne.s32.totalorder %v398, 0
      %vm791 = vcmp.ne.s32.totalorder %v409, 0
      %vm792 = vcmp.ne.s32.totalorder %v420, 0
      %vm793 = vcmp.ne.s32.totalorder %v431, 0
      %vm794 = vcmp.ne.s32.totalorder %v442, 0
      %vm795 = vcmp.ne.s32.totalorder %v453, 0
      %vm796 = vcmp.ne.s32.totalorder %v464, 0
      %vm797 = vcmp.ne.s32.totalorder %v475, 0
      %vm798 = vcmp.ne.s32.totalorder %v486, 0
      %vm799 = vcmp.ne.s32.totalorder %v497, 0
      %vm800 = vcmp.ne.s32.totalorder %v508, 0
      %vm801 = vcmp.ne.s32.totalorder %v519, 0
      %vm802 = vcmp.ne.s32.totalorder %v530, 0
      %vm803 = vcmp.ne.s32.totalorder %v541, 0
      %vm804 = vcmp.ne.s32.totalorder %v552, 0
      %vm805 = vcmp.ne.s32.totalorder %v563, 0
      %vm806 = vcmp.ne.s32.totalorder %v574, 0
      %vm807 = vcmp.ne.s32.totalorder %v585, 0
      %vm808 = vcmp.ne.s32.totalorder %v596, 0
      %vm809 = vcmp.ne.s32.totalorder %v607, 0
      %vm810 = vcmp.ne.s32.totalorder %v618, 0
      %vm811 = vcmp.ne.s32.totalorder %v629, 0
      %vm812 = vcmp.ne.s32.totalorder %v640, 0
      %vm813 = vcmp.ne.s32.totalorder %v651, 0
      %vm814 = vcmp.ne.s32.totalorder %v662, 0
      %vm815 = vcmp.ne.s32.totalorder %v673, 0
      %vm816 = vcmp.ne.s32.totalorder %v684, 0
      %vm817 = vcmp.ne.s32.totalorder %v695, 0
      %vm818 = vcmp.ne.s32.totalorder %v706, 0
      %vm819 = vcmp.ne.s32.totalorder %v717, 0
      %vm820 = vcmp.ne.s32.totalorder %v728, 0
      %vm821 = vcmp.ne.s32.totalorder %v739, 0
      %vm822 = vcmp.ne.s32.totalorder %v750, 0
      %vm823 = vcmp.ne.s32.totalorder %v761, 0
      %vm824 = vcmp.ne.s32.totalorder %v772, 0
      %vm825 = vcmp.ne.s32.totalorder %v783, 0
      %vm826 = vcmp.lt.s32.totalorder %v332, 0
      %vm827 = vcmp.lt.s32.totalorder %v343, 0
      %vm828 = vcmp.lt.s32.totalorder %v354, 0
      %vm829 = vcmp.lt.s32.totalorder %v365, 0
      %vm830 = vcmp.lt.s32.totalorder %v376, 0
      %vm831 = vcmp.lt.s32.totalorder %v387, 0
      %vm832 = vcmp.lt.s32.totalorder %v398, 0
      %vm833 = vcmp.lt.s32.totalorder %v409, 0
      %vm834 = vcmp.lt.s32.totalorder %v420, 0
      %vm835 = vcmp.lt.s32.totalorder %v431, 0
      %vm836 = vcmp.lt.s32.totalorder %v442, 0
      %vm837 = vcmp.lt.s32.totalorder %v453, 0
      %vm838 = vcmp.lt.s32.totalorder %v464, 0
      %vm839 = vcmp.lt.s32.totalorder %v475, 0
      %vm840 = vcmp.lt.s32.totalorder %v486, 0
      %vm841 = vcmp.lt.s32.totalorder %v497, 0
      %vm842 = vcmp.lt.s32.totalorder %v508, 0
      %vm843 = vcmp.lt.s32.totalorder %v519, 0
      %vm844 = vcmp.lt.s32.totalorder %v530, 0
      %vm845 = vcmp.lt.s32.totalorder %v541, 0
      %vm846 = vcmp.lt.s32.totalorder %v552, 0
      %vm847 = vcmp.lt.s32.totalorder %v563, 0
      %vm848 = vcmp.lt.s32.totalorder %v574, 0
      %vm849 = vcmp.lt.s32.totalorder %v585, 0
      %vm850 = vcmp.lt.s32.totalorder %v596, 0
      %vm851 = vcmp.lt.s32.totalorder %v607, 0
      %vm852 = vcmp.lt.s32.totalorder %v618, 0
      %vm853 = vcmp.lt.s32.totalorder %v629, 0
      %vm854 = vcmp.lt.s32.totalorder %v640, 0
      %vm855 = vcmp.lt.s32.totalorder %v651, 0
      %vm856 = vcmp.lt.s32.totalorder %v662, 0
      %vm857 = vcmp.lt.s32.totalorder %v673, 0
      %vm858 = vcmp.lt.s32.totalorder %v684, 0
      %vm859 = vcmp.lt.s32.totalorder %v695, 0
      %vm860 = vcmp.lt.s32.totalorder %v706, 0
      %vm861 = vcmp.lt.s32.totalorder %v717, 0
      %vm862 = vcmp.lt.s32.totalorder %v728, 0
      %vm863 = vcmp.lt.s32.totalorder %v739, 0
      %vm864 = vcmp.lt.s32.totalorder %v750, 0
      %vm865 = vcmp.lt.s32.totalorder %v761, 0
      %vm866 = vcmp.lt.s32.totalorder %v772, 0
      %vm867 = vcmp.lt.s32.totalorder %v783, 0
      %vm868 = vmand %vm826, %vm784
      %vm869 = vmand %vm827, %vm785
      %vm870 = vmand %vm828, %vm786
      %vm871 = vmand %vm829, %vm787
      %vm872 = vmand %vm830, %vm788
      %vm873 = vmand %vm831, %vm789
      %vm874 = vmand %vm832, %vm790
      %vm875 = vmand %vm833, %vm791
      %vm876 = vmand %vm834, %vm792
      %vm877 = vmand %vm835, %vm793
      %vm878 = vmand %vm836, %vm794
      %vm879 = vmand %vm837, %vm795
      %vm880 = vmand %vm838, %vm796
      %vm881 = vmand %vm839, %vm797
      %vm882 = vmand %vm840, %vm798
      %vm883 = vmand %vm841, %vm799
      %vm884 = vmand %vm842, %vm800
      %vm885 = vmand %vm843, %vm801
      %vm886 = vmand %vm844, %vm802
      %vm887 = vmand %vm845, %vm803
      %vm888 = vmand %vm846, %vm804
      %vm889 = vmand %vm847, %vm805
      %vm890 = vmand %vm848, %vm806
      %vm891 = vmand %vm849, %vm807
      %vm892 = vmand %vm850, %vm808
      %vm893 = vmand %vm851, %vm809
      %vm894 = vmand %vm852, %vm810
      %vm895 = vmand %vm853, %vm811
      %vm896 = vmand %vm854, %vm812
      %vm897 = vmand %vm855, %vm813
      %vm898 = vmand %vm856, %vm814
      %vm899 = vmand %vm857, %vm815
      %vm900 = vmand %vm858, %vm816
      %vm901 = vmand %vm859, %vm817
      %vm902 = vmand %vm860, %vm818
      %vm903 = vmand %vm861, %vm819
      %vm904 = vmand %vm862, %vm820
      %vm905 = vmand %vm863, %vm821
      %vm906 = vmand %vm864, %vm822
      %vm907 = vmand %vm865, %vm823
      %vm908 = vmand %vm866, %vm824
      %vm909 = vmand %vm867, %vm825
      %v910 = vadd.s32 %v332, 18
      %v911 = vadd.s32 %v343, 18
      %v912 = vadd.s32 %v354, 18
      %v913 = vadd.s32 %v365, 18
      %v914 = vadd.s32 %v376, 18
      %v915 = vadd.s32 %v387, 18
      %v916 = vadd.s32 %v398, 18
      %v917 = vadd.s32 %v409, 18
      %v918 = vadd.s32 %v420, 18
      %v919 = vadd.s32 %v431, 18
      %v920 = vadd.s32 %v442, 18
      %v921 = vadd.s32 %v453, 18
      %v922 = vadd.s32 %v464, 18
      %v923 = vadd.s32 %v475, 18
      %v924 = vadd.s32 %v486, 18
      %v925 = vadd.s32 %v497, 18
      %v926 = vadd.s32 %v508, 18
      %v927 = vadd.s32 %v519, 18
      %v928 = vadd.s32 %v530, 18
      %v929 = vadd.s32 %v541, 18
      %v930 = vadd.s32 %v552, 18
      %v931 = vadd.s32 %v563, 18
      %v932 = vadd.s32 %v574, 18
      %v933 = vadd.s32 %v585, 18
      %v934 = vadd.s32 %v596, 18
      %v935 = vadd.s32 %v607, 18
      %v936 = vadd.s32 %v618, 18
      %v937 = vadd.s32 %v629, 18
      %v938 = vadd.s32 %v640, 18
      %v939 = vadd.s32 %v651, 18
      %v940 = vadd.s32 %v662, 18
      %v941 = vadd.s32 %v673, 18
      %v942 = vadd.s32 %v684, 18
      %v943 = vadd.s32 %v695, 18
      %v944 = vadd.s32 %v706, 18
      %v945 = vadd.s32 %v717, 18
      %v946 = vadd.s32 %v728, 18
      %v947 = vadd.s32 %v739, 18
      %v948 = vadd.s32 %v750, 18
      %v949 = vadd.s32 %v761, 18
      %v950 = vadd.s32 %v772, 18
      %v951 = vadd.s32 %v783, 18
      %v952 = vsel %vm868, %v910, %v332
      %v953 = vsel %vm869, %v911, %v343
      %v954 = vsel %vm870, %v912, %v354
      %v955 = vsel %vm871, %v913, %v365
      %v956 = vsel %vm872, %v914, %v376
      %v957 = vsel %vm873, %v915, %v387
      %v958 = vsel %vm874, %v916, %v398
      %v959 = vsel %vm875, %v917, %v409
      %v960 = vsel %vm876, %v918, %v420
      %v961 = vsel %vm877, %v919, %v431
      %v962 = vsel %vm878, %v920, %v442
      %v963 = vsel %vm879, %v921, %v453
      %v964 = vsel %vm880, %v922, %v464
      %v965 = vsel %vm881, %v923, %v475
      %v966 = vsel %vm882, %v924, %v486
      %v967 = vsel %vm883, %v925, %v497
      %v968 = vsel %vm884, %v926, %v508
      %v969 = vsel %vm885, %v927, %v519
      %v970 = vsel %vm886, %v928, %v530
      %v971 = vsel %vm887, %v929, %v541
      %v972 = vsel %vm888, %v930, %v552
      %v973 = vsel %vm889, %v931, %v563
      %v974 = vsel %vm890, %v932, %v574
      %v975 = vsel %vm891, %v933, %v585
      %v976 = vsel %vm892, %v934, %v596
      %v977 = vsel %vm893, %v935, %v607
      %v978 = vsel %vm894, %v936, %v618
      %v979 = vsel %vm895, %v937, %v629
      %v980 = vsel %vm896, %v938, %v640
      %v981 = vsel %vm897, %v939, %v651
      %v982 = vsel %vm898, %v940, %v662
      %v983 = vsel %vm899, %v941, %v673
      %v984 = vsel %vm900, %v942, %v684
      %v985 = vsel %vm901, %v943, %v695
      %v986 = vsel %vm902, %v944, %v706
      %v987 = vsel %vm903, %v945, %v717
      %v988 = vsel %vm904, %v946, %v728
      %v989 = vsel %vm905, %v947, %v739
      %v990 = vsel %vm906, %v948, %v750
      %v991 = vsel %vm907, %v949, %v761
      %v992 = vsel %vm908, %v950, %v772
      %v993 = vsel %vm909, %v951, %v783
      %vm994 = vcmp.ge.s32.totalorder %v280, 18
      %vm995 = vcmp.ge.s32.totalorder %v281, 18
      %vm996 = vcmp.ge.s32.totalorder %v282, 18
      %vm997 = vcmp.ge.s32.totalorder %v283, 18
      %vm998 = vcmp.ge.s32.totalorder %v284, 18
      %vm999 = vcmp.ge.s32.totalorder %v285, 18
      %vm1000 = vcmp.ge.s32.totalorder %v286, 18
      %vm1001 = vcmp.ge.s32.totalorder %v287, 18
      %vm1002 = vcmp.ge.s32.totalorder %v288, 18
      %vm1003 = vcmp.ge.s32.totalorder %v289, 18
      %vm1004 = vcmp.ge.s32.totalorder %v290, 18
      %vm1005 = vcmp.ge.s32.totalorder %v291, 18
      %vm1006 = vcmp.ge.s32.totalorder %v292, 18
      %vm1007 = vcmp.ge.s32.totalorder %v293, 18
      %vm1008 = vcmp.ge.s32.totalorder %v294, 18
      %vm1009 = vcmp.ge.s32.totalorder %v295, 18
      %vm1010 = vcmp.ge.s32.totalorder %v296, 18
      %vm1011 = vcmp.ge.s32.totalorder %v297, 18
      %vm1012 = vcmp.ge.s32.totalorder %v298, 18
      %vm1013 = vcmp.ge.s32.totalorder %v299, 18
      %vm1014 = vcmp.ge.s32.totalorder %v300, 18
      %vm1015 = vcmp.ge.s32.totalorder %v301, 18
      %vm1016 = vcmp.ge.s32.totalorder %v302, 18
      %vm1017 = vcmp.ge.s32.totalorder %v303, 18
      %vm1018 = vcmp.ge.s32.totalorder %v304, 18
      %vm1019 = vcmp.ge.s32.totalorder %v305, 18
      %vm1020 = vcmp.ge.s32.totalorder %v306, 18
      %vm1021 = vcmp.ge.s32.totalorder %v307, 18
      %vm1022 = vcmp.ge.s32.totalorder %v308, 18
      %vm1023 = vcmp.ge.s32.totalorder %v309, 18
      %vm1024 = vcmp.ge.s32.totalorder %v310, 18
      %vm1025 = vcmp.ge.s32.totalorder %v311, 18
      %vm1026 = vcmp.ge.s32.totalorder %v312, 18
      %vm1027 = vcmp.ge.s32.totalorder %v313, 18
      %vm1028 = vcmp.ge.s32.totalorder %v314, 18
      %vm1029 = vcmp.ge.s32.totalorder %v315, 18
      %vm1030 = vcmp.ge.s32.totalorder %v316, 18
      %vm1031 = vcmp.ge.s32.totalorder %v317, 18
      %vm1032 = vcmp.ge.s32.totalorder %v318, 18
      %vm1033 = vcmp.ge.s32.totalorder %v319, 18
      %vm1034 = vcmp.ge.s32.totalorder %v320, 18
      %vm1035 = vcmp.ge.s32.totalorder %v321, 18
      %vm1036 = vcmp.lt.s32.totalorder %v280, 306
      %vm1037 = vcmp.lt.s32.totalorder %v281, 306
      %vm1038 = vcmp.lt.s32.totalorder %v282, 306
      %vm1039 = vcmp.lt.s32.totalorder %v283, 306
      %vm1040 = vcmp.lt.s32.totalorder %v284, 306
      %vm1041 = vcmp.lt.s32.totalorder %v285, 306
      %vm1042 = vcmp.lt.s32.totalorder %v286, 306
      %vm1043 = vcmp.lt.s32.totalorder %v287, 306
      %vm1044 = vcmp.lt.s32.totalorder %v288, 306
      %vm1045 = vcmp.lt.s32.totalorder %v289, 306
      %vm1046 = vcmp.lt.s32.totalorder %v290, 306
      %vm1047 = vcmp.lt.s32.totalorder %v291, 306
      %vm1048 = vcmp.lt.s32.totalorder %v292, 306
      %vm1049 = vcmp.lt.s32.totalorder %v293, 306
      %vm1050 = vcmp.lt.s32.totalorder %v294, 306
      %vm1051 = vcmp.lt.s32.totalorder %v295, 306
      %vm1052 = vcmp.lt.s32.totalorder %v296, 306
      %vm1053 = vcmp.lt.s32.totalorder %v297, 306
      %vm1054 = vcmp.lt.s32.totalorder %v298, 306
      %vm1055 = vcmp.lt.s32.totalorder %v299, 306
      %vm1056 = vcmp.lt.s32.totalorder %v300, 306
      %vm1057 = vcmp.lt.s32.totalorder %v301, 306
      %vm1058 = vcmp.lt.s32.totalorder %v302, 306
      %vm1059 = vcmp.lt.s32.totalorder %v303, 306
      %vm1060 = vcmp.lt.s32.totalorder %v304, 306
      %vm1061 = vcmp.lt.s32.totalorder %v305, 306
      %vm1062 = vcmp.lt.s32.totalorder %v306, 306
      %vm1063 = vcmp.lt.s32.totalorder %v307, 306
      %vm1064 = vcmp.lt.s32.totalorder %v308, 306
      %vm1065 = vcmp.lt.s32.totalorder %v309, 306
      %vm1066 = vcmp.lt.s32.totalorder %v310, 306
      %vm1067 = vcmp.lt.s32.totalorder %v311, 306
      %vm1068 = vcmp.lt.s32.totalorder %v312, 306
      %vm1069 = vcmp.lt.s32.totalorder %v313, 306
      %vm1070 = vcmp.lt.s32.totalorder %v314, 306
      %vm1071 = vcmp.lt.s32.totalorder %v315, 306
      %vm1072 = vcmp.lt.s32.totalorder %v316, 306
      %vm1073 = vcmp.lt.s32.totalorder %v317, 306
      %vm1074 = vcmp.lt.s32.totalorder %v318, 306
      %vm1075 = vcmp.lt.s32.totalorder %v319, 306
      %vm1076 = vcmp.lt.s32.totalorder %v320, 306
      %vm1077 = vcmp.lt.s32.totalorder %v321, 306
      %vm1078 = vmand %vm994, %vm1036
      %vm1079 = vmand %vm995, %vm1037
      %vm1080 = vmand %vm996, %vm1038
      %vm1081 = vmand %vm997, %vm1039
      %vm1082 = vmand %vm998, %vm1040
      %vm1083 = vmand %vm999, %vm1041
      %vm1084 = vmand %vm1000, %vm1042
      %vm1085 = vmand %vm1001, %vm1043
      %vm1086 = vmand %vm1002, %vm1044
      %vm1087 = vmand %vm1003, %vm1045
      %vm1088 = vmand %vm1004, %vm1046
      %vm1089 = vmand %vm1005, %vm1047
      %vm1090 = vmand %vm1006, %vm1048
      %vm1091 = vmand %vm1007, %vm1049
      %vm1092 = vmand %vm1008, %vm1050
      %vm1093 = vmand %vm1009, %vm1051
      %vm1094 = vmand %vm1010, %vm1052
      %vm1095 = vmand %vm1011, %vm1053
      %vm1096 = vmand %vm1012, %vm1054
      %vm1097 = vmand %vm1013, %vm1055
      %vm1098 = vmand %vm1014, %vm1056
      %vm1099 = vmand %vm1015, %vm1057
      %vm1100 = vmand %vm1016, %vm1058
      %vm1101 = vmand %vm1017, %vm1059
      %vm1102 = vmand %vm1018, %vm1060
      %vm1103 = vmand %vm1019, %vm1061
      %vm1104 = vmand %vm1020, %vm1062
      %vm1105 = vmand %vm1021, %vm1063
      %vm1106 = vmand %vm1022, %vm1064
      %vm1107 = vmand %vm1023, %vm1065
      %vm1108 = vmand %vm1024, %vm1066
      %vm1109 = vmand %vm1025, %vm1067
      %vm1110 = vmand %vm1026, %vm1068
      %vm1111 = vmand %vm1027, %vm1069
      %vm1112 = vmand %vm1028, %vm1070
      %vm1113 = vmand %vm1029, %vm1071
      %vm1114 = vmand %vm1030, %vm1072
      %vm1115 = vmand %vm1031, %vm1073
      %vm1116 = vmand %vm1032, %vm1074
      %vm1117 = vmand %vm1033, %vm1075
      %vm1118 = vmand %vm1034, %vm1076
      %vm1119 = vmand %vm1035, %vm1077
      %vm1120 = vcmp.ge.s32.totalorder %v952, 1
      %vm1121 = vcmp.ge.s32.totalorder %v953, 1
      %vm1122 = vcmp.ge.s32.totalorder %v954, 1
      %vm1123 = vcmp.ge.s32.totalorder %v955, 1
      %vm1124 = vcmp.ge.s32.totalorder %v956, 1
      %vm1125 = vcmp.ge.s32.totalorder %v957, 1
      %vm1126 = vcmp.ge.s32.totalorder %v958, 1
      %vm1127 = vcmp.ge.s32.totalorder %v959, 1
      %vm1128 = vcmp.ge.s32.totalorder %v960, 1
      %vm1129 = vcmp.ge.s32.totalorder %v961, 1
      %vm1130 = vcmp.ge.s32.totalorder %v962, 1
      %vm1131 = vcmp.ge.s32.totalorder %v963, 1
      %vm1132 = vcmp.ge.s32.totalorder %v964, 1
      %vm1133 = vcmp.ge.s32.totalorder %v965, 1
      %vm1134 = vcmp.ge.s32.totalorder %v966, 1
      %vm1135 = vcmp.ge.s32.totalorder %v967, 1
      %vm1136 = vcmp.ge.s32.totalorder %v968, 1
      %vm1137 = vcmp.ge.s32.totalorder %v969, 1
      %vm1138 = vcmp.ge.s32.totalorder %v970, 1
      %vm1139 = vcmp.ge.s32.totalorder %v971, 1
      %vm1140 = vcmp.ge.s32.totalorder %v972, 1
      %vm1141 = vcmp.ge.s32.totalorder %v973, 1
      %vm1142 = vcmp.ge.s32.totalorder %v974, 1
      %vm1143 = vcmp.ge.s32.totalorder %v975, 1
      %vm1144 = vcmp.ge.s32.totalorder %v976, 1
      %vm1145 = vcmp.ge.s32.totalorder %v977, 1
      %vm1146 = vcmp.ge.s32.totalorder %v978, 1
      %vm1147 = vcmp.ge.s32.totalorder %v979, 1
      %vm1148 = vcmp.ge.s32.totalorder %v980, 1
      %vm1149 = vcmp.ge.s32.totalorder %v981, 1
      %vm1150 = vcmp.ge.s32.totalorder %v982, 1
      %vm1151 = vcmp.ge.s32.totalorder %v983, 1
      %vm1152 = vcmp.ge.s32.totalorder %v984, 1
      %vm1153 = vcmp.ge.s32.totalorder %v985, 1
      %vm1154 = vcmp.ge.s32.totalorder %v986, 1
      %vm1155 = vcmp.ge.s32.totalorder %v987, 1
      %vm1156 = vcmp.ge.s32.totalorder %v988, 1
      %vm1157 = vcmp.ge.s32.totalorder %v989, 1
      %vm1158 = vcmp.ge.s32.totalorder %v990, 1
      %vm1159 = vcmp.ge.s32.totalorder %v991, 1
      %vm1160 = vcmp.ge.s32.totalorder %v992, 1
      %vm1161 = vcmp.ge.s32.totalorder %v993, 1
      %vm1162 = vmand %vm1078, %vm1120
      %vm1163 = vmand %vm1079, %vm1121
      %vm1164 = vmand %vm1080, %vm1122
      %vm1165 = vmand %vm1081, %vm1123
      %vm1166 = vmand %vm1082, %vm1124
      %vm1167 = vmand %vm1083, %vm1125
      %vm1168 = vmand %vm1084, %vm1126
      %vm1169 = vmand %vm1085, %vm1127
      %vm1170 = vmand %vm1086, %vm1128
      %vm1171 = vmand %vm1087, %vm1129
      %vm1172 = vmand %vm1088, %vm1130
      %vm1173 = vmand %vm1089, %vm1131
      %vm1174 = vmand %vm1090, %vm1132
      %vm1175 = vmand %vm1091, %vm1133
      %vm1176 = vmand %vm1092, %vm1134
      %vm1177 = vmand %vm1093, %vm1135
      %vm1178 = vmand %vm1094, %vm1136
      %vm1179 = vmand %vm1095, %vm1137
      %vm1180 = vmand %vm1096, %vm1138
      %vm1181 = vmand %vm1097, %vm1139
      %vm1182 = vmand %vm1098, %vm1140
      %vm1183 = vmand %vm1099, %vm1141
      %vm1184 = vmand %vm1100, %vm1142
      %vm1185 = vmand %vm1101, %vm1143
      %vm1186 = vmand %vm1102, %vm1144
      %vm1187 = vmand %vm1103, %vm1145
      %vm1188 = vmand %vm1104, %vm1146
      %vm1189 = vmand %vm1105, %vm1147
      %vm1190 = vmand %vm1106, %vm1148
      %vm1191 = vmand %vm1107, %vm1149
      %vm1192 = vmand %vm1108, %vm1150
      %vm1193 = vmand %vm1109, %vm1151
      %vm1194 = vmand %vm1110, %vm1152
      %vm1195 = vmand %vm1111, %vm1153
      %vm1196 = vmand %vm1112, %vm1154
      %vm1197 = vmand %vm1113, %vm1155
      %vm1198 = vmand %vm1114, %vm1156
      %vm1199 = vmand %vm1115, %vm1157
      %vm1200 = vmand %vm1116, %vm1158
      %vm1201 = vmand %vm1117, %vm1159
      %vm1202 = vmand %vm1118, %vm1160
      %vm1203 = vmand %vm1119, %vm1161
      %vm1204 = vcmp.le.s32.totalorder %v952, 16
      %vm1205 = vcmp.le.s32.totalorder %v953, 16
      %vm1206 = vcmp.le.s32.totalorder %v954, 16
      %vm1207 = vcmp.le.s32.totalorder %v955, 16
      %vm1208 = vcmp.le.s32.totalorder %v956, 16
      %vm1209 = vcmp.le.s32.totalorder %v957, 16
      %vm1210 = vcmp.le.s32.totalorder %v958, 16
      %vm1211 = vcmp.le.s32.totalorder %v959, 16
      %vm1212 = vcmp.le.s32.totalorder %v960, 16
      %vm1213 = vcmp.le.s32.totalorder %v961, 16
      %vm1214 = vcmp.le.s32.totalorder %v962, 16
      %vm1215 = vcmp.le.s32.totalorder %v963, 16
      %vm1216 = vcmp.le.s32.totalorder %v964, 16
      %vm1217 = vcmp.le.s32.totalorder %v965, 16
      %vm1218 = vcmp.le.s32.totalorder %v966, 16
      %vm1219 = vcmp.le.s32.totalorder %v967, 16
      %vm1220 = vcmp.le.s32.totalorder %v968, 16
      %vm1221 = vcmp.le.s32.totalorder %v969, 16
      %vm1222 = vcmp.le.s32.totalorder %v970, 16
      %vm1223 = vcmp.le.s32.totalorder %v971, 16
      %vm1224 = vcmp.le.s32.totalorder %v972, 16
      %vm1225 = vcmp.le.s32.totalorder %v973, 16
      %vm1226 = vcmp.le.s32.totalorder %v974, 16
      %vm1227 = vcmp.le.s32.totalorder %v975, 16
      %vm1228 = vcmp.le.s32.totalorder %v976, 16
      %vm1229 = vcmp.le.s32.totalorder %v977, 16
      %vm1230 = vcmp.le.s32.totalorder %v978, 16
      %vm1231 = vcmp.le.s32.totalorder %v979, 16
      %vm1232 = vcmp.le.s32.totalorder %v980, 16
      %vm1233 = vcmp.le.s32.totalorder %v981, 16
      %vm1234 = vcmp.le.s32.totalorder %v982, 16
      %vm1235 = vcmp.le.s32.totalorder %v983, 16
      %vm1236 = vcmp.le.s32.totalorder %v984, 16
      %vm1237 = vcmp.le.s32.totalorder %v985, 16
      %vm1238 = vcmp.le.s32.totalorder %v986, 16
      %vm1239 = vcmp.le.s32.totalorder %v987, 16
      %vm1240 = vcmp.le.s32.totalorder %v988, 16
      %vm1241 = vcmp.le.s32.totalorder %v989, 16
      %vm1242 = vcmp.le.s32.totalorder %v990, 16
      %vm1243 = vcmp.le.s32.totalorder %v991, 16
      %vm1244 = vcmp.le.s32.totalorder %v992, 16
      %vm1245 = vcmp.le.s32.totalorder %v993, 16
      %vm1246 = vmand %vm1162, %vm1204
      %vm1247 = vmand %vm1163, %vm1205
      %vm1248 = vmand %vm1164, %vm1206
      %vm1249 = vmand %vm1165, %vm1207
      %vm1250 = vmand %vm1166, %vm1208
      %vm1251 = vmand %vm1167, %vm1209
      %vm1252 = vmand %vm1168, %vm1210
      %vm1253 = vmand %vm1169, %vm1211
      %vm1254 = vmand %vm1170, %vm1212
      %vm1255 = vmand %vm1171, %vm1213
      %vm1256 = vmand %vm1172, %vm1214
      %vm1257 = vmand %vm1173, %vm1215
      %vm1258 = vmand %vm1174, %vm1216
      %vm1259 = vmand %vm1175, %vm1217
      %vm1260 = vmand %vm1176, %vm1218
      %vm1261 = vmand %vm1177, %vm1219
      %vm1262 = vmand %vm1178, %vm1220
      %vm1263 = vmand %vm1179, %vm1221
      %vm1264 = vmand %vm1180, %vm1222
      %vm1265 = vmand %vm1181, %vm1223
      %vm1266 = vmand %vm1182, %vm1224
      %vm1267 = vmand %vm1183, %vm1225
      %vm1268 = vmand %vm1184, %vm1226
      %vm1269 = vmand %vm1185, %vm1227
      %vm1270 = vmand %vm1186, %vm1228
      %vm1271 = vmand %vm1187, %vm1229
      %vm1272 = vmand %vm1188, %vm1230
      %vm1273 = vmand %vm1189, %vm1231
      %vm1274 = vmand %vm1190, %vm1232
      %vm1275 = vmand %vm1191, %vm1233
      %vm1276 = vmand %vm1192, %vm1234
      %vm1277 = vmand %vm1193, %vm1235
      %vm1278 = vmand %vm1194, %vm1236
      %vm1279 = vmand %vm1195, %vm1237
      %vm1280 = vmand %vm1196, %vm1238
      %vm1281 = vmand %vm1197, %vm1239
      %vm1282 = vmand %vm1198, %vm1240
      %vm1283 = vmand %vm1199, %vm1241
      %vm1284 = vmand %vm1200, %vm1242
      %vm1285 = vmand %vm1201, %vm1243
      %vm1286 = vmand %vm1202, %vm1244
      %vm1287 = vmand %vm1203, %vm1245
      %v1288 = vunpack.c.l.bf16 %v237
      %v1289 = vunpack.c.l.bf16 %v238
      %v1290 = vunpack.c.l.bf16 %v239
      %v1291 = vunpack.c.l.bf16 %v240
      %v1292 = vunpack.c.l.bf16 %v241
      %v1293 = vunpack.c.l.bf16 %v242
      %v1294 = vunpack.c.l.bf16 %v243
      %v1295 = vunpack.c.l.bf16 %v244
      %v1296 = vunpack.c.l.bf16 %v245
      %v1297 = vunpack.c.l.bf16 %v246
      %v1298 = vunpack.c.l.bf16 %v247
      %v1299 = vunpack.c.l.bf16 %v248
      %v1300 = vunpack.c.l.bf16 %v249
      %v1301 = vunpack.c.l.bf16 %v250
      %v1302 = vunpack.c.l.bf16 %v251
      %v1303 = vunpack.c.l.bf16 %v252
      %v1304 = vunpack.c.l.bf16 %v253
      %v1305 = vunpack.c.l.bf16 %v254
      %v1306 = vunpack.c.l.bf16 %v255
      %v1307 = vunpack.c.l.bf16 %v256
      %v1308 = vunpack.c.l.bf16 %v257
      %v1309 = vunpack.c.l.bf16 %v258
      %v1310 = vunpack.c.l.bf16 %v259
      %v1311 = vunpack.c.l.bf16 %v260
      %v1312 = vunpack.c.l.bf16 %v261
      %v1313 = vunpack.c.l.bf16 %v262
      %v1314 = vunpack.c.l.bf16 %v263
      %v1315 = vunpack.c.l.bf16 %v264
      %v1316 = vunpack.c.l.bf16 %v265
      %v1317 = vunpack.c.l.bf16 %v266
      %v1318 = vunpack.c.l.bf16 %v267
      %v1319 = vunpack.c.l.bf16 %v268
      %v1320 = vunpack.c.l.bf16 %v269
      %v1321 = vunpack.c.l.bf16 %v270
      %v1322 = vunpack.c.l.bf16 %v271
      %v1323 = vunpack.c.l.bf16 %v272
      %v1324 = vunpack.c.l.bf16 %v273
      %v1325 = vunpack.c.l.bf16 %v274
      %v1326 = vunpack.c.l.bf16 %v275
      %v1327 = vunpack.c.l.bf16 %v276
      %v1328 = vunpack.c.l.bf16 %v277
      %v1329 = vunpack.c.l.bf16 %v278
      %v1330 = vld [vmem:[%s2] sm:$0x1]
      %v1332 = vlaneseq
      %v1333 = vshrl.u32 %v1332, 7
      %v1334 = vsub.s32 0, %v1333
      %v1335 = vrot.slane %v1330, %v1334
      %v1337 = vmul.f32 %v1288, %v1335
      %v1338 = vmul.f32 %v1289, %v1335
      %v1339 = vmul.f32 %v1290, %v1335
      %v1340 = vmul.f32 %v1291, %v1335
      %v1341 = vmul.f32 %v1292, %v1335
      %v1342 = vmul.f32 %v1293, %v1335
      %v1343 = vmul.f32 %v1294, %v1335
      %v1344 = vmul.f32 %v1295, %v1335
      %v1345 = vmul.f32 %v1296, %v1335
      %v1346 = vmul.f32 %v1297, %v1335
      %v1347 = vmul.f32 %v1298, %v1335
      %v1348 = vmul.f32 %v1299, %v1335
      %v1349 = vmul.f32 %v1300, %v1335
      %v1350 = vmul.f32 %v1301, %v1335
      %v1351 = vmul.f32 %v1302, %v1335
      %v1352 = vmul.f32 %v1303, %v1335
      %v1353 = vmul.f32 %v1304, %v1335
      %v1354 = vmul.f32 %v1305, %v1335
      %v1355 = vmul.f32 %v1306, %v1335
      %v1356 = vmul.f32 %v1307, %v1335
      %v1357 = vmul.f32 %v1308, %v1335
      %v1358 = vmul.f32 %v1309, %v1335
      %v1359 = vmul.f32 %v1310, %v1335
      %v1360 = vmul.f32 %v1311, %v1335
      %v1361 = vmul.f32 %v1312, %v1335
      %v1362 = vmul.f32 %v1313, %v1335
      %v1363 = vmul.f32 %v1314, %v1335
      %v1364 = vmul.f32 %v1315, %v1335
      %v1365 = vmul.f32 %v1316, %v1335
      %v1366 = vmul.f32 %v1317, %v1335
      %v1367 = vmul.f32 %v1318, %v1335
      %v1368 = vmul.f32 %v1319, %v1335
      %v1369 = vmul.f32 %v1320, %v1335
      %v1370 = vmul.f32 %v1321, %v1335
      %v1371 = vmul.f32 %v1322, %v1335
      %v1372 = vmul.f32 %v1323, %v1335
      %v1373 = vmul.f32 %v1324, %v1335
      %v1374 = vmul.f32 %v1325, %v1335
      %v1375 = vmul.f32 %v1326, %v1335
      %v1376 = vmul.f32 %v1327, %v1335
      %v1377 = vmul.f32 %v1328, %v1335
      %v1378 = vmul.f32 %v1329, %v1335
      %v1379 = vld [vmem:[%s3] sm:$0x1]
      %v1381 = vlaneseq
      %v1382 = vshrl.u32 %v1381, 7
      %v1383 = vsub.s32 0, %v1382
      %v1384 = vrot.slane %v1379, %v1383
      %v1386 = vadd.f32 %v1337, %v1384
      %v1387 = vadd.f32 %v1338, %v1384
      %v1388 = vadd.f32 %v1339, %v1384
      %v1389 = vadd.f32 %v1340, %v1384
      %v1390 = vadd.f32 %v1341, %v1384
      %v1391 = vadd.f32 %v1342, %v1384
      %v1392 = vadd.f32 %v1343, %v1384
      %v1393 = vadd.f32 %v1344, %v1384
      %v1394 = vadd.f32 %v1345, %v1384
      %v1395 = vadd.f32 %v1346, %v1384
      %v1396 = vadd.f32 %v1347, %v1384
      %v1397 = vadd.f32 %v1348, %v1384
      %v1398 = vadd.f32 %v1349, %v1384
      %v1399 = vadd.f32 %v1350, %v1384
      %v1400 = vadd.f32 %v1351, %v1384
      %v1401 = vadd.f32 %v1352, %v1384
      %v1402 = vadd.f32 %v1353, %v1384
      %v1403 = vadd.f32 %v1354, %v1384
      %v1404 = vadd.f32 %v1355, %v1384
      %v1405 = vadd.f32 %v1356, %v1384
      %v1406 = vadd.f32 %v1357, %v1384
      %v1407 = vadd.f32 %v1358, %v1384
      %v1408 = vadd.f32 %v1359, %v1384
      %v1409 = vadd.f32 %v1360, %v1384
      %v1410 = vadd.f32 %v1361, %v1384
      %v1411 = vadd.f32 %v1362, %v1384
      %v1412 = vadd.f32 %v1363, %v1384
      %v1413 = vadd.f32 %v1364, %v1384
      %v1414 = vadd.f32 %v1365, %v1384
      %v1415 = vadd.f32 %v1366, %v1384
      %v1416 = vadd.f32 %v1367, %v1384
      %v1417 = vadd.f32 %v1368, %v1384
      %v1418 = vadd.f32 %v1369, %v1384
      %v1419 = vadd.f32 %v1370, %v1384
      %v1420 = vadd.f32 %v1371, %v1384
      %v1421 = vadd.f32 %v1372, %v1384
      %v1422 = vadd.f32 %v1373, %v1384
      %v1423 = vadd.f32 %v1374, %v1384
      %v1424 = vadd.f32 %v1375, %v1384
      %v1425 = vadd.f32 %v1376, %v1384
      %v1426 = vadd.f32 %v1377, %v1384
      %v1427 = vadd.f32 %v1378, %v1384
      %v1428 = vmax.f32 %v1386, 0.0
      %v1429 = vmax.f32 %v1387, 0.0
      %v1430 = vmax.f32 %v1388, 0.0
      %v1431 = vmax.f32 %v1389, 0.0
      %v1432 = vmax.f32 %v1390, 0.0
      %v1433 = vmax.f32 %v1391, 0.0
      %v1434 = vmax.f32 %v1392, 0.0
      %v1435 = vmax.f32 %v1393, 0.0
      %v1436 = vmax.f32 %v1394, 0.0
      %v1437 = vmax.f32 %v1395, 0.0
      %v1438 = vmax.f32 %v1396, 0.0
      %v1439 = vmax.f32 %v1397, 0.0
      %v1440 = vmax.f32 %v1398, 0.0
      %v1441 = vmax.f32 %v1399, 0.0
      %v1442 = vmax.f32 %v1400, 0.0
      %v1443 = vmax.f32 %v1401, 0.0
      %v1444 = vmax.f32 %v1402, 0.0
      %v1445 = vmax.f32 %v1403, 0.0
      %v1446 = vmax.f32 %v1404, 0.0
      %v1447 = vmax.f32 %v1405, 0.0
      %v1448 = vmax.f32 %v1406, 0.0
      %v1449 = vmax.f32 %v1407, 0.0
      %v1450 = vmax.f32 %v1408, 0.0
      %v1451 = vmax.f32 %v1409, 0.0
      %v1452 = vmax.f32 %v1410, 0.0
      %v1453 = vmax.f32 %v1411, 0.0
      %v1454 = vmax.f32 %v1412, 0.0
      %v1455 = vmax.f32 %v1413, 0.0
      %v1456 = vmax.f32 %v1414, 0.0
      %v1457 = vmax.f32 %v1415, 0.0
      %v1458 = vmax.f32 %v1416, 0.0
      %v1459 = vmax.f32 %v1417, 0.0
      %v1460 = vmax.f32 %v1418, 0.0
      %v1461 = vmax.f32 %v1419, 0.0
      %v1462 = vmax.f32 %v1420, 0.0
      %v1463 = vmax.f32 %v1421, 0.0
      %v1464 = vmax.f32 %v1422, 0.0
      %v1465 = vmax.f32 %v1423, 0.0
      %v1466 = vmax.f32 %v1424, 0.0
      %v1467 = vmax.f32 %v1425, 0.0
      %v1468 = vmax.f32 %v1426, 0.0
      %v1469 = vmax.f32 %v1427, 0.0
      %v1470 = vsel %vm1246, 1, 0
      %v1471 = vsel %vm1247, 1, 0
      %v1472 = vsel %vm1248, 1, 0
      %v1473 = vsel %vm1249, 1, 0
      %v1474 = vsel %vm1250, 1, 0
      %v1475 = vsel %vm1251, 1, 0
      %v1476 = vsel %vm1252, 1, 0
      %v1477 = vsel %vm1253, 1, 0
      %v1478 = vsel %vm1254, 1, 0
      %v1479 = vsel %vm1255, 1, 0
      %v1480 = vsel %vm1256, 1, 0
      %v1481 = vsel %vm1257, 1, 0
      %v1482 = vsel %vm1258, 1, 0
      %v1483 = vsel %vm1259, 1, 0
      %v1484 = vsel %vm1260, 1, 0
      %v1485 = vsel %vm1261, 1, 0
      %v1486 = vsel %vm1262, 1, 0
      %v1487 = vsel %vm1263, 1, 0
      %v1488 = vsel %vm1264, 1, 0
      %v1489 = vsel %vm1265, 1, 0
      %v1490 = vsel %vm1266, 1, 0
      %v1491 = vsel %vm1267, 1, 0
      %v1492 = vsel %vm1268, 1, 0
      %v1493 = vsel %vm1269, 1, 0
      %v1494 = vsel %vm1270, 1, 0
      %v1495 = vsel %vm1271, 1, 0
      %v1496 = vsel %vm1272, 1, 0
      %v1497 = vsel %vm1273, 1, 0
      %v1498 = vsel %vm1274, 1, 0
      %v1499 = vsel %vm1275, 1, 0
      %v1500 = vsel %vm1276, 1, 0
      %v1501 = vsel %vm1277, 1, 0
      %v1502 = vsel %vm1278, 1, 0
      %v1503 = vsel %vm1279, 1, 0
      %v1504 = vsel %vm1280, 1, 0
      %v1505 = vsel %vm1281, 1, 0
      %v1506 = vsel %vm1282, 1, 0
      %v1507 = vsel %vm1283, 1, 0
      %v1508 = vsel %vm1284, 1, 0
      %v1509 = vsel %vm1285, 1, 0
      %v1510 = vsel %vm1286, 1, 0
      %v1511 = vsel %vm1287, 1, 0
      %vm1512 = vcmp.eq.s32.totalorder %v1470, 1
      %vm1513 = vcmp.eq.s32.totalorder %v1471, 1
      %vm1514 = vcmp.eq.s32.totalorder %v1472, 1
      %vm1515 = vcmp.eq.s32.totalorder %v1473, 1
      %vm1516 = vcmp.eq.s32.totalorder %v1474, 1
      %vm1517 = vcmp.eq.s32.totalorder %v1475, 1
      %vm1518 = vcmp.eq.s32.totalorder %v1476, 1
      %vm1519 = vcmp.eq.s32.totalorder %v1477, 1
      %vm1520 = vcmp.eq.s32.totalorder %v1478, 1
      %vm1521 = vcmp.eq.s32.totalorder %v1479, 1
      %vm1522 = vcmp.eq.s32.totalorder %v1480, 1
      %vm1523 = vcmp.eq.s32.totalorder %v1481, 1
      %vm1524 = vcmp.eq.s32.totalorder %v1482, 1
      %vm1525 = vcmp.eq.s32.totalorder %v1483, 1
      %vm1526 = vcmp.eq.s32.totalorder %v1484, 1
      %vm1527 = vcmp.eq.s32.totalorder %v1485, 1
      %vm1528 = vcmp.eq.s32.totalorder %v1486, 1
      %vm1529 = vcmp.eq.s32.totalorder %v1487, 1
      %vm1530 = vcmp.eq.s32.totalorder %v1488, 1
      %vm1531 = vcmp.eq.s32.totalorder %v1489, 1
      %vm1532 = vcmp.eq.s32.totalorder %v1490, 1
      %vm1533 = vcmp.eq.s32.totalorder %v1491, 1
      %vm1534 = vcmp.eq.s32.totalorder %v1492, 1
      %vm1535 = vcmp.eq.s32.totalorder %v1493, 1
      %vm1536 = vcmp.eq.s32.totalorder %v1494, 1
      %vm1537 = vcmp.eq.s32.totalorder %v1495, 1
      %vm1538 = vcmp.eq.s32.totalorder %v1496, 1
      %vm1539 = vcmp.eq.s32.totalorder %v1497, 1
      %vm1540 = vcmp.eq.s32.totalorder %v1498, 1
      %vm1541 = vcmp.eq.s32.totalorder %v1499, 1
      %vm1542 = vcmp.eq.s32.totalorder %v1500, 1
      %vm1543 = vcmp.eq.s32.totalorder %v1501, 1
      %vm1544 = vcmp.eq.s32.totalorder %v1502, 1
      %vm1545 = vcmp.eq.s32.totalorder %v1503, 1
      %vm1546 = vcmp.eq.s32.totalorder %v1504, 1
      %vm1547 = vcmp.eq.s32.totalorder %v1505, 1
      %vm1548 = vcmp.eq.s32.totalorder %v1506, 1
      %vm1549 = vcmp.eq.s32.totalorder %v1507, 1
      %vm1550 = vcmp.eq.s32.totalorder %v1508, 1
      %vm1551 = vcmp.eq.s32.totalorder %v1509, 1
      %vm1552 = vcmp.eq.s32.totalorder %v1510, 1
      %vm1553 = vcmp.eq.s32.totalorder %v1511, 1
      %v1554 = vsel %vm1512, %v1428, 0.0
      %v1555 = vsel %vm1513, %v1429, 0.0
      %v1556 = vsel %vm1514, %v1430, 0.0
      %v1557 = vsel %vm1515, %v1431, 0.0
      %v1558 = vsel %vm1516, %v1432, 0.0
      %v1559 = vsel %vm1517, %v1433, 0.0
      %v1560 = vsel %vm1518, %v1434, 0.0
      %v1561 = vsel %vm1519, %v1435, 0.0
      %v1562 = vsel %vm1520, %v1436, 0.0
      %v1563 = vsel %vm1521, %v1437, 0.0
      %v1564 = vsel %vm1522, %v1438, 0.0
      %v1565 = vsel %vm1523, %v1439, 0.0
      %v1566 = vsel %vm1524, %v1440, 0.0
      %v1567 = vsel %vm1525, %v1441, 0.0
      %v1568 = vsel %vm1526, %v1442, 0.0
      %v1569 = vsel %vm1527, %v1443, 0.0
      %v1570 = vsel %vm1528, %v1444, 0.0
      %v1571 = vsel %vm1529, %v1445, 0.0
      %v1572 = vsel %vm1530, %v1446, 0.0
      %v1573 = vsel %vm1531, %v1447, 0.0
      %v1574 = vsel %vm1532, %v1448, 0.0
      %v1575 = vsel %vm1533, %v1449, 0.0
      %v1576 = vsel %vm1534, %v1450, 0.0
      %v1577 = vsel %vm1535, %v1451, 0.0
      %v1578 = vsel %vm1536, %v1452, 0.0
      %v1579 = vsel %vm1537, %v1453, 0.0
      %v1580 = vsel %vm1538, %v1454, 0.0
      %v1581 = vsel %vm1539, %v1455, 0.0
      %v1582 = vsel %vm1540, %v1456, 0.0
      %v1583 = vsel %vm1541, %v1457, 0.0
      %v1584 = vsel %vm1542, %v1458, 0.0
      %v1585 = vsel %vm1543, %v1459, 0.0
      %v1586 = vsel %vm1544, %v1460, 0.0
      %v1587 = vsel %vm1545, %v1461, 0.0
      %v1588 = vsel %vm1546, %v1462, 0.0
      %v1589 = vsel %vm1547, %v1463, 0.0
      %v1590 = vsel %vm1548, %v1464, 0.0
      %v1591 = vsel %vm1549, %v1465, 0.0
      %v1592 = vsel %vm1550, %v1466, 0.0
      %v1593 = vsel %vm1551, %v1467, 0.0
      %v1594 = vsel %vm1552, %v1468, 0.0
      %v1595 = vsel %vm1553, %v1469, 0.0
      %v1596 = vpack.c.bf16 %v1555, %v1554
      %v1597 = vpack.c.bf16 %v1557, %v1556
      %v1598 = vpack.c.bf16 %v1559, %v1558
      %v1599 = vpack.c.bf16 %v1561, %v1560
      %v1600 = vpack.c.bf16 %v1563, %v1562
      %v1601 = vpack.c.bf16 %v1565, %v1564
      %v1602 = vpack.c.bf16 %v1567, %v1566
      %v1603 = vpack.c.bf16 %v1569, %v1568
      %v1604 = vpack.c.bf16 %v1571, %v1570
      %v1605 = vpack.c.bf16 %v1573, %v1572
      %v1606 = vpack.c.bf16 %v1575, %v1574
      %v1607 = vpack.c.bf16 %v1577, %v1576
      %v1608 = vpack.c.bf16 %v1579, %v1578
      %v1609 = vpack.c.bf16 %v1581, %v1580
      %v1610 = vpack.c.bf16 %v1583, %v1582
      %v1611 = vpack.c.bf16 %v1585, %v1584
      %v1612 = vpack.c.bf16 %v1587, %v1586
      %v1613 = vpack.c.bf16 %v1589, %v1588
      %v1614 = vpack.c.bf16 %v1591, %v1590
      %v1615 = vpack.c.bf16 %v1593, %v1592
      %v1616 = vpack.c.bf16 %v1595, %v1594
      %v1617 = vld [vmem:[%s1] sm:$0xf]
      %v1618 = vld [vmem:[%s1 + $0x4] sm:$0xf]
      %v1619 = vld [vmem:[%s1 + $0x8] sm:$0xf]
      %v1620 = vld [vmem:[%s1 + $0xc] sm:$0xf]
      %v1621 = vld [vmem:[%s1 + $0x10] sm:$0xf]
      %v1622 = vld [vmem:[%s1 + $0x14] sm:$0xf]
      %v1623 = vld [vmem:[%s1 + $0x18] sm:$0xf]
      %v1624 = vld [vmem:[%s1 + $0x1c] sm:$0xf]
      %v1625 = vld [vmem:[%s1 + $0x20] sm:$0xf]
      %v1626 = vld [vmem:[%s1 + $0x24] sm:$0xf]
      %v1627 = vld [vmem:[%s1 + $0x28] sm:$0xf]
      %v1628 = vld [vmem:[%s1 + $0x2c] sm:$0xf]
      %v1629 = vld [vmem:[%s1 + $0x30] sm:$0xf]
      %v1630 = vld [vmem:[%s1 + $0x34] sm:$0xf]
      %v1631 = vld [vmem:[%s1 + $0x38] sm:$0xf]
      %v1632 = vld [vmem:[%s1 + $0x3c] sm:$0xf]
      %s1633 = scalar_lea.vmem %s1, 64
      %v1634 = vld [vmem:[%s1633] sm:$0xf]
      %v1635 = vld [vmem:[%s1633 + $0x4] sm:$0xf]
      %v1636 = vld [vmem:[%s1633 + $0x8] sm:$0xf]
      %v1637 = vld [vmem:[%s1633 + $0xc] sm:$0xf]
      %v1638 = vld [vmem:[%s1633 + $0x10] sm:$0xf]
      %v1639 = vld [vmem:[%s1633 + $0x14] sm:$0xf]
      %v1640 = vld [vmem:[%s1633 + $0x18] sm:$0xf]
      %v1641 = vld [vmem:[%s1633 + $0x1c] sm:$0xf]
      %v1642 = vld [vmem:[%s1633 + $0x20] sm:$0xf]
      %v1643 = vld [vmem:[%s1633 + $0x24] sm:$0xf]
      %v1644 = vld [vmem:[%s1633 + $0x28] sm:$0xf]
      %v1645 = vld [vmem:[%s1633 + $0x2c] sm:$0xf]
      %v1646 = vld [vmem:[%s1633 + $0x30] sm:$0xf]
      %v1647 = vld [vmem:[%s1633 + $0x34] sm:$0xf]
      %v1648 = vld [vmem:[%s1633 + $0x38] sm:$0xf]
      %v1649 = vld [vmem:[%s1633 + $0x3c] sm:$0xf]
      %vm1650 = vsmask.f32 7424
      %v1652 = vshrl.u32 %v1596, 16
      %v1654 = vshll.u32 %v1596, 16
      %v1656 = vrot.slane %v1654, 1
      %v1657 = vor.u32 %v1652, %v1656
      %v1659 = vshll.u32 %v1597, 16
      %v1661 = vrot.slane %v1659, 1
      %v1662 = vsel %vm1650, %v1657, %v1661
      %v1663 = vshrl.u32 %v1597, 16
      %v1665 = vor.u32 %v1663, %v1661
      %v1667 = vshll.u32 %v1598, 16
      %v1669 = vrot.slane %v1667, 1
      %v1670 = vsel %vm1650, %v1665, %v1669
      %v1671 = vshrl.u32 %v1598, 16
      %v1673 = vor.u32 %v1671, %v1669
      %v1675 = vshll.u32 %v1599, 16
      %v1677 = vrot.slane %v1675, 1
      %v1678 = vsel %vm1650, %v1673, %v1677
      %v1679 = vshrl.u32 %v1599, 16
      %v1681 = vor.u32 %v1679, %v1677
      %v1683 = vshll.u32 %v1600, 16
      %v1685 = vrot.slane %v1683, 1
      %v1686 = vsel %vm1650, %v1681, %v1685
      %v1687 = vshrl.u32 %v1600, 16
      %v1689 = vor.u32 %v1687, %v1685
      %v1691 = vshll.u32 %v1601, 16
      %v1693 = vrot.slane %v1691, 1
      %v1694 = vsel %vm1650, %v1689, %v1693
      %v1695 = vshrl.u32 %v1601, 16
      %v1697 = vor.u32 %v1695, %v1693
      %v1699 = vshll.u32 %v1602, 16
      %v1701 = vrot.slane %v1699, 1
      %v1702 = vsel %vm1650, %v1697, %v1701
      %v1703 = vshrl.u32 %v1602, 16
      %v1705 = vor.u32 %v1703, %v1701
      %v1707 = vshll.u32 %v1603, 16
      %v1709 = vrot.slane %v1707, 1
      %v1710 = vsel %vm1650, %v1705, %v1709
      %v1711 = vshrl.u32 %v1603, 16
      %v1713 = vor.u32 %v1711, %v1709
      %v1715 = vshll.u32 %v1604, 16
      %v1717 = vrot.slane %v1715, 1
      %v1718 = vsel %vm1650, %v1713, %v1717
      %v1719 = vshrl.u32 %v1604, 16
      %v1721 = vor.u32 %v1719, %v1717
      %v1723 = vshll.u32 %v1605, 16
      %v1725 = vrot.slane %v1723, 1
      %v1726 = vsel %vm1650, %v1721, %v1725
      %v1727 = vshrl.u32 %v1605, 16
      %v1729 = vor.u32 %v1727, %v1725
      %v1731 = vshll.u32 %v1606, 16
      %v1733 = vrot.slane %v1731, 1
      %v1734 = vsel %vm1650, %v1729, %v1733
      %v1735 = vshrl.u32 %v1606, 16
      %v1737 = vor.u32 %v1735, %v1733
      %v1739 = vshll.u32 %v1607, 16
      %v1741 = vrot.slane %v1739, 1
      %v1742 = vsel %vm1650, %v1737, %v1741
      %v1743 = vshrl.u32 %v1607, 16
      %v1745 = vor.u32 %v1743, %v1741
      %v1747 = vshll.u32 %v1608, 16
      %v1749 = vrot.slane %v1747, 1
      %v1750 = vsel %vm1650, %v1745, %v1749
      %v1751 = vshrl.u32 %v1608, 16
      %v1753 = vor.u32 %v1751, %v1749
      %v1755 = vshll.u32 %v1609, 16
      %v1757 = vrot.slane %v1755, 1
      %v1758 = vsel %vm1650, %v1753, %v1757
      %v1759 = vshrl.u32 %v1609, 16
      %v1761 = vor.u32 %v1759, %v1757
      %v1763 = vshll.u32 %v1610, 16
      %v1765 = vrot.slane %v1763, 1
      %v1766 = vsel %vm1650, %v1761, %v1765
      %v1767 = vshrl.u32 %v1610, 16
      %v1769 = vor.u32 %v1767, %v1765
      %v1771 = vshll.u32 %v1611, 16
      %v1773 = vrot.slane %v1771, 1
      %v1774 = vsel %vm1650, %v1769, %v1773
      %v1775 = vshrl.u32 %v1611, 16
      %v1777 = vor.u32 %v1775, %v1773
      %v1779 = vshll.u32 %v1612, 16
      %v1781 = vrot.slane %v1779, 1
      %v1782 = vsel %vm1650, %v1777, %v1781
      %v1783 = vshrl.u32 %v1612, 16
      %v1785 = vor.u32 %v1783, %v1781
      %v1787 = vshll.u32 %v1613, 16
      %v1789 = vrot.slane %v1787, 1
      %v1790 = vsel %vm1650, %v1785, %v1789
      %v1791 = vshrl.u32 %v1613, 16
      %v1793 = vor.u32 %v1791, %v1789
      %v1795 = vshll.u32 %v1614, 16
      %v1797 = vrot.slane %v1795, 1
      %v1798 = vsel %vm1650, %v1793, %v1797
      %v1833 = vunpack.c.l.b16 %v1634
      %v1834 = vunpack.c.l.b16 %v1635
      %v1835 = vunpack.c.l.b16 %v1636
      %v1836 = vunpack.c.l.b16 %v1637
      %v1837 = vunpack.c.l.b16 %v1638
      %v1838 = vunpack.c.l.b16 %v1639
      %v1839 = vunpack.c.l.b16 %v1640
      %v1840 = vunpack.c.l.b16 %v1641
      %v1841 = vunpack.c.l.b16 %v1642
      %v1842 = vunpack.c.l.b16 %v1643
      %v1843 = vunpack.c.l.b16 %v1644
      %v1844 = vunpack.c.l.b16 %v1645
      %v1845 = vunpack.c.l.b16 %v1646
      %v1846 = vunpack.c.l.b16 %v1647
      %v1847 = vunpack.c.l.b16 %v1648
      %v1848 = vunpack.c.l.b16 %v1649
      %v1849 = vpack.c.b16 %v1834, %v1833
      %v1850 = vpack.c.b16 %v1836, %v1835
      %v1851 = vpack.c.b16 %v1838, %v1837
      %v1852 = vpack.c.b16 %v1840, %v1839
      %v1853 = vpack.c.b16 %v1842, %v1841
      %v1854 = vpack.c.b16 %v1844, %v1843
      %v1855 = vpack.c.b16 %v1846, %v1845
      %v1856 = vpack.c.b16 %v1848, %v1847
      %1865 = vmatprep.subr.bf16.mxu0 0
      %1866 = vmatpush1.bf16.msra.mxu0 %v1849
      %1867 = vmatprep.subr.bf16.mxu0 0
      %1868 = vmatpush1.bf16.msra.mxu0 %v1850
      %1869 = vmatprep.subr.bf16.mxu0 0
      %1870 = vmatpush1.bf16.msra.mxu0 %v1851
      %1871 = vmatprep.subr.bf16.mxu0 0
      %1872 = vmatpush1.bf16.msra.mxu0 %v1852
      %1873 = vmatprep.subr.bf16.mxu0 0
      %1874 = vmatpush1.bf16.msra.mxu0 %v1853
      %1875 = vmatprep.subr.bf16.mxu0 0
      %1876 = vmatpush1.bf16.msra.mxu0 %v1854
      %1877 = vmatprep.subr.bf16.mxu0 0
      %1878 = vmatpush1.bf16.msra.mxu0 %v1855
      %1879 = vmatprep.subr.bf16.mxu0 0
      %1880 = vmatpush1.bf16.msra.mxu0 %v1856
      %1881 = vmatprep.subr.bf16.mxu0 0
      %1882 = vmatpush1.bf16.msra.mxu0 0
      %1883 = vmatprep.subr.bf16.mxu0 0
      %1884 = vmatpush1.bf16.msra.mxu0 0
      %1885 = vmatprep.subr.bf16.mxu0 0
      %1886 = vmatpush1.bf16.msra.mxu0 0
      %1887 = vmatprep.subr.bf16.mxu0 0
      %1888 = vmatpush1.bf16.msra.mxu0 0
      %1889 = vmatprep.subr.bf16.mxu0 0
      %1890 = vmatpush1.bf16.msra.mxu0 0
      %1891 = vmatprep.subr.bf16.mxu0 0
      %1892 = vmatpush1.bf16.msra.mxu0 0
      %1893 = vmatprep.subr.bf16.mxu0 0
      %1894 = vmatpush1.bf16.msra.mxu0 0
      %1895 = vmatprep.subr.bf16.mxu0 0
      %1896 = vmatpush1.bf16.msra.mxu0 0
      %1897 = vmatprep.mubr.bf16.mxu0 0
      %1898 = vmatmul.mubr.bf16.gmra.mrb[0].mxu0 %v1662
      %v1899 = vpop.f32.mrb[0].mxu0
      %v1900 = vadd.f32 0.0, %v1899
      %v1901 = vpop.f32.mrb[0].mxu0
      %v1902 = vpop.f32.mrb[0].mxu0
      %v1903 = vadd.f32 0.0, %v1902
      %v1904 = vpop.f32.mrb[0].mxu0
      %1905 = vmatprep.mubr.bf16.mxu0 0
      %1906 = vmatmul.mubr.bf16.gmra.mrb[0].mxu0 %v1670
      %v1907 = vpop.f32.mrb[0].mxu0
      %v1908 = vadd.f32 0.0, %v1907
      %v1909 = vpop.f32.mrb[0].mxu0
      %v1910 = vpop.f32.mrb[0].mxu0
      %v1911 = vadd.f32 0.0, %v1910
      %v1912 = vpop.f32.mrb[0].mxu0
      %1913 = vmatprep.mubr.bf16.mxu0 0
      %1914 = vmatmul.mubr.bf16.gmra.mrb[0].mxu0 %v1678
      %v1915 = vpop.f32.mrb[0].mxu0
      %v1916 = vadd.f32 0.0, %v1915
      %v1917 = vpop.f32.mrb[0].mxu0
      %v1918 = vpop.f32.mrb[0].mxu0
      %v1919 = vadd.f32 0.0, %v1918
      %v1920 = vpop.f32.mrb[0].mxu0
      %1921 = vmatprep.mubr.bf16.mxu0 0
      %1922 = vmatmul.mubr.bf16.gmra.mrb[0].mxu0 %v1686
      %v1923 = vpop.f32.mrb[0].mxu0
      %v1924 = vadd.f32 0.0, %v1923
      %v1925 = vpop.f32.mrb[0].mxu0
      %v1926 = vpop.f32.mrb[0].mxu0
      %v1927 = vadd.f32 0.0, %v1926
      %v1928 = vpop.f32.mrb[0].mxu0
      %1929 = vmatprep.mubr.bf16.mxu0 0
      %1930 = vmatmul.mubr.bf16.gmra.mrb[0].mxu0 %v1694
      %v1931 = vpop.f32.mrb[0].mxu0
      %v1932 = vadd.f32 0.0, %v1931
      %v1933 = vpop.f32.mrb[0].mxu0
      %v1934 = vpop.f32.mrb[0].mxu0
      %v1935 = vadd.f32 0.0, %v1934
      %v1936 = vpop.f32.mrb[0].mxu0
      %1937 = vmatprep.mubr.bf16.mxu0 0
      %1938 = vmatmul.mubr.bf16.gmra.mrb[0].mxu0 %v1702
      %v1939 = vpop.f32.mrb[0].mxu0
      %v1940 = vadd.f32 0.0, %v1939
      %v1941 = vpop.f32.mrb[0].mxu0
      %v1942 = vpop.f32.mrb[0].mxu0
      %v1943 = vadd.f32 0.0, %v1942
      %v1944 = vpop.f32.mrb[0].mxu0
      %1945 = vmatprep.mubr.bf16.mxu0 0
      %1946 = vmatmul.mubr.bf16.gmra.mrb[0].mxu0 %v1710
      %v1947 = vpop.f32.mrb[0].mxu0
      %v1948 = vadd.f32 0.0, %v1947
      %v1949 = vpop.f32.mrb[0].mxu0
      %v1950 = vpop.f32.mrb[0].mxu0
      %v1951 = vadd.f32 0.0, %v1950
      %v1952 = vpop.f32.mrb[0].mxu0
      %1953 = vmatprep.mubr.bf16.mxu0 0
      %1954 = vmatmul.mubr.bf16.gmra.mrb[0].mxu0 %v1718
      %v1955 = vpop.f32.mrb[0].mxu0
      %v1956 = vadd.f32 0.0, %v1955
      %v1957 = vpop.f32.mrb[0].mxu0
      %v1958 = vpop.f32.mrb[0].mxu0
      %v1959 = vadd.f32 0.0, %v1958
      %v1960 = vpop.f32.mrb[0].mxu0
      %1961 = vmatprep.mubr.bf16.mxu0 0
      %1962 = vmatmul.mubr.bf16.gmra.mrb[0].mxu0 %v1726
      %v1963 = vpop.f32.mrb[0].mxu0
      %v1964 = vadd.f32 0.0, %v1963
      %v1965 = vpop.f32.mrb[0].mxu0
      %v1966 = vpop.f32.mrb[0].mxu0
      %v1967 = vadd.f32 0.0, %v1966
      %v1968 = vpop.f32.mrb[0].mxu0
      %1969 = vmatprep.mubr.bf16.mxu0 0
      %1970 = vmatmul.mubr.bf16.gmra.mrb[0].mxu0 %v1734
      %v1971 = vpop.f32.mrb[0].mxu0
      %v1972 = vadd.f32 0.0, %v1971
      %v1973 = vpop.f32.mrb[0].mxu0
      %v1974 = vpop.f32.mrb[0].mxu0
      %v1975 = vadd.f32 0.0, %v1974
      %v1976 = vpop.f32.mrb[0].mxu0
      %1977 = vmatprep.mubr.bf16.mxu0 0
      %1978 = vmatmul.mubr.bf16.gmra.mrb[0].mxu0 %v1742
      %v1979 = vpop.f32.mrb[0].mxu0
      %v1980 = vadd.f32 0.0, %v1979
      %v1981 = vpop.f32.mrb[0].mxu0
      %v1982 = vpop.f32.mrb[0].mxu0
      %v1983 = vadd.f32 0.0, %v1982
      %v1984 = vpop.f32.mrb[0].mxu0
      %1985 = vmatprep.mubr.bf16.mxu0 0
      %1986 = vmatmul.mubr.bf16.gmra.mrb[0].mxu0 %v1750
      %v1987 = vpop.f32.mrb[0].mxu0
      %v1988 = vadd.f32 0.0, %v1987
      %v1989 = vpop.f32.mrb[0].mxu0
      %v1990 = vpop.f32.mrb[0].mxu0
      %v1991 = vadd.f32 0.0, %v1990
      %v1992 = vpop.f32.mrb[0].mxu0
      %1993 = vmatprep.mubr.bf16.mxu0 0
      %1994 = vmatmul.mubr.bf16.gmra.mrb[0].mxu0 %v1758
      %v1995 = vpop.f32.mrb[0].mxu0
      %v1996 = vadd.f32 0.0, %v1995
      %v1997 = vpop.f32.mrb[0].mxu0
      %v1998 = vpop.f32.mrb[0].mxu0
      %v1999 = vadd.f32 0.0, %v1998
      %v2000 = vpop.f32.mrb[0].mxu0
      %2001 = vmatprep.mubr.bf16.mxu0 0
      %2002 = vmatmul.mubr.bf16.gmra.mrb[0].mxu0 %v1766
      %v2003 = vpop.f32.mrb[0].mxu0
      %v2004 = vadd.f32 0.0, %v2003
      %v2005 = vpop.f32.mrb[0].mxu0
      %v2006 = vpop.f32.mrb[0].mxu0
      %v2007 = vadd.f32 0.0, %v2006
      %v2008 = vpop.f32.mrb[0].mxu0
      %2009 = vmatprep.mubr.bf16.mxu0 0
      %2010 = vmatmul.mubr.bf16.gmra.mrb[0].mxu0 %v1774
      %v2011 = vpop.f32.mrb[0].mxu0
      %v2012 = vadd.f32 0.0, %v2011
      %v2013 = vpop.f32.mrb[0].mxu0
      %v2014 = vpop.f32.mrb[0].mxu0
      %v2015 = vadd.f32 0.0, %v2014
      %v2016 = vpop.f32.mrb[0].mxu0
      %2017 = vmatprep.mubr.bf16.mxu0 0
      %2018 = vmatmul.mubr.bf16.gmra.mrb[0].mxu0 %v1782
      %v2019 = vpop.f32.mrb[0].mxu0
      %v2020 = vadd.f32 0.0, %v2019
      %v2021 = vpop.f32.mrb[0].mxu0
      %v2022 = vpop.f32.mrb[0].mxu0
      %v2023 = vadd.f32 0.0, %v2022
      %v2024 = vpop.f32.mrb[0].mxu0
      %2025 = vmatprep.mubr.bf16.mxu0 0
      %2026 = vmatmul.mubr.bf16.gmra.mrb[0].mxu0 %v1790
      %v2027 = vpop.f32.mrb[0].mxu0
      %v2028 = vadd.f32 0.0, %v2027
      %v2029 = vpop.f32.mrb[0].mxu0
      %v2030 = vpop.f32.mrb[0].mxu0
      %v2031 = vadd.f32 0.0, %v2030
      %v2032 = vpop.f32.mrb[0].mxu0
      %2033 = vmatprep.mubr.bf16.mxu0 0
      %2034 = vmatmul.mubr.bf16.gmra.mrb[0].mxu0 %v1798
      %v2035 = vpop.f32.mrb[0].mxu0
      %v2036 = vadd.f32 0.0, %v2035
      %v2037 = vpop.f32.mrb[0].mxu0
      %v2038 = vpop.f32.mrb[0].mxu0
      %v2039 = vadd.f32 0.0, %v2038
      %v2040 = vpop.f32.mrb[0].mxu0
      %2041 = vdwg.mxu0
      %v2058 = vunpack.c.l.b16 %v1617
      %v2059 = vunpack.c.l.b16 %v1618
      %v2060 = vunpack.c.l.b16 %v1619
      %v2061 = vunpack.c.l.b16 %v1620
      %v2062 = vunpack.c.l.b16 %v1621
      %v2063 = vunpack.c.l.b16 %v1622
      %v2064 = vunpack.c.l.b16 %v1623
      %v2065 = vunpack.c.l.b16 %v1624
      %v2066 = vunpack.c.l.b16 %v1625
      %v2067 = vunpack.c.l.b16 %v1626
      %v2068 = vunpack.c.l.b16 %v1627
      %v2069 = vunpack.c.l.b16 %v1628
      %v2070 = vunpack.c.l.b16 %v1629
      %v2071 = vunpack.c.l.b16 %v1630
      %v2072 = vunpack.c.l.b16 %v1631
      %v2073 = vunpack.c.l.b16 %v1632
      %v2074 = vpack.c.b16 %v2059, %v2058
      %v2075 = vpack.c.b16 %v2061, %v2060
      %v2076 = vpack.c.b16 %v2063, %v2062
      %v2077 = vpack.c.b16 %v2065, %v2064
      %v2078 = vpack.c.b16 %v2067, %v2066
      %v2079 = vpack.c.b16 %v2069, %v2068
      %v2080 = vpack.c.b16 %v2071, %v2070
      %v2081 = vpack.c.b16 %v2073, %v2072
      %2090 = vmatprep.subr.bf16.mxu0 0
      %2091 = vmatpush1.bf16.msra.mxu0 %v2074
      %2092 = vmatprep.subr.bf16.mxu0 0
      %2093 = vmatpush1.bf16.msra.mxu0 %v2075
      %2094 = vmatprep.subr.bf16.mxu0 0
      %2095 = vmatpush1.bf16.msra.mxu0 %v2076
      %2096 = vmatprep.subr.bf16.mxu0 0
      %2097 = vmatpush1.bf16.msra.mxu0 %v2077
      %2098 = vmatprep.subr.bf16.mxu0 0
      %2099 = vmatpush1.bf16.msra.mxu0 %v2078
      %2100 = vmatprep.subr.bf16.mxu0 0
      %2101 = vmatpush1.bf16.msra.mxu0 %v2079
      %2102 = vmatprep.subr.bf16.mxu0 0
      %2103 = vmatpush1.bf16.msra.mxu0 %v2080
      %2104 = vmatprep.subr.bf16.mxu0 0
      %2105 = vmatpush1.bf16.msra.mxu0 %v2081
      %2106 = vmatprep.subr.bf16.mxu0 0
      %2107 = vmatpush1.bf16.msra.mxu0 0
      %2108 = vmatprep.subr.bf16.mxu0 0
      %2109 = vmatpush1.bf16.msra.mxu0 0
      %2110 = vmatprep.subr.bf16.mxu0 0
      %2111 = vmatpush1.bf16.msra.mxu0 0
      %2112 = vmatprep.subr.bf16.mxu0 0
      %2113 = vmatpush1.bf16.msra.mxu0 0
      %2114 = vmatprep.subr.bf16.mxu0 0
      %2115 = vmatpush1.bf16.msra.mxu0 0
      %2116 = vmatprep.subr.bf16.mxu0 0
      %2117 = vmatpush1.bf16.msra.mxu0 0
      %2118 = vmatprep.subr.bf16.mxu0 0
      %2119 = vmatpush1.bf16.msra.mxu0 0
      %2120 = vmatprep.subr.bf16.mxu0 0
      %2121 = vmatpush1.bf16.msra.mxu0 0
      %2122 = vmatprep.mubr.bf16.mxu0 0
      %2123 = vmatmul.mubr.bf16.gmra.mrb[0].mxu0 %v1596
      %v2124 = vpop.f32.mrb[0].mxu0
      %v2125 = vadd.f32 %v1900, %v2124
      %v2126 = vpop.f32.mrb[0].mxu0
      %v2127 = vpop.f32.mrb[0].mxu0
      %v2128 = vadd.f32 %v1903, %v2127
      %v2129 = vpop.f32.mrb[0].mxu0
      %2130 = vmatprep.mubr.bf16.mxu0 0
      %2131 = vmatmul.mubr.bf16.gmra.mrb[0].mxu0 %v1597
      %v2132 = vpop.f32.mrb[0].mxu0
      %v2133 = vadd.f32 %v1908, %v2132
      %v2134 = vpop.f32.mrb[0].mxu0
      %v2135 = vpop.f32.mrb[0].mxu0
      %v2136 = vadd.f32 %v1911, %v2135
      %v2137 = vpop.f32.mrb[0].mxu0
      %2138 = vmatprep.mubr.bf16.mxu0 0
      %2139 = vmatmul.mubr.bf16.gmra.mrb[0].mxu0 %v1598
      %v2140 = vpop.f32.mrb[0].mxu0
      %v2141 = vadd.f32 %v1916, %v2140
      %v2142 = vpop.f32.mrb[0].mxu0
      %v2143 = vpop.f32.mrb[0].mxu0
      %v2144 = vadd.f32 %v1919, %v2143
      %v2145 = vpop.f32.mrb[0].mxu0
      %2146 = vmatprep.mubr.bf16.mxu0 0
      %2147 = vmatmul.mubr.bf16.gmra.mrb[0].mxu0 %v1599
      %v2148 = vpop.f32.mrb[0].mxu0
      %v2149 = vadd.f32 %v1924, %v2148
      %v2150 = vpop.f32.mrb[0].mxu0
      %v2151 = vpop.f32.mrb[0].mxu0
      %v2152 = vadd.f32 %v1927, %v2151
      %v2153 = vpop.f32.mrb[0].mxu0
      %2154 = vmatprep.mubr.bf16.mxu0 0
      %2155 = vmatmul.mubr.bf16.gmra.mrb[0].mxu0 %v1600
      %v2156 = vpop.f32.mrb[0].mxu0
      %v2157 = vadd.f32 %v1932, %v2156
      %v2158 = vpop.f32.mrb[0].mxu0
      %v2159 = vpop.f32.mrb[0].mxu0
      %v2160 = vadd.f32 %v1935, %v2159
      %v2161 = vpop.f32.mrb[0].mxu0
      %2162 = vmatprep.mubr.bf16.mxu0 0
      %2163 = vmatmul.mubr.bf16.gmra.mrb[0].mxu0 %v1601
      %v2164 = vpop.f32.mrb[0].mxu0
      %v2165 = vadd.f32 %v1940, %v2164
      %v2166 = vpop.f32.mrb[0].mxu0
      %v2167 = vpop.f32.mrb[0].mxu0
      %v2168 = vadd.f32 %v1943, %v2167
      %v2169 = vpop.f32.mrb[0].mxu0
      %2170 = vmatprep.mubr.bf16.mxu0 0
      %2171 = vmatmul.mubr.bf16.gmra.mrb[0].mxu0 %v1602
      %v2172 = vpop.f32.mrb[0].mxu0
      %v2173 = vadd.f32 %v1948, %v2172
      %v2174 = vpop.f32.mrb[0].mxu0
      %v2175 = vpop.f32.mrb[0].mxu0
      %v2176 = vadd.f32 %v1951, %v2175
      %v2177 = vpop.f32.mrb[0].mxu0
      %2178 = vmatprep.mubr.bf16.mxu0 0
      %2179 = vmatmul.mubr.bf16.gmra.mrb[0].mxu0 %v1603
      %v2180 = vpop.f32.mrb[0].mxu0
      %v2181 = vadd.f32 %v1956, %v2180
      %v2182 = vpop.f32.mrb[0].mxu0
      %v2183 = vpop.f32.mrb[0].mxu0
      %v2184 = vadd.f32 %v1959, %v2183
      %v2185 = vpop.f32.mrb[0].mxu0
      %2186 = vmatprep.mubr.bf16.mxu0 0
      %2187 = vmatmul.mubr.bf16.gmra.mrb[0].mxu0 %v1604
      %v2188 = vpop.f32.mrb[0].mxu0
      %v2189 = vadd.f32 %v1964, %v2188
      %v2190 = vpop.f32.mrb[0].mxu0
      %v2191 = vpop.f32.mrb[0].mxu0
      %v2192 = vadd.f32 %v1967, %v2191
      %v2193 = vpop.f32.mrb[0].mxu0
      %2194 = vmatprep.mubr.bf16.mxu0 0
      %2195 = vmatmul.mubr.bf16.gmra.mrb[0].mxu0 %v1605
      %v2196 = vpop.f32.mrb[0].mxu0
      %v2197 = vadd.f32 %v1972, %v2196
      %v2198 = vpop.f32.mrb[0].mxu0
      %v2199 = vpop.f32.mrb[0].mxu0
      %v2200 = vadd.f32 %v1975, %v2199
      %v2201 = vpop.f32.mrb[0].mxu0
      %2202 = vmatprep.mubr.bf16.mxu0 0
      %2203 = vmatmul.mubr.bf16.gmra.mrb[0].mxu0 %v1606
      %v2204 = vpop.f32.mrb[0].mxu0
      %v2205 = vadd.f32 %v1980, %v2204
      %v2206 = vpop.f32.mrb[0].mxu0
      %v2207 = vpop.f32.mrb[0].mxu0
      %v2208 = vadd.f32 %v1983, %v2207
      %v2209 = vpop.f32.mrb[0].mxu0
      %2210 = vmatprep.mubr.bf16.mxu0 0
      %2211 = vmatmul.mubr.bf16.gmra.mrb[0].mxu0 %v1607
      %v2212 = vpop.f32.mrb[0].mxu0
      %v2213 = vadd.f32 %v1988, %v2212
      %v2214 = vpop.f32.mrb[0].mxu0
      %v2215 = vpop.f32.mrb[0].mxu0
      %v2216 = vadd.f32 %v1991, %v2215
      %v2217 = vpop.f32.mrb[0].mxu0
      %2218 = vmatprep.mubr.bf16.mxu0 0
      %2219 = vmatmul.mubr.bf16.gmra.mrb[0].mxu0 %v1608
      %v2220 = vpop.f32.mrb[0].mxu0
      %v2221 = vadd.f32 %v1996, %v2220
      %v2222 = vpop.f32.mrb[0].mxu0
      %v2223 = vpop.f32.mrb[0].mxu0
      %v2224 = vadd.f32 %v1999, %v2223
      %v2225 = vpop.f32.mrb[0].mxu0
      %2226 = vmatprep.mubr.bf16.mxu0 0
      %2227 = vmatmul.mubr.bf16.gmra.mrb[0].mxu0 %v1609
      %v2228 = vpop.f32.mrb[0].mxu0
      %v2229 = vadd.f32 %v2004, %v2228
      %v2230 = vpop.f32.mrb[0].mxu0
      %v2231 = vpop.f32.mrb[0].mxu0
      %v2232 = vadd.f32 %v2007, %v2231
      %v2233 = vpop.f32.mrb[0].mxu0
      %2234 = vmatprep.mubr.bf16.mxu0 0
      %2235 = vmatmul.mubr.bf16.gmra.mrb[0].mxu0 %v1610
      %v2236 = vpop.f32.mrb[0].mxu0
      %v2237 = vadd.f32 %v2012, %v2236
      %v2238 = vpop.f32.mrb[0].mxu0
      %v2239 = vpop.f32.mrb[0].mxu0
      %v2240 = vadd.f32 %v2015, %v2239
      %v2241 = vpop.f32.mrb[0].mxu0
      %2242 = vmatprep.mubr.bf16.mxu0 0
      %2243 = vmatmul.mubr.bf16.gmra.mrb[0].mxu0 %v1611
      %v2244 = vpop.f32.mrb[0].mxu0
      %v2245 = vadd.f32 %v2020, %v2244
      %v2246 = vpop.f32.mrb[0].mxu0
      %v2247 = vpop.f32.mrb[0].mxu0
      %v2248 = vadd.f32 %v2023, %v2247
      %v2249 = vpop.f32.mrb[0].mxu0
      %2250 = vmatprep.mubr.bf16.mxu0 0
      %2251 = vmatmul.mubr.bf16.gmra.mrb[0].mxu0 %v1612
      %v2252 = vpop.f32.mrb[0].mxu0
      %v2253 = vadd.f32 %v2028, %v2252
      %v2254 = vpop.f32.mrb[0].mxu0
      %v2255 = vpop.f32.mrb[0].mxu0
      %v2256 = vadd.f32 %v2031, %v2255
      %v2257 = vpop.f32.mrb[0].mxu0
      %2258 = vmatprep.mubr.bf16.mxu0 0
      %2259 = vmatmul.mubr.bf16.gmra.mrb[0].mxu0 %v1613
      %v2260 = vpop.f32.mrb[0].mxu0
      %v2261 = vadd.f32 %v2036, %v2260
      %v2262 = vpop.f32.mrb[0].mxu0
      %v2263 = vpop.f32.mrb[0].mxu0
      %v2264 = vadd.f32 %v2039, %v2263
      %v2265 = vpop.f32.mrb[0].mxu0
      %2266 = vdwg.mxu0
      %s2267 = scalar_lea.vmem %s1, 128
      %v2268 = vld [vmem:[%s2267] sm:$0xf]
      %v2269 = vld [vmem:[%s2267 + $0x4] sm:$0xf]
      %v2270 = vld [vmem:[%s2267 + $0x8] sm:$0xf]
      %v2271 = vld [vmem:[%s2267 + $0xc] sm:$0xf]
      %v2272 = vld [vmem:[%s2267 + $0x10] sm:$0xf]
      %v2273 = vld [vmem:[%s2267 + $0x14] sm:$0xf]
      %v2274 = vld [vmem:[%s2267 + $0x18] sm:$0xf]
      %v2275 = vld [vmem:[%s2267 + $0x1c] sm:$0xf]
      %v2276 = vld [vmem:[%s2267 + $0x20] sm:$0xf]
      %v2277 = vld [vmem:[%s2267 + $0x24] sm:$0xf]
      %v2278 = vld [vmem:[%s2267 + $0x28] sm:$0xf]
      %v2279 = vld [vmem:[%s2267 + $0x2c] sm:$0xf]
      %v2280 = vld [vmem:[%s2267 + $0x30] sm:$0xf]
      %v2281 = vld [vmem:[%s2267 + $0x34] sm:$0xf]
      %v2282 = vld [vmem:[%s2267 + $0x38] sm:$0xf]
      %v2283 = vld [vmem:[%s2267 + $0x3c] sm:$0xf]
      %vm2303 = vcmask 1046528
      %v2304 = vrot.slane %v1596, 1
      %v2305 = vrot.slane %v1597, 1
      %v2306 = vsel %vm2303, %v2304, %v2305
      %v2307 = vrot.slane %v1598, 1
      %v2308 = vsel %vm2303, %v2305, %v2307
      %v2309 = vrot.slane %v1599, 1
      %v2310 = vsel %vm2303, %v2307, %v2309
      %v2311 = vrot.slane %v1600, 1
      %v2312 = vsel %vm2303, %v2309, %v2311
      %v2313 = vrot.slane %v1601, 1
      %v2314 = vsel %vm2303, %v2311, %v2313
      %v2315 = vrot.slane %v1602, 1
      %v2316 = vsel %vm2303, %v2313, %v2315
      %v2317 = vrot.slane %v1603, 1
      %v2318 = vsel %vm2303, %v2315, %v2317
      %v2319 = vrot.slane %v1604, 1
      %v2320 = vsel %vm2303, %v2317, %v2319
      %v2321 = vrot.slane %v1605, 1
      %v2322 = vsel %vm2303, %v2319, %v2321
      %v2323 = vrot.slane %v1606, 1
      %v2324 = vsel %vm2303, %v2321, %v2323
      %v2325 = vrot.slane %v1607, 1
      %v2326 = vsel %vm2303, %v2323, %v2325
      %v2327 = vrot.slane %v1608, 1
      %v2328 = vsel %vm2303, %v2325, %v2327
      %v2329 = vrot.slane %v1609, 1
      %v2330 = vsel %vm2303, %v2327, %v2329
      %v2331 = vrot.slane %v1610, 1
      %v2332 = vsel %vm2303, %v2329, %v2331
      %v2333 = vrot.slane %v1611, 1
      %v2334 = vsel %vm2303, %v2331, %v2333
      %v2335 = vrot.slane %v1612, 1
      %v2336 = vsel %vm2303, %v2333, %v2335
      %v2337 = vrot.slane %v1613, 1
      %v2338 = vsel %vm2303, %v2335, %v2337
      %v2339 = vrot.slane %v1614, 1
      %v2340 = vsel %vm2303, %v2337, %v2339
      %v2375 = vunpack.c.l.b16 %v2268
      %v2376 = vunpack.c.l.b16 %v2269
      %v2377 = vunpack.c.l.b16 %v2270
      %v2378 = vunpack.c.l.b16 %v2271
      %v2379 = vunpack.c.l.b16 %v2272
      %v2380 = vunpack.c.l.b16 %v2273
      %v2381 = vunpack.c.l.b16 %v2274
      %v2382 = vunpack.c.l.b16 %v2275
      %v2383 = vunpack.c.l.b16 %v2276
      %v2384 = vunpack.c.l.b16 %v2277
      %v2385 = vunpack.c.l.b16 %v2278
      %v2386 = vunpack.c.l.b16 %v2279
      %v2387 = vunpack.c.l.b16 %v2280
      %v2388 = vunpack.c.l.b16 %v2281
      %v2389 = vunpack.c.l.b16 %v2282
      %v2390 = vunpack.c.l.b16 %v2283
      %v2391 = vpack.c.b16 %v2376, %v2375
      %v2392 = vpack.c.b16 %v2378, %v2377
      %v2393 = vpack.c.b16 %v2380, %v2379
      %v2394 = vpack.c.b16 %v2382, %v2381
      %v2395 = vpack.c.b16 %v2384, %v2383
      %v2396 = vpack.c.b16 %v2386, %v2385
      %v2397 = vpack.c.b16 %v2388, %v2387
      %v2398 = vpack.c.b16 %v2390, %v2389
      %2407 = vmatprep.subr.bf16.mxu0 0
      %2408 = vmatpush1.bf16.msra.mxu0 %v2391
      %2409 = vmatprep.subr.bf16.mxu0 0
      %2410 = vmatpush1.bf16.msra.mxu0 %v2392
      %2411 = vmatprep.subr.bf16.mxu0 0
      %2412 = vmatpush1.bf16.msra.mxu0 %v2393
      %2413 = vmatprep.subr.bf16.mxu0 0
      %2414 = vmatpush1.bf16.msra.mxu0 %v2394
      %2415 = vmatprep.subr.bf16.mxu0 0
      %2416 = vmatpush1.bf16.msra.mxu0 %v2395
      %2417 = vmatprep.subr.bf16.mxu0 0
      %2418 = vmatpush1.bf16.msra.mxu0 %v2396
      %2419 = vmatprep.subr.bf16.mxu0 0
      %2420 = vmatpush1.bf16.msra.mxu0 %v2397
      %2421 = vmatprep.subr.bf16.mxu0 0
      %2422 = vmatpush1.bf16.msra.mxu0 %v2398
      %2423 = vmatprep.subr.bf16.mxu0 0
      %2424 = vmatpush1.bf16.msra.mxu0 0
      %2425 = vmatprep.subr.bf16.mxu0 0
      %2426 = vmatpush1.bf16.msra.mxu0 0
      %2427 = vmatprep.subr.bf16.mxu0 0
      %2428 = vmatpush1.bf16.msra.mxu0 0
      %2429 = vmatprep.subr.bf16.mxu0 0
      %2430 = vmatpush1.bf16.msra.mxu0 0
      %2431 = vmatprep.subr.bf16.mxu0 0
      %2432 = vmatpush1.bf16.msra.mxu0 0
      %2433 = vmatprep.subr.bf16.mxu0 0
      %2434 = vmatpush1.bf16.msra.mxu0 0
      %2435 = vmatprep.subr.bf16.mxu0 0
      %2436 = vmatpush1.bf16.msra.mxu0 0
      %2437 = vmatprep.subr.bf16.mxu0 0
      %2438 = vmatpush1.bf16.msra.mxu0 0
      %2439 = vmatprep.mubr.bf16.mxu0 0
      %2440 = vmatmul.mubr.bf16.gmra.mrb[0].mxu0 %v2306
      %v2441 = vpop.f32.mrb[0].mxu0
      %v2442 = vadd.f32 0.0, %v2441
      %v2443 = vpop.f32.mrb[0].mxu0
      %v2444 = vpop.f32.mrb[0].mxu0
      %v2445 = vadd.f32 0.0, %v2444
      %v2446 = vpop.f32.mrb[0].mxu0
      %2447 = vmatprep.mubr.bf16.mxu0 0
      %2448 = vmatmul.mubr.bf16.gmra.mrb[0].mxu0 %v2308
      %v2449 = vpop.f32.mrb[0].mxu0
      %v2450 = vadd.f32 0.0, %v2449
      %v2451 = vpop.f32.mrb[0].mxu0
      %v2452 = vpop.f32.mrb[0].mxu0
      %v2453 = vadd.f32 0.0, %v2452
      %v2454 = vpop.f32.mrb[0].mxu0
      %2455 = vmatprep.mubr.bf16.mxu0 0
      %2456 = vmatmul.mubr.bf16.gmra.mrb[0].mxu0 %v2310
      %v2457 = vpop.f32.mrb[0].mxu0
      %v2458 = vadd.f32 0.0, %v2457
      %v2459 = vpop.f32.mrb[0].mxu0
      %v2460 = vpop.f32.mrb[0].mxu0
      %v2461 = vadd.f32 0.0, %v2460
      %v2462 = vpop.f32.mrb[0].mxu0
      %2463 = vmatprep.mubr.bf16.mxu0 0
      %2464 = vmatmul.mubr.bf16.gmra.mrb[0].mxu0 %v2312
      %v2465 = vpop.f32.mrb[0].mxu0
      %v2466 = vadd.f32 0.0, %v2465
      %v2467 = vpop.f32.mrb[0].mxu0
      %v2468 = vpop.f32.mrb[0].mxu0
      %v2469 = vadd.f32 0.0, %v2468
      %v2470 = vpop.f32.mrb[0].mxu0
      %2471 = vmatprep.mubr.bf16.mxu0 0
      %2472 = vmatmul.mubr.bf16.gmra.mrb[0].mxu0 %v2314
      %v2473 = vpop.f32.mrb[0].mxu0
      %v2474 = vadd.f32 0.0, %v2473
      %v2475 = vpop.f32.mrb[0].mxu0
      %v2476 = vpop.f32.mrb[0].mxu0
      %v2477 = vadd.f32 0.0, %v2476
      %v2478 = vpop.f32.mrb[0].mxu0
      %2479 = vmatprep.mubr.bf16.mxu0 0
      %2480 = vmatmul.mubr.bf16.gmra.mrb[0].mxu0 %v2316
      %v2481 = vpop.f32.mrb[0].mxu0
      %v2482 = vadd.f32 0.0, %v2481
      %v2483 = vpop.f32.mrb[0].mxu0
      %v2484 = vpop.f32.mrb[0].mxu0
      %v2485 = vadd.f32 0.0, %v2484
      %v2486 = vpop.f32.mrb[0].mxu0
      %2487 = vmatprep.mubr.bf16.mxu0 0
      %2488 = vmatmul.mubr.bf16.gmra.mrb[0].mxu0 %v2318
      %v2489 = vpop.f32.mrb[0].mxu0
      %v2490 = vadd.f32 0.0, %v2489
      %v2491 = vpop.f32.mrb[0].mxu0
      %v2492 = vpop.f32.mrb[0].mxu0
      %v2493 = vadd.f32 0.0, %v2492
      %v2494 = vpop.f32.mrb[0].mxu0
      %2495 = vmatprep.mubr.bf16.mxu0 0
      %2496 = vmatmul.mubr.bf16.gmra.mrb[0].mxu0 %v2320
      %v2497 = vpop.f32.mrb[0].mxu0
      %v2498 = vadd.f32 0.0, %v2497
      %v2499 = vpop.f32.mrb[0].mxu0
      %v2500 = vpop.f32.mrb[0].mxu0
      %v2501 = vadd.f32 0.0, %v2500
      %v2502 = vpop.f32.mrb[0].mxu0
      %2503 = vmatprep.mubr.bf16.mxu0 0
      %2504 = vmatmul.mubr.bf16.gmra.mrb[0].mxu0 %v2322
      %v2505 = vpop.f32.mrb[0].mxu0
      %v2506 = vadd.f32 0.0, %v2505
      %v2507 = vpop.f32.mrb[0].mxu0
      %v2508 = vpop.f32.mrb[0].mxu0
      %v2509 = vadd.f32 0.0, %v2508
      %v2510 = vpop.f32.mrb[0].mxu0
      %2511 = vmatprep.mubr.bf16.mxu0 0
      %2512 = vmatmul.mubr.bf16.gmra.mrb[0].mxu0 %v2324
      %v2513 = vpop.f32.mrb[0].mxu0
      %v2514 = vadd.f32 0.0, %v2513
      %v2515 = vpop.f32.mrb[0].mxu0
      %v2516 = vpop.f32.mrb[0].mxu0
      %v2517 = vadd.f32 0.0, %v2516
      %v2518 = vpop.f32.mrb[0].mxu0
      %2519 = vmatprep.mubr.bf16.mxu0 0
      %2520 = vmatmul.mubr.bf16.gmra.mrb[0].mxu0 %v2326
      %v2521 = vpop.f32.mrb[0].mxu0
      %v2522 = vadd.f32 0.0, %v2521
      %v2523 = vpop.f32.mrb[0].mxu0
      %v2524 = vpop.f32.mrb[0].mxu0
      %v2525 = vadd.f32 0.0, %v2524
      %v2526 = vpop.f32.mrb[0].mxu0
      %2527 = vmatprep.mubr.bf16.mxu0 0
      %2528 = vmatmul.mubr.bf16.gmra.mrb[0].mxu0 %v2328
      %v2529 = vpop.f32.mrb[0].mxu0
      %v2530 = vadd.f32 0.0, %v2529
      %v2531 = vpop.f32.mrb[0].mxu0
      %v2532 = vpop.f32.mrb[0].mxu0
      %v2533 = vadd.f32 0.0, %v2532
      %v2534 = vpop.f32.mrb[0].mxu0
      %2535 = vmatprep.mubr.bf16.mxu0 0
      %2536 = vmatmul.mubr.bf16.gmra.mrb[0].mxu0 %v2330
      %v2537 = vpop.f32.mrb[0].mxu0
      %v2538 = vadd.f32 0.0, %v2537
      %v2539 = vpop.f32.mrb[0].mxu0
      %v2540 = vpop.f32.mrb[0].mxu0
      %v2541 = vadd.f32 0.0, %v2540
      %v2542 = vpop.f32.mrb[0].mxu0
      %2543 = vmatprep.mubr.bf16.mxu0 0
      %2544 = vmatmul.mubr.bf16.gmra.mrb[0].mxu0 %v2332
      %v2545 = vpop.f32.mrb[0].mxu0
      %v2546 = vadd.f32 0.0, %v2545
      %v2547 = vpop.f32.mrb[0].mxu0
      %v2548 = vpop.f32.mrb[0].mxu0
      %v2549 = vadd.f32 0.0, %v2548
      %v2550 = vpop.f32.mrb[0].mxu0
      %2551 = vmatprep.mubr.bf16.mxu0 0
      %2552 = vmatmul.mubr.bf16.gmra.mrb[0].mxu0 %v2334
      %v2553 = vpop.f32.mrb[0].mxu0
      %v2554 = vadd.f32 0.0, %v2553
      %v2555 = vpop.f32.mrb[0].mxu0
      %v2556 = vpop.f32.mrb[0].mxu0
      %v2557 = vadd.f32 0.0, %v2556
      %v2558 = vpop.f32.mrb[0].mxu0
      %2559 = vmatprep.mubr.bf16.mxu0 0
      %2560 = vmatmul.mubr.bf16.gmra.mrb[0].mxu0 %v2336
      %v2561 = vpop.f32.mrb[0].mxu0
      %v2562 = vadd.f32 0.0, %v2561
      %v2563 = vpop.f32.mrb[0].mxu0
      %v2564 = vpop.f32.mrb[0].mxu0
      %v2565 = vadd.f32 0.0, %v2564
      %v2566 = vpop.f32.mrb[0].mxu0
      %2567 = vmatprep.mubr.bf16.mxu0 0
      %2568 = vmatmul.mubr.bf16.gmra.mrb[0].mxu0 %v2338
      %v2569 = vpop.f32.mrb[0].mxu0
      %v2570 = vadd.f32 0.0, %v2569
      %v2571 = vpop.f32.mrb[0].mxu0
      %v2572 = vpop.f32.mrb[0].mxu0
      %v2573 = vadd.f32 0.0, %v2572
      %v2574 = vpop.f32.mrb[0].mxu0
      %2575 = vmatprep.mubr.bf16.mxu0 0
      %2576 = vmatmul.mubr.bf16.gmra.mrb[0].mxu0 %v2340
      %v2577 = vpop.f32.mrb[0].mxu0
      %v2578 = vadd.f32 0.0, %v2577
      %v2579 = vpop.f32.mrb[0].mxu0
      %v2580 = vpop.f32.mrb[0].mxu0
      %v2581 = vadd.f32 0.0, %v2580
      %v2582 = vpop.f32.mrb[0].mxu0
      %2583 = vdwg.mxu0
      %v2584 = vadd.f32 %v2125, %v2442
      %v2585 = vadd.f32 %v2128, %v2445
      %v2586 = vadd.f32 %v2133, %v2450
      %v2587 = vadd.f32 %v2136, %v2453
      %v2588 = vadd.f32 %v2141, %v2458
      %v2589 = vadd.f32 %v2144, %v2461
      %v2590 = vadd.f32 %v2149, %v2466
      %v2591 = vadd.f32 %v2152, %v2469
      %v2592 = vadd.f32 %v2157, %v2474
      %v2593 = vadd.f32 %v2160, %v2477
      %v2594 = vadd.f32 %v2165, %v2482
      %v2595 = vadd.f32 %v2168, %v2485
      %v2596 = vadd.f32 %v2173, %v2490
      %v2597 = vadd.f32 %v2176, %v2493
      %v2598 = vadd.f32 %v2181, %v2498
      %v2599 = vadd.f32 %v2184, %v2501
      %v2600 = vadd.f32 %v2189, %v2506
      %v2601 = vadd.f32 %v2192, %v2509
      %v2602 = vadd.f32 %v2197, %v2514
      %v2603 = vadd.f32 %v2200, %v2517
      %v2604 = vadd.f32 %v2205, %v2522
      %v2605 = vadd.f32 %v2208, %v2525
      %v2606 = vadd.f32 %v2213, %v2530
      %v2607 = vadd.f32 %v2216, %v2533
      %v2608 = vadd.f32 %v2221, %v2538
      %v2609 = vadd.f32 %v2224, %v2541
      %v2610 = vadd.f32 %v2229, %v2546
      %v2611 = vadd.f32 %v2232, %v2549
      %v2612 = vadd.f32 %v2237, %v2554
      %v2613 = vadd.f32 %v2240, %v2557
      %v2614 = vadd.f32 %v2245, %v2562
      %v2615 = vadd.f32 %v2248, %v2565
      %v2616 = vadd.f32 %v2253, %v2570
      %v2617 = vadd.f32 %v2256, %v2573
      %v2618 = vadd.f32 %v2261, %v2578
      %v2619 = vadd.f32 %v2264, %v2581
      %s2620 = scalar_lea.vmem %s1, 192
      %v2621 = vld [vmem:[%s2620] sm:$0xf]
      %v2622 = vld [vmem:[%s2620 + $0x4] sm:$0xf]
      %v2623 = vld [vmem:[%s2620 + $0x8] sm:$0xf]
      %v2624 = vld [vmem:[%s2620 + $0xc] sm:$0xf]
      %v2625 = vld [vmem:[%s2620 + $0x10] sm:$0xf]
      %v2626 = vld [vmem:[%s2620 + $0x14] sm:$0xf]
      %v2627 = vld [vmem:[%s2620 + $0x18] sm:$0xf]
      %v2628 = vld [vmem:[%s2620 + $0x1c] sm:$0xf]
      %v2629 = vld [vmem:[%s2620 + $0x20] sm:$0xf]
      %v2630 = vld [vmem:[%s2620 + $0x24] sm:$0xf]
      %v2631 = vld [vmem:[%s2620 + $0x28] sm:$0xf]
      %v2632 = vld [vmem:[%s2620 + $0x2c] sm:$0xf]
      %v2633 = vld [vmem:[%s2620 + $0x30] sm:$0xf]
      %v2634 = vld [vmem:[%s2620 + $0x34] sm:$0xf]
      %v2635 = vld [vmem:[%s2620 + $0x38] sm:$0xf]
      %v2636 = vld [vmem:[%s2620 + $0x3c] sm:$0xf]
      %v2638 = vrot.slane %v1615, 1
      %v2639 = vsel %vm2303, %v2339, %v2638
      %v2657 = vunpack.c.l.b16 %v2621
      %v2658 = vunpack.c.l.b16 %v2622
      %v2659 = vunpack.c.l.b16 %v2623
      %v2660 = vunpack.c.l.b16 %v2624
      %v2661 = vunpack.c.l.b16 %v2625
      %v2662 = vunpack.c.l.b16 %v2626
      %v2663 = vunpack.c.l.b16 %v2627
      %v2664 = vunpack.c.l.b16 %v2628
      %v2665 = vunpack.c.l.b16 %v2629
      %v2666 = vunpack.c.l.b16 %v2630
      %v2667 = vunpack.c.l.b16 %v2631
      %v2668 = vunpack.c.l.b16 %v2632
      %v2669 = vunpack.c.l.b16 %v2633
      %v2670 = vunpack.c.l.b16 %v2634
      %v2671 = vunpack.c.l.b16 %v2635
      %v2672 = vunpack.c.l.b16 %v2636
      %v2673 = vpack.c.b16 %v2658, %v2657
      %v2674 = vpack.c.b16 %v2660, %v2659
      %v2675 = vpack.c.b16 %v2662, %v2661
      %v2676 = vpack.c.b16 %v2664, %v2663
      %v2677 = vpack.c.b16 %v2666, %v2665
      %v2678 = vpack.c.b16 %v2668, %v2667
      %v2679 = vpack.c.b16 %v2670, %v2669
      %v2680 = vpack.c.b16 %v2672, %v2671
      %2689 = vmatprep.subr.bf16.mxu0 0
      %2690 = vmatpush1.bf16.msra.mxu0 %v2673
      %2691 = vmatprep.subr.bf16.mxu0 0
      %2692 = vmatpush1.bf16.msra.mxu0 %v2674
      %2693 = vmatprep.subr.bf16.mxu0 0
      %2694 = vmatpush1.bf16.msra.mxu0 %v2675
      %2695 = vmatprep.subr.bf16.mxu0 0
      %2696 = vmatpush1.bf16.msra.mxu0 %v2676
      %2697 = vmatprep.subr.bf16.mxu0 0
      %2698 = vmatpush1.bf16.msra.mxu0 %v2677
      %2699 = vmatprep.subr.bf16.mxu0 0
      %2700 = vmatpush1.bf16.msra.mxu0 %v2678
      %2701 = vmatprep.subr.bf16.mxu0 0
      %2702 = vmatpush1.bf16.msra.mxu0 %v2679
      %2703 = vmatprep.subr.bf16.mxu0 0
      %2704 = vmatpush1.bf16.msra.mxu0 %v2680
      %2705 = vmatprep.subr.bf16.mxu0 0
      %2706 = vmatpush1.bf16.msra.mxu0 0
      %2707 = vmatprep.subr.bf16.mxu0 0
      %2708 = vmatpush1.bf16.msra.mxu0 0
      %2709 = vmatprep.subr.bf16.mxu0 0
      %2710 = vmatpush1.bf16.msra.mxu0 0
      %2711 = vmatprep.subr.bf16.mxu0 0
      %2712 = vmatpush1.bf16.msra.mxu0 0
      %2713 = vmatprep.subr.bf16.mxu0 0
      %2714 = vmatpush1.bf16.msra.mxu0 0
      %2715 = vmatprep.subr.bf16.mxu0 0
      %2716 = vmatpush1.bf16.msra.mxu0 0
      %2717 = vmatprep.subr.bf16.mxu0 0
      %2718 = vmatpush1.bf16.msra.mxu0 0
      %2719 = vmatprep.subr.bf16.mxu0 0
      %2720 = vmatpush1.bf16.msra.mxu0 0
      %2721 = vmatprep.mubr.bf16.mxu0 0
      %2722 = vmatmul.mubr.bf16.gmra.mrb[0].mxu0 %v2308
      %v2723 = vpop.f32.mrb[0].mxu0
      %v2724 = vadd.f32 0.0, %v2723
      %v2725 = vpop.f32.mrb[0].mxu0
      %v2726 = vpop.f32.mrb[0].mxu0
      %v2727 = vadd.f32 0.0, %v2726
      %v2728 = vpop.f32.mrb[0].mxu0
      %2729 = vmatprep.mubr.bf16.mxu0 0
      %2730 = vmatmul.mubr.bf16.gmra.mrb[0].mxu0 %v2310
      %v2731 = vpop.f32.mrb[0].mxu0
      %v2732 = vadd.f32 0.0, %v2731
      %v2733 = vpop.f32.mrb[0].mxu0
      %v2734 = vpop.f32.mrb[0].mxu0
      %v2735 = vadd.f32 0.0, %v2734
      %v2736 = vpop.f32.mrb[0].mxu0
      %2737 = vmatprep.mubr.bf16.mxu0 0
      %2738 = vmatmul.mubr.bf16.gmra.mrb[0].mxu0 %v2312
      %v2739 = vpop.f32.mrb[0].mxu0
      %v2740 = vadd.f32 0.0, %v2739
      %v2741 = vpop.f32.mrb[0].mxu0
      %v2742 = vpop.f32.mrb[0].mxu0
      %v2743 = vadd.f32 0.0, %v2742
      %v2744 = vpop.f32.mrb[0].mxu0
      %2745 = vmatprep.mubr.bf16.mxu0 0
      %2746 = vmatmul.mubr.bf16.gmra.mrb[0].mxu0 %v2314
      %v2747 = vpop.f32.mrb[0].mxu0
      %v2748 = vadd.f32 0.0, %v2747
      %v2749 = vpop.f32.mrb[0].mxu0
      %v2750 = vpop.f32.mrb[0].mxu0
      %v2751 = vadd.f32 0.0, %v2750
      %v2752 = vpop.f32.mrb[0].mxu0
      %2753 = vmatprep.mubr.bf16.mxu0 0
      %2754 = vmatmul.mubr.bf16.gmra.mrb[0].mxu0 %v2316
      %v2755 = vpop.f32.mrb[0].mxu0
      %v2756 = vadd.f32 0.0, %v2755
      %v2757 = vpop.f32.mrb[0].mxu0
      %v2758 = vpop.f32.mrb[0].mxu0
      %v2759 = vadd.f32 0.0, %v2758
      %v2760 = vpop.f32.mrb[0].mxu0
      %2761 = vmatprep.mubr.bf16.mxu0 0
      %2762 = vmatmul.mubr.bf16.gmra.mrb[0].mxu0 %v2318
      %v2763 = vpop.f32.mrb[0].mxu0
      %v2764 = vadd.f32 0.0, %v2763
      %v2765 = vpop.f32.mrb[0].mxu0
      %v2766 = vpop.f32.mrb[0].mxu0
      %v2767 = vadd.f32 0.0, %v2766
      %v2768 = vpop.f32.mrb[0].mxu0
      %2769 = vmatprep.mubr.bf16.mxu0 0
      %2770 = vmatmul.mubr.bf16.gmra.mrb[0].mxu0 %v2320
      %v2771 = vpop.f32.mrb[0].mxu0
      %v2772 = vadd.f32 0.0, %v2771
      %v2773 = vpop.f32.mrb[0].mxu0
      %v2774 = vpop.f32.mrb[0].mxu0
      %v2775 = vadd.f32 0.0, %v2774
      %v2776 = vpop.f32.mrb[0].mxu0
      %2777 = vmatprep.mubr.bf16.mxu0 0
      %2778 = vmatmul.mubr.bf16.gmra.mrb[0].mxu0 %v2322
      %v2779 = vpop.f32.mrb[0].mxu0
      %v2780 = vadd.f32 0.0, %v2779
      %v2781 = vpop.f32.mrb[0].mxu0
      %v2782 = vpop.f32.mrb[0].mxu0
      %v2783 = vadd.f32 0.0, %v2782
      %v2784 = vpop.f32.mrb[0].mxu0
      %2785 = vmatprep.mubr.bf16.mxu0 0
      %2786 = vmatmul.mubr.bf16.gmra.mrb[0].mxu0 %v2324
      %v2787 = vpop.f32.mrb[0].mxu0
      %v2788 = vadd.f32 0.0, %v2787
      %v2789 = vpop.f32.mrb[0].mxu0
      %v2790 = vpop.f32.mrb[0].mxu0
      %v2791 = vadd.f32 0.0, %v2790
      %v2792 = vpop.f32.mrb[0].mxu0
      %2793 = vmatprep.mubr.bf16.mxu0 0
      %2794 = vmatmul.mubr.bf16.gmra.mrb[0].mxu0 %v2326
      %v2795 = vpop.f32.mrb[0].mxu0
      %v2796 = vadd.f32 0.0, %v2795
      %v2797 = vpop.f32.mrb[0].mxu0
      %v2798 = vpop.f32.mrb[0].mxu0
      %v2799 = vadd.f32 0.0, %v2798
      %v2800 = vpop.f32.mrb[0].mxu0
      %2801 = vmatprep.mubr.bf16.mxu0 0
      %2802 = vmatmul.mubr.bf16.gmra.mrb[0].mxu0 %v2328
      %v2803 = vpop.f32.mrb[0].mxu0
      %v2804 = vadd.f32 0.0, %v2803
      %v2805 = vpop.f32.mrb[0].mxu0
      %v2806 = vpop.f32.mrb[0].mxu0
      %v2807 = vadd.f32 0.0, %v2806
      %v2808 = vpop.f32.mrb[0].mxu0
      %2809 = vmatprep.mubr.bf16.mxu0 0
      %2810 = vmatmul.mubr.bf16.gmra.mrb[0].mxu0 %v2330
      %v2811 = vpop.f32.mrb[0].mxu0
      %v2812 = vadd.f32 0.0, %v2811
      %v2813 = vpop.f32.mrb[0].mxu0
      %v2814 = vpop.f32.mrb[0].mxu0
      %v2815 = vadd.f32 0.0, %v2814
      %v2816 = vpop.f32.mrb[0].mxu0
      %2817 = vmatprep.mubr.bf16.mxu0 0
      %2818 = vmatmul.mubr.bf16.gmra.mrb[0].mxu0 %v2332
      %v2819 = vpop.f32.mrb[0].mxu0
      %v2820 = vadd.f32 0.0, %v2819
      %v2821 = vpop.f32.mrb[0].mxu0
      %v2822 = vpop.f32.mrb[0].mxu0
      %v2823 = vadd.f32 0.0, %v2822
      %v2824 = vpop.f32.mrb[0].mxu0
      %2825 = vmatprep.mubr.bf16.mxu0 0
      %2826 = vmatmul.mubr.bf16.gmra.mrb[0].mxu0 %v2334
      %v2827 = vpop.f32.mrb[0].mxu0
      %v2828 = vadd.f32 0.0, %v2827
      %v2829 = vpop.f32.mrb[0].mxu0
      %v2830 = vpop.f32.mrb[0].mxu0
      %v2831 = vadd.f32 0.0, %v2830
      %v2832 = vpop.f32.mrb[0].mxu0
      %2833 = vmatprep.mubr.bf16.mxu0 0
      %2834 = vmatmul.mubr.bf16.gmra.mrb[0].mxu0 %v2336
      %v2835 = vpop.f32.mrb[0].mxu0
      %v2836 = vadd.f32 0.0, %v2835
      %v2837 = vpop.f32.mrb[0].mxu0
      %v2838 = vpop.f32.mrb[0].mxu0
      %v2839 = vadd.f32 0.0, %v2838
      %v2840 = vpop.f32.mrb[0].mxu0
      %2841 = vmatprep.mubr.bf16.mxu0 0
      %2842 = vmatmul.mubr.bf16.gmra.mrb[0].mxu0 %v2338
      %v2843 = vpop.f32.mrb[0].mxu0
      %v2844 = vadd.f32 0.0, %v2843
      %v2845 = vpop.f32.mrb[0].mxu0
      %v2846 = vpop.f32.mrb[0].mxu0
      %v2847 = vadd.f32 0.0, %v2846
      %v2848 = vpop.f32.mrb[0].mxu0
      %2849 = vmatprep.mubr.bf16.mxu0 0
      %2850 = vmatmul.mubr.bf16.gmra.mrb[0].mxu0 %v2340
      %v2851 = vpop.f32.mrb[0].mxu0
      %v2852 = vadd.f32 0.0, %v2851
      %v2853 = vpop.f32.mrb[0].mxu0
      %v2854 = vpop.f32.mrb[0].mxu0
      %v2855 = vadd.f32 0.0, %v2854
      %v2856 = vpop.f32.mrb[0].mxu0
      %2857 = vmatprep.mubr.bf16.mxu0 0
      %2858 = vmatmul.mubr.bf16.gmra.mrb[0].mxu0 %v2639
      %v2859 = vpop.f32.mrb[0].mxu0
      %v2860 = vadd.f32 0.0, %v2859
      %v2861 = vpop.f32.mrb[0].mxu0
      %v2862 = vpop.f32.mrb[0].mxu0
      %v2863 = vadd.f32 0.0, %v2862
      %v2864 = vpop.f32.mrb[0].mxu0
      %2865 = vdwg.mxu0
      %v2866 = vadd.f32 %v2584, %v2724
      %v2867 = vadd.f32 %v2585, %v2727
      %v2868 = vadd.f32 %v2586, %v2732
      %v2869 = vadd.f32 %v2587, %v2735
      %v2870 = vadd.f32 %v2588, %v2740
      %v2871 = vadd.f32 %v2589, %v2743
      %v2872 = vadd.f32 %v2590, %v2748
      %v2873 = vadd.f32 %v2591, %v2751
      %v2874 = vadd.f32 %v2592, %v2756
      %v2875 = vadd.f32 %v2593, %v2759
      %v2876 = vadd.f32 %v2594, %v2764
      %v2877 = vadd.f32 %v2595, %v2767
      %v2878 = vadd.f32 %v2596, %v2772
      %v2879 = vadd.f32 %v2597, %v2775
      %v2880 = vadd.f32 %v2598, %v2780
      %v2881 = vadd.f32 %v2599, %v2783
      %v2882 = vadd.f32 %v2600, %v2788
      %v2883 = vadd.f32 %v2601, %v2791
      %v2884 = vadd.f32 %v2602, %v2796
      %v2885 = vadd.f32 %v2603, %v2799
      %v2886 = vadd.f32 %v2604, %v2804
      %v2887 = vadd.f32 %v2605, %v2807
      %v2888 = vadd.f32 %v2606, %v2812
      %v2889 = vadd.f32 %v2607, %v2815
      %v2890 = vadd.f32 %v2608, %v2820
      %v2891 = vadd.f32 %v2609, %v2823
      %v2892 = vadd.f32 %v2610, %v2828
      %v2893 = vadd.f32 %v2611, %v2831
      %v2894 = vadd.f32 %v2612, %v2836
      %v2895 = vadd.f32 %v2613, %v2839
      %v2896 = vadd.f32 %v2614, %v2844
      %v2897 = vadd.f32 %v2615, %v2847
      %v2898 = vadd.f32 %v2616, %v2852
      %v2899 = vadd.f32 %v2617, %v2855
      %v2900 = vadd.f32 %v2618, %v2860
      %v2901 = vadd.f32 %v2619, %v2863
      %s2902 = scalar_lea.vmem %s1, 256
      %v2903 = vld [vmem:[%s2902] sm:$0xf]
      %v2904 = vld [vmem:[%s2902 + $0x4] sm:$0xf]
      %v2905 = vld [vmem:[%s2902 + $0x8] sm:$0xf]
      %v2906 = vld [vmem:[%s2902 + $0xc] sm:$0xf]
      %v2907 = vld [vmem:[%s2902 + $0x10] sm:$0xf]
      %v2908 = vld [vmem:[%s2902 + $0x14] sm:$0xf]
      %v2909 = vld [vmem:[%s2902 + $0x18] sm:$0xf]
      %v2910 = vld [vmem:[%s2902 + $0x1c] sm:$0xf]
      %v2911 = vld [vmem:[%s2902 + $0x20] sm:$0xf]
      %v2912 = vld [vmem:[%s2902 + $0x24] sm:$0xf]
      %v2913 = vld [vmem:[%s2902 + $0x28] sm:$0xf]
      %v2914 = vld [vmem:[%s2902 + $0x2c] sm:$0xf]
      %v2915 = vld [vmem:[%s2902 + $0x30] sm:$0xf]
      %v2916 = vld [vmem:[%s2902 + $0x34] sm:$0xf]
      %v2917 = vld [vmem:[%s2902 + $0x38] sm:$0xf]
      %v2918 = vld [vmem:[%s2902 + $0x3c] sm:$0xf]
      %vm2919 = vsmask.f32 6400
      %v2920 = vrot.slane %v1663, 1
      %v2921 = vrot.slane %v1659, 2
      %v2922 = vor.u32 %v2920, %v2921
      %v2923 = vrot.slane %v1671, 1
      %v2924 = vrot.slane %v1667, 2
      %v2925 = vor.u32 %v2923, %v2924
      %v2926 = vsel %vm2919, %v2922, %v2925
      %v2927 = vrot.slane %v1679, 1
      %v2928 = vrot.slane %v1675, 2
      %v2929 = vor.u32 %v2927, %v2928
      %v2930 = vsel %vm2919, %v2925, %v2929
      %v2931 = vrot.slane %v1687, 1
      %v2932 = vrot.slane %v1683, 2
      %v2933 = vor.u32 %v2931, %v2932
      %v2934 = vsel %vm2919, %v2929, %v2933
      %v2935 = vrot.slane %v1695, 1
      %v2936 = vrot.slane %v1691, 2
      %v2937 = vor.u32 %v2935, %v2936
      %v2938 = vsel %vm2919, %v2933, %v2937
      %v2939 = vrot.slane %v1703, 1
      %v2940 = vrot.slane %v1699, 2
      %v2941 = vor.u32 %v2939, %v2940
      %v2942 = vsel %vm2919, %v2937, %v2941
      %v2943 = vrot.slane %v1711, 1
      %v2944 = vrot.slane %v1707, 2
      %v2945 = vor.u32 %v2943, %v2944
      %v2946 = vsel %vm2919, %v2941, %v2945
      %v2947 = vrot.slane %v1719, 1
      %v2948 = vrot.slane %v1715, 2
      %v2949 = vor.u32 %v2947, %v2948
      %v2950 = vsel %vm2919, %v2945, %v2949
      %v2951 = vrot.slane %v1727, 1
      %v2952 = vrot.slane %v1723, 2
      %v2953 = vor.u32 %v2951, %v2952
      %v2954 = vsel %vm2919, %v2949, %v2953
      %v2955 = vrot.slane %v1735, 1
      %v2956 = vrot.slane %v1731, 2
      %v2957 = vor.u32 %v2955, %v2956
      %v2958 = vsel %vm2919, %v2953, %v2957
      %v2959 = vrot.slane %v1743, 1
      %v2960 = vrot.slane %v1739, 2
      %v2961 = vor.u32 %v2959, %v2960
      %v2962 = vsel %vm2919, %v2957, %v2961
      %v2963 = vrot.slane %v1751, 1
      %v2964 = vrot.slane %v1747, 2
      %v2965 = vor.u32 %v2963, %v2964
      %v2966 = vsel %vm2919, %v2961, %v2965
      %v2967 = vrot.slane %v1759, 1
      %v2968 = vrot.slane %v1755, 2
      %v2969 = vor.u32 %v2967, %v2968
      %v2970 = vsel %vm2919, %v2965, %v2969
      %v2971 = vrot.slane %v1767, 1
      %v2972 = vrot.slane %v1763, 2
      %v2973 = vor.u32 %v2971, %v2972
      %v2974 = vsel %vm2919, %v2969, %v2973
      %v2975 = vrot.slane %v1775, 1
      %v2976 = vrot.slane %v1771, 2
      %v2977 = vor.u32 %v2975, %v2976
      %v2978 = vsel %vm2919, %v2973, %v2977
      %v2979 = vrot.slane %v1783, 1
      %v2980 = vrot.slane %v1779, 2
      %v2981 = vor.u32 %v2979, %v2980
      %v2982 = vsel %vm2919, %v2977, %v2981
      %v2983 = vrot.slane %v1791, 1
      %v2984 = vrot.slane %v1787, 2
      %v2985 = vor.u32 %v2983, %v2984
      %v2986 = vsel %vm2919, %v2981, %v2985
      %v2987 = vshrl.u32 %v1614, 16
      %v2989 = vrot.slane %v2987, 1
      %v2990 = vrot.slane %v1795, 2
      %v2991 = vor.u32 %v2989, %v2990
      %v2992 = vsel %vm2919, %v2985, %v2991
      %v2994 = vshrl.u32 %v1615, 16
      %v2996 = vrot.slane %v2994, 1
      %v2997 = vshll.u32 %v1615, 16
      %v2999 = vrot.slane %v2997, 2
      %v3000 = vor.u32 %v2996, %v2999
      %v3001 = vsel %vm2919, %v2991, %v3000
      %v3036 = vunpack.c.l.b16 %v2903
      %v3037 = vunpack.c.l.b16 %v2904
      %v3038 = vunpack.c.l.b16 %v2905
      %v3039 = vunpack.c.l.b16 %v2906
      %v3040 = vunpack.c.l.b16 %v2907
      %v3041 = vunpack.c.l.b16 %v2908
      %v3042 = vunpack.c.l.b16 %v2909
      %v3043 = vunpack.c.l.b16 %v2910
      %v3044 = vunpack.c.l.b16 %v2911
      %v3045 = vunpack.c.l.b16 %v2912
      %v3046 = vunpack.c.l.b16 %v2913
      %v3047 = vunpack.c.l.b16 %v2914
      %v3048 = vunpack.c.l.b16 %v2915
      %v3049 = vunpack.c.l.b16 %v2916
      %v3050 = vunpack.c.l.b16 %v2917
      %v3051 = vunpack.c.l.b16 %v2918
      %v3052 = vpack.c.b16 %v3037, %v3036
      %v3053 = vpack.c.b16 %v3039, %v3038
      %v3054 = vpack.c.b16 %v3041, %v3040
      %v3055 = vpack.c.b16 %v3043, %v3042
      %v3056 = vpack.c.b16 %v3045, %v3044
      %v3057 = vpack.c.b16 %v3047, %v3046
      %v3058 = vpack.c.b16 %v3049, %v3048
      %v3059 = vpack.c.b16 %v3051, %v3050
      %3068 = vmatprep.subr.bf16.mxu0 0
      %3069 = vmatpush1.bf16.msra.mxu0 %v3052
      %3070 = vmatprep.subr.bf16.mxu0 0
      %3071 = vmatpush1.bf16.msra.mxu0 %v3053
      %3072 = vmatprep.subr.bf16.mxu0 0
      %3073 = vmatpush1.bf16.msra.mxu0 %v3054
      %3074 = vmatprep.subr.bf16.mxu0 0
      %3075 = vmatpush1.bf16.msra.mxu0 %v3055
      %3076 = vmatprep.subr.bf16.mxu0 0
      %3077 = vmatpush1.bf16.msra.mxu0 %v3056
      %3078 = vmatprep.subr.bf16.mxu0 0
      %3079 = vmatpush1.bf16.msra.mxu0 %v3057
      %3080 = vmatprep.subr.bf16.mxu0 0
      %3081 = vmatpush1.bf16.msra.mxu0 %v3058
      %3082 = vmatprep.subr.bf16.mxu0 0
      %3083 = vmatpush1.bf16.msra.mxu0 %v3059
      %3084 = vmatprep.subr.bf16.mxu0 0
      %3085 = vmatpush1.bf16.msra.mxu0 0
      %3086 = vmatprep.subr.bf16.mxu0 0
      %3087 = vmatpush1.bf16.msra.mxu0 0
      %3088 = vmatprep.subr.bf16.mxu0 0
      %3089 = vmatpush1.bf16.msra.mxu0 0
      %3090 = vmatprep.subr.bf16.mxu0 0
      %3091 = vmatpush1.bf16.msra.mxu0 0
      %3092 = vmatprep.subr.bf16.mxu0 0
      %3093 = vmatpush1.bf16.msra.mxu0 0
      %3094 = vmatprep.subr.bf16.mxu0 0
      %3095 = vmatpush1.bf16.msra.mxu0 0
      %3096 = vmatprep.subr.bf16.mxu0 0
      %3097 = vmatpush1.bf16.msra.mxu0 0
      %3098 = vmatprep.subr.bf16.mxu0 0
      %3099 = vmatpush1.bf16.msra.mxu0 0
      %3100 = vmatprep.mubr.bf16.mxu0 0
      %3101 = vmatmul.mubr.bf16.gmra.mrb[0].mxu0 %v2926
      %v3102 = vpop.f32.mrb[0].mxu0
      %v3103 = vadd.f32 0.0, %v3102
      %v3104 = vpop.f32.mrb[0].mxu0
      %v3105 = vpop.f32.mrb[0].mxu0
      %v3106 = vadd.f32 0.0, %v3105
      %v3107 = vpop.f32.mrb[0].mxu0
      %3108 = vmatprep.mubr.bf16.mxu0 0
      %3109 = vmatmul.mubr.bf16.gmra.mrb[0].mxu0 %v2930
      %v3110 = vpop.f32.mrb[0].mxu0
      %v3111 = vadd.f32 0.0, %v3110
      %v3112 = vpop.f32.mrb[0].mxu0
      %v3113 = vpop.f32.mrb[0].mxu0
      %v3114 = vadd.f32 0.0, %v3113
      %v3115 = vpop.f32.mrb[0].mxu0
      %3116 = vmatprep.mubr.bf16.mxu0 0
      %3117 = vmatmul.mubr.bf16.gmra.mrb[0].mxu0 %v2934
      %v3118 = vpop.f32.mrb[0].mxu0
      %v3119 = vadd.f32 0.0, %v3118
      %v3120 = vpop.f32.mrb[0].mxu0
      %v3121 = vpop.f32.mrb[0].mxu0
      %v3122 = vadd.f32 0.0, %v3121
      %v3123 = vpop.f32.mrb[0].mxu0
      %3124 = vmatprep.mubr.bf16.mxu0 0
      %3125 = vmatmul.mubr.bf16.gmra.mrb[0].mxu0 %v2938
      %v3126 = vpop.f32.mrb[0].mxu0
      %v3127 = vadd.f32 0.0, %v3126
      %v3128 = vpop.f32.mrb[0].mxu0
      %v3129 = vpop.f32.mrb[0].mxu0
      %v3130 = vadd.f32 0.0, %v3129
      %v3131 = vpop.f32.mrb[0].mxu0
      %3132 = vmatprep.mubr.bf16.mxu0 0
      %3133 = vmatmul.mubr.bf16.gmra.mrb[0].mxu0 %v2942
      %v3134 = vpop.f32.mrb[0].mxu0
      %v3135 = vadd.f32 0.0, %v3134
      %v3136 = vpop.f32.mrb[0].mxu0
      %v3137 = vpop.f32.mrb[0].mxu0
      %v3138 = vadd.f32 0.0, %v3137
      %v3139 = vpop.f32.mrb[0].mxu0
      %3140 = vmatprep.mubr.bf16.mxu0 0
      %3141 = vmatmul.mubr.bf16.gmra.mrb[0].mxu0 %v2946
      %v3142 = vpop.f32.mrb[0].mxu0
      %v3143 = vadd.f32 0.0, %v3142
      %v3144 = vpop.f32.mrb[0].mxu0
      %v3145 = vpop.f32.mrb[0].mxu0
      %v3146 = vadd.f32 0.0, %v3145
      %v3147 = vpop.f32.mrb[0].mxu0
      %3148 = vmatprep.mubr.bf16.mxu0 0
      %3149 = vmatmul.mubr.bf16.gmra.mrb[0].mxu0 %v2950
      %v3150 = vpop.f32.mrb[0].mxu0
      %v3151 = vadd.f32 0.0, %v3150
      %v3152 = vpop.f32.mrb[0].mxu0
      %v3153 = vpop.f32.mrb[0].mxu0
      %v3154 = vadd.f32 0.0, %v3153
      %v3155 = vpop.f32.mrb[0].mxu0
      %3156 = vmatprep.mubr.bf16.mxu0 0
      %3157 = vmatmul.mubr.bf16.gmra.mrb[0].mxu0 %v2954
      %v3158 = vpop.f32.mrb[0].mxu0
      %v3159 = vadd.f32 0.0, %v3158
      %v3160 = vpop.f32.mrb[0].mxu0
      %v3161 = vpop.f32.mrb[0].mxu0
      %v3162 = vadd.f32 0.0, %v3161
      %v3163 = vpop.f32.mrb[0].mxu0
      %3164 = vmatprep.mubr.bf16.mxu0 0
      %3165 = vmatmul.mubr.bf16.gmra.mrb[0].mxu0 %v2958
      %v3166 = vpop.f32.mrb[0].mxu0
      %v3167 = vadd.f32 0.0, %v3166
      %v3168 = vpop.f32.mrb[0].mxu0
      %v3169 = vpop.f32.mrb[0].mxu0
      %v3170 = vadd.f32 0.0, %v3169
      %v3171 = vpop.f32.mrb[0].mxu0
      %3172 = vmatprep.mubr.bf16.mxu0 0
      %3173 = vmatmul.mubr.bf16.gmra.mrb[0].mxu0 %v2962
      %v3174 = vpop.f32.mrb[0].mxu0
      %v3175 = vadd.f32 0.0, %v3174
      %v3176 = vpop.f32.mrb[0].mxu0
      %v3177 = vpop.f32.mrb[0].mxu0
      %v3178 = vadd.f32 0.0, %v3177
      %v3179 = vpop.f32.mrb[0].mxu0
      %3180 = vmatprep.mubr.bf16.mxu0 0
      %3181 = vmatmul.mubr.bf16.gmra.mrb[0].mxu0 %v2966
      %v3182 = vpop.f32.mrb[0].mxu0
      %v3183 = vadd.f32 0.0, %v3182
      %v3184 = vpop.f32.mrb[0].mxu0
      %v3185 = vpop.f32.mrb[0].mxu0
      %v3186 = vadd.f32 0.0, %v3185
      %v3187 = vpop.f32.mrb[0].mxu0
      %3188 = vmatprep.mubr.bf16.mxu0 0
      %3189 = vmatmul.mubr.bf16.gmra.mrb[0].mxu0 %v2970
      %v3190 = vpop.f32.mrb[0].mxu0
      %v3191 = vadd.f32 0.0, %v3190
      %v3192 = vpop.f32.mrb[0].mxu0
      %v3193 = vpop.f32.mrb[0].mxu0
      %v3194 = vadd.f32 0.0, %v3193
      %v3195 = vpop.f32.mrb[0].mxu0
      %3196 = vmatprep.mubr.bf16.mxu0 0
      %3197 = vmatmul.mubr.bf16.gmra.mrb[0].mxu0 %v2974
      %v3198 = vpop.f32.mrb[0].mxu0
      %v3199 = vadd.f32 0.0, %v3198
      %v3200 = vpop.f32.mrb[0].mxu0
      %v3201 = vpop.f32.mrb[0].mxu0
      %v3202 = vadd.f32 0.0, %v3201
      %v3203 = vpop.f32.mrb[0].mxu0
      %3204 = vmatprep.mubr.bf16.mxu0 0
      %3205 = vmatmul.mubr.bf16.gmra.mrb[0].mxu0 %v2978
      %v3206 = vpop.f32.mrb[0].mxu0
      %v3207 = vadd.f32 0.0, %v3206
      %v3208 = vpop.f32.mrb[0].mxu0
      %v3209 = vpop.f32.mrb[0].mxu0
      %v3210 = vadd.f32 0.0, %v3209
      %v3211 = vpop.f32.mrb[0].mxu0
      %3212 = vmatprep.mubr.bf16.mxu0 0
      %3213 = vmatmul.mubr.bf16.gmra.mrb[0].mxu0 %v2982
      %v3214 = vpop.f32.mrb[0].mxu0
      %v3215 = vadd.f32 0.0, %v3214
      %v3216 = vpop.f32.mrb[0].mxu0
      %v3217 = vpop.f32.mrb[0].mxu0
      %v3218 = vadd.f32 0.0, %v3217
      %v3219 = vpop.f32.mrb[0].mxu0
      %3220 = vmatprep.mubr.bf16.mxu0 0
      %3221 = vmatmul.mubr.bf16.gmra.mrb[0].mxu0 %v2986
      %v3222 = vpop.f32.mrb[0].mxu0
      %v3223 = vadd.f32 0.0, %v3222
      %v3224 = vpop.f32.mrb[0].mxu0
      %v3225 = vpop.f32.mrb[0].mxu0
      %v3226 = vadd.f32 0.0, %v3225
      %v3227 = vpop.f32.mrb[0].mxu0
      %3228 = vmatprep.mubr.bf16.mxu0 0
      %3229 = vmatmul.mubr.bf16.gmra.mrb[0].mxu0 %v2992
      %v3230 = vpop.f32.mrb[0].mxu0
      %v3231 = vadd.f32 0.0, %v3230
      %v3232 = vpop.f32.mrb[0].mxu0
      %v3233 = vpop.f32.mrb[0].mxu0
      %v3234 = vadd.f32 0.0, %v3233
      %v3235 = vpop.f32.mrb[0].mxu0
      %3236 = vmatprep.mubr.bf16.mxu0 0
      %3237 = vmatmul.mubr.bf16.gmra.mrb[0].mxu0 %v3001
      %v3238 = vpop.f32.mrb[0].mxu0
      %v3239 = vadd.f32 0.0, %v3238
      %v3240 = vpop.f32.mrb[0].mxu0
      %v3241 = vpop.f32.mrb[0].mxu0
      %v3242 = vadd.f32 0.0, %v3241
      %v3243 = vpop.f32.mrb[0].mxu0
      %3244 = vdwg.mxu0
      %v3245 = vadd.f32 %v2866, %v3103
      %v3246 = vadd.f32 %v2867, %v3106
      %v3247 = vadd.f32 %v2868, %v3111
      %v3248 = vadd.f32 %v2869, %v3114
      %v3249 = vadd.f32 %v2870, %v3119
      %v3250 = vadd.f32 %v2871, %v3122
      %v3251 = vadd.f32 %v2872, %v3127
      %v3252 = vadd.f32 %v2873, %v3130
      %v3253 = vadd.f32 %v2874, %v3135
      %v3254 = vadd.f32 %v2875, %v3138
      %v3255 = vadd.f32 %v2876, %v3143
      %v3256 = vadd.f32 %v2877, %v3146
      %v3257 = vadd.f32 %v2878, %v3151
      %v3258 = vadd.f32 %v2879, %v3154
      %v3259 = vadd.f32 %v2880, %v3159
      %v3260 = vadd.f32 %v2881, %v3162
      %v3261 = vadd.f32 %v2882, %v3167
      %v3262 = vadd.f32 %v2883, %v3170
      %v3263 = vadd.f32 %v2884, %v3175
      %v3264 = vadd.f32 %v2885, %v3178
      %v3265 = vadd.f32 %v2886, %v3183
      %v3266 = vadd.f32 %v2887, %v3186
      %v3267 = vadd.f32 %v2888, %v3191
      %v3268 = vadd.f32 %v2889, %v3194
      %v3269 = vadd.f32 %v2890, %v3199
      %v3270 = vadd.f32 %v2891, %v3202
      %v3271 = vadd.f32 %v2892, %v3207
      %v3272 = vadd.f32 %v2893, %v3210
      %v3273 = vadd.f32 %v2894, %v3215
      %v3274 = vadd.f32 %v2895, %v3218
      %v3275 = vadd.f32 %v2896, %v3223
      %v3276 = vadd.f32 %v2897, %v3226
      %v3277 = vadd.f32 %v2898, %v3231
      %v3278 = vadd.f32 %v2899, %v3234
      %v3279 = vadd.f32 %v2900, %v3239
      %v3280 = vadd.f32 %v2901, %v3242
      %s3281 = scalar_lea.vmem %s1, 320
      %v3282 = vld [vmem:[%s3281] sm:$0xf]
      %v3283 = vld [vmem:[%s3281 + $0x4] sm:$0xf]
      %v3284 = vld [vmem:[%s3281 + $0x8] sm:$0xf]
      %v3285 = vld [vmem:[%s3281 + $0xc] sm:$0xf]
      %v3286 = vld [vmem:[%s3281 + $0x10] sm:$0xf]
      %v3287 = vld [vmem:[%s3281 + $0x14] sm:$0xf]
      %v3288 = vld [vmem:[%s3281 + $0x18] sm:$0xf]
      %v3289 = vld [vmem:[%s3281 + $0x1c] sm:$0xf]
      %v3290 = vld [vmem:[%s3281 + $0x20] sm:$0xf]
      %v3291 = vld [vmem:[%s3281 + $0x24] sm:$0xf]
      %v3292 = vld [vmem:[%s3281 + $0x28] sm:$0xf]
      %v3293 = vld [vmem:[%s3281 + $0x2c] sm:$0xf]
      %v3294 = vld [vmem:[%s3281 + $0x30] sm:$0xf]
      %v3295 = vld [vmem:[%s3281 + $0x34] sm:$0xf]
      %v3296 = vld [vmem:[%s3281 + $0x38] sm:$0xf]
      %v3297 = vld [vmem:[%s3281 + $0x3c] sm:$0xf]
      %vm3298 = vcmask 1045504
      %v3299 = vrot.slane %v1597, 2
      %v3300 = vrot.slane %v1598, 2
      %v3301 = vsel %vm3298, %v3299, %v3300
      %v3302 = vrot.slane %v1599, 2
      %v3303 = vsel %vm3298, %v3300, %v3302
      %v3304 = vrot.slane %v1600, 2
      %v3305 = vsel %vm3298, %v3302, %v3304
      %v3306 = vrot.slane %v1601, 2
      %v3307 = vsel %vm3298, %v3304, %v3306
      %v3308 = vrot.slane %v1602, 2
      %v3309 = vsel %vm3298, %v3306, %v3308
      %v3310 = vrot.slane %v1603, 2
      %v3311 = vsel %vm3298, %v3308, %v3310
      %v3312 = vrot.slane %v1604, 2
      %v3313 = vsel %vm3298, %v3310, %v3312
      %v3314 = vrot.slane %v1605, 2
      %v3315 = vsel %vm3298, %v3312, %v3314
      %v3316 = vrot.slane %v1606, 2
      %v3317 = vsel %vm3298, %v3314, %v3316
      %v3318 = vrot.slane %v1607, 2
      %v3319 = vsel %vm3298, %v3316, %v3318
      %v3320 = vrot.slane %v1608, 2
      %v3321 = vsel %vm3298, %v3318, %v3320
      %v3322 = vrot.slane %v1609, 2
      %v3323 = vsel %vm3298, %v3320, %v3322
      %v3324 = vrot.slane %v1610, 2
      %v3325 = vsel %vm3298, %v3322, %v3324
      %v3326 = vrot.slane %v1611, 2
      %v3327 = vsel %vm3298, %v3324, %v3326
      %v3328 = vrot.slane %v1612, 2
      %v3329 = vsel %vm3298, %v3326, %v3328
      %v3330 = vrot.slane %v1613, 2
      %v3331 = vsel %vm3298, %v3328, %v3330
      %v3332 = vrot.slane %v1614, 2
      %v3333 = vsel %vm3298, %v3330, %v3332
      %v3334 = vrot.slane %v1615, 2
      %v3335 = vsel %vm3298, %v3332, %v3334
      %v3370 = vunpack.c.l.b16 %v3282
      %v3371 = vunpack.c.l.b16 %v3283
      %v3372 = vunpack.c.l.b16 %v3284
      %v3373 = vunpack.c.l.b16 %v3285
      %v3374 = vunpack.c.l.b16 %v3286
      %v3375 = vunpack.c.l.b16 %v3287
      %v3376 = vunpack.c.l.b16 %v3288
      %v3377 = vunpack.c.l.b16 %v3289
      %v3378 = vunpack.c.l.b16 %v3290
      %v3379 = vunpack.c.l.b16 %v3291
      %v3380 = vunpack.c.l.b16 %v3292
      %v3381 = vunpack.c.l.b16 %v3293
      %v3382 = vunpack.c.l.b16 %v3294
      %v3383 = vunpack.c.l.b16 %v3295
      %v3384 = vunpack.c.l.b16 %v3296
      %v3385 = vunpack.c.l.b16 %v3297
      %v3386 = vpack.c.b16 %v3371, %v3370
      %v3387 = vpack.c.b16 %v3373, %v3372
      %v3388 = vpack.c.b16 %v3375, %v3374
      %v3389 = vpack.c.b16 %v3377, %v3376
      %v3390 = vpack.c.b16 %v3379, %v3378
      %v3391 = vpack.c.b16 %v3381, %v3380
      %v3392 = vpack.c.b16 %v3383, %v3382
      %v3393 = vpack.c.b16 %v3385, %v3384
      %3402 = vmatprep.subr.bf16.mxu0 0
      %3403 = vmatpush1.bf16.msra.mxu0 %v3386
      %3404 = vmatprep.subr.bf16.mxu0 0
      %3405 = vmatpush1.bf16.msra.mxu0 %v3387
      %3406 = vmatprep.subr.bf16.mxu0 0
      %3407 = vmatpush1.bf16.msra.mxu0 %v3388
      %3408 = vmatprep.subr.bf16.mxu0 0
      %3409 = vmatpush1.bf16.msra.mxu0 %v3389
      %3410 = vmatprep.subr.bf16.mxu0 0
      %3411 = vmatpush1.bf16.msra.mxu0 %v3390
      %3412 = vmatprep.subr.bf16.mxu0 0
      %3413 = vmatpush1.bf16.msra.mxu0 %v3391
      %3414 = vmatprep.subr.bf16.mxu0 0
      %3415 = vmatpush1.bf16.msra.mxu0 %v3392
      %3416 = vmatprep.subr.bf16.mxu0 0
      %3417 = vmatpush1.bf16.msra.mxu0 %v3393
      %3418 = vmatprep.subr.bf16.mxu0 0
      %3419 = vmatpush1.bf16.msra.mxu0 0
      %3420 = vmatprep.subr.bf16.mxu0 0
      %3421 = vmatpush1.bf16.msra.mxu0 0
      %3422 = vmatprep.subr.bf16.mxu0 0
      %3423 = vmatpush1.bf16.msra.mxu0 0
      %3424 = vmatprep.subr.bf16.mxu0 0
      %3425 = vmatpush1.bf16.msra.mxu0 0
      %3426 = vmatprep.subr.bf16.mxu0 0
      %3427 = vmatpush1.bf16.msra.mxu0 0
      %3428 = vmatprep.subr.bf16.mxu0 0
      %3429 = vmatpush1.bf16.msra.mxu0 0
      %3430 = vmatprep.subr.bf16.mxu0 0
      %3431 = vmatpush1.bf16.msra.mxu0 0
      %3432 = vmatprep.subr.bf16.mxu0 0
      %3433 = vmatpush1.bf16.msra.mxu0 0
      %3434 = vmatprep.mubr.bf16.mxu0 0
      %3435 = vmatmul.mubr.bf16.gmra.mrb[0].mxu0 %v3301
      %v3436 = vpop.f32.mrb[0].mxu0
      %v3437 = vadd.f32 0.0, %v3436
      %v3438 = vpop.f32.mrb[0].mxu0
      %v3439 = vpop.f32.mrb[0].mxu0
      %v3440 = vadd.f32 0.0, %v3439
      %v3441 = vpop.f32.mrb[0].mxu0
      %3442 = vmatprep.mubr.bf16.mxu0 0
      %3443 = vmatmul.mubr.bf16.gmra.mrb[0].mxu0 %v3303
      %v3444 = vpop.f32.mrb[0].mxu0
      %v3445 = vadd.f32 0.0, %v3444
      %v3446 = vpop.f32.mrb[0].mxu0
      %v3447 = vpop.f32.mrb[0].mxu0
      %v3448 = vadd.f32 0.0, %v3447
      %v3449 = vpop.f32.mrb[0].mxu0
      %3450 = vmatprep.mubr.bf16.mxu0 0
      %3451 = vmatmul.mubr.bf16.gmra.mrb[0].mxu0 %v3305
      %v3452 = vpop.f32.mrb[0].mxu0
      %v3453 = vadd.f32 0.0, %v3452
      %v3454 = vpop.f32.mrb[0].mxu0
      %v3455 = vpop.f32.mrb[0].mxu0
      %v3456 = vadd.f32 0.0, %v3455
      %v3457 = vpop.f32.mrb[0].mxu0
      %3458 = vmatprep.mubr.bf16.mxu0 0
      %3459 = vmatmul.mubr.bf16.gmra.mrb[0].mxu0 %v3307
      %v3460 = vpop.f32.mrb[0].mxu0
      %v3461 = vadd.f32 0.0, %v3460
      %v3462 = vpop.f32.mrb[0].mxu0
      %v3463 = vpop.f32.mrb[0].mxu0
      %v3464 = vadd.f32 0.0, %v3463
      %v3465 = vpop.f32.mrb[0].mxu0
      %3466 = vmatprep.mubr.bf16.mxu0 0
      %3467 = vmatmul.mubr.bf16.gmra.mrb[0].mxu0 %v3309
      %v3468 = vpop.f32.mrb[0].mxu0
      %v3469 = vadd.f32 0.0, %v3468
      %v3470 = vpop.f32.mrb[0].mxu0
      %v3471 = vpop.f32.mrb[0].mxu0
      %v3472 = vadd.f32 0.0, %v3471
      %v3473 = vpop.f32.mrb[0].mxu0
      %3474 = vmatprep.mubr.bf16.mxu0 0
      %3475 = vmatmul.mubr.bf16.gmra.mrb[0].mxu0 %v3311
      %v3476 = vpop.f32.mrb[0].mxu0
      %v3477 = vadd.f32 0.0, %v3476
      %v3478 = vpop.f32.mrb[0].mxu0
      %v3479 = vpop.f32.mrb[0].mxu0
      %v3480 = vadd.f32 0.0, %v3479
      %v3481 = vpop.f32.mrb[0].mxu0
      %3482 = vmatprep.mubr.bf16.mxu0 0
      %3483 = vmatmul.mubr.bf16.gmra.mrb[0].mxu0 %v3313
      %v3484 = vpop.f32.mrb[0].mxu0
      %v3485 = vadd.f32 0.0, %v3484
      %v3486 = vpop.f32.mrb[0].mxu0
      %v3487 = vpop.f32.mrb[0].mxu0
      %v3488 = vadd.f32 0.0, %v3487
      %v3489 = vpop.f32.mrb[0].mxu0
      %3490 = vmatprep.mubr.bf16.mxu0 0
      %3491 = vmatmul.mubr.bf16.gmra.mrb[0].mxu0 %v3315
      %v3492 = vpop.f32.mrb[0].mxu0
      %v3493 = vadd.f32 0.0, %v3492
      %v3494 = vpop.f32.mrb[0].mxu0
      %v3495 = vpop.f32.mrb[0].mxu0
      %v3496 = vadd.f32 0.0, %v3495
      %v3497 = vpop.f32.mrb[0].mxu0
      %3498 = vmatprep.mubr.bf16.mxu0 0
      %3499 = vmatmul.mubr.bf16.gmra.mrb[0].mxu0 %v3317
      %v3500 = vpop.f32.mrb[0].mxu0
      %v3501 = vadd.f32 0.0, %v3500
      %v3502 = vpop.f32.mrb[0].mxu0
      %v3503 = vpop.f32.mrb[0].mxu0
      %v3504 = vadd.f32 0.0, %v3503
      %v3505 = vpop.f32.mrb[0].mxu0
      %3506 = vmatprep.mubr.bf16.mxu0 0
      %3507 = vmatmul.mubr.bf16.gmra.mrb[0].mxu0 %v3319
      %v3508 = vpop.f32.mrb[0].mxu0
      %v3509 = vadd.f32 0.0, %v3508
      %v3510 = vpop.f32.mrb[0].mxu0
      %v3511 = vpop.f32.mrb[0].mxu0
      %v3512 = vadd.f32 0.0, %v3511
      %v3513 = vpop.f32.mrb[0].mxu0
      %3514 = vmatprep.mubr.bf16.mxu0 0
      %3515 = vmatmul.mubr.bf16.gmra.mrb[0].mxu0 %v3321
      %v3516 = vpop.f32.mrb[0].mxu0
      %v3517 = vadd.f32 0.0, %v3516
      %v3518 = vpop.f32.mrb[0].mxu0
      %v3519 = vpop.f32.mrb[0].mxu0
      %v3520 = vadd.f32 0.0, %v3519
      %v3521 = vpop.f32.mrb[0].mxu0
      %3522 = vmatprep.mubr.bf16.mxu0 0
      %3523 = vmatmul.mubr.bf16.gmra.mrb[0].mxu0 %v3323
      %v3524 = vpop.f32.mrb[0].mxu0
      %v3525 = vadd.f32 0.0, %v3524
      %v3526 = vpop.f32.mrb[0].mxu0
      %v3527 = vpop.f32.mrb[0].mxu0
      %v3528 = vadd.f32 0.0, %v3527
      %v3529 = vpop.f32.mrb[0].mxu0
      %3530 = vmatprep.mubr.bf16.mxu0 0
      %3531 = vmatmul.mubr.bf16.gmra.mrb[0].mxu0 %v3325
      %v3532 = vpop.f32.mrb[0].mxu0
      %v3533 = vadd.f32 0.0, %v3532
      %v3534 = vpop.f32.mrb[0].mxu0
      %v3535 = vpop.f32.mrb[0].mxu0
      %v3536 = vadd.f32 0.0, %v3535
      %v3537 = vpop.f32.mrb[0].mxu0
      %3538 = vmatprep.mubr.bf16.mxu0 0
      %3539 = vmatmul.mubr.bf16.gmra.mrb[0].mxu0 %v3327
      %v3540 = vpop.f32.mrb[0].mxu0
      %v3541 = vadd.f32 0.0, %v3540
      %v3542 = vpop.f32.mrb[0].mxu0
      %v3543 = vpop.f32.mrb[0].mxu0
      %v3544 = vadd.f32 0.0, %v3543
      %v3545 = vpop.f32.mrb[0].mxu0
      %3546 = vmatprep.mubr.bf16.mxu0 0
      %3547 = vmatmul.mubr.bf16.gmra.mrb[0].mxu0 %v3329
      %v3548 = vpop.f32.mrb[0].mxu0
      %v3549 = vadd.f32 0.0, %v3548
      %v3550 = vpop.f32.mrb[0].mxu0
      %v3551 = vpop.f32.mrb[0].mxu0
      %v3552 = vadd.f32 0.0, %v3551
      %v3553 = vpop.f32.mrb[0].mxu0
      %3554 = vmatprep.mubr.bf16.mxu0 0
      %3555 = vmatmul.mubr.bf16.gmra.mrb[0].mxu0 %v3331
      %v3556 = vpop.f32.mrb[0].mxu0
      %v3557 = vadd.f32 0.0, %v3556
      %v3558 = vpop.f32.mrb[0].mxu0
      %v3559 = vpop.f32.mrb[0].mxu0
      %v3560 = vadd.f32 0.0, %v3559
      %v3561 = vpop.f32.mrb[0].mxu0
      %3562 = vmatprep.mubr.bf16.mxu0 0
      %3563 = vmatmul.mubr.bf16.gmra.mrb[0].mxu0 %v3333
      %v3564 = vpop.f32.mrb[0].mxu0
      %v3565 = vadd.f32 0.0, %v3564
      %v3566 = vpop.f32.mrb[0].mxu0
      %v3567 = vpop.f32.mrb[0].mxu0
      %v3568 = vadd.f32 0.0, %v3567
      %v3569 = vpop.f32.mrb[0].mxu0
      %3570 = vmatprep.mubr.bf16.mxu0 0
      %3571 = vmatmul.mubr.bf16.gmra.mrb[0].mxu0 %v3335
      %v3572 = vpop.f32.mrb[0].mxu0
      %v3573 = vadd.f32 0.0, %v3572
      %v3574 = vpop.f32.mrb[0].mxu0
      %v3575 = vpop.f32.mrb[0].mxu0
      %v3576 = vadd.f32 0.0, %v3575
      %v3577 = vpop.f32.mrb[0].mxu0
      %3578 = vdwg.mxu0
      %v3579 = vadd.f32 %v3245, %v3437
      %v3580 = vadd.f32 %v3246, %v3440
      %v3581 = vadd.f32 %v3247, %v3445
      %v3582 = vadd.f32 %v3248, %v3448
      %v3583 = vadd.f32 %v3249, %v3453
      %v3584 = vadd.f32 %v3250, %v3456
      %v3585 = vadd.f32 %v3251, %v3461
      %v3586 = vadd.f32 %v3252, %v3464
      %v3587 = vadd.f32 %v3253, %v3469
      %v3588 = vadd.f32 %v3254, %v3472
      %v3589 = vadd.f32 %v3255, %v3477
      %v3590 = vadd.f32 %v3256, %v3480
      %v3591 = vadd.f32 %v3257, %v3485
      %v3592 = vadd.f32 %v3258, %v3488
      %v3593 = vadd.f32 %v3259, %v3493
      %v3594 = vadd.f32 %v3260, %v3496
      %v3595 = vadd.f32 %v3261, %v3501
      %v3596 = vadd.f32 %v3262, %v3504
      %v3597 = vadd.f32 %v3263, %v3509
      %v3598 = vadd.f32 %v3264, %v3512
      %v3599 = vadd.f32 %v3265, %v3517
      %v3600 = vadd.f32 %v3266, %v3520
      %v3601 = vadd.f32 %v3267, %v3525
      %v3602 = vadd.f32 %v3268, %v3528
      %v3603 = vadd.f32 %v3269, %v3533
      %v3604 = vadd.f32 %v3270, %v3536
      %v3605 = vadd.f32 %v3271, %v3541
      %v3606 = vadd.f32 %v3272, %v3544
      %v3607 = vadd.f32 %v3273, %v3549
      %v3608 = vadd.f32 %v3274, %v3552
      %v3609 = vadd.f32 %v3275, %v3557
      %v3610 = vadd.f32 %v3276, %v3560
      %v3611 = vadd.f32 %v3277, %v3565
      %v3612 = vadd.f32 %v3278, %v3568
      %v3613 = vadd.f32 %v3279, %v3573
      %v3614 = vadd.f32 %v3280, %v3576
      %s3615 = scalar_lea.vmem %s1, 384
      %v3616 = vld [vmem:[%s3615] sm:$0xf]
      %v3617 = vld [vmem:[%s3615 + $0x4] sm:$0xf]
      %v3618 = vld [vmem:[%s3615 + $0x8] sm:$0xf]
      %v3619 = vld [vmem:[%s3615 + $0xc] sm:$0xf]
      %v3620 = vld [vmem:[%s3615 + $0x10] sm:$0xf]
      %v3621 = vld [vmem:[%s3615 + $0x14] sm:$0xf]
      %v3622 = vld [vmem:[%s3615 + $0x18] sm:$0xf]
      %v3623 = vld [vmem:[%s3615 + $0x1c] sm:$0xf]
      %v3624 = vld [vmem:[%s3615 + $0x20] sm:$0xf]
      %v3625 = vld [vmem:[%s3615 + $0x24] sm:$0xf]
      %v3626 = vld [vmem:[%s3615 + $0x28] sm:$0xf]
      %v3627 = vld [vmem:[%s3615 + $0x2c] sm:$0xf]
      %v3628 = vld [vmem:[%s3615 + $0x30] sm:$0xf]
      %v3629 = vld [vmem:[%s3615 + $0x34] sm:$0xf]
      %v3630 = vld [vmem:[%s3615 + $0x38] sm:$0xf]
      %v3631 = vld [vmem:[%s3615 + $0x3c] sm:$0xf]
      %v3633 = vrot.slane %v1616, 2
      %v3634 = vsel %vm3298, %v3334, %v3633
      %v3652 = vunpack.c.l.b16 %v3616
      %v3653 = vunpack.c.l.b16 %v3617
      %v3654 = vunpack.c.l.b16 %v3618
      %v3655 = vunpack.c.l.b16 %v3619
      %v3656 = vunpack.c.l.b16 %v3620
      %v3657 = vunpack.c.l.b16 %v3621
      %v3658 = vunpack.c.l.b16 %v3622
      %v3659 = vunpack.c.l.b16 %v3623
      %v3660 = vunpack.c.l.b16 %v3624
      %v3661 = vunpack.c.l.b16 %v3625
      %v3662 = vunpack.c.l.b16 %v3626
      %v3663 = vunpack.c.l.b16 %v3627
      %v3664 = vunpack.c.l.b16 %v3628
      %v3665 = vunpack.c.l.b16 %v3629
      %v3666 = vunpack.c.l.b16 %v3630
      %v3667 = vunpack.c.l.b16 %v3631
      %v3668 = vpack.c.b16 %v3653, %v3652
      %v3669 = vpack.c.b16 %v3655, %v3654
      %v3670 = vpack.c.b16 %v3657, %v3656
      %v3671 = vpack.c.b16 %v3659, %v3658
      %v3672 = vpack.c.b16 %v3661, %v3660
      %v3673 = vpack.c.b16 %v3663, %v3662
      %v3674 = vpack.c.b16 %v3665, %v3664
      %v3675 = vpack.c.b16 %v3667, %v3666
      %3684 = vmatprep.subr.bf16.mxu0 0
      %3685 = vmatpush1.bf16.msra.mxu0 %v3668
      %3686 = vmatprep.subr.bf16.mxu0 0
      %3687 = vmatpush1.bf16.msra.mxu0 %v3669
      %3688 = vmatprep.subr.bf16.mxu0 0
      %3689 = vmatpush1.bf16.msra.mxu0 %v3670
      %3690 = vmatprep.subr.bf16.mxu0 0
      %3691 = vmatpush1.bf16.msra.mxu0 %v3671
      %3692 = vmatprep.subr.bf16.mxu0 0
      %3693 = vmatpush1.bf16.msra.mxu0 %v3672
      %3694 = vmatprep.subr.bf16.mxu0 0
      %3695 = vmatpush1.bf16.msra.mxu0 %v3673
      %3696 = vmatprep.subr.bf16.mxu0 0
      %3697 = vmatpush1.bf16.msra.mxu0 %v3674
      %3698 = vmatprep.subr.bf16.mxu0 0
      %3699 = vmatpush1.bf16.msra.mxu0 %v3675
      %3700 = vmatprep.subr.bf16.mxu0 0
      %3701 = vmatpush1.bf16.msra.mxu0 0
      %3702 = vmatprep.subr.bf16.mxu0 0
      %3703 = vmatpush1.bf16.msra.mxu0 0
      %3704 = vmatprep.subr.bf16.mxu0 0
      %3705 = vmatpush1.bf16.msra.mxu0 0
      %3706 = vmatprep.subr.bf16.mxu0 0
      %3707 = vmatpush1.bf16.msra.mxu0 0
      %3708 = vmatprep.subr.bf16.mxu0 0
      %3709 = vmatpush1.bf16.msra.mxu0 0
      %3710 = vmatprep.subr.bf16.mxu0 0
      %3711 = vmatpush1.bf16.msra.mxu0 0
      %3712 = vmatprep.subr.bf16.mxu0 0
      %3713 = vmatpush1.bf16.msra.mxu0 0
      %3714 = vmatprep.subr.bf16.mxu0 0
      %3715 = vmatpush1.bf16.msra.mxu0 0
      %3716 = vmatprep.mubr.bf16.mxu0 0
      %3717 = vmatmul.mubr.bf16.gmra.mrb[0].mxu0 %v3303
      %v3718 = vpop.f32.mrb[0].mxu0
      %v3719 = vadd.f32 0.0, %v3718
      %v3720 = vpop.f32.mrb[0].mxu0
      %v3721 = vpop.f32.mrb[0].mxu0
      %v3722 = vadd.f32 0.0, %v3721
      %v3723 = vpop.f32.mrb[0].mxu0
      %3724 = vmatprep.mubr.bf16.mxu0 0
      %3725 = vmatmul.mubr.bf16.gmra.mrb[0].mxu0 %v3305
      %v3726 = vpop.f32.mrb[0].mxu0
      %v3727 = vadd.f32 0.0, %v3726
      %v3728 = vpop.f32.mrb[0].mxu0
      %v3729 = vpop.f32.mrb[0].mxu0
      %v3730 = vadd.f32 0.0, %v3729
      %v3731 = vpop.f32.mrb[0].mxu0
      %3732 = vmatprep.mubr.bf16.mxu0 0
      %3733 = vmatmul.mubr.bf16.gmra.mrb[0].mxu0 %v3307
      %v3734 = vpop.f32.mrb[0].mxu0
      %v3735 = vadd.f32 0.0, %v3734
      %v3736 = vpop.f32.mrb[0].mxu0
      %v3737 = vpop.f32.mrb[0].mxu0
      %v3738 = vadd.f32 0.0, %v3737
      %v3739 = vpop.f32.mrb[0].mxu0
      %3740 = vmatprep.mubr.bf16.mxu0 0
      %3741 = vmatmul.mubr.bf16.gmra.mrb[0].mxu0 %v3309
      %v3742 = vpop.f32.mrb[0].mxu0
      %v3743 = vadd.f32 0.0, %v3742
      %v3744 = vpop.f32.mrb[0].mxu0
      %v3745 = vpop.f32.mrb[0].mxu0
      %v3746 = vadd.f32 0.0, %v3745
      %v3747 = vpop.f32.mrb[0].mxu0
      %3748 = vmatprep.mubr.bf16.mxu0 0
      %3749 = vmatmul.mubr.bf16.gmra.mrb[0].mxu0 %v3311
      %v3750 = vpop.f32.mrb[0].mxu0
      %v3751 = vadd.f32 0.0, %v3750
      %v3752 = vpop.f32.mrb[0].mxu0
      %v3753 = vpop.f32.mrb[0].mxu0
      %v3754 = vadd.f32 0.0, %v3753
      %v3755 = vpop.f32.mrb[0].mxu0
      %3756 = vmatprep.mubr.bf16.mxu0 0
      %3757 = vmatmul.mubr.bf16.gmra.mrb[0].mxu0 %v3313
      %v3758 = vpop.f32.mrb[0].mxu0
      %v3759 = vadd.f32 0.0, %v3758
      %v3760 = vpop.f32.mrb[0].mxu0
      %v3761 = vpop.f32.mrb[0].mxu0
      %v3762 = vadd.f32 0.0, %v3761
      %v3763 = vpop.f32.mrb[0].mxu0
      %3764 = vmatprep.mubr.bf16.mxu0 0
      %3765 = vmatmul.mubr.bf16.gmra.mrb[0].mxu0 %v3315
      %v3766 = vpop.f32.mrb[0].mxu0
      %v3767 = vadd.f32 0.0, %v3766
      %v3768 = vpop.f32.mrb[0].mxu0
      %v3769 = vpop.f32.mrb[0].mxu0
      %v3770 = vadd.f32 0.0, %v3769
      %v3771 = vpop.f32.mrb[0].mxu0
      %3772 = vmatprep.mubr.bf16.mxu0 0
      %3773 = vmatmul.mubr.bf16.gmra.mrb[0].mxu0 %v3317
      %v3774 = vpop.f32.mrb[0].mxu0
      %v3775 = vadd.f32 0.0, %v3774
      %v3776 = vpop.f32.mrb[0].mxu0
      %v3777 = vpop.f32.mrb[0].mxu0
      %v3778 = vadd.f32 0.0, %v3777
      %v3779 = vpop.f32.mrb[0].mxu0
      %3780 = vmatprep.mubr.bf16.mxu0 0
      %3781 = vmatmul.mubr.bf16.gmra.mrb[0].mxu0 %v3319
      %v3782 = vpop.f32.mrb[0].mxu0
      %v3783 = vadd.f32 0.0, %v3782
      %v3784 = vpop.f32.mrb[0].mxu0
      %v3785 = vpop.f32.mrb[0].mxu0
      %v3786 = vadd.f32 0.0, %v3785
      %v3787 = vpop.f32.mrb[0].mxu0
      %3788 = vmatprep.mubr.bf16.mxu0 0
      %3789 = vmatmul.mubr.bf16.gmra.mrb[0].mxu0 %v3321
      %v3790 = vpop.f32.mrb[0].mxu0
      %v3791 = vadd.f32 0.0, %v3790
      %v3792 = vpop.f32.mrb[0].mxu0
      %v3793 = vpop.f32.mrb[0].mxu0
      %v3794 = vadd.f32 0.0, %v3793
      %v3795 = vpop.f32.mrb[0].mxu0
      %3796 = vmatprep.mubr.bf16.mxu0 0
      %3797 = vmatmul.mubr.bf16.gmra.mrb[0].mxu0 %v3323
      %v3798 = vpop.f32.mrb[0].mxu0
      %v3799 = vadd.f32 0.0, %v3798
      %v3800 = vpop.f32.mrb[0].mxu0
      %v3801 = vpop.f32.mrb[0].mxu0
      %v3802 = vadd.f32 0.0, %v3801
      %v3803 = vpop.f32.mrb[0].mxu0
      %3804 = vmatprep.mubr.bf16.mxu0 0
      %3805 = vmatmul.mubr.bf16.gmra.mrb[0].mxu0 %v3325
      %v3806 = vpop.f32.mrb[0].mxu0
      %v3807 = vadd.f32 0.0, %v3806
      %v3808 = vpop.f32.mrb[0].mxu0
      %v3809 = vpop.f32.mrb[0].mxu0
      %v3810 = vadd.f32 0.0, %v3809
      %v3811 = vpop.f32.mrb[0].mxu0
      %3812 = vmatprep.mubr.bf16.mxu0 0
      %3813 = vmatmul.mubr.bf16.gmra.mrb[0].mxu0 %v3327
      %v3814 = vpop.f32.mrb[0].mxu0
      %v3815 = vadd.f32 0.0, %v3814
      %v3816 = vpop.f32.mrb[0].mxu0
      %v3817 = vpop.f32.mrb[0].mxu0
      %v3818 = vadd.f32 0.0, %v3817
      %v3819 = vpop.f32.mrb[0].mxu0
      %3820 = vmatprep.mubr.bf16.mxu0 0
      %3821 = vmatmul.mubr.bf16.gmra.mrb[0].mxu0 %v3329
      %v3822 = vpop.f32.mrb[0].mxu0
      %v3823 = vadd.f32 0.0, %v3822
      %v3824 = vpop.f32.mrb[0].mxu0
      %v3825 = vpop.f32.mrb[0].mxu0
      %v3826 = vadd.f32 0.0, %v3825
      %v3827 = vpop.f32.mrb[0].mxu0
      %3828 = vmatprep.mubr.bf16.mxu0 0
      %3829 = vmatmul.mubr.bf16.gmra.mrb[0].mxu0 %v3331
      %v3830 = vpop.f32.mrb[0].mxu0
      %v3831 = vadd.f32 0.0, %v3830
      %v3832 = vpop.f32.mrb[0].mxu0
      %v3833 = vpop.f32.mrb[0].mxu0
      %v3834 = vadd.f32 0.0, %v3833
      %v3835 = vpop.f32.mrb[0].mxu0
      %3836 = vmatprep.mubr.bf16.mxu0 0
      %3837 = vmatmul.mubr.bf16.gmra.mrb[0].mxu0 %v3333
      %v3838 = vpop.f32.mrb[0].mxu0
      %v3839 = vadd.f32 0.0, %v3838
      %v3840 = vpop.f32.mrb[0].mxu0
      %v3841 = vpop.f32.mrb[0].mxu0
      %v3842 = vadd.f32 0.0, %v3841
      %v3843 = vpop.f32.mrb[0].mxu0
      %3844 = vmatprep.mubr.bf16.mxu0 0
      %3845 = vmatmul.mubr.bf16.gmra.mrb[0].mxu0 %v3335
      %v3846 = vpop.f32.mrb[0].mxu0
      %v3847 = vadd.f32 0.0, %v3846
      %v3848 = vpop.f32.mrb[0].mxu0
      %v3849 = vpop.f32.mrb[0].mxu0
      %v3850 = vadd.f32 0.0, %v3849
      %v3851 = vpop.f32.mrb[0].mxu0
      %3852 = vmatprep.mubr.bf16.mxu0 0
      %3853 = vmatmul.mubr.bf16.gmra.mrb[0].mxu0 %v3634
      %v3854 = vpop.f32.mrb[0].mxu0
      %v3855 = vadd.f32 0.0, %v3854
      %v3856 = vpop.f32.mrb[0].mxu0
      %v3857 = vpop.f32.mrb[0].mxu0
      %v3858 = vadd.f32 0.0, %v3857
      %v3859 = vpop.f32.mrb[0].mxu0
      %3860 = vdwg.mxu0
      %v3861 = vadd.f32 %v3579, %v3719
      %v3862 = vadd.f32 %v3580, %v3722
      %v3863 = vadd.f32 %v3581, %v3727
      %v3864 = vadd.f32 %v3582, %v3730
      %v3865 = vadd.f32 %v3583, %v3735
      %v3866 = vadd.f32 %v3584, %v3738
      %v3867 = vadd.f32 %v3585, %v3743
      %v3868 = vadd.f32 %v3586, %v3746
      %v3869 = vadd.f32 %v3587, %v3751
      %v3870 = vadd.f32 %v3588, %v3754
      %v3871 = vadd.f32 %v3589, %v3759
      %v3872 = vadd.f32 %v3590, %v3762
      %v3873 = vadd.f32 %v3591, %v3767
      %v3874 = vadd.f32 %v3592, %v3770
      %v3875 = vadd.f32 %v3593, %v3775
      %v3876 = vadd.f32 %v3594, %v3778
      %v3877 = vadd.f32 %v3595, %v3783
      %v3878 = vadd.f32 %v3596, %v3786
      %v3879 = vadd.f32 %v3597, %v3791
      %v3880 = vadd.f32 %v3598, %v3794
      %v3881 = vadd.f32 %v3599, %v3799
      %v3882 = vadd.f32 %v3600, %v3802
      %v3883 = vadd.f32 %v3601, %v3807
      %v3884 = vadd.f32 %v3602, %v3810
      %v3885 = vadd.f32 %v3603, %v3815
      %v3886 = vadd.f32 %v3604, %v3818
      %v3887 = vadd.f32 %v3605, %v3823
      %v3888 = vadd.f32 %v3606, %v3826
      %v3889 = vadd.f32 %v3607, %v3831
      %v3890 = vadd.f32 %v3608, %v3834
      %v3891 = vadd.f32 %v3609, %v3839
      %v3892 = vadd.f32 %v3610, %v3842
      %v3893 = vadd.f32 %v3611, %v3847
      %v3894 = vadd.f32 %v3612, %v3850
      %v3895 = vadd.f32 %v3613, %v3855
      %v3896 = vadd.f32 %v3614, %v3858
      %s3897 = scalar_lea.vmem %s1, 448
      %v3898 = vld [vmem:[%s3897] sm:$0xf]
      %v3899 = vld [vmem:[%s3897 + $0x4] sm:$0xf]
      %v3900 = vld [vmem:[%s3897 + $0x8] sm:$0xf]
      %v3901 = vld [vmem:[%s3897 + $0xc] sm:$0xf]
      %v3902 = vld [vmem:[%s3897 + $0x10] sm:$0xf]
      %v3903 = vld [vmem:[%s3897 + $0x14] sm:$0xf]
      %v3904 = vld [vmem:[%s3897 + $0x18] sm:$0xf]
      %v3905 = vld [vmem:[%s3897 + $0x1c] sm:$0xf]
      %v3906 = vld [vmem:[%s3897 + $0x20] sm:$0xf]
      %v3907 = vld [vmem:[%s3897 + $0x24] sm:$0xf]
      %v3908 = vld [vmem:[%s3897 + $0x28] sm:$0xf]
      %v3909 = vld [vmem:[%s3897 + $0x2c] sm:$0xf]
      %v3910 = vld [vmem:[%s3897 + $0x30] sm:$0xf]
      %v3911 = vld [vmem:[%s3897 + $0x34] sm:$0xf]
      %v3912 = vld [vmem:[%s3897 + $0x38] sm:$0xf]
      %v3913 = vld [vmem:[%s3897 + $0x3c] sm:$0xf]
      %vm3914 = vsmask.f32 5376
      %v3915 = vrot.slane %v1671, 2
      %v3916 = vrot.slane %v1667, 3
      %v3917 = vor.u32 %v3915, %v3916
      %v3918 = vrot.slane %v1679, 2
      %v3919 = vrot.slane %v1675, 3
      %v3920 = vor.u32 %v3918, %v3919
      %v3921 = vsel %vm3914, %v3917, %v3920
      %v3922 = vrot.slane %v1687, 2
      %v3923 = vrot.slane %v1683, 3
      %v3924 = vor.u32 %v3922, %v3923
      %v3925 = vsel %vm3914, %v3920, %v3924
      %v3926 = vrot.slane %v1695, 2
      %v3927 = vrot.slane %v1691, 3
      %v3928 = vor.u32 %v3926, %v3927
      %v3929 = vsel %vm3914, %v3924, %v3928
      %v3930 = vrot.slane %v1703, 2
      %v3931 = vrot.slane %v1699, 3
      %v3932 = vor.u32 %v3930, %v3931
      %v3933 = vsel %vm3914, %v3928, %v3932
      %v3934 = vrot.slane %v1711, 2
      %v3935 = vrot.slane %v1707, 3
      %v3936 = vor.u32 %v3934, %v3935
      %v3937 = vsel %vm3914, %v3932, %v3936
      %v3938 = vrot.slane %v1719, 2
      %v3939 = vrot.slane %v1715, 3
      %v3940 = vor.u32 %v3938, %v3939
      %v3941 = vsel %vm3914, %v3936, %v3940
      %v3942 = vrot.slane %v1727, 2
      %v3943 = vrot.slane %v1723, 3
      %v3944 = vor.u32 %v3942, %v3943
      %v3945 = vsel %vm3914, %v3940, %v3944
      %v3946 = vrot.slane %v1735, 2
      %v3947 = vrot.slane %v1731, 3
      %v3948 = vor.u32 %v3946, %v3947
      %v3949 = vsel %vm3914, %v3944, %v3948
      %v3950 = vrot.slane %v1743, 2
      %v3951 = vrot.slane %v1739, 3
      %v3952 = vor.u32 %v3950, %v3951
      %v3953 = vsel %vm3914, %v3948, %v3952
      %v3954 = vrot.slane %v1751, 2
      %v3955 = vrot.slane %v1747, 3
      %v3956 = vor.u32 %v3954, %v3955
      %v3957 = vsel %vm3914, %v3952, %v3956
      %v3958 = vrot.slane %v1759, 2
      %v3959 = vrot.slane %v1755, 3
      %v3960 = vor.u32 %v3958, %v3959
      %v3961 = vsel %vm3914, %v3956, %v3960
      %v3962 = vrot.slane %v1767, 2
      %v3963 = vrot.slane %v1763, 3
      %v3964 = vor.u32 %v3962, %v3963
      %v3965 = vsel %vm3914, %v3960, %v3964
      %v3966 = vrot.slane %v1775, 2
      %v3967 = vrot.slane %v1771, 3
      %v3968 = vor.u32 %v3966, %v3967
      %v3969 = vsel %vm3914, %v3964, %v3968
      %v3970 = vrot.slane %v1783, 2
      %v3971 = vrot.slane %v1779, 3
      %v3972 = vor.u32 %v3970, %v3971
      %v3973 = vsel %vm3914, %v3968, %v3972
      %v3974 = vrot.slane %v1791, 2
      %v3975 = vrot.slane %v1787, 3
      %v3976 = vor.u32 %v3974, %v3975
      %v3977 = vsel %vm3914, %v3972, %v3976
      %v3978 = vrot.slane %v2987, 2
      %v3979 = vrot.slane %v1795, 3
      %v3980 = vor.u32 %v3978, %v3979
      %v3981 = vsel %vm3914, %v3976, %v3980
      %v3982 = vrot.slane %v2994, 2
      %v3983 = vrot.slane %v2997, 3
      %v3984 = vor.u32 %v3982, %v3983
      %v3985 = vsel %vm3914, %v3980, %v3984
      %v3987 = vshrl.u32 %v1616, 16
      %v3989 = vrot.slane %v3987, 2
      %v3990 = vshll.u32 %v1616, 16
      %v3992 = vrot.slane %v3990, 3
      %v3993 = vor.u32 %v3989, %v3992
      %v3994 = vsel %vm3914, %v3984, %v3993
      %v4029 = vunpack.c.l.b16 %v3898
      %v4030 = vunpack.c.l.b16 %v3899
      %v4031 = vunpack.c.l.b16 %v3900
      %v4032 = vunpack.c.l.b16 %v3901
      %v4033 = vunpack.c.l.b16 %v3902
      %v4034 = vunpack.c.l.b16 %v3903
      %v4035 = vunpack.c.l.b16 %v3904
      %v4036 = vunpack.c.l.b16 %v3905
      %v4037 = vunpack.c.l.b16 %v3906
      %v4038 = vunpack.c.l.b16 %v3907
      %v4039 = vunpack.c.l.b16 %v3908
      %v4040 = vunpack.c.l.b16 %v3909
      %v4041 = vunpack.c.l.b16 %v3910
      %v4042 = vunpack.c.l.b16 %v3911
      %v4043 = vunpack.c.l.b16 %v3912
      %v4044 = vunpack.c.l.b16 %v3913
      %v4045 = vpack.c.b16 %v4030, %v4029
      %v4046 = vpack.c.b16 %v4032, %v4031
      %v4047 = vpack.c.b16 %v4034, %v4033
      %v4048 = vpack.c.b16 %v4036, %v4035
      %v4049 = vpack.c.b16 %v4038, %v4037
      %v4050 = vpack.c.b16 %v4040, %v4039
      %v4051 = vpack.c.b16 %v4042, %v4041
      %v4052 = vpack.c.b16 %v4044, %v4043
      %4061 = vmatprep.subr.bf16.mxu0 0
      %4062 = vmatpush1.bf16.msra.mxu0 %v4045
      %4063 = vmatprep.subr.bf16.mxu0 0
      %4064 = vmatpush1.bf16.msra.mxu0 %v4046
      %4065 = vmatprep.subr.bf16.mxu0 0
      %4066 = vmatpush1.bf16.msra.mxu0 %v4047
      %4067 = vmatprep.subr.bf16.mxu0 0
      %4068 = vmatpush1.bf16.msra.mxu0 %v4048
      %4069 = vmatprep.subr.bf16.mxu0 0
      %4070 = vmatpush1.bf16.msra.mxu0 %v4049
      %4071 = vmatprep.subr.bf16.mxu0 0
      %4072 = vmatpush1.bf16.msra.mxu0 %v4050
      %4073 = vmatprep.subr.bf16.mxu0 0
      %4074 = vmatpush1.bf16.msra.mxu0 %v4051
      %4075 = vmatprep.subr.bf16.mxu0 0
      %4076 = vmatpush1.bf16.msra.mxu0 %v4052
      %4077 = vmatprep.subr.bf16.mxu0 0
      %4078 = vmatpush1.bf16.msra.mxu0 0
      %4079 = vmatprep.subr.bf16.mxu0 0
      %4080 = vmatpush1.bf16.msra.mxu0 0
      %4081 = vmatprep.subr.bf16.mxu0 0
      %4082 = vmatpush1.bf16.msra.mxu0 0
      %4083 = vmatprep.subr.bf16.mxu0 0
      %4084 = vmatpush1.bf16.msra.mxu0 0
      %4085 = vmatprep.subr.bf16.mxu0 0
      %4086 = vmatpush1.bf16.msra.mxu0 0
      %4087 = vmatprep.subr.bf16.mxu0 0
      %4088 = vmatpush1.bf16.msra.mxu0 0
      %4089 = vmatprep.subr.bf16.mxu0 0
      %4090 = vmatpush1.bf16.msra.mxu0 0
      %4091 = vmatprep.subr.bf16.mxu0 0
      %4092 = vmatpush1.bf16.msra.mxu0 0
      %4093 = vmatprep.mubr.bf16.mxu0 0
      %4094 = vmatmul.mubr.bf16.gmra.mrb[0].mxu0 %v3921
      %v4095 = vpop.f32.mrb[0].mxu0
      %v4096 = vadd.f32 0.0, %v4095
      %v4097 = vpop.f32.mrb[0].mxu0
      %v4098 = vpop.f32.mrb[0].mxu0
      %v4099 = vadd.f32 0.0, %v4098
      %v4100 = vpop.f32.mrb[0].mxu0
      %4101 = vmatprep.mubr.bf16.mxu0 0
      %4102 = vmatmul.mubr.bf16.gmra.mrb[0].mxu0 %v3925
      %v4103 = vpop.f32.mrb[0].mxu0
      %v4104 = vadd.f32 0.0, %v4103
      %v4105 = vpop.f32.mrb[0].mxu0
      %v4106 = vpop.f32.mrb[0].mxu0
      %v4107 = vadd.f32 0.0, %v4106
      %v4108 = vpop.f32.mrb[0].mxu0
      %4109 = vmatprep.mubr.bf16.mxu0 0
      %4110 = vmatmul.mubr.bf16.gmra.mrb[0].mxu0 %v3929
      %v4111 = vpop.f32.mrb[0].mxu0
      %v4112 = vadd.f32 0.0, %v4111
      %v4113 = vpop.f32.mrb[0].mxu0
      %v4114 = vpop.f32.mrb[0].mxu0
      %v4115 = vadd.f32 0.0, %v4114
      %v4116 = vpop.f32.mrb[0].mxu0
      %4117 = vmatprep.mubr.bf16.mxu0 0
      %4118 = vmatmul.mubr.bf16.gmra.mrb[0].mxu0 %v3933
      %v4119 = vpop.f32.mrb[0].mxu0
      %v4120 = vadd.f32 0.0, %v4119
      %v4121 = vpop.f32.mrb[0].mxu0
      %v4122 = vpop.f32.mrb[0].mxu0
      %v4123 = vadd.f32 0.0, %v4122
      %v4124 = vpop.f32.mrb[0].mxu0
      %4125 = vmatprep.mubr.bf16.mxu0 0
      %4126 = vmatmul.mubr.bf16.gmra.mrb[0].mxu0 %v3937
      %v4127 = vpop.f32.mrb[0].mxu0
      %v4128 = vadd.f32 0.0, %v4127
      %v4129 = vpop.f32.mrb[0].mxu0
      %v4130 = vpop.f32.mrb[0].mxu0
      %v4131 = vadd.f32 0.0, %v4130
      %v4132 = vpop.f32.mrb[0].mxu0
      %4133 = vmatprep.mubr.bf16.mxu0 0
      %4134 = vmatmul.mubr.bf16.gmra.mrb[0].mxu0 %v3941
      %v4135 = vpop.f32.mrb[0].mxu0
      %v4136 = vadd.f32 0.0, %v4135
      %v4137 = vpop.f32.mrb[0].mxu0
      %v4138 = vpop.f32.mrb[0].mxu0
      %v4139 = vadd.f32 0.0, %v4138
      %v4140 = vpop.f32.mrb[0].mxu0
      %4141 = vmatprep.mubr.bf16.mxu0 0
      %4142 = vmatmul.mubr.bf16.gmra.mrb[0].mxu0 %v3945
      %v4143 = vpop.f32.mrb[0].mxu0
      %v4144 = vadd.f32 0.0, %v4143
      %v4145 = vpop.f32.mrb[0].mxu0
      %v4146 = vpop.f32.mrb[0].mxu0
      %v4147 = vadd.f32 0.0, %v4146
      %v4148 = vpop.f32.mrb[0].mxu0
      %4149 = vmatprep.mubr.bf16.mxu0 0
      %4150 = vmatmul.mubr.bf16.gmra.mrb[0].mxu0 %v3949
      %v4151 = vpop.f32.mrb[0].mxu0
      %v4152 = vadd.f32 0.0, %v4151
      %v4153 = vpop.f32.mrb[0].mxu0
      %v4154 = vpop.f32.mrb[0].mxu0
      %v4155 = vadd.f32 0.0, %v4154
      %v4156 = vpop.f32.mrb[0].mxu0
      %4157 = vmatprep.mubr.bf16.mxu0 0
      %4158 = vmatmul.mubr.bf16.gmra.mrb[0].mxu0 %v3953
      %v4159 = vpop.f32.mrb[0].mxu0
      %v4160 = vadd.f32 0.0, %v4159
      %v4161 = vpop.f32.mrb[0].mxu0
      %v4162 = vpop.f32.mrb[0].mxu0
      %v4163 = vadd.f32 0.0, %v4162
      %v4164 = vpop.f32.mrb[0].mxu0
      %4165 = vmatprep.mubr.bf16.mxu0 0
      %4166 = vmatmul.mubr.bf16.gmra.mrb[0].mxu0 %v3957
      %v4167 = vpop.f32.mrb[0].mxu0
      %v4168 = vadd.f32 0.0, %v4167
      %v4169 = vpop.f32.mrb[0].mxu0
      %v4170 = vpop.f32.mrb[0].mxu0
      %v4171 = vadd.f32 0.0, %v4170
      %v4172 = vpop.f32.mrb[0].mxu0
      %4173 = vmatprep.mubr.bf16.mxu0 0
      %4174 = vmatmul.mubr.bf16.gmra.mrb[0].mxu0 %v3961
      %v4175 = vpop.f32.mrb[0].mxu0
      %v4176 = vadd.f32 0.0, %v4175
      %v4177 = vpop.f32.mrb[0].mxu0
      %v4178 = vpop.f32.mrb[0].mxu0
      %v4179 = vadd.f32 0.0, %v4178
      %v4180 = vpop.f32.mrb[0].mxu0
      %4181 = vmatprep.mubr.bf16.mxu0 0
      %4182 = vmatmul.mubr.bf16.gmra.mrb[0].mxu0 %v3965
      %v4183 = vpop.f32.mrb[0].mxu0
      %v4184 = vadd.f32 0.0, %v4183
      %v4185 = vpop.f32.mrb[0].mxu0
      %v4186 = vpop.f32.mrb[0].mxu0
      %v4187 = vadd.f32 0.0, %v4186
      %v4188 = vpop.f32.mrb[0].mxu0
      %4189 = vmatprep.mubr.bf16.mxu0 0
      %4190 = vmatmul.mubr.bf16.gmra.mrb[0].mxu0 %v3969
      %v4191 = vpop.f32.mrb[0].mxu0
      %v4192 = vadd.f32 0.0, %v4191
      %v4193 = vpop.f32.mrb[0].mxu0
      %v4194 = vpop.f32.mrb[0].mxu0
      %v4195 = vadd.f32 0.0, %v4194
      %v4196 = vpop.f32.mrb[0].mxu0
      %4197 = vmatprep.mubr.bf16.mxu0 0
      %4198 = vmatmul.mubr.bf16.gmra.mrb[0].mxu0 %v3973
      %v4199 = vpop.f32.mrb[0].mxu0
      %v4200 = vadd.f32 0.0, %v4199
      %v4201 = vpop.f32.mrb[0].mxu0
      %v4202 = vpop.f32.mrb[0].mxu0
      %v4203 = vadd.f32 0.0, %v4202
      %v4204 = vpop.f32.mrb[0].mxu0
      %4205 = vmatprep.mubr.bf16.mxu0 0
      %4206 = vmatmul.mubr.bf16.gmra.mrb[0].mxu0 %v3977
      %v4207 = vpop.f32.mrb[0].mxu0
      %v4208 = vadd.f32 0.0, %v4207
      %v4209 = vpop.f32.mrb[0].mxu0
      %v4210 = vpop.f32.mrb[0].mxu0
      %v4211 = vadd.f32 0.0, %v4210
      %v4212 = vpop.f32.mrb[0].mxu0
      %4213 = vmatprep.mubr.bf16.mxu0 0
      %4214 = vmatmul.mubr.bf16.gmra.mrb[0].mxu0 %v3981
      %v4215 = vpop.f32.mrb[0].mxu0
      %v4216 = vadd.f32 0.0, %v4215
      %v4217 = vpop.f32.mrb[0].mxu0
      %v4218 = vpop.f32.mrb[0].mxu0
      %v4219 = vadd.f32 0.0, %v4218
      %v4220 = vpop.f32.mrb[0].mxu0
      %4221 = vmatprep.mubr.bf16.mxu0 0
      %4222 = vmatmul.mubr.bf16.gmra.mrb[0].mxu0 %v3985
      %v4223 = vpop.f32.mrb[0].mxu0
      %v4224 = vadd.f32 0.0, %v4223
      %v4225 = vpop.f32.mrb[0].mxu0
      %v4226 = vpop.f32.mrb[0].mxu0
      %v4227 = vadd.f32 0.0, %v4226
      %v4228 = vpop.f32.mrb[0].mxu0
      %4229 = vmatprep.mubr.bf16.mxu0 0
      %4230 = vmatmul.mubr.bf16.gmra.mrb[0].mxu0 %v3994
      %v4231 = vpop.f32.mrb[0].mxu0
      %v4232 = vadd.f32 0.0, %v4231
      %v4233 = vpop.f32.mrb[0].mxu0
      %v4234 = vpop.f32.mrb[0].mxu0
      %v4235 = vadd.f32 0.0, %v4234
      %v4236 = vpop.f32.mrb[0].mxu0
      %4237 = vdwg.mxu0
      %v4238 = vadd.f32 %v3861, %v4096
      %v4239 = vadd.f32 %v3862, %v4099
      %v4240 = vadd.f32 %v3863, %v4104
      %v4241 = vadd.f32 %v3864, %v4107
      %v4242 = vadd.f32 %v3865, %v4112
      %v4243 = vadd.f32 %v3866, %v4115
      %v4244 = vadd.f32 %v3867, %v4120
      %v4245 = vadd.f32 %v3868, %v4123
      %v4246 = vadd.f32 %v3869, %v4128
      %v4247 = vadd.f32 %v3870, %v4131
      %v4248 = vadd.f32 %v3871, %v4136
      %v4249 = vadd.f32 %v3872, %v4139
      %v4250 = vadd.f32 %v3873, %v4144
      %v4251 = vadd.f32 %v3874, %v4147
      %v4252 = vadd.f32 %v3875, %v4152
      %v4253 = vadd.f32 %v3876, %v4155
      %v4254 = vadd.f32 %v3877, %v4160
      %v4255 = vadd.f32 %v3878, %v4163
      %v4256 = vadd.f32 %v3879, %v4168
      %v4257 = vadd.f32 %v3880, %v4171
      %v4258 = vadd.f32 %v3881, %v4176
      %v4259 = vadd.f32 %v3882, %v4179
      %v4260 = vadd.f32 %v3883, %v4184
      %v4261 = vadd.f32 %v3884, %v4187
      %v4262 = vadd.f32 %v3885, %v4192
      %v4263 = vadd.f32 %v3886, %v4195
      %v4264 = vadd.f32 %v3887, %v4200
      %v4265 = vadd.f32 %v3888, %v4203
      %v4266 = vadd.f32 %v3889, %v4208
      %v4267 = vadd.f32 %v3890, %v4211
      %v4268 = vadd.f32 %v3891, %v4216
      %v4269 = vadd.f32 %v3892, %v4219
      %v4270 = vadd.f32 %v3893, %v4224
      %v4271 = vadd.f32 %v3894, %v4227
      %v4272 = vadd.f32 %v3895, %v4232
      %v4273 = vadd.f32 %v3896, %v4235
      %s4274 = scalar_lea.vmem %s1, 512
      %v4275 = vld [vmem:[%s4274] sm:$0xf]
      %v4276 = vld [vmem:[%s4274 + $0x4] sm:$0xf]
      %v4277 = vld [vmem:[%s4274 + $0x8] sm:$0xf]
      %v4278 = vld [vmem:[%s4274 + $0xc] sm:$0xf]
      %v4279 = vld [vmem:[%s4274 + $0x10] sm:$0xf]
      %v4280 = vld [vmem:[%s4274 + $0x14] sm:$0xf]
      %v4281 = vld [vmem:[%s4274 + $0x18] sm:$0xf]
      %v4282 = vld [vmem:[%s4274 + $0x1c] sm:$0xf]
      %v4283 = vld [vmem:[%s4274 + $0x20] sm:$0xf]
      %v4284 = vld [vmem:[%s4274 + $0x24] sm:$0xf]
      %v4285 = vld [vmem:[%s4274 + $0x28] sm:$0xf]
      %v4286 = vld [vmem:[%s4274 + $0x2c] sm:$0xf]
      %v4287 = vld [vmem:[%s4274 + $0x30] sm:$0xf]
      %v4288 = vld [vmem:[%s4274 + $0x34] sm:$0xf]
      %v4289 = vld [vmem:[%s4274 + $0x38] sm:$0xf]
      %v4290 = vld [vmem:[%s4274 + $0x3c] sm:$0xf]
      %vm4291 = vcmask 1044480
      %v4292 = vrot.slane %v1598, 3
      %v4293 = vrot.slane %v1599, 3
      %v4294 = vsel %vm4291, %v4292, %v4293
      %v4295 = vrot.slane %v1600, 3
      %v4296 = vsel %vm4291, %v4293, %v4295
      %v4297 = vrot.slane %v1601, 3
      %v4298 = vsel %vm4291, %v4295, %v4297
      %v4299 = vrot.slane %v1602, 3
      %v4300 = vsel %vm4291, %v4297, %v4299
      %v4301 = vrot.slane %v1603, 3
      %v4302 = vsel %vm4291, %v4299, %v4301
      %v4303 = vrot.slane %v1604, 3
      %v4304 = vsel %vm4291, %v4301, %v4303
      %v4305 = vrot.slane %v1605, 3
      %v4306 = vsel %vm4291, %v4303, %v4305
      %v4307 = vrot.slane %v1606, 3
      %v4308 = vsel %vm4291, %v4305, %v4307
      %v4309 = vrot.slane %v1607, 3
      %v4310 = vsel %vm4291, %v4307, %v4309
      %v4311 = vrot.slane %v1608, 3
      %v4312 = vsel %vm4291, %v4309, %v4311
      %v4313 = vrot.slane %v1609, 3
      %v4314 = vsel %vm4291, %v4311, %v4313
      %v4315 = vrot.slane %v1610, 3
      %v4316 = vsel %vm4291, %v4313, %v4315
      %v4317 = vrot.slane %v1611, 3
      %v4318 = vsel %vm4291, %v4315, %v4317
      %v4319 = vrot.slane %v1612, 3
      %v4320 = vsel %vm4291, %v4317, %v4319
      %v4321 = vrot.slane %v1613, 3
      %v4322 = vsel %vm4291, %v4319, %v4321
      %v4323 = vrot.slane %v1614, 3
      %v4324 = vsel %vm4291, %v4321, %v4323
      %v4325 = vrot.slane %v1615, 3
      %v4326 = vsel %vm4291, %v4323, %v4325
      %v4327 = vrot.slane %v1616, 3
      %v4328 = vsel %vm4291, %v4325, %v4327
      %v4363 = vunpack.c.l.b16 %v4275
      %v4364 = vunpack.c.l.b16 %v4276
      %v4365 = vunpack.c.l.b16 %v4277
      %v4366 = vunpack.c.l.b16 %v4278
      %v4367 = vunpack.c.l.b16 %v4279
      %v4368 = vunpack.c.l.b16 %v4280
      %v4369 = vunpack.c.l.b16 %v4281
      %v4370 = vunpack.c.l.b16 %v4282
      %v4371 = vunpack.c.l.b16 %v4283
      %v4372 = vunpack.c.l.b16 %v4284
      %v4373 = vunpack.c.l.b16 %v4285
      %v4374 = vunpack.c.l.b16 %v4286
      %v4375 = vunpack.c.l.b16 %v4287
      %v4376 = vunpack.c.l.b16 %v4288
      %v4377 = vunpack.c.l.b16 %v4289
      %v4378 = vunpack.c.l.b16 %v4290
      %v4379 = vpack.c.b16 %v4364, %v4363
      %v4380 = vpack.c.b16 %v4366, %v4365
      %v4381 = vpack.c.b16 %v4368, %v4367
      %v4382 = vpack.c.b16 %v4370, %v4369
      %v4383 = vpack.c.b16 %v4372, %v4371
      %v4384 = vpack.c.b16 %v4374, %v4373
      %v4385 = vpack.c.b16 %v4376, %v4375
      %v4386 = vpack.c.b16 %v4378, %v4377
      %4395 = vmatprep.subr.bf16.mxu0 0
      %4396 = vmatpush1.bf16.msra.mxu0 %v4379
      %4397 = vmatprep.subr.bf16.mxu0 0
      %4398 = vmatpush1.bf16.msra.mxu0 %v4380
      %4399 = vmatprep.subr.bf16.mxu0 0
      %4400 = vmatpush1.bf16.msra.mxu0 %v4381
      %4401 = vmatprep.subr.bf16.mxu0 0
      %4402 = vmatpush1.bf16.msra.mxu0 %v4382
      %4403 = vmatprep.subr.bf16.mxu0 0
      %4404 = vmatpush1.bf16.msra.mxu0 %v4383
      %4405 = vmatprep.subr.bf16.mxu0 0
      %4406 = vmatpush1.bf16.msra.mxu0 %v4384
      %4407 = vmatprep.subr.bf16.mxu0 0
      %4408 = vmatpush1.bf16.msra.mxu0 %v4385
      %4409 = vmatprep.subr.bf16.mxu0 0
      %4410 = vmatpush1.bf16.msra.mxu0 %v4386
      %4411 = vmatprep.subr.bf16.mxu0 0
      %4412 = vmatpush1.bf16.msra.mxu0 0
      %4413 = vmatprep.subr.bf16.mxu0 0
      %4414 = vmatpush1.bf16.msra.mxu0 0
      %4415 = vmatprep.subr.bf16.mxu0 0
      %4416 = vmatpush1.bf16.msra.mxu0 0
      %4417 = vmatprep.subr.bf16.mxu0 0
      %4418 = vmatpush1.bf16.msra.mxu0 0
      %4419 = vmatprep.subr.bf16.mxu0 0
      %4420 = vmatpush1.bf16.msra.mxu0 0
      %4421 = vmatprep.subr.bf16.mxu0 0
      %4422 = vmatpush1.bf16.msra.mxu0 0
      %4423 = vmatprep.subr.bf16.mxu0 0
      %4424 = vmatpush1.bf16.msra.mxu0 0
      %4425 = vmatprep.subr.bf16.mxu0 0
      %4426 = vmatpush1.bf16.msra.mxu0 0
      %4427 = vmatprep.mubr.bf16.mxu0 0
      %4428 = vmatmul.mubr.bf16.gmra.mrb[0].mxu0 %v4294
      %v4429 = vpop.f32.mrb[0].mxu0
      %v4430 = vadd.f32 0.0, %v4429
      %v4431 = vpop.f32.mrb[0].mxu0
      %v4432 = vpop.f32.mrb[0].mxu0
      %v4433 = vadd.f32 0.0, %v4432
      %v4434 = vpop.f32.mrb[0].mxu0
      %4435 = vmatprep.mubr.bf16.mxu0 0
      %4436 = vmatmul.mubr.bf16.gmra.mrb[0].mxu0 %v4296
      %v4437 = vpop.f32.mrb[0].mxu0
      %v4438 = vadd.f32 0.0, %v4437
      %v4439 = vpop.f32.mrb[0].mxu0
      %v4440 = vpop.f32.mrb[0].mxu0
      %v4441 = vadd.f32 0.0, %v4440
      %v4442 = vpop.f32.mrb[0].mxu0
      %4443 = vmatprep.mubr.bf16.mxu0 0
      %4444 = vmatmul.mubr.bf16.gmra.mrb[0].mxu0 %v4298
      %v4445 = vpop.f32.mrb[0].mxu0
      %v4446 = vadd.f32 0.0, %v4445
      %v4447 = vpop.f32.mrb[0].mxu0
      %v4448 = vpop.f32.mrb[0].mxu0
      %v4449 = vadd.f32 0.0, %v4448
      %v4450 = vpop.f32.mrb[0].mxu0
      %4451 = vmatprep.mubr.bf16.mxu0 0
      %4452 = vmatmul.mubr.bf16.gmra.mrb[0].mxu0 %v4300
      %v4453 = vpop.f32.mrb[0].mxu0
      %v4454 = vadd.f32 0.0, %v4453
      %v4455 = vpop.f32.mrb[0].mxu0
      %v4456 = vpop.f32.mrb[0].mxu0
      %v4457 = vadd.f32 0.0, %v4456
      %v4458 = vpop.f32.mrb[0].mxu0
      %4459 = vmatprep.mubr.bf16.mxu0 0
      %4460 = vmatmul.mubr.bf16.gmra.mrb[0].mxu0 %v4302
      %v4461 = vpop.f32.mrb[0].mxu0
      %v4462 = vadd.f32 0.0, %v4461
      %v4463 = vpop.f32.mrb[0].mxu0
      %v4464 = vpop.f32.mrb[0].mxu0
      %v4465 = vadd.f32 0.0, %v4464
      %v4466 = vpop.f32.mrb[0].mxu0
      %4467 = vmatprep.mubr.bf16.mxu0 0
      %4468 = vmatmul.mubr.bf16.gmra.mrb[0].mxu0 %v4304
      %v4469 = vpop.f32.mrb[0].mxu0
      %v4470 = vadd.f32 0.0, %v4469
      %v4471 = vpop.f32.mrb[0].mxu0
      %v4472 = vpop.f32.mrb[0].mxu0
      %v4473 = vadd.f32 0.0, %v4472
      %v4474 = vpop.f32.mrb[0].mxu0
      %4475 = vmatprep.mubr.bf16.mxu0 0
      %4476 = vmatmul.mubr.bf16.gmra.mrb[0].mxu0 %v4306
      %v4477 = vpop.f32.mrb[0].mxu0
      %v4478 = vadd.f32 0.0, %v4477
      %v4479 = vpop.f32.mrb[0].mxu0
      %v4480 = vpop.f32.mrb[0].mxu0
      %v4481 = vadd.f32 0.0, %v4480
      %v4482 = vpop.f32.mrb[0].mxu0
      %4483 = vmatprep.mubr.bf16.mxu0 0
      %4484 = vmatmul.mubr.bf16.gmra.mrb[0].mxu0 %v4308
      %v4485 = vpop.f32.mrb[0].mxu0
      %v4486 = vadd.f32 0.0, %v4485
      %v4487 = vpop.f32.mrb[0].mxu0
      %v4488 = vpop.f32.mrb[0].mxu0
      %v4489 = vadd.f32 0.0, %v4488
      %v4490 = vpop.f32.mrb[0].mxu0
      %4491 = vmatprep.mubr.bf16.mxu0 0
      %4492 = vmatmul.mubr.bf16.gmra.mrb[0].mxu0 %v4310
      %v4493 = vpop.f32.mrb[0].mxu0
      %v4494 = vadd.f32 0.0, %v4493
      %v4495 = vpop.f32.mrb[0].mxu0
      %v4496 = vpop.f32.mrb[0].mxu0
      %v4497 = vadd.f32 0.0, %v4496
      %v4498 = vpop.f32.mrb[0].mxu0
      %4499 = vmatprep.mubr.bf16.mxu0 0
      %4500 = vmatmul.mubr.bf16.gmra.mrb[0].mxu0 %v4312
      %v4501 = vpop.f32.mrb[0].mxu0
      %v4502 = vadd.f32 0.0, %v4501
      %v4503 = vpop.f32.mrb[0].mxu0
      %v4504 = vpop.f32.mrb[0].mxu0
      %v4505 = vadd.f32 0.0, %v4504
      %v4506 = vpop.f32.mrb[0].mxu0
      %4507 = vmatprep.mubr.bf16.mxu0 0
      %4508 = vmatmul.mubr.bf16.gmra.mrb[0].mxu0 %v4314
      %v4509 = vpop.f32.mrb[0].mxu0
      %v4510 = vadd.f32 0.0, %v4509
      %v4511 = vpop.f32.mrb[0].mxu0
      %v4512 = vpop.f32.mrb[0].mxu0
      %v4513 = vadd.f32 0.0, %v4512
      %v4514 = vpop.f32.mrb[0].mxu0
      %4515 = vmatprep.mubr.bf16.mxu0 0
      %4516 = vmatmul.mubr.bf16.gmra.mrb[0].mxu0 %v4316
      %v4517 = vpop.f32.mrb[0].mxu0
      %v4518 = vadd.f32 0.0, %v4517
      %v4519 = vpop.f32.mrb[0].mxu0
      %v4520 = vpop.f32.mrb[0].mxu0
      %v4521 = vadd.f32 0.0, %v4520
      %v4522 = vpop.f32.mrb[0].mxu0
      %4523 = vmatprep.mubr.bf16.mxu0 0
      %4524 = vmatmul.mubr.bf16.gmra.mrb[0].mxu0 %v4318
      %v4525 = vpop.f32.mrb[0].mxu0
      %v4526 = vadd.f32 0.0, %v4525
      %v4527 = vpop.f32.mrb[0].mxu0
      %v4528 = vpop.f32.mrb[0].mxu0
      %v4529 = vadd.f32 0.0, %v4528
      %v4530 = vpop.f32.mrb[0].mxu0
      %4531 = vmatprep.mubr.bf16.mxu0 0
      %4532 = vmatmul.mubr.bf16.gmra.mrb[0].mxu0 %v4320
      %v4533 = vpop.f32.mrb[0].mxu0
      %v4534 = vadd.f32 0.0, %v4533
      %v4535 = vpop.f32.mrb[0].mxu0
      %v4536 = vpop.f32.mrb[0].mxu0
      %v4537 = vadd.f32 0.0, %v4536
      %v4538 = vpop.f32.mrb[0].mxu0
      %4539 = vmatprep.mubr.bf16.mxu0 0
      %4540 = vmatmul.mubr.bf16.gmra.mrb[0].mxu0 %v4322
      %v4541 = vpop.f32.mrb[0].mxu0
      %v4542 = vadd.f32 0.0, %v4541
      %v4543 = vpop.f32.mrb[0].mxu0
      %v4544 = vpop.f32.mrb[0].mxu0
      %v4545 = vadd.f32 0.0, %v4544
      %v4546 = vpop.f32.mrb[0].mxu0
      %4547 = vmatprep.mubr.bf16.mxu0 0
      %4548 = vmatmul.mubr.bf16.gmra.mrb[0].mxu0 %v4324
      %v4549 = vpop.f32.mrb[0].mxu0
      %v4550 = vadd.f32 0.0, %v4549
      %v4551 = vpop.f32.mrb[0].mxu0
      %v4552 = vpop.f32.mrb[0].mxu0
      %v4553 = vadd.f32 0.0, %v4552
      %v4554 = vpop.f32.mrb[0].mxu0
      %4555 = vmatprep.mubr.bf16.mxu0 0
      %4556 = vmatmul.mubr.bf16.gmra.mrb[0].mxu0 %v4326
      %v4557 = vpop.f32.mrb[0].mxu0
      %v4558 = vadd.f32 0.0, %v4557
      %v4559 = vpop.f32.mrb[0].mxu0
      %v4560 = vpop.f32.mrb[0].mxu0
      %v4561 = vadd.f32 0.0, %v4560
      %v4562 = vpop.f32.mrb[0].mxu0
      %4563 = vmatprep.mubr.bf16.mxu0 0
      %4564 = vmatmul.mubr.bf16.gmra.mrb[0].mxu0 %v4328
      %v4565 = vpop.f32.mrb[0].mxu0
      %v4566 = vadd.f32 0.0, %v4565
      %v4567 = vpop.f32.mrb[0].mxu0
      %v4568 = vpop.f32.mrb[0].mxu0
      %v4569 = vadd.f32 0.0, %v4568
      %v4570 = vpop.f32.mrb[0].mxu0
      %4571 = vdwg.mxu0
      %v4572 = vadd.f32 %v4238, %v4430
      %v4573 = vadd.f32 %v4239, %v4433
      %v4574 = vadd.f32 %v4240, %v4438
      %v4575 = vadd.f32 %v4241, %v4441
      %v4576 = vadd.f32 %v4242, %v4446
      %v4577 = vadd.f32 %v4243, %v4449
      %v4578 = vadd.f32 %v4244, %v4454
      %v4579 = vadd.f32 %v4245, %v4457
      %v4580 = vadd.f32 %v4246, %v4462
      %v4581 = vadd.f32 %v4247, %v4465
      %v4582 = vadd.f32 %v4248, %v4470
      %v4583 = vadd.f32 %v4249, %v4473
      %v4584 = vadd.f32 %v4250, %v4478
      %v4585 = vadd.f32 %v4251, %v4481
      %v4586 = vadd.f32 %v4252, %v4486
      %v4587 = vadd.f32 %v4253, %v4489
      %v4588 = vadd.f32 %v4254, %v4494
      %v4589 = vadd.f32 %v4255, %v4497
      %v4590 = vadd.f32 %v4256, %v4502
      %v4591 = vadd.f32 %v4257, %v4505
      %v4592 = vadd.f32 %v4258, %v4510
      %v4593 = vadd.f32 %v4259, %v4513
      %v4594 = vadd.f32 %v4260, %v4518
      %v4595 = vadd.f32 %v4261, %v4521
      %v4596 = vadd.f32 %v4262, %v4526
      %v4597 = vadd.f32 %v4263, %v4529
      %v4598 = vadd.f32 %v4264, %v4534
      %v4599 = vadd.f32 %v4265, %v4537
      %v4600 = vadd.f32 %v4266, %v4542
      %v4601 = vadd.f32 %v4267, %v4545
      %v4602 = vadd.f32 %v4268, %v4550
      %v4603 = vadd.f32 %v4269, %v4553
      %v4604 = vadd.f32 %v4270, %v4558
      %v4605 = vadd.f32 %v4271, %v4561
      %v4606 = vadd.f32 %v4272, %v4566
      %v4607 = vadd.f32 %v4273, %v4569
      %vm4608 = vcmp.lt.s32.totalorder %v952, 16
      %vm4609 = vcmp.lt.s32.totalorder %v953, 16
      %vm4610 = vcmp.lt.s32.totalorder %v954, 16
      %vm4611 = vcmp.lt.s32.totalorder %v955, 16
      %vm4612 = vcmp.lt.s32.totalorder %v956, 16
      %vm4613 = vcmp.lt.s32.totalorder %v957, 16
      %vm4614 = vcmp.lt.s32.totalorder %v958, 16
      %vm4615 = vcmp.lt.s32.totalorder %v959, 16
      %vm4616 = vcmp.lt.s32.totalorder %v960, 16
      %vm4617 = vcmp.lt.s32.totalorder %v961, 16
      %vm4618 = vcmp.lt.s32.totalorder %v962, 16
      %vm4619 = vcmp.lt.s32.totalorder %v963, 16
      %vm4620 = vcmp.lt.s32.totalorder %v964, 16
      %vm4621 = vcmp.lt.s32.totalorder %v965, 16
      %vm4622 = vcmp.lt.s32.totalorder %v966, 16
      %vm4623 = vcmp.lt.s32.totalorder %v967, 16
      %vm4624 = vcmp.lt.s32.totalorder %v968, 16
      %vm4625 = vcmp.lt.s32.totalorder %v969, 16
      %vm4626 = vcmp.lt.s32.totalorder %v970, 16
      %vm4627 = vcmp.lt.s32.totalorder %v971, 16
      %vm4628 = vcmp.lt.s32.totalorder %v972, 16
      %vm4629 = vcmp.lt.s32.totalorder %v973, 16
      %vm4630 = vcmp.lt.s32.totalorder %v974, 16
      %vm4631 = vcmp.lt.s32.totalorder %v975, 16
      %vm4632 = vcmp.lt.s32.totalorder %v976, 16
      %vm4633 = vcmp.lt.s32.totalorder %v977, 16
      %vm4634 = vcmp.lt.s32.totalorder %v978, 16
      %vm4635 = vcmp.lt.s32.totalorder %v979, 16
      %vm4636 = vcmp.lt.s32.totalorder %v980, 16
      %vm4637 = vcmp.lt.s32.totalorder %v981, 16
      %vm4638 = vcmp.lt.s32.totalorder %v982, 16
      %vm4639 = vcmp.lt.s32.totalorder %v983, 16
      %vm4640 = vcmp.lt.s32.totalorder %v984, 16
      %vm4641 = vcmp.lt.s32.totalorder %v985, 16
      %vm4642 = vcmp.lt.s32.totalorder %v986, 16
      %vm4643 = vcmp.lt.s32.totalorder %v987, 16
      %v4644 = vsel %vm4608, 1, 0
      %v4645 = vsel %vm4609, 1, 0
      %v4646 = vsel %vm4610, 1, 0
      %v4647 = vsel %vm4611, 1, 0
      %v4648 = vsel %vm4612, 1, 0
      %v4649 = vsel %vm4613, 1, 0
      %v4650 = vsel %vm4614, 1, 0
      %v4651 = vsel %vm4615, 1, 0
      %v4652 = vsel %vm4616, 1, 0
      %v4653 = vsel %vm4617, 1, 0
      %v4654 = vsel %vm4618, 1, 0
      %v4655 = vsel %vm4619, 1, 0
      %v4656 = vsel %vm4620, 1, 0
      %v4657 = vsel %vm4621, 1, 0
      %v4658 = vsel %vm4622, 1, 0
      %v4659 = vsel %vm4623, 1, 0
      %v4660 = vsel %vm4624, 1, 0
      %v4661 = vsel %vm4625, 1, 0
      %v4662 = vsel %vm4626, 1, 0
      %v4663 = vsel %vm4627, 1, 0
      %v4664 = vsel %vm4628, 1, 0
      %v4665 = vsel %vm4629, 1, 0
      %v4666 = vsel %vm4630, 1, 0
      %v4667 = vsel %vm4631, 1, 0
      %v4668 = vsel %vm4632, 1, 0
      %v4669 = vsel %vm4633, 1, 0
      %v4670 = vsel %vm4634, 1, 0
      %v4671 = vsel %vm4635, 1, 0
      %v4672 = vsel %vm4636, 1, 0
      %v4673 = vsel %vm4637, 1, 0
      %v4674 = vsel %vm4638, 1, 0
      %v4675 = vsel %vm4639, 1, 0
      %v4676 = vsel %vm4640, 1, 0
      %v4677 = vsel %vm4641, 1, 0
      %v4678 = vsel %vm4642, 1, 0
      %v4679 = vsel %vm4643, 1, 0
      %vm4680 = vcmp.eq.s32.totalorder %v4644, 1
      %vm4681 = vcmp.eq.s32.totalorder %v4645, 1
      %vm4682 = vcmp.eq.s32.totalorder %v4646, 1
      %vm4683 = vcmp.eq.s32.totalorder %v4647, 1
      %vm4684 = vcmp.eq.s32.totalorder %v4648, 1
      %vm4685 = vcmp.eq.s32.totalorder %v4649, 1
      %vm4686 = vcmp.eq.s32.totalorder %v4650, 1
      %vm4687 = vcmp.eq.s32.totalorder %v4651, 1
      %vm4688 = vcmp.eq.s32.totalorder %v4652, 1
      %vm4689 = vcmp.eq.s32.totalorder %v4653, 1
      %vm4690 = vcmp.eq.s32.totalorder %v4654, 1
      %vm4691 = vcmp.eq.s32.totalorder %v4655, 1
      %vm4692 = vcmp.eq.s32.totalorder %v4656, 1
      %vm4693 = vcmp.eq.s32.totalorder %v4657, 1
      %vm4694 = vcmp.eq.s32.totalorder %v4658, 1
      %vm4695 = vcmp.eq.s32.totalorder %v4659, 1
      %vm4696 = vcmp.eq.s32.totalorder %v4660, 1
      %vm4697 = vcmp.eq.s32.totalorder %v4661, 1
      %vm4698 = vcmp.eq.s32.totalorder %v4662, 1
      %vm4699 = vcmp.eq.s32.totalorder %v4663, 1
      %vm4700 = vcmp.eq.s32.totalorder %v4664, 1
      %vm4701 = vcmp.eq.s32.totalorder %v4665, 1
      %vm4702 = vcmp.eq.s32.totalorder %v4666, 1
      %vm4703 = vcmp.eq.s32.totalorder %v4667, 1
      %vm4704 = vcmp.eq.s32.totalorder %v4668, 1
      %vm4705 = vcmp.eq.s32.totalorder %v4669, 1
      %vm4706 = vcmp.eq.s32.totalorder %v4670, 1
      %vm4707 = vcmp.eq.s32.totalorder %v4671, 1
      %vm4708 = vcmp.eq.s32.totalorder %v4672, 1
      %vm4709 = vcmp.eq.s32.totalorder %v4673, 1
      %vm4710 = vcmp.eq.s32.totalorder %v4674, 1
      %vm4711 = vcmp.eq.s32.totalorder %v4675, 1
      %vm4712 = vcmp.eq.s32.totalorder %v4676, 1
      %vm4713 = vcmp.eq.s32.totalorder %v4677, 1
      %vm4714 = vcmp.eq.s32.totalorder %v4678, 1
      %vm4715 = vcmp.eq.s32.totalorder %v4679, 1
      %v4716 = vsel %vm4680, %v4572, 0.0
      %v4717 = vsel %vm4681, %v4573, 0.0
      %v4718 = vsel %vm4682, %v4574, 0.0
      %v4719 = vsel %vm4683, %v4575, 0.0
      %v4720 = vsel %vm4684, %v4576, 0.0
      %v4721 = vsel %vm4685, %v4577, 0.0
      %v4722 = vsel %vm4686, %v4578, 0.0
      %v4723 = vsel %vm4687, %v4579, 0.0
      %v4724 = vsel %vm4688, %v4580, 0.0
      %v4725 = vsel %vm4689, %v4581, 0.0
      %v4726 = vsel %vm4690, %v4582, 0.0
      %v4727 = vsel %vm4691, %v4583, 0.0
      %v4728 = vsel %vm4692, %v4584, 0.0
      %v4729 = vsel %vm4693, %v4585, 0.0
      %v4730 = vsel %vm4694, %v4586, 0.0
      %v4731 = vsel %vm4695, %v4587, 0.0
      %v4732 = vsel %vm4696, %v4588, 0.0
      %v4733 = vsel %vm4697, %v4589, 0.0
      %v4734 = vsel %vm4698, %v4590, 0.0
      %v4735 = vsel %vm4699, %v4591, 0.0
      %v4736 = vsel %vm4700, %v4592, 0.0
      %v4737 = vsel %vm4701, %v4593, 0.0
      %v4738 = vsel %vm4702, %v4594, 0.0
      %v4739 = vsel %vm4703, %v4595, 0.0
      %v4740 = vsel %vm4704, %v4596, 0.0
      %v4741 = vsel %vm4705, %v4597, 0.0
      %v4742 = vsel %vm4706, %v4598, 0.0
      %v4743 = vsel %vm4707, %v4599, 0.0
      %v4744 = vsel %vm4708, %v4600, 0.0
      %v4745 = vsel %vm4709, %v4601, 0.0
      %v4746 = vsel %vm4710, %v4602, 0.0
      %v4747 = vsel %vm4711, %v4603, 0.0
      %v4748 = vsel %vm4712, %v4604, 0.0
      %v4749 = vsel %vm4713, %v4605, 0.0
      %v4750 = vsel %vm4714, %v4606, 0.0
      %v4751 = vsel %vm4715, %v4607, 0.0
      %v4752 = vadd.f32 %v4716, %v4717
      %v4753 = vadd.f32 %v4752, %v4718
      %v4754 = vadd.f32 %v4753, %v4719
      %v4755 = vadd.f32 %v4754, %v4720
      %v4756 = vadd.f32 %v4755, %v4721
      %v4757 = vadd.f32 %v4756, %v4722
      %v4758 = vadd.f32 %v4757, %v4723
      %v4759 = vadd.f32 %v4758, %v4724
      %v4760 = vadd.f32 %v4759, %v4725
      %v4761 = vadd.f32 %v4760, %v4726
      %v4762 = vadd.f32 %v4761, %v4727
      %v4763 = vadd.f32 %v4762, %v4728
      %v4764 = vadd.f32 %v4763, %v4729
      %v4765 = vadd.f32 %v4764, %v4730
      %v4766 = vadd.f32 %v4765, %v4731
      %v4767 = vadd.f32 %v4766, %v4732
      %v4768 = vadd.f32 %v4767, %v4733
      %v4769 = vadd.f32 %v4768, %v4734
      %v4770 = vadd.f32 %v4769, %v4735
      %v4771 = vadd.f32 %v4770, %v4736
      %v4772 = vadd.f32 %v4771, %v4737
      %v4773 = vadd.f32 %v4772, %v4738
      %v4774 = vadd.f32 %v4773, %v4739
      %v4775 = vadd.f32 %v4774, %v4740
      %v4776 = vadd.f32 %v4775, %v4741
      %v4777 = vadd.f32 %v4776, %v4742
      %v4778 = vadd.f32 %v4777, %v4743
      %v4779 = vadd.f32 %v4778, %v4744
      %v4780 = vadd.f32 %v4779, %v4745
      %v4781 = vadd.f32 %v4780, %v4746
      %v4782 = vadd.f32 %v4781, %v4747
      %v4783 = vadd.f32 %v4782, %v4748
      %v4784 = vadd.f32 %v4783, %v4749
      %v4785 = vadd.f32 %v4784, %v4750
      %v4786 = vadd.f32 %v4785, %v4751
      %v4787 = vrot.slane %v4786, 4
      %v4788 = vadd.f32 %v4786, %v4787
      %v4789 = vrot.slane %v4788, 2
      %v4790 = vadd.f32 %v4788, %v4789
      %v4791 = vrot.slane %v4790, 1
      %v4792 = vadd.f32 %v4790, %v4791
      %4793 = vst [vmem:[%s235] sm:$0x1] %v4792
      %v4794 = vmul.f32 %v4716, %v4716
      %v4795 = vmul.f32 %v4717, %v4717
      %v4796 = vmul.f32 %v4718, %v4718
      %v4797 = vmul.f32 %v4719, %v4719
      %v4798 = vmul.f32 %v4720, %v4720
      %v4799 = vmul.f32 %v4721, %v4721
      %v4800 = vmul.f32 %v4722, %v4722
      %v4801 = vmul.f32 %v4723, %v4723
      %v4802 = vmul.f32 %v4724, %v4724
      %v4803 = vmul.f32 %v4725, %v4725
      %v4804 = vmul.f32 %v4726, %v4726
      %v4805 = vmul.f32 %v4727, %v4727
      %v4806 = vmul.f32 %v4728, %v4728
      %v4807 = vmul.f32 %v4729, %v4729
      %v4808 = vmul.f32 %v4730, %v4730
      %v4809 = vmul.f32 %v4731, %v4731
      %v4810 = vmul.f32 %v4732, %v4732
      %v4811 = vmul.f32 %v4733, %v4733
      %v4812 = vmul.f32 %v4734, %v4734
      %v4813 = vmul.f32 %v4735, %v4735
      %v4814 = vmul.f32 %v4736, %v4736
      %v4815 = vmul.f32 %v4737, %v4737
      %v4816 = vmul.f32 %v4738, %v4738
      %v4817 = vmul.f32 %v4739, %v4739
      %v4818 = vmul.f32 %v4740, %v4740
      %v4819 = vmul.f32 %v4741, %v4741
      %v4820 = vmul.f32 %v4742, %v4742
      %v4821 = vmul.f32 %v4743, %v4743
      %v4822 = vmul.f32 %v4744, %v4744
      %v4823 = vmul.f32 %v4745, %v4745
      %v4824 = vmul.f32 %v4746, %v4746
      %v4825 = vmul.f32 %v4747, %v4747
      %v4826 = vmul.f32 %v4748, %v4748
      %v4827 = vmul.f32 %v4749, %v4749
      %v4828 = vmul.f32 %v4750, %v4750
      %v4829 = vmul.f32 %v4751, %v4751
      %v4830 = vadd.f32 %v4794, %v4795
      %v4831 = vadd.f32 %v4830, %v4796
      %v4832 = vadd.f32 %v4831, %v4797
      %v4833 = vadd.f32 %v4832, %v4798
      %v4834 = vadd.f32 %v4833, %v4799
      %v4835 = vadd.f32 %v4834, %v4800
      %v4836 = vadd.f32 %v4835, %v4801
      %v4837 = vadd.f32 %v4836, %v4802
      %v4838 = vadd.f32 %v4837, %v4803
      %v4839 = vadd.f32 %v4838, %v4804
      %v4840 = vadd.f32 %v4839, %v4805
      %v4841 = vadd.f32 %v4840, %v4806
      %v4842 = vadd.f32 %v4841, %v4807
      %v4843 = vadd.f32 %v4842, %v4808
      %v4844 = vadd.f32 %v4843, %v4809
      %v4845 = vadd.f32 %v4844, %v4810
      %v4846 = vadd.f32 %v4845, %v4811
      %v4847 = vadd.f32 %v4846, %v4812
      %v4848 = vadd.f32 %v4847, %v4813
      %v4849 = vadd.f32 %v4848, %v4814
      %v4850 = vadd.f32 %v4849, %v4815
      %v4851 = vadd.f32 %v4850, %v4816
      %v4852 = vadd.f32 %v4851, %v4817
      %v4853 = vadd.f32 %v4852, %v4818
      %v4854 = vadd.f32 %v4853, %v4819
      %v4855 = vadd.f32 %v4854, %v4820
      %v4856 = vadd.f32 %v4855, %v4821
      %v4857 = vadd.f32 %v4856, %v4822
      %v4858 = vadd.f32 %v4857, %v4823
      %v4859 = vadd.f32 %v4858, %v4824
      %v4860 = vadd.f32 %v4859, %v4825
      %v4861 = vadd.f32 %v4860, %v4826
      %v4862 = vadd.f32 %v4861, %v4827
      %v4863 = vadd.f32 %v4862, %v4828
      %v4864 = vadd.f32 %v4863, %v4829
      %v4865 = vrot.slane %v4864, 4
      %v4866 = vadd.f32 %v4864, %v4865
      %v4867 = vrot.slane %v4866, 2
      %v4868 = vadd.f32 %v4866, %v4867
      %v4869 = vrot.slane %v4868, 1
      %v4870 = vadd.f32 %v4868, %v4869
      %4871 = vst [vmem:[%s235 + $0x1] sm:$0x1] %v4870
      %4872 = vst [vmem:[%s231] sm:$0xf] 0
      %4873 = vst [vmem:[%s231 + $0x4] sm:$0xf] 0
      %4874 = vst [vmem:[%s231 + $0x8] sm:$0xf] 0
      %4875 = vst [vmem:[%s231 + $0xc] sm:$0xf] 0
      %4876 = vst [vmem:[%s231 + $0x10] sm:$0xf] 0
      %4877 = vst [vmem:[%s231 + $0x14] sm:$0xf] 0
      %4878 = vst [vmem:[%s231 + $0x18] sm:$0xf] 0
      %4879 = vst [vmem:[%s231 + $0x1c] sm:$0xf] 0
      %4880 = vst [vmem:[%s231 + $0x20] sm:$0xf] 0
      %4881 = vst [vmem:[%s231 + $0x24] sm:$0xf] 0
      %4882 = vst [vmem:[%s231 + $0x28] sm:$0xf] 0
      %4883 = vst [vmem:[%s231 + $0x2c] sm:$0xf] 0
      %4884 = vst [vmem:[%s231 + $0x30] sm:$0xf] 0
      %4885 = vst [vmem:[%s231 + $0x34] sm:$0xf] 0
      %4886 = vst [vmem:[%s231 + $0x38] sm:$0xf] 0
      %4887 = vst [vmem:[%s231 + $0x3c] sm:$0xf] 0
      %4888 = vst [vmem:[%s231 + $0x40] sm:$0xf] 0
      %4889 = vst [vmem:[%s231 + $0x44] sm:$0xf] 0
      %4890 = vst [vmem:[%s231 + $0x48] sm:$0xf] 0
      %4891 = vst [vmem:[%s231 + $0x4c] sm:$0xf] 0
      %4892 = vst [vmem:[%s231 + $0x50] sm:$0xf] 0
      %4893 = vst [vmem:[%s231 + $0x54] sm:$0xf] 0
      %4894 = vst [vmem:[%s231 + $0x58] sm:$0xf] 0
      %4895 = vst [vmem:[%s231 + $0x5c] sm:$0xf] 0
      %4896 = vst [vmem:[%s231 + $0x60] sm:$0xf] 0
      %4897 = vst [vmem:[%s231 + $0x64] sm:$0xf] 0
      %4898 = vst [vmem:[%s231 + $0x68] sm:$0xf] 0
      %4899 = vst [vmem:[%s231 + $0x6c] sm:$0xf] 0
      %4900 = vst [vmem:[%s231 + $0x70] sm:$0xf] 0
      %4901 = vst [vmem:[%s231 + $0x74] sm:$0xf] 0
      %4902 = vst [vmem:[%s231 + $0x78] sm:$0xf] 0
      %4903 = vst [vmem:[%s231 + $0x7c] sm:$0xf] 0
      %4904 = vst [vmem:[%s231 + $0x80] sm:$0xf] 0
      %4905 = vst [vmem:[%s231 + $0x84] sm:$0xf] 0
      %4906 = vst [vmem:[%s231 + $0x88] sm:$0xf] 0
      %4907 = vst [vmem:[%s231 + $0x8c] sm:$0xf] 0
      %4908 = vst [vmem:[%s231 + $0x90] sm:$0xf] 0
      %4909 = vst [vmem:[%s231 + $0x94] sm:$0xf] 0
      %4910 = vst [vmem:[%s231 + $0x98] sm:$0xf] 0
      %4911 = vst [vmem:[%s231 + $0x9c] sm:$0xf] 0
      %4912 = vst [vmem:[%s231 + $0xa0] sm:$0xf] 0
      %4913 = vst [vmem:[%s231 + $0xa4] sm:$0xf] 0
      %4914 = vst [vmem:[%s231 + $0xa8] sm:$0xf] 0
      %4915 = vst [vmem:[%s231 + $0xac] sm:$0xf] 0
      %4916 = vst [vmem:[%s231 + $0xb0] sm:$0xf] 0
      %v4917 = vpack.c.bf16 %v4717, %v4716
      %v4918 = vpack.c.bf16 %v4719, %v4718
      %v4919 = vpack.c.bf16 %v4721, %v4720
      %v4920 = vpack.c.bf16 %v4723, %v4722
      %v4921 = vpack.c.bf16 %v4725, %v4724
      %v4922 = vpack.c.bf16 %v4727, %v4726
      %v4923 = vpack.c.bf16 %v4729, %v4728
      %v4924 = vpack.c.bf16 %v4731, %v4730
      %v4925 = vpack.c.bf16 %v4733, %v4732
      %v4926 = vpack.c.bf16 %v4735, %v4734
      %v4927 = vpack.c.bf16 %v4737, %v4736
      %v4928 = vpack.c.bf16 %v4739, %v4738
      %v4929 = vpack.c.bf16 %v4741, %v4740
      %v4930 = vpack.c.bf16 %v4743, %v4742
      %v4931 = vpack.c.bf16 %v4745, %v4744
      %v4932 = vpack.c.bf16 %v4747, %v4746
      %v4933 = vpack.c.bf16 %v4749, %v4748
      %v4934 = vpack.c.bf16 %v4751, %v4750
      %v4953 = vunpack.c.l.b16 %v4917
      %v4954 = vunpack.c.h.b16 %v4917
      %v4955 = vunpack.c.l.b16 %v4918
      %v4956 = vunpack.c.h.b16 %v4918
      %v4957 = vunpack.c.l.b16 %v4919
      %v4958 = vunpack.c.h.b16 %v4919
      %v4959 = vunpack.c.l.b16 %v4920
      %v4960 = vunpack.c.h.b16 %v4920
      %v4961 = vunpack.c.l.b16 %v4921
      %v4962 = vunpack.c.h.b16 %v4921
      %v4963 = vunpack.c.l.b16 %v4922
      %v4964 = vunpack.c.h.b16 %v4922
      %v4965 = vunpack.c.l.b16 %v4923
      %v4966 = vunpack.c.h.b16 %v4923
      %v4967 = vunpack.c.l.b16 %v4924
      %v4968 = vunpack.c.h.b16 %v4924
      %v4969 = vunpack.c.l.b16 %v4925
      %v4970 = vunpack.c.h.b16 %v4925
      %v4971 = vunpack.c.l.b16 %v4926
      %v4972 = vunpack.c.h.b16 %v4926
      %v4973 = vunpack.c.l.b16 %v4927
      %v4974 = vunpack.c.h.b16 %v4927
      %v4975 = vunpack.c.l.b16 %v4928
      %v4976 = vunpack.c.h.b16 %v4928
      %v4977 = vunpack.c.l.b16 %v4929
      %v4978 = vunpack.c.h.b16 %v4929
      %v4979 = vunpack.c.l.b16 %v4930
      %v4980 = vunpack.c.h.b16 %v4930
      %v4981 = vunpack.c.l.b16 %v4931
      %v4982 = vunpack.c.h.b16 %v4931
      %v4983 = vunpack.c.l.b16 %v4932
      %v4984 = vunpack.c.h.b16 %v4932
      %v4985 = vunpack.c.l.b16 %v4933
      %v4986 = vunpack.c.h.b16 %v4933
      %v4987 = vunpack.c.l.b16 %v4934
      %v4988 = vunpack.c.h.b16 %v4934
      %v4989 = vpack.c.b16 %v4953, %v4953
      %v4990 = vpack.c.b16 %v4954, %v4954
      %v4991 = vpack.c.b16 %v4955, %v4955
      %v4992 = vpack.c.b16 %v4956, %v4956
      %v4993 = vpack.c.b16 %v4957, %v4957
      %v4994 = vpack.c.b16 %v4958, %v4958
      %v4995 = vpack.c.b16 %v4959, %v4959
      %v4996 = vpack.c.b16 %v4960, %v4960
      %v4997 = vpack.c.b16 %v4961, %v4961
      %v4998 = vpack.c.b16 %v4962, %v4962
      %v4999 = vpack.c.b16 %v4963, %v4963
      %v5000 = vpack.c.b16 %v4964, %v4964
      %v5001 = vpack.c.b16 %v4965, %v4965
      %v5002 = vpack.c.b16 %v4966, %v4966
      %v5003 = vpack.c.b16 %v4967, %v4967
      %v5004 = vpack.c.b16 %v4968, %v4968
      %v5005 = vpack.c.b16 %v4969, %v4969
      %v5006 = vpack.c.b16 %v4970, %v4970
      %v5007 = vpack.c.b16 %v4971, %v4971
      %v5008 = vpack.c.b16 %v4972, %v4972
      %v5009 = vpack.c.b16 %v4973, %v4973
      %v5010 = vpack.c.b16 %v4974, %v4974
      %v5011 = vpack.c.b16 %v4975, %v4975
      %v5012 = vpack.c.b16 %v4976, %v4976
      %v5013 = vpack.c.b16 %v4977, %v4977
      %v5014 = vpack.c.b16 %v4978, %v4978
      %v5015 = vpack.c.b16 %v4979, %v4979
      %v5016 = vpack.c.b16 %v4980, %v4980
      %v5017 = vpack.c.b16 %v4981, %v4981
      %v5018 = vpack.c.b16 %v4982, %v4982
      %v5019 = vpack.c.b16 %v4983, %v4983
      %v5020 = vpack.c.b16 %v4984, %v4984
      %v5021 = vpack.c.b16 %v4985, %v4985
      %v5022 = vpack.c.b16 %v4986, %v4986
      %v5023 = vpack.c.b16 %v4987, %v4987
      %v5024 = vpack.c.b16 %v4988, %v4988
      %vm5025 = vsmask.f32 1280
      %vm5026 = vsmask.f32 5392
      %vm5027 = vmor %vm5025, %vm5026
      %v5029 = vshrl.u32 %v4989, 16
      %v5031 = vrot.slane %v5029, 6
      %v5032 = vshll.u32 %v4989, 16
      %v5034 = vrot.slane %v5032, 7
      %v5035 = vor.u32 %v5031, %v5034
      %v5036 = vrot.slane %v5035, 4
      %v5038 = vshrl.u32 %v4990, 16
      %v5040 = vrot.slane %v5038, 6
      %v5041 = vshll.u32 %v4990, 16
      %v5043 = vrot.slane %v5041, 7
      %v5044 = vor.u32 %v5040, %v5043
      %v5045 = vsel %vm5027, %v5036, %v5044
      %v5046 = vrot.slane %v5044, 4
      %v5048 = vshrl.u32 %v4991, 16
      %v5050 = vrot.slane %v5048, 6
      %v5051 = vshll.u32 %v4991, 16
      %v5053 = vrot.slane %v5051, 7
      %v5054 = vor.u32 %v5050, %v5053
      %v5055 = vsel %vm5027, %v5046, %v5054
      %v5056 = vrot.slane %v5054, 4
      %v5058 = vshrl.u32 %v4992, 16
      %v5060 = vrot.slane %v5058, 6
      %v5061 = vshll.u32 %v4992, 16
      %v5063 = vrot.slane %v5061, 7
      %v5064 = vor.u32 %v5060, %v5063
      %v5065 = vsel %vm5027, %v5056, %v5064
      %v5066 = vrot.slane %v5064, 4
      %v5068 = vshrl.u32 %v4993, 16
      %v5070 = vrot.slane %v5068, 6
      %v5071 = vshll.u32 %v4993, 16
      %v5073 = vrot.slane %v5071, 7
      %v5074 = vor.u32 %v5070, %v5073
      %v5075 = vsel %vm5027, %v5066, %v5074
      %v5076 = vrot.slane %v5074, 4
      %v5078 = vshrl.u32 %v4994, 16
      %v5080 = vrot.slane %v5078, 6
      %v5081 = vshll.u32 %v4994, 16
      %v5083 = vrot.slane %v5081, 7
      %v5084 = vor.u32 %v5080, %v5083
      %v5085 = vsel %vm5027, %v5076, %v5084
      %v5086 = vrot.slane %v5084, 4
      %v5088 = vshrl.u32 %v4995, 16
      %v5090 = vrot.slane %v5088, 6
      %v5091 = vshll.u32 %v4995, 16
      %v5093 = vrot.slane %v5091, 7
      %v5094 = vor.u32 %v5090, %v5093
      %v5095 = vsel %vm5027, %v5086, %v5094
      %v5096 = vrot.slane %v5094, 4
      %v5098 = vshrl.u32 %v4996, 16
      %v5100 = vrot.slane %v5098, 6
      %v5101 = vshll.u32 %v4996, 16
      %v5103 = vrot.slane %v5101, 7
      %v5104 = vor.u32 %v5100, %v5103
      %v5105 = vsel %vm5027, %v5096, %v5104
      %v5106 = vrot.slane %v5104, 4
      %v5108 = vshrl.u32 %v4997, 16
      %v5110 = vrot.slane %v5108, 6
      %v5111 = vshll.u32 %v4997, 16
      %v5113 = vrot.slane %v5111, 7
      %v5114 = vor.u32 %v5110, %v5113
      %v5115 = vsel %vm5027, %v5106, %v5114
      %v5116 = vrot.slane %v5114, 4
      %v5118 = vshrl.u32 %v4998, 16
      %v5120 = vrot.slane %v5118, 6
      %v5121 = vshll.u32 %v4998, 16
      %v5123 = vrot.slane %v5121, 7
      %v5124 = vor.u32 %v5120, %v5123
      %v5125 = vsel %vm5027, %v5116, %v5124
      %v5126 = vrot.slane %v5124, 4
      %v5128 = vshrl.u32 %v4999, 16
      %v5130 = vrot.slane %v5128, 6
      %v5131 = vshll.u32 %v4999, 16
      %v5133 = vrot.slane %v5131, 7
      %v5134 = vor.u32 %v5130, %v5133
      %v5135 = vsel %vm5027, %v5126, %v5134
      %v5136 = vrot.slane %v5134, 4
      %v5138 = vshrl.u32 %v5000, 16
      %v5140 = vrot.slane %v5138, 6
      %v5141 = vshll.u32 %v5000, 16
      %v5143 = vrot.slane %v5141, 7
      %v5144 = vor.u32 %v5140, %v5143
      %v5145 = vsel %vm5027, %v5136, %v5144
      %v5146 = vrot.slane %v5144, 4
      %v5148 = vshrl.u32 %v5001, 16
      %v5150 = vrot.slane %v5148, 6
      %v5151 = vshll.u32 %v5001, 16
      %v5153 = vrot.slane %v5151, 7
      %v5154 = vor.u32 %v5150, %v5153
      %v5155 = vsel %vm5027, %v5146, %v5154
      %v5156 = vrot.slane %v5154, 4
      %v5158 = vshrl.u32 %v5002, 16
      %v5160 = vrot.slane %v5158, 6
      %v5161 = vshll.u32 %v5002, 16
      %v5163 = vrot.slane %v5161, 7
      %v5164 = vor.u32 %v5160, %v5163
      %v5165 = vsel %vm5027, %v5156, %v5164
      %v5166 = vrot.slane %v5164, 4
      %v5168 = vshrl.u32 %v5003, 16
      %v5170 = vrot.slane %v5168, 6
      %v5171 = vshll.u32 %v5003, 16
      %v5173 = vrot.slane %v5171, 7
      %v5174 = vor.u32 %v5170, %v5173
      %v5175 = vsel %vm5027, %v5166, %v5174
      %v5176 = vrot.slane %v5174, 4
      %v5178 = vshrl.u32 %v5004, 16
      %v5180 = vrot.slane %v5178, 6
      %v5181 = vshll.u32 %v5004, 16
      %v5183 = vrot.slane %v5181, 7
      %v5184 = vor.u32 %v5180, %v5183
      %v5185 = vsel %vm5027, %v5176, %v5184
      %v5186 = vrot.slane %v5184, 4
      %v5188 = vshrl.u32 %v5005, 16
      %v5190 = vrot.slane %v5188, 6
      %v5191 = vshll.u32 %v5005, 16
      %v5193 = vrot.slane %v5191, 7
      %v5194 = vor.u32 %v5190, %v5193
      %v5195 = vsel %vm5027, %v5186, %v5194
      %v5196 = vrot.slane %v5194, 4
      %v5198 = vshrl.u32 %v5006, 16
      %v5200 = vrot.slane %v5198, 6
      %v5201 = vshll.u32 %v5006, 16
      %v5203 = vrot.slane %v5201, 7
      %v5204 = vor.u32 %v5200, %v5203
      %v5205 = vsel %vm5027, %v5196, %v5204
      %v5206 = vrot.slane %v5204, 4
      %v5208 = vshrl.u32 %v5007, 16
      %v5210 = vrot.slane %v5208, 6
      %v5211 = vshll.u32 %v5007, 16
      %v5213 = vrot.slane %v5211, 7
      %v5214 = vor.u32 %v5210, %v5213
      %v5215 = vsel %vm5027, %v5206, %v5214
      %v5216 = vrot.slane %v5214, 4
      %v5218 = vshrl.u32 %v5008, 16
      %v5220 = vrot.slane %v5218, 6
      %v5221 = vshll.u32 %v5008, 16
      %v5223 = vrot.slane %v5221, 7
      %v5224 = vor.u32 %v5220, %v5223
      %v5225 = vsel %vm5027, %v5216, %v5224
      %v5226 = vrot.slane %v5224, 4
      %v5228 = vshrl.u32 %v5009, 16
      %v5230 = vrot.slane %v5228, 6
      %v5231 = vshll.u32 %v5009, 16
      %v5233 = vrot.slane %v5231, 7
      %v5234 = vor.u32 %v5230, %v5233
      %v5235 = vsel %vm5027, %v5226, %v5234
      %v5236 = vrot.slane %v5234, 4
      %v5238 = vshrl.u32 %v5010, 16
      %v5240 = vrot.slane %v5238, 6
      %v5241 = vshll.u32 %v5010, 16
      %v5243 = vrot.slane %v5241, 7
      %v5244 = vor.u32 %v5240, %v5243
      %v5245 = vsel %vm5027, %v5236, %v5244
      %v5246 = vrot.slane %v5244, 4
      %v5248 = vshrl.u32 %v5011, 16
      %v5250 = vrot.slane %v5248, 6
      %v5251 = vshll.u32 %v5011, 16
      %v5253 = vrot.slane %v5251, 7
      %v5254 = vor.u32 %v5250, %v5253
      %v5255 = vsel %vm5027, %v5246, %v5254
      %v5256 = vrot.slane %v5254, 4
      %v5258 = vshrl.u32 %v5012, 16
      %v5260 = vrot.slane %v5258, 6
      %v5261 = vshll.u32 %v5012, 16
      %v5263 = vrot.slane %v5261, 7
      %v5264 = vor.u32 %v5260, %v5263
      %v5265 = vsel %vm5027, %v5256, %v5264
      %v5266 = vrot.slane %v5264, 4
      %v5268 = vshrl.u32 %v5013, 16
      %v5270 = vrot.slane %v5268, 6
      %v5271 = vshll.u32 %v5013, 16
      %v5273 = vrot.slane %v5271, 7
      %v5274 = vor.u32 %v5270, %v5273
      %v5275 = vsel %vm5027, %v5266, %v5274
      %v5276 = vrot.slane %v5274, 4
      %v5278 = vshrl.u32 %v5014, 16
      %v5280 = vrot.slane %v5278, 6
      %v5281 = vshll.u32 %v5014, 16
      %v5283 = vrot.slane %v5281, 7
      %v5284 = vor.u32 %v5280, %v5283
      %v5285 = vsel %vm5027, %v5276, %v5284
      %v5286 = vrot.slane %v5284, 4
      %v5288 = vshrl.u32 %v5015, 16
      %v5290 = vrot.slane %v5288, 6
      %v5291 = vshll.u32 %v5015, 16
      %v5293 = vrot.slane %v5291, 7
      %v5294 = vor.u32 %v5290, %v5293
      %v5295 = vsel %vm5027, %v5286, %v5294
      %v5296 = vrot.slane %v5294, 4
      %v5298 = vshrl.u32 %v5016, 16
      %v5300 = vrot.slane %v5298, 6
      %v5301 = vshll.u32 %v5016, 16
      %v5303 = vrot.slane %v5301, 7
      %v5304 = vor.u32 %v5300, %v5303
      %v5305 = vsel %vm5027, %v5296, %v5304
      %v5306 = vrot.slane %v5304, 4
      %v5308 = vshrl.u32 %v5017, 16
      %v5310 = vrot.slane %v5308, 6
      %v5311 = vshll.u32 %v5017, 16
      %v5313 = vrot.slane %v5311, 7
      %v5314 = vor.u32 %v5310, %v5313
      %v5315 = vsel %vm5027, %v5306, %v5314
      %v5316 = vrot.slane %v5314, 4
      %v5318 = vshrl.u32 %v5018, 16
      %v5320 = vrot.slane %v5318, 6
      %v5321 = vshll.u32 %v5018, 16
      %v5323 = vrot.slane %v5321, 7
      %v5324 = vor.u32 %v5320, %v5323
      %v5325 = vsel %vm5027, %v5316, %v5324
      %v5326 = vrot.slane %v5324, 4
      %v5328 = vshrl.u32 %v5019, 16
      %v5330 = vrot.slane %v5328, 6
      %v5331 = vshll.u32 %v5019, 16
      %v5333 = vrot.slane %v5331, 7
      %v5334 = vor.u32 %v5330, %v5333
      %v5335 = vsel %vm5027, %v5326, %v5334
      %v5336 = vrot.slane %v5334, 4
      %v5338 = vshrl.u32 %v5020, 16
      %v5340 = vrot.slane %v5338, 6
      %v5341 = vshll.u32 %v5020, 16
      %v5343 = vrot.slane %v5341, 7
      %v5344 = vor.u32 %v5340, %v5343
      %v5345 = vsel %vm5027, %v5336, %v5344
      %v5346 = vrot.slane %v5344, 4
      %v5348 = vshrl.u32 %v5021, 16
      %v5350 = vrot.slane %v5348, 6
      %v5351 = vshll.u32 %v5021, 16
      %v5353 = vrot.slane %v5351, 7
      %v5354 = vor.u32 %v5350, %v5353
      %v5355 = vsel %vm5027, %v5346, %v5354
      %v5356 = vrot.slane %v5354, 4
      %v5358 = vshrl.u32 %v5022, 16
      %v5360 = vrot.slane %v5358, 6
      %v5361 = vshll.u32 %v5022, 16
      %v5363 = vrot.slane %v5361, 7
      %v5364 = vor.u32 %v5360, %v5363
      %v5365 = vsel %vm5027, %v5356, %v5364
      %v5366 = vrot.slane %v5364, 4
      %v5368 = vshrl.u32 %v5023, 16
      %v5370 = vrot.slane %v5368, 6
      %v5371 = vshll.u32 %v5023, 16
      %v5373 = vrot.slane %v5371, 7
      %v5374 = vor.u32 %v5370, %v5373
      %v5375 = vsel %vm5027, %v5366, %v5374
      %v5376 = vrot.slane %v5374, 4
      %v5378 = vshrl.u32 %v5024, 16
      %v5380 = vrot.slane %v5378, 6
      %v5381 = vshll.u32 %v5024, 16
      %v5383 = vrot.slane %v5381, 7
      %v5384 = vor.u32 %v5380, %v5383
      %v5385 = vsel %vm5027, %v5376, %v5384
      %v5386 = vrot.slane %v5384, 4
      %vm5424 = vcmask 1043457
      %vm5425 = vsmask.f32 7942
      %vm5426 = vmand %vm5424, %vm5425
      %v5427 = vld [vmem:[%s231 + $0x8] sm:$0xe]
      %v5428 = vsel %vm5426, %v5035, %v5427
      %5429 = vst [vmem:[%s231 + $0x8] sm:$0xe] %v5428
      %5430 = vst [vmem:[%s231 + $0xc] sm:$0xf] %v5045
      %5431 = vst [vmem:[%s231 + $0x10] sm:$0xf] %v5055
      %5432 = vst [vmem:[%s231 + $0x14] sm:$0xf] %v5065
      %5433 = vst [vmem:[%s231 + $0x18] sm:$0xf] %v5075
      %5434 = vst [vmem:[%s231 + $0x1c] sm:$0xf] %v5085
      %5435 = vst [vmem:[%s231 + $0x20] sm:$0xf] %v5095
      %5436 = vst [vmem:[%s231 + $0x24] sm:$0xf] %v5105
      %5437 = vst [vmem:[%s231 + $0x28] sm:$0xf] %v5115
      %5438 = vst [vmem:[%s231 + $0x2c] sm:$0xf] %v5125
      %5439 = vst [vmem:[%s231 + $0x30] sm:$0xf] %v5135
      %5440 = vst [vmem:[%s231 + $0x34] sm:$0xf] %v5145
      %5441 = vst [vmem:[%s231 + $0x38] sm:$0xf] %v5155
      %5442 = vst [vmem:[%s231 + $0x3c] sm:$0xf] %v5165
      %5443 = vst [vmem:[%s231 + $0x40] sm:$0xf] %v5175
      %5444 = vst [vmem:[%s231 + $0x44] sm:$0xf] %v5185
      %5445 = vst [vmem:[%s231 + $0x48] sm:$0xf] %v5195
      %5446 = vst [vmem:[%s231 + $0x4c] sm:$0xf] %v5205
      %5447 = vst [vmem:[%s231 + $0x50] sm:$0xf] %v5215
      %5448 = vst [vmem:[%s231 + $0x54] sm:$0xf] %v5225
      %5449 = vst [vmem:[%s231 + $0x58] sm:$0xf] %v5235
      %5450 = vst [vmem:[%s231 + $0x5c] sm:$0xf] %v5245
      %5451 = vst [vmem:[%s231 + $0x60] sm:$0xf] %v5255
      %5452 = vst [vmem:[%s231 + $0x64] sm:$0xf] %v5265
      %5453 = vst [vmem:[%s231 + $0x68] sm:$0xf] %v5275
      %5454 = vst [vmem:[%s231 + $0x6c] sm:$0xf] %v5285
      %5455 = vst [vmem:[%s231 + $0x70] sm:$0xf] %v5295
      %5456 = vst [vmem:[%s231 + $0x74] sm:$0xf] %v5305
      %5457 = vst [vmem:[%s231 + $0x78] sm:$0xf] %v5315
      %5458 = vst [vmem:[%s231 + $0x7c] sm:$0xf] %v5325
      %5459 = vst [vmem:[%s231 + $0x80] sm:$0xf] %v5335
      %5460 = vst [vmem:[%s231 + $0x84] sm:$0xf] %v5345
      %5461 = vst [vmem:[%s231 + $0x88] sm:$0xf] %v5355
      %5462 = vst [vmem:[%s231 + $0x8c] sm:$0xf] %v5365
      %5463 = vst [vmem:[%s231 + $0x90] sm:$0xf] %v5375
      %5464 = vst [vmem:[%s231 + $0x94] sm:$0xf] %v5385
      %vm5465 = vcmask 1041408
      %vm5466 = vmand %vm5465, %vm5025
      %v5467 = vld [vmem:[%s231 + $0x98] sm:$0x3]
      %v5468 = vsel %vm5466, %v5386, %v5467
      %5469 = vst [vmem:[%s231 + $0x98] sm:$0x3] %v5468
      %p5470 = scmp.lt.s32.totalorder %s17, 1
      %s5471 = scalar_select %p5470, %s17, 1
      %s5472 = smul.addr %s5471, 45
      %s5473 = smul.addr %s5472, 4
      %s5474 = scalar_lea.vmem %s4, %s5473
      %p5475 = scmp.lt.s32.totalorder %s17, 1
      %s5476 = scalar_select %p5475, %s17, 1
      %s5477 = smul.addr %s5476, 2
      %s5478 = scalar_lea.vmem %s5, %s5477
      // Predicated region
      $region37: #{_double_conv_impl.4} parent=35 // pred_check
        %p5479 = pneg %p124
      $region38: #{_double_conv_impl.4} parent=35 // pred_check_branch
        %5481 = sbr.rel (%p5479) target = $region40
      $region39: #{_double_conv_impl.4} parent=35 // pred_region
        _
      $region40: #{_double_conv_impl.4} parent=35 // pred_fallthru
        _
      // Predicated region
      $region41: #{_double_conv_impl.4} parent=35 // pred_check
        %p5482 = pneg %p150
      $region42: #{_double_conv_impl.4} parent=35 // pred_check_branch
        %5484 = sbr.rel (%p5482) target = $region44
      $region43: #{_double_conv_impl.4} parent=35 // pred_region
        _
      $region44: #{_double_conv_impl.4} parent=35 // pred_fallthru
        _
    $region36: #{_double_conv_impl.4} parent=5 // pred_fallthru
      _
    %p5485 = scmp.le.s32.totalorder 2, %s12
    // Predicated region
    $region45: #{_double_conv_impl.4} parent=5 // pred_check
      %p5486 = pneg %p5485
    $region46: #{_double_conv_impl.4} parent=5 // pred_check_branch
      %5488 = sbr.rel (%p5486) target = $region48
    $region47: #{_double_conv_impl.4} parent=5 // pred_region
      %s5489 = ssub.s32 %s12, 2
      // Predicated region
      $region49: #{_double_conv_impl.4} parent=47 // pred_check
        %p5490 = pneg %p130
      $region50: #{_double_conv_impl.4} parent=47 // pred_check_branch
        %5492 = sbr.rel (%p5490) target = $region52
      $region51: #{_double_conv_impl.4} parent=47 // pred_region
        %p5493 = scmp.lt.s32.totalorder %s18, 1
        %s5494 = scalar_select %p5493, %s18, 1
        %s5495 = smul.addr %s5494, 45
        %s5496 = smul.addr %s5495, 4
        %s5497 = scalar_lea.vmem %s4, %s5496
      $region52: #{_double_conv_impl.4} parent=47 // pred_fallthru
        _
      // Predicated region
      $region53: #{_double_conv_impl.4} parent=47 // pred_check
        %p5498 = pneg %p156
      $region54: #{_double_conv_impl.4} parent=47 // pred_check_branch
        %5500 = sbr.rel (%p5498) target = $region56
      $region55: #{_double_conv_impl.4} parent=47 // pred_region
        %p5501 = scmp.lt.s32.totalorder %s18, 1
        %s5502 = scalar_select %p5501, %s18, 1
        %s5503 = smul.addr %s5502, 2
        %s5504 = scalar_lea.vmem %s5, %s5503
      $region56: #{_double_conv_impl.4} parent=47 // pred_fallthru
        _
    $region48: #{_double_conv_impl.4} parent=5 // pred_fallthru
      _
  $region6: #{_double_conv_impl.4} parent=0 // loop_footer
    %s16 = sadd.s32 1, %s12
  $region7: #{_double_conv_impl.4} parent=0 // loop_footer_branch
    %11 = sbr.rel target = $region3
  $region8: #{_double_conv_impl.4} parent=0 // loop_exit
    _

</llo_original>
